<compile_context>
chip_gen: v7x
topology: tpu7x:2x2x1
jax: 0.10.0
libtpu: 0.0.40
codegen_flags: <defaults>
</compile_context>

<pallas_src>
import math

import jax
import jax.numpy as jnp
from jax.experimental import pallas as pl
from jax.experimental.pallas import tpu as pltpu

# --- small synthetic configuration (consistent with the module's __init__) ---
IMAGE_SIZE = (16, 16)
PATCH_SIZE = (4, 4)
EMB_DIM = 32
NUM_LAYER = 2
NUM_HEAD = 4
MLP_RATIO = 4
LN_EPS = 1e-5       # nn.LayerNorm default
NEG_INF = -1e30


def _layernorm(x, w, b):
    # x: (M, C) f32, w/b: (1, C) f32
    mu = jnp.mean(x, axis=-1, keepdims=True)
    xc = x - mu
    var = jnp.mean(xc * xc, axis=-1, keepdims=True)
    return xc * jax.lax.rsqrt(var + LN_EPS) * w + b


def _make_decoder_kernel(bb, t_full, emb_dim, n_head, n_layer):
    m = bb * t_full
    d = emb_dim // n_head
    scale = 1.0 / math.sqrt(d)
    bf16 = jnp.bfloat16
    f32 = jnp.float32

    def kernel(sel_ref, src_ref, pos_ref, amask_ref,
               ln1_w, ln1_b, q_w, q_b, k_w, k_b, v_w, v_b, pj_w, pj_b,
               ln2_w, ln2_b, f1_w, f1_b, f2_w, f2_b, hd_w, hd_b,
               out_ref):
        # ---- fused un-shuffle gather + mask-token fill + pos-embedding add ----
        # one-hot selection matmul in f32 -> exact row copies, runs on the MXU.
        x = jnp.dot(sel_ref[0], src_ref[0], preferred_element_type=f32)
        x = x + pos_ref[...]                      # (m, C) f32 residual stream

        amask = amask_ref[...]                    # (m, m) additive block-diag mask

        for l in range(n_layer):                  # static unrolled layer loop
            # ---- self-attention (pre-LN) ----
            h = _layernorm(x, ln1_w[l], ln1_b[l])
            hb = h.astype(bf16)
            o = jnp.zeros((m, emb_dim), f32)
            for hh in range(n_head):              # static unrolled head loop
                q = jnp.dot(hb, q_w[l, hh], preferred_element_type=f32) + q_b[l, hh]
                k = jnp.dot(hb, k_w[l, hh], preferred_element_type=f32) + k_b[l, hh]
                v = jnp.dot(hb, v_w[l, hh], preferred_element_type=f32) + v_b[l, hh]
                att = jax.lax.dot_general(
                    q.astype(bf16), k.astype(bf16),
                    (((1,), (1,)), ((), ())),
                    preferred_element_type=f32) * scale + amask
                att = jnp.exp(att - jnp.max(att, axis=-1, keepdims=True))
                att = att * pl.reciprocal(jnp.sum(att, axis=-1, keepdims=True),
                                          approx=True)
                av = jnp.dot(att.astype(bf16), v.astype(bf16),
                             preferred_element_type=f32)
                # accumulate straight into the output projection (no concat)
                o = o + jnp.dot(av.astype(bf16), pj_w[l, hh],
                                preferred_element_type=f32)
            x = x + o + pj_b[l]

            # ---- MLP ----
            h = _layernorm(x, ln2_w[l], ln2_b[l])
            h = jnp.dot(h.astype(bf16), f1_w[l], preferred_element_type=f32) + f1_b[l]
            # TODO(synk): timm's Block uses exact (erf) GELU; tanh approximation
            # used here for Mosaic lowering safety.
            h = jax.nn.gelu(h, approximate=True)
            h = jnp.dot(h.astype(bf16), f2_w[l], preferred_element_type=f32) + f2_b[l]
            x = x + h

        # ---- decoder head (output lanes padded to 128 -> unmasked stores) ----
        patches = jnp.dot(x.astype(bf16), hd_w[...],
                          preferred_element_type=f32) + hd_b[...]
        for b in range(bb):
            out_ref[b] = patches[b * t_full:(b + 1) * t_full, :]

    return kernel


def _pick_batch_block(batch):
    if batch <= 1:
        return 1
    # keep >= 2 grid steps when possible (v7x has 2 TensorCores); cap at 8
    return min(8, -(-batch // 2))


def _transformer_head_pallas(params, feats_btc, bi_t):
    """feats_btc: (B, T_vis, C) f32; bi_t: (B, T_full) int32 -> (B, T_full, P)."""
    B, T_vis, C = feats_btc.shape
    T_full = params['pos_embedding'].shape[0]
    L, H = NUM_LAYER, NUM_HEAD
    D = C // H
    H4 = MLP_RATIO * C
    P = params['head_w'].shape[1]
    P_pad = max(128, ((P + 127) // 128) * 128)

    bb = _pick_batch_block(B)
    grid = -(-B // bb)
    b_pad = grid * bb
    if b_pad > B:
        feats_btc = jnp.concatenate(
            [feats_btc, jnp.zeros((b_pad - B, T_vis, C), jnp.float32)], axis=0)
        bi_t = jnp.concatenate(
            [bi_t, jnp.zeros((b_pad - B, T_full), jnp.int32)], axis=0)

    m = bb * T_full
    S = T_vis + 1   # visible feature rows + one mask-token row

    # Block-diagonal one-hot gather matrices (gather executes on the MXU).
    onehot = jax.nn.one_hot(jnp.minimum(bi_t, T_vis), S, dtype=jnp.float32)
    eye = jnp.eye(bb, dtype=jnp.float32)
    sel = jnp.einsum('gbts,bc->gbtcs', onehot.reshape(grid, bb, T_full, S), eye)
    sel = sel.reshape(grid, m, bb * S)

    mask_row = jnp.broadcast_to(params['mask_token'].reshape(1, 1, C), (b_pad, 1, C))
    src = jnp.concatenate([feats_btc, mask_row], axis=1).reshape(grid, bb * S, C)

    pos = jnp.tile(params['pos_embedding'].reshape(T_full, C).astype(jnp.float32),
                   (bb, 1))                                           # (m, C)

    tok_batch = jnp.arange(m, dtype=jnp.int32) // T_full
    amask = jnp.where(tok_batch[:, None] == tok_batch[None, :],
                      0.0, NEG_INF).astype(jnp.float32)               # (m, m)

    # Lane-dense head: pad output features to a multiple of 128 lanes.
    head_w = jnp.zeros((C, P_pad), jnp.float32).at[:, :P].set(params['head_w'])
    head_b = jnp.zeros((1, P_pad), jnp.float32).at[:, :P].set(params['head_b'])

    bf = lambda a: a.astype(jnp.bfloat16)   # MXU inputs in bf16, f32 accumulation

    def full(shape):
        nd = len(shape)
        return pl.BlockSpec(shape, lambda i, _n=nd: (0,) * _n)

    # TODO(synk): at real decoder widths, stream one layer's weights per grid
    # step (extra grid axis / emit_pipeline) and single-buffer constant-index
    # weight blocks so the working set fits v7x's 64 MiB VMEM.
    in_specs = [
        pl.BlockSpec((1, m, bb * S), lambda i: (i, 0, 0)),   # sel (gather one-hot)
        pl.BlockSpec((1, bb * S, C), lambda i: (i, 0, 0)),   # src (features + mask tok)
        full((m, C)),                                        # pos embedding (tiled)
        full((m, m)),                                        # additive attention mask
        full((L, 1, C)), full((L, 1, C)),                    # ln1 w/b
        full((L, H, C, D)), full((L, H, 1, D)),              # q w/b (per-head)
        full((L, H, C, D)), full((L, H, 1, D)),              # k w/b
        full((L, H, C, D)), full((L, H, 1, D)),              # v w/b
        full((L, H, D, C)), full((L, 1, C)),                 # proj w/b (per-head rows)
        full((L, 1, C)), full((L, 1, C)),                    # ln2 w/b
        full((L, C, H4)), full((L, 1, H4)),                  # fc1 w/b
        full((L, H4, C)), full((L, 1, C)),                   # fc2 w/b
        full((C, P_pad)), full((1, P_pad)),                  # head w/b (lane padded)
    ]

    kernel = _make_decoder_kernel(bb, T_full, C, H, L)
    out = pl.pallas_call(
        kernel,
        out_shape=jax.ShapeDtypeStruct((b_pad, T_full, P_pad), jnp.float32),
        grid_spec=pltpu.PrefetchScalarGridSpec(
            num_scalar_prefetch=0,
            grid=(grid,),
            in_specs=in_specs,
            out_specs=pl.BlockSpec((bb, T_full, P_pad), lambda i: (i, 0, 0)),
        ),
        compiler_params=pltpu.CompilerParams(dimension_semantics=("parallel",)),
    )(sel, src, pos, amask,
      params['ln1_w'], params['ln1_b'],
      bf(params['q_w']), params['q_b'],
      bf(params['k_w']), params['k_b'],
      bf(params['v_w']), params['v_b'],
      bf(params['proj_w']), params['proj_b'],
      params['ln2_w'], params['ln2_b'],
      bf(params['fc1_w']), params['fc1_b'],
      bf(params['fc2_w']), params['fc2_b'],
      bf(head_w), head_b)

    return out[:B, :, :P]   # drop batch padding and lane padding


def init_params(key):
    """Deterministic synthetic params (shapes follow MAE_Decoder.__init__).

    NOTE: Linear weights are stored 'x @ W' style, already split per head; to
    load real PyTorch nn.Linear weights, transpose them (W.T) and split the
    fused qkv along its output axis into per-head (C, D) blocks.
    """
    C = EMB_DIM
    P = PATCH_SIZE[0] * PATCH_SIZE[1]
    L, H = NUM_LAYER, NUM_HEAD
    D = C // H
    H4 = MLP_RATIO * C
    T_full = (IMAGE_SIZE[0] // PATCH_SIZE[0]) * (IMAGE_SIZE[1] // PATCH_SIZE[1]) + 1
    keys = jax.random.split(key, 10)
    std = 0.02

    # TODO(synk): trunc_normal_ init approximated with plain normal * std.
    def nrm(k, shape, s=std):
        return (s * jax.random.normal(k, shape)).astype(jnp.float32)

    return {
        'mask_token': nrm(keys[0], (1, 1, C)),
        'pos_embedding': nrm(keys[1], (T_full, 1, C)),
        'ln1_w': jnp.ones((L, 1, C), jnp.float32),
        'ln1_b': jnp.zeros((L, 1, C), jnp.float32),
        'q_w': nrm(keys[2], (L, H, C, D)),
        'q_b': jnp.zeros((L, H, 1, D), jnp.float32),
        'k_w': nrm(keys[3], (L, H, C, D)),
        'k_b': jnp.zeros((L, H, 1, D), jnp.float32),
        'v_w': nrm(keys[4], (L, H, C, D)),
        'v_b': jnp.zeros((L, H, 1, D), jnp.float32),
        'proj_w': nrm(keys[5], (L, H, D, C)),
        'proj_b': jnp.zeros((L, 1, C), jnp.float32),
        'ln2_w': jnp.ones((L, 1, C), jnp.float32),
        'ln2_b': jnp.zeros((L, 1, C), jnp.float32),
        'fc1_w': nrm(keys[6], (L, C, H4)),
        'fc1_b': jnp.zeros((L, 1, H4), jnp.float32),
        'fc2_w': nrm(keys[7], (L, H4, C)),
        'fc2_b': jnp.zeros((L, 1, C), jnp.float32),
        'head_w': nrm(keys[8], (C, P)),
        'head_b': jnp.zeros((1, P), jnp.float32),
    }


def mae_decoder_forward(params, features, backward_indexes):
    """features: (T_vis, B, C) float32 (token-major, cls included);
       backward_indexes: (N_patches, B) int32."""
    T_vis, B, C = features.shape
    hp = IMAGE_SIZE[0] // PATCH_SIZE[0]
    wp = IMAGE_SIZE[1] // PATCH_SIZE[1]
    p1, p2 = PATCH_SIZE
    N = hp * wp
    P = p1 * p2

    # backward_indexes = cat([zeros(1, B), backward_indexes + 1])
    bi = jnp.concatenate(
        [jnp.zeros((1, B), backward_indexes.dtype), backward_indexes + 1], axis=0)
    bi_t = jnp.transpose(bi).astype(jnp.int32)                  # (B, T_full)

    feats_btc = jnp.transpose(features, (1, 0, 2)).astype(jnp.float32)  # (B, T_vis, C)

    # gather + pos-embed + transformer + head, all inside the Pallas kernel
    patches_full = _transformer_head_pallas(params, feats_btc, bi_t)    # (B, T_full, P)
    patches = patches_full[:, 1:, :]                                    # drop cls

    # mask: zeros, mask[T_vis:] = 1 (shuffled patch order), gathered with bi[1:]-1
    mask0 = jnp.zeros((B, N, P), jnp.float32).at[:, T_vis:, :].set(1.0)
    midx = jnp.broadcast_to((bi_t[:, 1:] - 1)[:, :, None], (B, N, P)).astype(jnp.int32)
    mask = jnp.take_along_axis(mask0, midx, axis=1)

    def patch2img(t):
        # '(h w) b (c p1 p2) -> b c (h p1) (w p2)' with c=1, batch-major input
        t = t.reshape(B, hp, wp, 1, p1, p2)
        t = jnp.transpose(t, (0, 3, 1, 4, 2, 5))
        return t.reshape(B, 1, hp * p1, wp * p2)

    return patch2img(patches), patch2img(mask)


if __name__ == "__main__":
    key = jax.random.PRNGKey(0)
    pkey, fkey, ikey = jax.random.split(key, 3)
    params = init_params(pkey)

    B = 4
    N = (IMAGE_SIZE[0] // PATCH_SIZE[0]) * (IMAGE_SIZE[1] // PATCH_SIZE[1])  # 16 patches
    T_vis = 5  # 4 visible patch tokens + 1 cls token

    features = jax.random.normal(fkey, (T_vis, B, EMB_DIM), jnp.float32)
    # per-batch permutation of patch indices (shape (N, B), int32)
    backward_indexes = jnp.stack(
        [jax.random.permutation(jax.random.fold_in(ikey, b), N) for b in range(B)],
        axis=1).astype(jnp.int32)

    img, mask = jax.jit(mae_decoder_forward)(params, features, backward_indexes)
    jax.block_until_ready((img, mask))

    assert img.shape == (B, 1, IMAGE_SIZE[0], IMAGE_SIZE[1]), img.shape
    assert mask.shape == (B, 1, IMAGE_SIZE[0], IMAGE_SIZE[1]), mask.shape
    print("KERNEL_OK")
</pallas_src>

<mosaic_0001>
module attributes {stable_mosaic.version = 11 : i64} {
  func.func @kernel(%arg0: i32, %arg1: memref<1x34x12xf32, #tpu.memory_space<vmem>>, %arg2: memref<1x12x32xf32, #tpu.memory_space<vmem>>, %arg3: memref<34x32xf32, #tpu.memory_space<vmem>>, %arg4: memref<34x34xf32, #tpu.memory_space<vmem>>, %arg5: memref<2x1x32xf32, #tpu.memory_space<vmem>>, %arg6: memref<2x1x32xf32, #tpu.memory_space<vmem>>, %arg7: memref<2x4x32x8xbf16, #tpu.memory_space<vmem>>, %arg8: memref<2x4x1x8xf32, #tpu.memory_space<vmem>>, %arg9: memref<2x4x32x8xbf16, #tpu.memory_space<vmem>>, %arg10: memref<2x4x1x8xf32, #tpu.memory_space<vmem>>, %arg11: memref<2x4x32x8xbf16, #tpu.memory_space<vmem>>, %arg12: memref<2x4x1x8xf32, #tpu.memory_space<vmem>>, %arg13: memref<2x4x8x32xbf16, #tpu.memory_space<vmem>>, %arg14: memref<2x1x32xf32, #tpu.memory_space<vmem>>, %arg15: memref<2x1x32xf32, #tpu.memory_space<vmem>>, %arg16: memref<2x1x32xf32, #tpu.memory_space<vmem>>, %arg17: memref<2x32x128xbf16, #tpu.memory_space<vmem>>, %arg18: memref<2x1x128xf32, #tpu.memory_space<vmem>>, %arg19: memref<2x128x32xbf16, #tpu.memory_space<vmem>>, %arg20: memref<2x1x32xf32, #tpu.memory_space<vmem>>, %arg21: memref<32x128xbf16, #tpu.memory_space<vmem>>, %arg22: memref<1x128xf32, #tpu.memory_space<vmem>>, %arg23: memref<2x17x128xf32, #tpu.memory_space<vmem>>) attributes {dimension_semantics = [#tpu.dimension_semantics<parallel>], iteration_bounds = array<i64: 2>, scalar_prefetch = 0 : i64, scratch_operands = 0 : i64, tpu.core_type = #tpu.core_type<tc>, window_params = [{transform_indices = @transform_0, window_bounds = array<i64: 1, 34, 12>}, {transform_indices = @transform_1, window_bounds = array<i64: 1, 12, 32>}, {pipeline_mode = #tpu.pipeline_mode<synchronous>, transform_indices = @transform_2, window_bounds = array<i64: 34, 32>}, {pipeline_mode = #tpu.pipeline_mode<synchronous>, transform_indices = @transform_3, window_bounds = array<i64: 34, 34>}, {pipeline_mode = #tpu.pipeline_mode<synchronous>, transform_indices = @transform_4, window_bounds = array<i64: 2, 1, 32>}, {pipeline_mode = #tpu.pipeline_mode<synchronous>, transform_indices = @transform_5, window_bounds = array<i64: 2, 1, 32>}, {pipeline_mode = #tpu.pipeline_mode<synchronous>, transform_indices = @transform_6, window_bounds = array<i64: 2, 4, 32, 8>}, {pipeline_mode = #tpu.pipeline_mode<synchronous>, transform_indices = @transform_7, window_bounds = array<i64: 2, 4, 1, 8>}, {pipeline_mode = #tpu.pipeline_mode<synchronous>, transform_indices = @transform_8, window_bounds = array<i64: 2, 4, 32, 8>}, {pipeline_mode = #tpu.pipeline_mode<synchronous>, transform_indices = @transform_9, window_bounds = array<i64: 2, 4, 1, 8>}, {pipeline_mode = #tpu.pipeline_mode<synchronous>, transform_indices = @transform_10, window_bounds = array<i64: 2, 4, 32, 8>}, {pipeline_mode = #tpu.pipeline_mode<synchronous>, transform_indices = @transform_11, window_bounds = array<i64: 2, 4, 1, 8>}, {pipeline_mode = #tpu.pipeline_mode<synchronous>, transform_indices = @transform_12, window_bounds = array<i64: 2, 4, 8, 32>}, {pipeline_mode = #tpu.pipeline_mode<synchronous>, transform_indices = @transform_13, window_bounds = array<i64: 2, 1, 32>}, {pipeline_mode = #tpu.pipeline_mode<synchronous>, transform_indices = @transform_14, window_bounds = array<i64: 2, 1, 32>}, {pipeline_mode = #tpu.pipeline_mode<synchronous>, transform_indices = @transform_15, window_bounds = array<i64: 2, 1, 32>}, {pipeline_mode = #tpu.pipeline_mode<synchronous>, transform_indices = @transform_16, window_bounds = array<i64: 2, 32, 128>}, {pipeline_mode = #tpu.pipeline_mode<synchronous>, transform_indices = @transform_17, window_bounds = array<i64: 2, 1, 128>}, {pipeline_mode = #tpu.pipeline_mode<synchronous>, transform_indices = @transform_18, window_bounds = array<i64: 2, 128, 32>}, {pipeline_mode = #tpu.pipeline_mode<synchronous>, transform_indices = @transform_19, window_bounds = array<i64: 2, 1, 32>}, {pipeline_mode = #tpu.pipeline_mode<synchronous>, transform_indices = @transform_20, window_bounds = array<i64: 32, 128>}, {pipeline_mode = #tpu.pipeline_mode<synchronous>, transform_indices = @transform_21, window_bounds = array<i64: 1, 128>}, {transform_indices = @transform_22, window_bounds = array<i64: 2, 17, 128>}]} {
    %c0 = arith.constant 0 : index
    %c0_0 = arith.constant 0 : index
    %c0_1 = arith.constant 0 : index
    %0 = vector.load %arg1[%c0, %c0_0, %c0_1] : memref<1x34x12xf32, #tpu.memory_space<vmem>>, vector<1x34x12xf32>
    %1 = vector.shape_cast %0 : vector<1x34x12xf32> to vector<34x12xf32>
    %c0_2 = arith.constant 0 : index
    %c0_3 = arith.constant 0 : index
    %c0_4 = arith.constant 0 : index
    %2 = vector.load %arg2[%c0_2, %c0_3, %c0_4] : memref<1x12x32xf32, #tpu.memory_space<vmem>>, vector<1x12x32xf32>
    %3 = vector.shape_cast %2 : vector<1x12x32xf32> to vector<12x32xf32>
    %cst = arith.constant dense<0.000000e+00> : vector<34x32xf32>
    %4 = tpu.matmul %1, %3, %cst {dimension_numbers = #tpu.dot_dimension_numbers<[1], [0], [0], [1], [0, 0, 1, 1], [], []>} : vector<34x12xf32>, vector<12x32xf32>, vector<34x32xf32> -> vector<34x32xf32>
    %c0_5 = arith.constant 0 : index
    %c0_6 = arith.constant 0 : index
    %5 = vector.load %arg3[%c0_5, %c0_6] : memref<34x32xf32, #tpu.memory_space<vmem>>, vector<34x32xf32>
    %6 = arith.addf %4, %5 : vector<34x32xf32>
    %c0_7 = arith.constant 0 : index
    %c0_8 = arith.constant 0 : index
    %7 = vector.load %arg4[%c0_7, %c0_8] : memref<34x34xf32, #tpu.memory_space<vmem>>, vector<34x34xf32>
    %c0_9 = arith.constant 0 : index
    %c0_10 = arith.constant 0 : index
    %c0_11 = arith.constant 0 : index
    %8 = vector.load %arg5[%c0_9, %c0_10, %c0_11] : memref<2x1x32xf32, #tpu.memory_space<vmem>>, vector<1x1x32xf32>
    %9 = vector.shape_cast %8 : vector<1x1x32xf32> to vector<1x32xf32>
    %c0_12 = arith.constant 0 : index
    %c0_13 = arith.constant 0 : index
    %c0_14 = arith.constant 0 : index
    %10 = vector.load %arg6[%c0_12, %c0_13, %c0_14] : memref<2x1x32xf32, #tpu.memory_space<vmem>>, vector<1x1x32xf32>
    %11 = vector.shape_cast %10 : vector<1x1x32xf32> to vector<1x32xf32>
    %cst_15 = arith.constant dense<0.000000e+00> : vector<34xf32>
    %12 = vector.multi_reduction <add>, %6, %cst_15 [1] : vector<34x32xf32> to vector<34xf32>
    %13 = vector.shape_cast %12 : vector<34xf32> to vector<34x1xf32>
    %cst_16 = arith.constant 3.200000e+01 : f32
    %14 = vector.broadcast %cst_16 : f32 to vector<34x1xf32>
    %15 = arith.divf %13, %14 : vector<34x1xf32>
    %16 = vector.broadcast %15 : vector<34x1xf32> to vector<34x32xf32>
    %17 = arith.subf %6, %16 : vector<34x32xf32>
    %18 = arith.mulf %17, %17 : vector<34x32xf32>
    %cst_17 = arith.constant dense<0.000000e+00> : vector<34xf32>
    %19 = vector.multi_reduction <add>, %18, %cst_17 [1] : vector<34x32xf32> to vector<34xf32>
    %20 = vector.shape_cast %19 : vector<34xf32> to vector<34x1xf32>
    %cst_18 = arith.constant 3.200000e+01 : f32
    %21 = vector.broadcast %cst_18 : f32 to vector<34x1xf32>
    %22 = arith.divf %20, %21 : vector<34x1xf32>
    %cst_19 = arith.constant 9.99999974E-6 : f32
    %23 = vector.broadcast %cst_19 : f32 to vector<34x1xf32>
    %24 = arith.addf %22, %23 : vector<34x1xf32>
    %25 = math.rsqrt %24 : vector<34x1xf32>
    %26 = vector.broadcast %25 : vector<34x1xf32> to vector<34x32xf32>
    %27 = arith.mulf %17, %26 : vector<34x32xf32>
    %28 = vector.broadcast %9 : vector<1x32xf32> to vector<34x32xf32>
    %29 = arith.mulf %27, %28 : vector<34x32xf32>
    %30 = vector.broadcast %11 : vector<1x32xf32> to vector<34x32xf32>
    %31 = arith.addf %29, %30 : vector<34x32xf32>
    %32 = arith.truncf %31 : vector<34x32xf32> to vector<34x32xbf16>
    %cst_20 = arith.constant 0.000000e+00 : f32
    %33 = vector.broadcast %cst_20 : f32 to vector<34x32xf32>
    %c0_21 = arith.constant 0 : index
    %c0_22 = arith.constant 0 : index
    %c0_23 = arith.constant 0 : index
    %c0_24 = arith.constant 0 : index
    %34 = vector.load %arg7[%c0_21, %c0_22, %c0_23, %c0_24] : memref<2x4x32x8xbf16, #tpu.memory_space<vmem>>, vector<1x1x32x8xbf16>
    %35 = vector.shape_cast %34 : vector<1x1x32x8xbf16> to vector<32x8xbf16>
    %cst_25 = arith.constant dense<0.000000e+00> : vector<34x8xf32>
    %36 = tpu.matmul %32, %35, %cst_25 {dimension_numbers = #tpu.dot_dimension_numbers<[1], [0], [0], [1], [0, 0, 1, 1], [], []>} : vector<34x32xbf16>, vector<32x8xbf16>, vector<34x8xf32> -> vector<34x8xf32>
    %c0_26 = arith.constant 0 : index
    %c0_27 = arith.constant 0 : index
    %c0_28 = arith.constant 0 : index
    %c0_29 = arith.constant 0 : index
    %37 = vector.load %arg8[%c0_26, %c0_27, %c0_28, %c0_29] : memref<2x4x1x8xf32, #tpu.memory_space<vmem>>, vector<1x1x1x8xf32>
    %38 = vector.shape_cast %37 : vector<1x1x1x8xf32> to vector<1x8xf32>
    %39 = vector.broadcast %38 : vector<1x8xf32> to vector<34x8xf32>
    %40 = arith.addf %36, %39 : vector<34x8xf32>
    %c0_30 = arith.constant 0 : index
    %c0_31 = arith.constant 0 : index
    %c0_32 = arith.constant 0 : index
    %c0_33 = arith.constant 0 : index
    %41 = vector.load %arg9[%c0_30, %c0_31, %c0_32, %c0_33] : memref<2x4x32x8xbf16, #tpu.memory_space<vmem>>, vector<1x1x32x8xbf16>
    %42 = vector.shape_cast %41 : vector<1x1x32x8xbf16> to vector<32x8xbf16>
    %cst_34 = arith.constant dense<0.000000e+00> : vector<34x8xf32>
    %43 = tpu.matmul %32, %42, %cst_34 {dimension_numbers = #tpu.dot_dimension_numbers<[1], [0], [0], [1], [0, 0, 1, 1], [], []>} : vector<34x32xbf16>, vector<32x8xbf16>, vector<34x8xf32> -> vector<34x8xf32>
    %c0_35 = arith.constant 0 : index
    %c0_36 = arith.constant 0 : index
    %c0_37 = arith.constant 0 : index
    %c0_38 = arith.constant 0 : index
    %44 = vector.load %arg10[%c0_35, %c0_36, %c0_37, %c0_38] : memref<2x4x1x8xf32, #tpu.memory_space<vmem>>, vector<1x1x1x8xf32>
    %45 = vector.shape_cast %44 : vector<1x1x1x8xf32> to vector<1x8xf32>
    %46 = vector.broadcast %45 : vector<1x8xf32> to vector<34x8xf32>
    %47 = arith.addf %43, %46 : vector<34x8xf32>
    %c0_39 = arith.constant 0 : index
    %c0_40 = arith.constant 0 : index
    %c0_41 = arith.constant 0 : index
    %c0_42 = arith.constant 0 : index
    %48 = vector.load %arg11[%c0_39, %c0_40, %c0_41, %c0_42] : memref<2x4x32x8xbf16, #tpu.memory_space<vmem>>, vector<1x1x32x8xbf16>
    %49 = vector.shape_cast %48 : vector<1x1x32x8xbf16> to vector<32x8xbf16>
    %cst_43 = arith.constant dense<0.000000e+00> : vector<34x8xf32>
    %50 = tpu.matmul %32, %49, %cst_43 {dimension_numbers = #tpu.dot_dimension_numbers<[1], [0], [0], [1], [0, 0, 1, 1], [], []>} : vector<34x32xbf16>, vector<32x8xbf16>, vector<34x8xf32> -> vector<34x8xf32>
    %c0_44 = arith.constant 0 : index
    %c0_45 = arith.constant 0 : index
    %c0_46 = arith.constant 0 : index
    %c0_47 = arith.constant 0 : index
    %51 = vector.load %arg12[%c0_44, %c0_45, %c0_46, %c0_47] : memref<2x4x1x8xf32, #tpu.memory_space<vmem>>, vector<1x1x1x8xf32>
    %52 = vector.shape_cast %51 : vector<1x1x1x8xf32> to vector<1x8xf32>
    %53 = vector.broadcast %52 : vector<1x8xf32> to vector<34x8xf32>
    %54 = arith.addf %50, %53 : vector<34x8xf32>
    %55 = arith.truncf %40 : vector<34x8xf32> to vector<34x8xbf16>
    %56 = arith.truncf %47 : vector<34x8xf32> to vector<34x8xbf16>
    %cst_48 = arith.constant dense<0.000000e+00> : vector<34x34xf32>
    %57 = tpu.matmul %55, %56, %cst_48 {dimension_numbers = #tpu.dot_dimension_numbers<[1], [1], [0], [0], [0, 0, 1, 0], [], []>} : vector<34x8xbf16>, vector<34x8xbf16>, vector<34x34xf32> -> vector<34x34xf32>
    %cst_49 = arith.constant 0.353553385 : f32
    %58 = vector.broadcast %cst_49 : f32 to vector<34x34xf32>
    %59 = arith.mulf %57, %58 : vector<34x34xf32>
    %60 = arith.addf %59, %7 : vector<34x34xf32>
    %cst_50 = arith.constant dense<0xFF800000> : vector<34xf32>
    %61 = vector.multi_reduction <maximumf>, %60, %cst_50 [1] : vector<34x34xf32> to vector<34xf32>
    %62 = vector.shape_cast %61 : vector<34xf32> to vector<34x1xf32>
    %63 = vector.broadcast %62 : vector<34x1xf32> to vector<34x34xf32>
    %64 = arith.subf %60, %63 : vector<34x34xf32>
    %65 = math.exp %64 : vector<34x34xf32>
    %cst_51 = arith.constant dense<0.000000e+00> : vector<34xf32>
    %66 = vector.multi_reduction <add>, %65, %cst_51 [1] : vector<34x34xf32> to vector<34xf32>
    %67 = vector.shape_cast %66 : vector<34xf32> to vector<34x1xf32>
    %68 = tpu.reciprocal %67 {approx = true} : vector<34x1xf32> -> vector<34x1xf32>
    %69 = vector.broadcast %68 : vector<34x1xf32> to vector<34x34xf32>
    %70 = arith.mulf %65, %69 : vector<34x34xf32>
    %71 = arith.truncf %70 : vector<34x34xf32> to vector<34x34xbf16>
    %72 = arith.truncf %54 : vector<34x8xf32> to vector<34x8xbf16>
    %cst_52 = arith.constant dense<0.000000e+00> : vector<34x8xf32>
    %73 = tpu.matmul %71, %72, %cst_52 {dimension_numbers = #tpu.dot_dimension_numbers<[1], [0], [0], [1], [0, 0, 1, 1], [], []>} : vector<34x34xbf16>, vector<34x8xbf16>, vector<34x8xf32> -> vector<34x8xf32>
    %74 = arith.truncf %73 : vector<34x8xf32> to vector<34x8xbf16>
    %c0_53 = arith.constant 0 : index
    %c0_54 = arith.constant 0 : index
    %c0_55 = arith.constant 0 : index
    %c0_56 = arith.constant 0 : index
    %75 = vector.load %arg13[%c0_53, %c0_54, %c0_55, %c0_56] : memref<2x4x8x32xbf16, #tpu.memory_space<vmem>>, vector<1x1x8x32xbf16>
    %76 = vector.shape_cast %75 : vector<1x1x8x32xbf16> to vector<8x32xbf16>
    %cst_57 = arith.constant dense<0.000000e+00> : vector<34x32xf32>
    %77 = tpu.matmul %74, %76, %cst_57 {dimension_numbers = #tpu.dot_dimension_numbers<[1], [0], [0], [1], [0, 0, 1, 1], [], []>} : vector<34x8xbf16>, vector<8x32xbf16>, vector<34x32xf32> -> vector<34x32xf32>
    %78 = arith.addf %33, %77 : vector<34x32xf32>
    %c0_58 = arith.constant 0 : index
    %c1 = arith.constant 1 : index
    %c0_59 = arith.constant 0 : index
    %c0_60 = arith.constant 0 : index
    %79 = vector.load %arg7[%c0_58, %c1, %c0_59, %c0_60] : memref<2x4x32x8xbf16, #tpu.memory_space<vmem>>, vector<1x1x32x8xbf16>
    %80 = vector.shape_cast %79 : vector<1x1x32x8xbf16> to vector<32x8xbf16>
    %cst_61 = arith.constant dense<0.000000e+00> : vector<34x8xf32>
    %81 = tpu.matmul %32, %80, %cst_61 {dimension_numbers = #tpu.dot_dimension_numbers<[1], [0], [0], [1], [0, 0, 1, 1], [], []>} : vector<34x32xbf16>, vector<32x8xbf16>, vector<34x8xf32> -> vector<34x8xf32>
    %c0_62 = arith.constant 0 : index
    %c1_63 = arith.constant 1 : index
    %c0_64 = arith.constant 0 : index
    %c0_65 = arith.constant 0 : index
    %82 = vector.load %arg8[%c0_62, %c1_63, %c0_64, %c0_65] : memref<2x4x1x8xf32, #tpu.memory_space<vmem>>, vector<1x1x1x8xf32>
    %83 = vector.shape_cast %82 : vector<1x1x1x8xf32> to vector<1x8xf32>
    %84 = vector.broadcast %83 : vector<1x8xf32> to vector<34x8xf32>
    %85 = arith.addf %81, %84 : vector<34x8xf32>
    %c0_66 = arith.constant 0 : index
    %c1_67 = arith.constant 1 : index
    %c0_68 = arith.constant 0 : index
    %c0_69 = arith.constant 0 : index
    %86 = vector.load %arg9[%c0_66, %c1_67, %c0_68, %c0_69] : memref<2x4x32x8xbf16, #tpu.memory_space<vmem>>, vector<1x1x32x8xbf16>
    %87 = vector.shape_cast %86 : vector<1x1x32x8xbf16> to vector<32x8xbf16>
    %cst_70 = arith.constant dense<0.000000e+00> : vector<34x8xf32>
    %88 = tpu.matmul %32, %87, %cst_70 {dimension_numbers = #tpu.dot_dimension_numbers<[1], [0], [0], [1], [0, 0, 1, 1], [], []>} : vector<34x32xbf16>, vector<32x8xbf16>, vector<34x8xf32> -> vector<34x8xf32>
    %c0_71 = arith.constant 0 : index
    %c1_72 = arith.constant 1 : index
    %c0_73 = arith.constant 0 : index
    %c0_74 = arith.constant 0 : index
    %89 = vector.load %arg10[%c0_71, %c1_72, %c0_73, %c0_74] : memref<2x4x1x8xf32, #tpu.memory_space<vmem>>, vector<1x1x1x8xf32>
    %90 = vector.shape_cast %89 : vector<1x1x1x8xf32> to vector<1x8xf32>
    %91 = vector.broadcast %90 : vector<1x8xf32> to vector<34x8xf32>
    %92 = arith.addf %88, %91 : vector<34x8xf32>
    %c0_75 = arith.constant 0 : index
    %c1_76 = arith.constant 1 : index
    %c0_77 = arith.constant 0 : index
    %c0_78 = arith.constant 0 : index
    %93 = vector.load %arg11[%c0_75, %c1_76, %c0_77, %c0_78] : memref<2x4x32x8xbf16, #tpu.memory_space<vmem>>, vector<1x1x32x8xbf16>
    %94 = vector.shape_cast %93 : vector<1x1x32x8xbf16> to vector<32x8xbf16>
    %cst_79 = arith.constant dense<0.000000e+00> : vector<34x8xf32>
    %95 = tpu.matmul %32, %94, %cst_79 {dimension_numbers = #tpu.dot_dimension_numbers<[1], [0], [0], [1], [0, 0, 1, 1], [], []>} : vector<34x32xbf16>, vector<32x8xbf16>, vector<34x8xf32> -> vector<34x8xf32>
    %c0_80 = arith.constant 0 : index
    %c1_81 = arith.constant 1 : index
    %c0_82 = arith.constant 0 : index
    %c0_83 = arith.constant 0 : index
    %96 = vector.load %arg12[%c0_80, %c1_81, %c0_82, %c0_83] : memref<2x4x1x8xf32, #tpu.memory_space<vmem>>, vector<1x1x1x8xf32>
    %97 = vector.shape_cast %96 : vector<1x1x1x8xf32> to vector<1x8xf32>
    %98 = vector.broadcast %97 : vector<1x8xf32> to vector<34x8xf32>
    %99 = arith.addf %95, %98 : vector<34x8xf32>
    %100 = arith.truncf %85 : vector<34x8xf32> to vector<34x8xbf16>
    %101 = arith.truncf %92 : vector<34x8xf32> to vector<34x8xbf16>
    %cst_84 = arith.constant dense<0.000000e+00> : vector<34x34xf32>
    %102 = tpu.matmul %100, %101, %cst_84 {dimension_numbers = #tpu.dot_dimension_numbers<[1], [1], [0], [0], [0, 0, 1, 0], [], []>} : vector<34x8xbf16>, vector<34x8xbf16>, vector<34x34xf32> -> vector<34x34xf32>
    %cst_85 = arith.constant 0.353553385 : f32
    %103 = vector.broadcast %cst_85 : f32 to vector<34x34xf32>
    %104 = arith.mulf %102, %103 : vector<34x34xf32>
    %105 = arith.addf %104, %7 : vector<34x34xf32>
    %cst_86 = arith.constant dense<0xFF800000> : vector<34xf32>
    %106 = vector.multi_reduction <maximumf>, %105, %cst_86 [1] : vector<34x34xf32> to vector<34xf32>
    %107 = vector.shape_cast %106 : vector<34xf32> to vector<34x1xf32>
    %108 = vector.broadcast %107 : vector<34x1xf32> to vector<34x34xf32>
    %109 = arith.subf %105, %108 : vector<34x34xf32>
    %110 = math.exp %109 : vector<34x34xf32>
    %cst_87 = arith.constant dense<0.000000e+00> : vector<34xf32>
    %111 = vector.multi_reduction <add>, %110, %cst_87 [1] : vector<34x34xf32> to vector<34xf32>
    %112 = vector.shape_cast %111 : vector<34xf32> to vector<34x1xf32>
    %113 = tpu.reciprocal %112 {approx = true} : vector<34x1xf32> -> vector<34x1xf32>
    %114 = vector.broadcast %113 : vector<34x1xf32> to vector<34x34xf32>
    %115 = arith.mulf %110, %114 : vector<34x34xf32>
    %116 = arith.truncf %115 : vector<34x34xf32> to vector<34x34xbf16>
    %117 = arith.truncf %99 : vector<34x8xf32> to vector<34x8xbf16>
    %cst_88 = arith.constant dense<0.000000e+00> : vector<34x8xf32>
    %118 = tpu.matmul %116, %117, %cst_88 {dimension_numbers = #tpu.dot_dimension_numbers<[1], [0], [0], [1], [0, 0, 1, 1], [], []>} : vector<34x34xbf16>, vector<34x8xbf16>, vector<34x8xf32> -> vector<34x8xf32>
    %119 = arith.truncf %118 : vector<34x8xf32> to vector<34x8xbf16>
    %c0_89 = arith.constant 0 : index
    %c1_90 = arith.constant 1 : index
    %c0_91 = arith.constant 0 : index
    %c0_92 = arith.constant 0 : index
    %120 = vector.load %arg13[%c0_89, %c1_90, %c0_91, %c0_92] : memref<2x4x8x32xbf16, #tpu.memory_space<vmem>>, vector<1x1x8x32xbf16>
    %121 = vector.shape_cast %120 : vector<1x1x8x32xbf16> to vector<8x32xbf16>
    %cst_93 = arith.constant dense<0.000000e+00> : vector<34x32xf32>
    %122 = tpu.matmul %119, %121, %cst_93 {dimension_numbers = #tpu.dot_dimension_numbers<[1], [0], [0], [1], [0, 0, 1, 1], [], []>} : vector<34x8xbf16>, vector<8x32xbf16>, vector<34x32xf32> -> vector<34x32xf32>
    %123 = arith.addf %78, %122 : vector<34x32xf32>
    %c0_94 = arith.constant 0 : index
    %c2 = arith.constant 2 : index
    %c0_95 = arith.constant 0 : index
    %c0_96 = arith.constant 0 : index
    %124 = vector.load %arg7[%c0_94, %c2, %c0_95, %c0_96] : memref<2x4x32x8xbf16, #tpu.memory_space<vmem>>, vector<1x1x32x8xbf16>
    %125 = vector.shape_cast %124 : vector<1x1x32x8xbf16> to vector<32x8xbf16>
    %cst_97 = arith.constant dense<0.000000e+00> : vector<34x8xf32>
    %126 = tpu.matmul %32, %125, %cst_97 {dimension_numbers = #tpu.dot_dimension_numbers<[1], [0], [0], [1], [0, 0, 1, 1], [], []>} : vector<34x32xbf16>, vector<32x8xbf16>, vector<34x8xf32> -> vector<34x8xf32>
    %c0_98 = arith.constant 0 : index
    %c2_99 = arith.constant 2 : index
    %c0_100 = arith.constant 0 : index
    %c0_101 = arith.constant 0 : index
    %127 = vector.load %arg8[%c0_98, %c2_99, %c0_100, %c0_101] : memref<2x4x1x8xf32, #tpu.memory_space<vmem>>, vector<1x1x1x8xf32>
    %128 = vector.shape_cast %127 : vector<1x1x1x8xf32> to vector<1x8xf32>
    %129 = vector.broadcast %128 : vector<1x8xf32> to vector<34x8xf32>
    %130 = arith.addf %126, %129 : vector<34x8xf32>
    %c0_102 = arith.constant 0 : index
    %c2_103 = arith.constant 2 : index
    %c0_104 = arith.constant 0 : index
    %c0_105 = arith.constant 0 : index
    %131 = vector.load %arg9[%c0_102, %c2_103, %c0_104, %c0_105] : memref<2x4x32x8xbf16, #tpu.memory_space<vmem>>, vector<1x1x32x8xbf16>
    %132 = vector.shape_cast %131 : vector<1x1x32x8xbf16> to vector<32x8xbf16>
    %cst_106 = arith.constant dense<0.000000e+00> : vector<34x8xf32>
    %133 = tpu.matmul %32, %132, %cst_106 {dimension_numbers = #tpu.dot_dimension_numbers<[1], [0], [0], [1], [0, 0, 1, 1], [], []>} : vector<34x32xbf16>, vector<32x8xbf16>, vector<34x8xf32> -> vector<34x8xf32>
    %c0_107 = arith.constant 0 : index
    %c2_108 = arith.constant 2 : index
    %c0_109 = arith.constant 0 : index
    %c0_110 = arith.constant 0 : index
    %134 = vector.load %arg10[%c0_107, %c2_108, %c0_109, %c0_110] : memref<2x4x1x8xf32, #tpu.memory_space<vmem>>, vector<1x1x1x8xf32>
    %135 = vector.shape_cast %134 : vector<1x1x1x8xf32> to vector<1x8xf32>
    %136 = vector.broadcast %135 : vector<1x8xf32> to vector<34x8xf32>
    %137 = arith.addf %133, %136 : vector<34x8xf32>
    %c0_111 = arith.constant 0 : index
    %c2_112 = arith.constant 2 : index
    %c0_113 = arith.constant 0 : index
    %c0_114 = arith.constant 0 : index
    %138 = vector.load %arg11[%c0_111, %c2_112, %c0_113, %c0_114] : memref<2x4x32x8xbf16, #tpu.memory_space<vmem>>, vector<1x1x32x8xbf16>
    %139 = vector.shape_cast %138 : vector<1x1x32x8xbf16> to vector<32x8xbf16>
    %cst_115 = arith.constant dense<0.000000e+00> : vector<34x8xf32>
    %140 = tpu.matmul %32, %139, %cst_115 {dimension_numbers = #tpu.dot_dimension_numbers<[1], [0], [0], [1], [0, 0, 1, 1], [], []>} : vector<34x32xbf16>, vector<32x8xbf16>, vector<34x8xf32> -> vector<34x8xf32>
    %c0_116 = arith.constant 0 : index
    %c2_117 = arith.constant 2 : index
    %c0_118 = arith.constant 0 : index
    %c0_119 = arith.constant 0 : index
    %141 = vector.load %arg12[%c0_116, %c2_117, %c0_118, %c0_119] : memref<2x4x1x8xf32, #tpu.memory_space<vmem>>, vector<1x1x1x8xf32>
    %142 = vector.shape_cast %141 : vector<1x1x1x8xf32> to vector<1x8xf32>
    %143 = vector.broadcast %142 : vector<1x8xf32> to vector<34x8xf32>
    %144 = arith.addf %140, %143 : vector<34x8xf32>
    %145 = arith.truncf %130 : vector<34x8xf32> to vector<34x8xbf16>
    %146 = arith.truncf %137 : vector<34x8xf32> to vector<34x8xbf16>
    %cst_120 = arith.constant dense<0.000000e+00> : vector<34x34xf32>
    %147 = tpu.matmul %145, %146, %cst_120 {dimension_numbers = #tpu.dot_dimension_numbers<[1], [1], [0], [0], [0, 0, 1, 0], [], []>} : vector<34x8xbf16>, vector<34x8xbf16>, vector<34x34xf32> -> vector<34x34xf32>
    %cst_121 = arith.constant 0.353553385 : f32
    %148 = vector.broadcast %cst_121 : f32 to vector<34x34xf32>
    %149 = arith.mulf %147, %148 : vector<34x34xf32>
    %150 = arith.addf %149, %7 : vector<34x34xf32>
    %cst_122 = arith.constant dense<0xFF800000> : vector<34xf32>
    %151 = vector.multi_reduction <maximumf>, %150, %cst_122 [1] : vector<34x34xf32> to vector<34xf32>
    %152 = vector.shape_cast %151 : vector<34xf32> to vector<34x1xf32>
    %153 = vector.broadcast %152 : vector<34x1xf32> to vector<34x34xf32>
    %154 = arith.subf %150, %153 : vector<34x34xf32>
    %155 = math.exp %154 : vector<34x34xf32>
    %cst_123 = arith.constant dense<0.000000e+00> : vector<34xf32>
    %156 = vector.multi_reduction <add>, %155, %cst_123 [1] : vector<34x34xf32> to vector<34xf32>
    %157 = vector.shape_cast %156 : vector<34xf32> to vector<34x1xf32>
    %158 = tpu.reciprocal %157 {approx = true} : vector<34x1xf32> -> vector<34x1xf32>
    %159 = vector.broadcast %158 : vector<34x1xf32> to vector<34x34xf32>
    %160 = arith.mulf %155, %159 : vector<34x34xf32>
    %161 = arith.truncf %160 : vector<34x34xf32> to vector<34x34xbf16>
    %162 = arith.truncf %144 : vector<34x8xf32> to vector<34x8xbf16>
    %cst_124 = arith.constant dense<0.000000e+00> : vector<34x8xf32>
    %163 = tpu.matmul %161, %162, %cst_124 {dimension_numbers = #tpu.dot_dimension_numbers<[1], [0], [0], [1], [0, 0, 1, 1], [], []>} : vector<34x34xbf16>, vector<34x8xbf16>, vector<34x8xf32> -> vector<34x8xf32>
    %164 = arith.truncf %163 : vector<34x8xf32> to vector<34x8xbf16>
    %c0_125 = arith.constant 0 : index
    %c2_126 = arith.constant 2 : index
    %c0_127 = arith.constant 0 : index
    %c0_128 = arith.constant 0 : index
    %165 = vector.load %arg13[%c0_125, %c2_126, %c0_127, %c0_128] : memref<2x4x8x32xbf16, #tpu.memory_space<vmem>>, vector<1x1x8x32xbf16>
    %166 = vector.shape_cast %165 : vector<1x1x8x32xbf16> to vector<8x32xbf16>
    %cst_129 = arith.constant dense<0.000000e+00> : vector<34x32xf32>
    %167 = tpu.matmul %164, %166, %cst_129 {dimension_numbers = #tpu.dot_dimension_numbers<[1], [0], [0], [1], [0, 0, 1, 1], [], []>} : vector<34x8xbf16>, vector<8x32xbf16>, vector<34x32xf32> -> vector<34x32xf32>
    %168 = arith.addf %123, %167 : vector<34x32xf32>
    %c0_130 = arith.constant 0 : index
    %c3 = arith.constant 3 : index
    %c0_131 = arith.constant 0 : index
    %c0_132 = arith.constant 0 : index
    %169 = vector.load %arg7[%c0_130, %c3, %c0_131, %c0_132] : memref<2x4x32x8xbf16, #tpu.memory_space<vmem>>, vector<1x1x32x8xbf16>
    %170 = vector.shape_cast %169 : vector<1x1x32x8xbf16> to vector<32x8xbf16>
    %cst_133 = arith.constant dense<0.000000e+00> : vector<34x8xf32>
    %171 = tpu.matmul %32, %170, %cst_133 {dimension_numbers = #tpu.dot_dimension_numbers<[1], [0], [0], [1], [0, 0, 1, 1], [], []>} : vector<34x32xbf16>, vector<32x8xbf16>, vector<34x8xf32> -> vector<34x8xf32>
    %c0_134 = arith.constant 0 : index
    %c3_135 = arith.constant 3 : index
    %c0_136 = arith.constant 0 : index
    %c0_137 = arith.constant 0 : index
    %172 = vector.load %arg8[%c0_134, %c3_135, %c0_136, %c0_137] : memref<2x4x1x8xf32, #tpu.memory_space<vmem>>, vector<1x1x1x8xf32>
    %173 = vector.shape_cast %172 : vector<1x1x1x8xf32> to vector<1x8xf32>
    %174 = vector.broadcast %173 : vector<1x8xf32> to vector<34x8xf32>
    %175 = arith.addf %171, %174 : vector<34x8xf32>
    %c0_138 = arith.constant 0 : index
    %c3_139 = arith.constant 3 : index
    %c0_140 = arith.constant 0 : index
    %c0_141 = arith.constant 0 : index
    %176 = vector.load %arg9[%c0_138, %c3_139, %c0_140, %c0_141] : memref<2x4x32x8xbf16, #tpu.memory_space<vmem>>, vector<1x1x32x8xbf16>
    %177 = vector.shape_cast %176 : vector<1x1x32x8xbf16> to vector<32x8xbf16>
    %cst_142 = arith.constant dense<0.000000e+00> : vector<34x8xf32>
    %178 = tpu.matmul %32, %177, %cst_142 {dimension_numbers = #tpu.dot_dimension_numbers<[1], [0], [0], [1], [0, 0, 1, 1], [], []>} : vector<34x32xbf16>, vector<32x8xbf16>, vector<34x8xf32> -> vector<34x8xf32>
    %c0_143 = arith.constant 0 : index
    %c3_144 = arith.constant 3 : index
    %c0_145 = arith.constant 0 : index
    %c0_146 = arith.constant 0 : index
    %179 = vector.load %arg10[%c0_143, %c3_144, %c0_145, %c0_146] : memref<2x4x1x8xf32, #tpu.memory_space<vmem>>, vector<1x1x1x8xf32>
    %180 = vector.shape_cast %179 : vector<1x1x1x8xf32> to vector<1x8xf32>
    %181 = vector.broadcast %180 : vector<1x8xf32> to vector<34x8xf32>
    %182 = arith.addf %178, %181 : vector<34x8xf32>
    %c0_147 = arith.constant 0 : index
    %c3_148 = arith.constant 3 : index
    %c0_149 = arith.constant 0 : index
    %c0_150 = arith.constant 0 : index
    %183 = vector.load %arg11[%c0_147, %c3_148, %c0_149, %c0_150] : memref<2x4x32x8xbf16, #tpu.memory_space<vmem>>, vector<1x1x32x8xbf16>
    %184 = vector.shape_cast %183 : vector<1x1x32x8xbf16> to vector<32x8xbf16>
    %cst_151 = arith.constant dense<0.000000e+00> : vector<34x8xf32>
    %185 = tpu.matmul %32, %184, %cst_151 {dimension_numbers = #tpu.dot_dimension_numbers<[1], [0], [0], [1], [0, 0, 1, 1], [], []>} : vector<34x32xbf16>, vector<32x8xbf16>, vector<34x8xf32> -> vector<34x8xf32>
    %c0_152 = arith.constant 0 : index
    %c3_153 = arith.constant 3 : index
    %c0_154 = arith.constant 0 : index
    %c0_155 = arith.constant 0 : index
    %186 = vector.load %arg12[%c0_152, %c3_153, %c0_154, %c0_155] : memref<2x4x1x8xf32, #tpu.memory_space<vmem>>, vector<1x1x1x8xf32>
    %187 = vector.shape_cast %186 : vector<1x1x1x8xf32> to vector<1x8xf32>
    %188 = vector.broadcast %187 : vector<1x8xf32> to vector<34x8xf32>
    %189 = arith.addf %185, %188 : vector<34x8xf32>
    %190 = arith.truncf %175 : vector<34x8xf32> to vector<34x8xbf16>
    %191 = arith.truncf %182 : vector<34x8xf32> to vector<34x8xbf16>
    %cst_156 = arith.constant dense<0.000000e+00> : vector<34x34xf32>
    %192 = tpu.matmul %190, %191, %cst_156 {dimension_numbers = #tpu.dot_dimension_numbers<[1], [1], [0], [0], [0, 0, 1, 0], [], []>} : vector<34x8xbf16>, vector<34x8xbf16>, vector<34x34xf32> -> vector<34x34xf32>
    %cst_157 = arith.constant 0.353553385 : f32
    %193 = vector.broadcast %cst_157 : f32 to vector<34x34xf32>
    %194 = arith.mulf %192, %193 : vector<34x34xf32>
    %195 = arith.addf %194, %7 : vector<34x34xf32>
    %cst_158 = arith.constant dense<0xFF800000> : vector<34xf32>
    %196 = vector.multi_reduction <maximumf>, %195, %cst_158 [1] : vector<34x34xf32> to vector<34xf32>
    %197 = vector.shape_cast %196 : vector<34xf32> to vector<34x1xf32>
    %198 = vector.broadcast %197 : vector<34x1xf32> to vector<34x34xf32>
    %199 = arith.subf %195, %198 : vector<34x34xf32>
    %200 = math.exp %199 : vector<34x34xf32>
    %cst_159 = arith.constant dense<0.000000e+00> : vector<34xf32>
    %201 = vector.multi_reduction <add>, %200, %cst_159 [1] : vector<34x34xf32> to vector<34xf32>
    %202 = vector.shape_cast %201 : vector<34xf32> to vector<34x1xf32>
    %203 = tpu.reciprocal %202 {approx = true} : vector<34x1xf32> -> vector<34x1xf32>
    %204 = vector.broadcast %203 : vector<34x1xf32> to vector<34x34xf32>
    %205 = arith.mulf %200, %204 : vector<34x34xf32>
    %206 = arith.truncf %205 : vector<34x34xf32> to vector<34x34xbf16>
    %207 = arith.truncf %189 : vector<34x8xf32> to vector<34x8xbf16>
    %cst_160 = arith.constant dense<0.000000e+00> : vector<34x8xf32>
    %208 = tpu.matmul %206, %207, %cst_160 {dimension_numbers = #tpu.dot_dimension_numbers<[1], [0], [0], [1], [0, 0, 1, 1], [], []>} : vector<34x34xbf16>, vector<34x8xbf16>, vector<34x8xf32> -> vector<34x8xf32>
    %209 = arith.truncf %208 : vector<34x8xf32> to vector<34x8xbf16>
    %c0_161 = arith.constant 0 : index
    %c3_162 = arith.constant 3 : index
    %c0_163 = arith.constant 0 : index
    %c0_164 = arith.constant 0 : index
    %210 = vector.load %arg13[%c0_161, %c3_162, %c0_163, %c0_164] : memref<2x4x8x32xbf16, #tpu.memory_space<vmem>>, vector<1x1x8x32xbf16>
    %211 = vector.shape_cast %210 : vector<1x1x8x32xbf16> to vector<8x32xbf16>
    %cst_165 = arith.constant dense<0.000000e+00> : vector<34x32xf32>
    %212 = tpu.matmul %209, %211, %cst_165 {dimension_numbers = #tpu.dot_dimension_numbers<[1], [0], [0], [1], [0, 0, 1, 1], [], []>} : vector<34x8xbf16>, vector<8x32xbf16>, vector<34x32xf32> -> vector<34x32xf32>
    %213 = arith.addf %168, %212 : vector<34x32xf32>
    %214 = arith.addf %6, %213 : vector<34x32xf32>
    %c0_166 = arith.constant 0 : index
    %c0_167 = arith.constant 0 : index
    %c0_168 = arith.constant 0 : index
    %215 = vector.load %arg14[%c0_166, %c0_167, %c0_168] : memref<2x1x32xf32, #tpu.memory_space<vmem>>, vector<1x1x32xf32>
    %216 = vector.shape_cast %215 : vector<1x1x32xf32> to vector<1x32xf32>
    %217 = vector.broadcast %216 : vector<1x32xf32> to vector<34x32xf32>
    %218 = arith.addf %214, %217 : vector<34x32xf32>
    %c0_169 = arith.constant 0 : index
    %c0_170 = arith.constant 0 : index
    %c0_171 = arith.constant 0 : index
    %219 = vector.load %arg15[%c0_169, %c0_170, %c0_171] : memref<2x1x32xf32, #tpu.memory_space<vmem>>, vector<1x1x32xf32>
    %220 = vector.shape_cast %219 : vector<1x1x32xf32> to vector<1x32xf32>
    %c0_172 = arith.constant 0 : index
    %c0_173 = arith.constant 0 : index
    %c0_174 = arith.constant 0 : index
    %221 = vector.load %arg16[%c0_172, %c0_173, %c0_174] : memref<2x1x32xf32, #tpu.memory_space<vmem>>, vector<1x1x32xf32>
    %222 = vector.shape_cast %221 : vector<1x1x32xf32> to vector<1x32xf32>
    %cst_175 = arith.constant dense<0.000000e+00> : vector<34xf32>
    %223 = vector.multi_reduction <add>, %218, %cst_175 [1] : vector<34x32xf32> to vector<34xf32>
    %224 = vector.shape_cast %223 : vector<34xf32> to vector<34x1xf32>
    %cst_176 = arith.constant 3.200000e+01 : f32
    %225 = vector.broadcast %cst_176 : f32 to vector<34x1xf32>
    %226 = arith.divf %224, %225 : vector<34x1xf32>
    %227 = vector.broadcast %226 : vector<34x1xf32> to vector<34x32xf32>
    %228 = arith.subf %218, %227 : vector<34x32xf32>
    %229 = arith.mulf %228, %228 : vector<34x32xf32>
    %cst_177 = arith.constant dense<0.000000e+00> : vector<34xf32>
    %230 = vector.multi_reduction <add>, %229, %cst_177 [1] : vector<34x32xf32> to vector<34xf32>
    %231 = vector.shape_cast %230 : vector<34xf32> to vector<34x1xf32>
    %cst_178 = arith.constant 3.200000e+01 : f32
    %232 = vector.broadcast %cst_178 : f32 to vector<34x1xf32>
    %233 = arith.divf %231, %232 : vector<34x1xf32>
    %cst_179 = arith.constant 9.99999974E-6 : f32
    %234 = vector.broadcast %cst_179 : f32 to vector<34x1xf32>
    %235 = arith.addf %233, %234 : vector<34x1xf32>
    %236 = math.rsqrt %235 : vector<34x1xf32>
    %237 = vector.broadcast %236 : vector<34x1xf32> to vector<34x32xf32>
    %238 = arith.mulf %228, %237 : vector<34x32xf32>
    %239 = vector.broadcast %220 : vector<1x32xf32> to vector<34x32xf32>
    %240 = arith.mulf %238, %239 : vector<34x32xf32>
    %241 = vector.broadcast %222 : vector<1x32xf32> to vector<34x32xf32>
    %242 = arith.addf %240, %241 : vector<34x32xf32>
    %243 = arith.truncf %242 : vector<34x32xf32> to vector<34x32xbf16>
    %c0_180 = arith.constant 0 : index
    %c0_181 = arith.constant 0 : index
    %c0_182 = arith.constant 0 : index
    %244 = vector.load %arg17[%c0_180, %c0_181, %c0_182] : memref<2x32x128xbf16, #tpu.memory_space<vmem>>, vector<1x32x128xbf16>
    %245 = vector.shape_cast %244 : vector<1x32x128xbf16> to vector<32x128xbf16>
    %cst_183 = arith.constant dense<0.000000e+00> : vector<34x128xf32>
    %246 = tpu.matmul %243, %245, %cst_183 {dimension_numbers = #tpu.dot_dimension_numbers<[1], [0], [0], [1], [0, 0, 1, 1], [], []>} : vector<34x32xbf16>, vector<32x128xbf16>, vector<34x128xf32> -> vector<34x128xf32>
    %c0_184 = arith.constant 0 : index
    %c0_185 = arith.constant 0 : index
    %c0_186 = arith.constant 0 : index
    %247 = vector.load %arg18[%c0_184, %c0_185, %c0_186] : memref<2x1x128xf32, #tpu.memory_space<vmem>>, vector<1x1x128xf32>
    %248 = vector.shape_cast %247 : vector<1x1x128xf32> to vector<1x128xf32>
    %249 = vector.broadcast %248 : vector<1x128xf32> to vector<34x128xf32>
    %250 = arith.addf %246, %249 : vector<34x128xf32>
    %251 = arith.mulf %250, %250 : vector<34x128xf32>
    %252 = arith.mulf %250, %251 : vector<34x128xf32>
    %cst_187 = arith.constant 4.471500e-02 : f32
    %253 = vector.broadcast %cst_187 : f32 to vector<34x128xf32>
    %254 = arith.mulf %253, %252 : vector<34x128xf32>
    %255 = arith.addf %250, %254 : vector<34x128xf32>
    %cst_188 = arith.constant 0.797884583 : f32
    %256 = vector.broadcast %cst_188 : f32 to vector<34x128xf32>
    %257 = arith.mulf %256, %255 : vector<34x128xf32>
    %258 = math.tanh %257 : vector<34x128xf32>
    %cst_189 = arith.constant 1.000000e+00 : f32
    %259 = vector.broadcast %cst_189 : f32 to vector<34x128xf32>
    %260 = arith.addf %259, %258 : vector<34x128xf32>
    %cst_190 = arith.constant 5.000000e-01 : f32
    %261 = vector.broadcast %cst_190 : f32 to vector<34x128xf32>
    %262 = arith.mulf %261, %260 : vector<34x128xf32>
    %263 = arith.mulf %250, %262 : vector<34x128xf32>
    %264 = arith.truncf %263 : vector<34x128xf32> to vector<34x128xbf16>
    %c0_191 = arith.constant 0 : index
    %c0_192 = arith.constant 0 : index
    %c0_193 = arith.constant 0 : index
    %265 = vector.load %arg19[%c0_191, %c0_192, %c0_193] : memref<2x128x32xbf16, #tpu.memory_space<vmem>>, vector<1x128x32xbf16>
    %266 = vector.shape_cast %265 : vector<1x128x32xbf16> to vector<128x32xbf16>
    %cst_194 = arith.constant dense<0.000000e+00> : vector<34x32xf32>
    %267 = tpu.matmul %264, %266, %cst_194 {dimension_numbers = #tpu.dot_dimension_numbers<[1], [0], [0], [1], [0, 0, 1, 1], [], []>} : vector<34x128xbf16>, vector<128x32xbf16>, vector<34x32xf32> -> vector<34x32xf32>
    %c0_195 = arith.constant 0 : index
    %c0_196 = arith.constant 0 : index
    %c0_197 = arith.constant 0 : index
    %268 = vector.load %arg20[%c0_195, %c0_196, %c0_197] : memref<2x1x32xf32, #tpu.memory_space<vmem>>, vector<1x1x32xf32>
    %269 = vector.shape_cast %268 : vector<1x1x32xf32> to vector<1x32xf32>
    %270 = vector.broadcast %269 : vector<1x32xf32> to vector<34x32xf32>
    %271 = arith.addf %267, %270 : vector<34x32xf32>
    %272 = arith.addf %218, %271 : vector<34x32xf32>
    %c1_198 = arith.constant 1 : index
    %c0_199 = arith.constant 0 : index
    %c0_200 = arith.constant 0 : index
    %273 = vector.load %arg5[%c1_198, %c0_199, %c0_200] : memref<2x1x32xf32, #tpu.memory_space<vmem>>, vector<1x1x32xf32>
    %274 = vector.shape_cast %273 : vector<1x1x32xf32> to vector<1x32xf32>
    %c1_201 = arith.constant 1 : index
    %c0_202 = arith.constant 0 : index
    %c0_203 = arith.constant 0 : index
    %275 = vector.load %arg6[%c1_201, %c0_202, %c0_203] : memref<2x1x32xf32, #tpu.memory_space<vmem>>, vector<1x1x32xf32>
    %276 = vector.shape_cast %275 : vector<1x1x32xf32> to vector<1x32xf32>
    %cst_204 = arith.constant dense<0.000000e+00> : vector<34xf32>
    %277 = vector.multi_reduction <add>, %272, %cst_204 [1] : vector<34x32xf32> to vector<34xf32>
    %278 = vector.shape_cast %277 : vector<34xf32> to vector<34x1xf32>
    %cst_205 = arith.constant 3.200000e+01 : f32
    %279 = vector.broadcast %cst_205 : f32 to vector<34x1xf32>
    %280 = arith.divf %278, %279 : vector<34x1xf32>
    %281 = vector.broadcast %280 : vector<34x1xf32> to vector<34x32xf32>
    %282 = arith.subf %272, %281 : vector<34x32xf32>
    %283 = arith.mulf %282, %282 : vector<34x32xf32>
    %cst_206 = arith.constant dense<0.000000e+00> : vector<34xf32>
    %284 = vector.multi_reduction <add>, %283, %cst_206 [1] : vector<34x32xf32> to vector<34xf32>
    %285 = vector.shape_cast %284 : vector<34xf32> to vector<34x1xf32>
    %cst_207 = arith.constant 3.200000e+01 : f32
    %286 = vector.broadcast %cst_207 : f32 to vector<34x1xf32>
    %287 = arith.divf %285, %286 : vector<34x1xf32>
    %cst_208 = arith.constant 9.99999974E-6 : f32
    %288 = vector.broadcast %cst_208 : f32 to vector<34x1xf32>
    %289 = arith.addf %287, %288 : vector<34x1xf32>
    %290 = math.rsqrt %289 : vector<34x1xf32>
    %291 = vector.broadcast %290 : vector<34x1xf32> to vector<34x32xf32>
    %292 = arith.mulf %282, %291 : vector<34x32xf32>
    %293 = vector.broadcast %274 : vector<1x32xf32> to vector<34x32xf32>
    %294 = arith.mulf %292, %293 : vector<34x32xf32>
    %295 = vector.broadcast %276 : vector<1x32xf32> to vector<34x32xf32>
    %296 = arith.addf %294, %295 : vector<34x32xf32>
    %297 = arith.truncf %296 : vector<34x32xf32> to vector<34x32xbf16>
    %cst_209 = arith.constant 0.000000e+00 : f32
    %298 = vector.broadcast %cst_209 : f32 to vector<34x32xf32>
    %c1_210 = arith.constant 1 : index
    %c0_211 = arith.constant 0 : index
    %c0_212 = arith.constant 0 : index
    %c0_213 = arith.constant 0 : index
    %299 = vector.load %arg7[%c1_210, %c0_211, %c0_212, %c0_213] : memref<2x4x32x8xbf16, #tpu.memory_space<vmem>>, vector<1x1x32x8xbf16>
    %300 = vector.shape_cast %299 : vector<1x1x32x8xbf16> to vector<32x8xbf16>
    %cst_214 = arith.constant dense<0.000000e+00> : vector<34x8xf32>
    %301 = tpu.matmul %297, %300, %cst_214 {dimension_numbers = #tpu.dot_dimension_numbers<[1], [0], [0], [1], [0, 0, 1, 1], [], []>} : vector<34x32xbf16>, vector<32x8xbf16>, vector<34x8xf32> -> vector<34x8xf32>
    %c1_215 = arith.constant 1 : index
    %c0_216 = arith.constant 0 : index
    %c0_217 = arith.constant 0 : index
    %c0_218 = arith.constant 0 : index
    %302 = vector.load %arg8[%c1_215, %c0_216, %c0_217, %c0_218] : memref<2x4x1x8xf32, #tpu.memory_space<vmem>>, vector<1x1x1x8xf32>
    %303 = vector.shape_cast %302 : vector<1x1x1x8xf32> to vector<1x8xf32>
    %304 = vector.broadcast %303 : vector<1x8xf32> to vector<34x8xf32>
    %305 = arith.addf %301, %304 : vector<34x8xf32>
    %c1_219 = arith.constant 1 : index
    %c0_220 = arith.constant 0 : index
    %c0_221 = arith.constant 0 : index
    %c0_222 = arith.constant 0 : index
    %306 = vector.load %arg9[%c1_219, %c0_220, %c0_221, %c0_222] : memref<2x4x32x8xbf16, #tpu.memory_space<vmem>>, vector<1x1x32x8xbf16>
    %307 = vector.shape_cast %306 : vector<1x1x32x8xbf16> to vector<32x8xbf16>
    %cst_223 = arith.constant dense<0.000000e+00> : vector<34x8xf32>
    %308 = tpu.matmul %297, %307, %cst_223 {dimension_numbers = #tpu.dot_dimension_numbers<[1], [0], [0], [1], [0, 0, 1, 1], [], []>} : vector<34x32xbf16>, vector<32x8xbf16>, vector<34x8xf32> -> vector<34x8xf32>
    %c1_224 = arith.constant 1 : index
    %c0_225 = arith.constant 0 : index
    %c0_226 = arith.constant 0 : index
    %c0_227 = arith.constant 0 : index
    %309 = vector.load %arg10[%c1_224, %c0_225, %c0_226, %c0_227] : memref<2x4x1x8xf32, #tpu.memory_space<vmem>>, vector<1x1x1x8xf32>
    %310 = vector.shape_cast %309 : vector<1x1x1x8xf32> to vector<1x8xf32>
    %311 = vector.broadcast %310 : vector<1x8xf32> to vector<34x8xf32>
    %312 = arith.addf %308, %311 : vector<34x8xf32>
    %c1_228 = arith.constant 1 : index
    %c0_229 = arith.constant 0 : index
    %c0_230 = arith.constant 0 : index
    %c0_231 = arith.constant 0 : index
    %313 = vector.load %arg11[%c1_228, %c0_229, %c0_230, %c0_231] : memref<2x4x32x8xbf16, #tpu.memory_space<vmem>>, vector<1x1x32x8xbf16>
    %314 = vector.shape_cast %313 : vector<1x1x32x8xbf16> to vector<32x8xbf16>
    %cst_232 = arith.constant dense<0.000000e+00> : vector<34x8xf32>
    %315 = tpu.matmul %297, %314, %cst_232 {dimension_numbers = #tpu.dot_dimension_numbers<[1], [0], [0], [1], [0, 0, 1, 1], [], []>} : vector<34x32xbf16>, vector<32x8xbf16>, vector<34x8xf32> -> vector<34x8xf32>
    %c1_233 = arith.constant 1 : index
    %c0_234 = arith.constant 0 : index
    %c0_235 = arith.constant 0 : index
    %c0_236 = arith.constant 0 : index
    %316 = vector.load %arg12[%c1_233, %c0_234, %c0_235, %c0_236] : memref<2x4x1x8xf32, #tpu.memory_space<vmem>>, vector<1x1x1x8xf32>
    %317 = vector.shape_cast %316 : vector<1x1x1x8xf32> to vector<1x8xf32>
    %318 = vector.broadcast %317 : vector<1x8xf32> to vector<34x8xf32>
    %319 = arith.addf %315, %318 : vector<34x8xf32>
    %320 = arith.truncf %305 : vector<34x8xf32> to vector<34x8xbf16>
    %321 = arith.truncf %312 : vector<34x8xf32> to vector<34x8xbf16>
    %cst_237 = arith.constant dense<0.000000e+00> : vector<34x34xf32>
    %322 = tpu.matmul %320, %321, %cst_237 {dimension_numbers = #tpu.dot_dimension_numbers<[1], [1], [0], [0], [0, 0, 1, 0], [], []>} : vector<34x8xbf16>, vector<34x8xbf16>, vector<34x34xf32> -> vector<34x34xf32>
    %cst_238 = arith.constant 0.353553385 : f32
    %323 = vector.broadcast %cst_238 : f32 to vector<34x34xf32>
    %324 = arith.mulf %322, %323 : vector<34x34xf32>
    %325 = arith.addf %324, %7 : vector<34x34xf32>
    %cst_239 = arith.constant dense<0xFF800000> : vector<34xf32>
    %326 = vector.multi_reduction <maximumf>, %325, %cst_239 [1] : vector<34x34xf32> to vector<34xf32>
    %327 = vector.shape_cast %326 : vector<34xf32> to vector<34x1xf32>
    %328 = vector.broadcast %327 : vector<34x1xf32> to vector<34x34xf32>
    %329 = arith.subf %325, %328 : vector<34x34xf32>
    %330 = math.exp %329 : vector<34x34xf32>
    %cst_240 = arith.constant dense<0.000000e+00> : vector<34xf32>
    %331 = vector.multi_reduction <add>, %330, %cst_240 [1] : vector<34x34xf32> to vector<34xf32>
    %332 = vector.shape_cast %331 : vector<34xf32> to vector<34x1xf32>
    %333 = tpu.reciprocal %332 {approx = true} : vector<34x1xf32> -> vector<34x1xf32>
    %334 = vector.broadcast %333 : vector<34x1xf32> to vector<34x34xf32>
    %335 = arith.mulf %330, %334 : vector<34x34xf32>
    %336 = arith.truncf %335 : vector<34x34xf32> to vector<34x34xbf16>
    %337 = arith.truncf %319 : vector<34x8xf32> to vector<34x8xbf16>
    %cst_241 = arith.constant dense<0.000000e+00> : vector<34x8xf32>
    %338 = tpu.matmul %336, %337, %cst_241 {dimension_numbers = #tpu.dot_dimension_numbers<[1], [0], [0], [1], [0, 0, 1, 1], [], []>} : vector<34x34xbf16>, vector<34x8xbf16>, vector<34x8xf32> -> vector<34x8xf32>
    %339 = arith.truncf %338 : vector<34x8xf32> to vector<34x8xbf16>
    %c1_242 = arith.constant 1 : index
    %c0_243 = arith.constant 0 : index
    %c0_244 = arith.constant 0 : index
    %c0_245 = arith.constant 0 : index
    %340 = vector.load %arg13[%c1_242, %c0_243, %c0_244, %c0_245] : memref<2x4x8x32xbf16, #tpu.memory_space<vmem>>, vector<1x1x8x32xbf16>
    %341 = vector.shape_cast %340 : vector<1x1x8x32xbf16> to vector<8x32xbf16>
    %cst_246 = arith.constant dense<0.000000e+00> : vector<34x32xf32>
    %342 = tpu.matmul %339, %341, %cst_246 {dimension_numbers = #tpu.dot_dimension_numbers<[1], [0], [0], [1], [0, 0, 1, 1], [], []>} : vector<34x8xbf16>, vector<8x32xbf16>, vector<34x32xf32> -> vector<34x32xf32>
    %343 = arith.addf %298, %342 : vector<34x32xf32>
    %c1_247 = arith.constant 1 : index
    %c1_248 = arith.constant 1 : index
    %c0_249 = arith.constant 0 : index
    %c0_250 = arith.constant 0 : index
    %344 = vector.load %arg7[%c1_247, %c1_248, %c0_249, %c0_250] : memref<2x4x32x8xbf16, #tpu.memory_space<vmem>>, vector<1x1x32x8xbf16>
    %345 = vector.shape_cast %344 : vector<1x1x32x8xbf16> to vector<32x8xbf16>
    %cst_251 = arith.constant dense<0.000000e+00> : vector<34x8xf32>
    %346 = tpu.matmul %297, %345, %cst_251 {dimension_numbers = #tpu.dot_dimension_numbers<[1], [0], [0], [1], [0, 0, 1, 1], [], []>} : vector<34x32xbf16>, vector<32x8xbf16>, vector<34x8xf32> -> vector<34x8xf32>
    %c1_252 = arith.constant 1 : index
    %c1_253 = arith.constant 1 : index
    %c0_254 = arith.constant 0 : index
    %c0_255 = arith.constant 0 : index
    %347 = vector.load %arg8[%c1_252, %c1_253, %c0_254, %c0_255] : memref<2x4x1x8xf32, #tpu.memory_space<vmem>>, vector<1x1x1x8xf32>
    %348 = vector.shape_cast %347 : vector<1x1x1x8xf32> to vector<1x8xf32>
    %349 = vector.broadcast %348 : vector<1x8xf32> to vector<34x8xf32>
    %350 = arith.addf %346, %349 : vector<34x8xf32>
    %c1_256 = arith.constant 1 : index
    %c1_257 = arith.constant 1 : index
    %c0_258 = arith.constant 0 : index
    %c0_259 = arith.constant 0 : index
    %351 = vector.load %arg9[%c1_256, %c1_257, %c0_258, %c0_259] : memref<2x4x32x8xbf16, #tpu.memory_space<vmem>>, vector<1x1x32x8xbf16>
    %352 = vector.shape_cast %351 : vector<1x1x32x8xbf16> to vector<32x8xbf16>
    %cst_260 = arith.constant dense<0.000000e+00> : vector<34x8xf32>
    %353 = tpu.matmul %297, %352, %cst_260 {dimension_numbers = #tpu.dot_dimension_numbers<[1], [0], [0], [1], [0, 0, 1, 1], [], []>} : vector<34x32xbf16>, vector<32x8xbf16>, vector<34x8xf32> -> vector<34x8xf32>
    %c1_261 = arith.constant 1 : index
    %c1_262 = arith.constant 1 : index
    %c0_263 = arith.constant 0 : index
    %c0_264 = arith.constant 0 : index
    %354 = vector.load %arg10[%c1_261, %c1_262, %c0_263, %c0_264] : memref<2x4x1x8xf32, #tpu.memory_space<vmem>>, vector<1x1x1x8xf32>
    %355 = vector.shape_cast %354 : vector<1x1x1x8xf32> to vector<1x8xf32>
    %356 = vector.broadcast %355 : vector<1x8xf32> to vector<34x8xf32>
    %357 = arith.addf %353, %356 : vector<34x8xf32>
    %c1_265 = arith.constant 1 : index
    %c1_266 = arith.constant 1 : index
    %c0_267 = arith.constant 0 : index
    %c0_268 = arith.constant 0 : index
    %358 = vector.load %arg11[%c1_265, %c1_266, %c0_267, %c0_268] : memref<2x4x32x8xbf16, #tpu.memory_space<vmem>>, vector<1x1x32x8xbf16>
    %359 = vector.shape_cast %358 : vector<1x1x32x8xbf16> to vector<32x8xbf16>
    %cst_269 = arith.constant dense<0.000000e+00> : vector<34x8xf32>
    %360 = tpu.matmul %297, %359, %cst_269 {dimension_numbers = #tpu.dot_dimension_numbers<[1], [0], [0], [1], [0, 0, 1, 1], [], []>} : vector<34x32xbf16>, vector<32x8xbf16>, vector<34x8xf32> -> vector<34x8xf32>
    %c1_270 = arith.constant 1 : index
    %c1_271 = arith.constant 1 : index
    %c0_272 = arith.constant 0 : index
    %c0_273 = arith.constant 0 : index
    %361 = vector.load %arg12[%c1_270, %c1_271, %c0_272, %c0_273] : memref<2x4x1x8xf32, #tpu.memory_space<vmem>>, vector<1x1x1x8xf32>
    %362 = vector.shape_cast %361 : vector<1x1x1x8xf32> to vector<1x8xf32>
    %363 = vector.broadcast %362 : vector<1x8xf32> to vector<34x8xf32>
    %364 = arith.addf %360, %363 : vector<34x8xf32>
    %365 = arith.truncf %350 : vector<34x8xf32> to vector<34x8xbf16>
    %366 = arith.truncf %357 : vector<34x8xf32> to vector<34x8xbf16>
    %cst_274 = arith.constant dense<0.000000e+00> : vector<34x34xf32>
    %367 = tpu.matmul %365, %366, %cst_274 {dimension_numbers = #tpu.dot_dimension_numbers<[1], [1], [0], [0], [0, 0, 1, 0], [], []>} : vector<34x8xbf16>, vector<34x8xbf16>, vector<34x34xf32> -> vector<34x34xf32>
    %cst_275 = arith.constant 0.353553385 : f32
    %368 = vector.broadcast %cst_275 : f32 to vector<34x34xf32>
    %369 = arith.mulf %367, %368 : vector<34x34xf32>
    %370 = arith.addf %369, %7 : vector<34x34xf32>
    %cst_276 = arith.constant dense<0xFF800000> : vector<34xf32>
    %371 = vector.multi_reduction <maximumf>, %370, %cst_276 [1] : vector<34x34xf32> to vector<34xf32>
    %372 = vector.shape_cast %371 : vector<34xf32> to vector<34x1xf32>
    %373 = vector.broadcast %372 : vector<34x1xf32> to vector<34x34xf32>
    %374 = arith.subf %370, %373 : vector<34x34xf32>
    %375 = math.exp %374 : vector<34x34xf32>
    %cst_277 = arith.constant dense<0.000000e+00> : vector<34xf32>
    %376 = vector.multi_reduction <add>, %375, %cst_277 [1] : vector<34x34xf32> to vector<34xf32>
    %377 = vector.shape_cast %376 : vector<34xf32> to vector<34x1xf32>
    %378 = tpu.reciprocal %377 {approx = true} : vector<34x1xf32> -> vector<34x1xf32>
    %379 = vector.broadcast %378 : vector<34x1xf32> to vector<34x34xf32>
    %380 = arith.mulf %375, %379 : vector<34x34xf32>
    %381 = arith.truncf %380 : vector<34x34xf32> to vector<34x34xbf16>
    %382 = arith.truncf %364 : vector<34x8xf32> to vector<34x8xbf16>
    %cst_278 = arith.constant dense<0.000000e+00> : vector<34x8xf32>
    %383 = tpu.matmul %381, %382, %cst_278 {dimension_numbers = #tpu.dot_dimension_numbers<[1], [0], [0], [1], [0, 0, 1, 1], [], []>} : vector<34x34xbf16>, vector<34x8xbf16>, vector<34x8xf32> -> vector<34x8xf32>
    %384 = arith.truncf %383 : vector<34x8xf32> to vector<34x8xbf16>
    %c1_279 = arith.constant 1 : index
    %c1_280 = arith.constant 1 : index
    %c0_281 = arith.constant 0 : index
    %c0_282 = arith.constant 0 : index
    %385 = vector.load %arg13[%c1_279, %c1_280, %c0_281, %c0_282] : memref<2x4x8x32xbf16, #tpu.memory_space<vmem>>, vector<1x1x8x32xbf16>
    %386 = vector.shape_cast %385 : vector<1x1x8x32xbf16> to vector<8x32xbf16>
    %cst_283 = arith.constant dense<0.000000e+00> : vector<34x32xf32>
    %387 = tpu.matmul %384, %386, %cst_283 {dimension_numbers = #tpu.dot_dimension_numbers<[1], [0], [0], [1], [0, 0, 1, 1], [], []>} : vector<34x8xbf16>, vector<8x32xbf16>, vector<34x32xf32> -> vector<34x32xf32>
    %388 = arith.addf %343, %387 : vector<34x32xf32>
    %c1_284 = arith.constant 1 : index
    %c2_285 = arith.constant 2 : index
    %c0_286 = arith.constant 0 : index
    %c0_287 = arith.constant 0 : index
    %389 = vector.load %arg7[%c1_284, %c2_285, %c0_286, %c0_287] : memref<2x4x32x8xbf16, #tpu.memory_space<vmem>>, vector<1x1x32x8xbf16>
    %390 = vector.shape_cast %389 : vector<1x1x32x8xbf16> to vector<32x8xbf16>
    %cst_288 = arith.constant dense<0.000000e+00> : vector<34x8xf32>
    %391 = tpu.matmul %297, %390, %cst_288 {dimension_numbers = #tpu.dot_dimension_numbers<[1], [0], [0], [1], [0, 0, 1, 1], [], []>} : vector<34x32xbf16>, vector<32x8xbf16>, vector<34x8xf32> -> vector<34x8xf32>
    %c1_289 = arith.constant 1 : index
    %c2_290 = arith.constant 2 : index
    %c0_291 = arith.constant 0 : index
    %c0_292 = arith.constant 0 : index
    %392 = vector.load %arg8[%c1_289, %c2_290, %c0_291, %c0_292] : memref<2x4x1x8xf32, #tpu.memory_space<vmem>>, vector<1x1x1x8xf32>
    %393 = vector.shape_cast %392 : vector<1x1x1x8xf32> to vector<1x8xf32>
    %394 = vector.broadcast %393 : vector<1x8xf32> to vector<34x8xf32>
    %395 = arith.addf %391, %394 : vector<34x8xf32>
    %c1_293 = arith.constant 1 : index
    %c2_294 = arith.constant 2 : index
    %c0_295 = arith.constant 0 : index
    %c0_296 = arith.constant 0 : index
    %396 = vector.load %arg9[%c1_293, %c2_294, %c0_295, %c0_296] : memref<2x4x32x8xbf16, #tpu.memory_space<vmem>>, vector<1x1x32x8xbf16>
    %397 = vector.shape_cast %396 : vector<1x1x32x8xbf16> to vector<32x8xbf16>
    %cst_297 = arith.constant dense<0.000000e+00> : vector<34x8xf32>
    %398 = tpu.matmul %297, %397, %cst_297 {dimension_numbers = #tpu.dot_dimension_numbers<[1], [0], [0], [1], [0, 0, 1, 1], [], []>} : vector<34x32xbf16>, vector<32x8xbf16>, vector<34x8xf32> -> vector<34x8xf32>
    %c1_298 = arith.constant 1 : index
    %c2_299 = arith.constant 2 : index
    %c0_300 = arith.constant 0 : index
    %c0_301 = arith.constant 0 : index
    %399 = vector.load %arg10[%c1_298, %c2_299, %c0_300, %c0_301] : memref<2x4x1x8xf32, #tpu.memory_space<vmem>>, vector<1x1x1x8xf32>
    %400 = vector.shape_cast %399 : vector<1x1x1x8xf32> to vector<1x8xf32>
    %401 = vector.broadcast %400 : vector<1x8xf32> to vector<34x8xf32>
    %402 = arith.addf %398, %401 : vector<34x8xf32>
    %c1_302 = arith.constant 1 : index
    %c2_303 = arith.constant 2 : index
    %c0_304 = arith.constant 0 : index
    %c0_305 = arith.constant 0 : index
    %403 = vector.load %arg11[%c1_302, %c2_303, %c0_304, %c0_305] : memref<2x4x32x8xbf16, #tpu.memory_space<vmem>>, vector<1x1x32x8xbf16>
    %404 = vector.shape_cast %403 : vector<1x1x32x8xbf16> to vector<32x8xbf16>
    %cst_306 = arith.constant dense<0.000000e+00> : vector<34x8xf32>
    %405 = tpu.matmul %297, %404, %cst_306 {dimension_numbers = #tpu.dot_dimension_numbers<[1], [0], [0], [1], [0, 0, 1, 1], [], []>} : vector<34x32xbf16>, vector<32x8xbf16>, vector<34x8xf32> -> vector<34x8xf32>
    %c1_307 = arith.constant 1 : index
    %c2_308 = arith.constant 2 : index
    %c0_309 = arith.constant 0 : index
    %c0_310 = arith.constant 0 : index
    %406 = vector.load %arg12[%c1_307, %c2_308, %c0_309, %c0_310] : memref<2x4x1x8xf32, #tpu.memory_space<vmem>>, vector<1x1x1x8xf32>
    %407 = vector.shape_cast %406 : vector<1x1x1x8xf32> to vector<1x8xf32>
    %408 = vector.broadcast %407 : vector<1x8xf32> to vector<34x8xf32>
    %409 = arith.addf %405, %408 : vector<34x8xf32>
    %410 = arith.truncf %395 : vector<34x8xf32> to vector<34x8xbf16>
    %411 = arith.truncf %402 : vector<34x8xf32> to vector<34x8xbf16>
    %cst_311 = arith.constant dense<0.000000e+00> : vector<34x34xf32>
    %412 = tpu.matmul %410, %411, %cst_311 {dimension_numbers = #tpu.dot_dimension_numbers<[1], [1], [0], [0], [0, 0, 1, 0], [], []>} : vector<34x8xbf16>, vector<34x8xbf16>, vector<34x34xf32> -> vector<34x34xf32>
    %cst_312 = arith.constant 0.353553385 : f32
    %413 = vector.broadcast %cst_312 : f32 to vector<34x34xf32>
    %414 = arith.mulf %412, %413 : vector<34x34xf32>
    %415 = arith.addf %414, %7 : vector<34x34xf32>
    %cst_313 = arith.constant dense<0xFF800000> : vector<34xf32>
    %416 = vector.multi_reduction <maximumf>, %415, %cst_313 [1] : vector<34x34xf32> to vector<34xf32>
    %417 = vector.shape_cast %416 : vector<34xf32> to vector<34x1xf32>
    %418 = vector.broadcast %417 : vector<34x1xf32> to vector<34x34xf32>
    %419 = arith.subf %415, %418 : vector<34x34xf32>
    %420 = math.exp %419 : vector<34x34xf32>
    %cst_314 = arith.constant dense<0.000000e+00> : vector<34xf32>
    %421 = vector.multi_reduction <add>, %420, %cst_314 [1] : vector<34x34xf32> to vector<34xf32>
    %422 = vector.shape_cast %421 : vector<34xf32> to vector<34x1xf32>
    %423 = tpu.reciprocal %422 {approx = true} : vector<34x1xf32> -> vector<34x1xf32>
    %424 = vector.broadcast %423 : vector<34x1xf32> to vector<34x34xf32>
    %425 = arith.mulf %420, %424 : vector<34x34xf32>
    %426 = arith.truncf %425 : vector<34x34xf32> to vector<34x34xbf16>
    %427 = arith.truncf %409 : vector<34x8xf32> to vector<34x8xbf16>
    %cst_315 = arith.constant dense<0.000000e+00> : vector<34x8xf32>
    %428 = tpu.matmul %426, %427, %cst_315 {dimension_numbers = #tpu.dot_dimension_numbers<[1], [0], [0], [1], [0, 0, 1, 1], [], []>} : vector<34x34xbf16>, vector<34x8xbf16>, vector<34x8xf32> -> vector<34x8xf32>
    %429 = arith.truncf %428 : vector<34x8xf32> to vector<34x8xbf16>
    %c1_316 = arith.constant 1 : index
    %c2_317 = arith.constant 2 : index
    %c0_318 = arith.constant 0 : index
    %c0_319 = arith.constant 0 : index
    %430 = vector.load %arg13[%c1_316, %c2_317, %c0_318, %c0_319] : memref<2x4x8x32xbf16, #tpu.memory_space<vmem>>, vector<1x1x8x32xbf16>
    %431 = vector.shape_cast %430 : vector<1x1x8x32xbf16> to vector<8x32xbf16>
    %cst_320 = arith.constant dense<0.000000e+00> : vector<34x32xf32>
    %432 = tpu.matmul %429, %431, %cst_320 {dimension_numbers = #tpu.dot_dimension_numbers<[1], [0], [0], [1], [0, 0, 1, 1], [], []>} : vector<34x8xbf16>, vector<8x32xbf16>, vector<34x32xf32> -> vector<34x32xf32>
    %433 = arith.addf %388, %432 : vector<34x32xf32>
    %c1_321 = arith.constant 1 : index
    %c3_322 = arith.constant 3 : index
    %c0_323 = arith.constant 0 : index
    %c0_324 = arith.constant 0 : index
    %434 = vector.load %arg7[%c1_321, %c3_322, %c0_323, %c0_324] : memref<2x4x32x8xbf16, #tpu.memory_space<vmem>>, vector<1x1x32x8xbf16>
    %435 = vector.shape_cast %434 : vector<1x1x32x8xbf16> to vector<32x8xbf16>
    %cst_325 = arith.constant dense<0.000000e+00> : vector<34x8xf32>
    %436 = tpu.matmul %297, %435, %cst_325 {dimension_numbers = #tpu.dot_dimension_numbers<[1], [0], [0], [1], [0, 0, 1, 1], [], []>} : vector<34x32xbf16>, vector<32x8xbf16>, vector<34x8xf32> -> vector<34x8xf32>
    %c1_326 = arith.constant 1 : index
    %c3_327 = arith.constant 3 : index
    %c0_328 = arith.constant 0 : index
    %c0_329 = arith.constant 0 : index
    %437 = vector.load %arg8[%c1_326, %c3_327, %c0_328, %c0_329] : memref<2x4x1x8xf32, #tpu.memory_space<vmem>>, vector<1x1x1x8xf32>
    %438 = vector.shape_cast %437 : vector<1x1x1x8xf32> to vector<1x8xf32>
    %439 = vector.broadcast %438 : vector<1x8xf32> to vector<34x8xf32>
    %440 = arith.addf %436, %439 : vector<34x8xf32>
    %c1_330 = arith.constant 1 : index
    %c3_331 = arith.constant 3 : index
    %c0_332 = arith.constant 0 : index
    %c0_333 = arith.constant 0 : index
    %441 = vector.load %arg9[%c1_330, %c3_331, %c0_332, %c0_333] : memref<2x4x32x8xbf16, #tpu.memory_space<vmem>>, vector<1x1x32x8xbf16>
    %442 = vector.shape_cast %441 : vector<1x1x32x8xbf16> to vector<32x8xbf16>
    %cst_334 = arith.constant dense<0.000000e+00> : vector<34x8xf32>
    %443 = tpu.matmul %297, %442, %cst_334 {dimension_numbers = #tpu.dot_dimension_numbers<[1], [0], [0], [1], [0, 0, 1, 1], [], []>} : vector<34x32xbf16>, vector<32x8xbf16>, vector<34x8xf32> -> vector<34x8xf32>
    %c1_335 = arith.constant 1 : index
    %c3_336 = arith.constant 3 : index
    %c0_337 = arith.constant 0 : index
    %c0_338 = arith.constant 0 : index
    %444 = vector.load %arg10[%c1_335, %c3_336, %c0_337, %c0_338] : memref<2x4x1x8xf32, #tpu.memory_space<vmem>>, vector<1x1x1x8xf32>
    %445 = vector.shape_cast %444 : vector<1x1x1x8xf32> to vector<1x8xf32>
    %446 = vector.broadcast %445 : vector<1x8xf32> to vector<34x8xf32>
    %447 = arith.addf %443, %446 : vector<34x8xf32>
    %c1_339 = arith.constant 1 : index
    %c3_340 = arith.constant 3 : index
    %c0_341 = arith.constant 0 : index
    %c0_342 = arith.constant 0 : index
    %448 = vector.load %arg11[%c1_339, %c3_340, %c0_341, %c0_342] : memref<2x4x32x8xbf16, #tpu.memory_space<vmem>>, vector<1x1x32x8xbf16>
    %449 = vector.shape_cast %448 : vector<1x1x32x8xbf16> to vector<32x8xbf16>
    %cst_343 = arith.constant dense<0.000000e+00> : vector<34x8xf32>
    %450 = tpu.matmul %297, %449, %cst_343 {dimension_numbers = #tpu.dot_dimension_numbers<[1], [0], [0], [1], [0, 0, 1, 1], [], []>} : vector<34x32xbf16>, vector<32x8xbf16>, vector<34x8xf32> -> vector<34x8xf32>
    %c1_344 = arith.constant 1 : index
    %c3_345 = arith.constant 3 : index
    %c0_346 = arith.constant 0 : index
    %c0_347 = arith.constant 0 : index
    %451 = vector.load %arg12[%c1_344, %c3_345, %c0_346, %c0_347] : memref<2x4x1x8xf32, #tpu.memory_space<vmem>>, vector<1x1x1x8xf32>
    %452 = vector.shape_cast %451 : vector<1x1x1x8xf32> to vector<1x8xf32>
    %453 = vector.broadcast %452 : vector<1x8xf32> to vector<34x8xf32>
    %454 = arith.addf %450, %453 : vector<34x8xf32>
    %455 = arith.truncf %440 : vector<34x8xf32> to vector<34x8xbf16>
    %456 = arith.truncf %447 : vector<34x8xf32> to vector<34x8xbf16>
    %cst_348 = arith.constant dense<0.000000e+00> : vector<34x34xf32>
    %457 = tpu.matmul %455, %456, %cst_348 {dimension_numbers = #tpu.dot_dimension_numbers<[1], [1], [0], [0], [0, 0, 1, 0], [], []>} : vector<34x8xbf16>, vector<34x8xbf16>, vector<34x34xf32> -> vector<34x34xf32>
    %cst_349 = arith.constant 0.353553385 : f32
    %458 = vector.broadcast %cst_349 : f32 to vector<34x34xf32>
    %459 = arith.mulf %457, %458 : vector<34x34xf32>
    %460 = arith.addf %459, %7 : vector<34x34xf32>
    %cst_350 = arith.constant dense<0xFF800000> : vector<34xf32>
    %461 = vector.multi_reduction <maximumf>, %460, %cst_350 [1] : vector<34x34xf32> to vector<34xf32>
    %462 = vector.shape_cast %461 : vector<34xf32> to vector<34x1xf32>
    %463 = vector.broadcast %462 : vector<34x1xf32> to vector<34x34xf32>
    %464 = arith.subf %460, %463 : vector<34x34xf32>
    %465 = math.exp %464 : vector<34x34xf32>
    %cst_351 = arith.constant dense<0.000000e+00> : vector<34xf32>
    %466 = vector.multi_reduction <add>, %465, %cst_351 [1] : vector<34x34xf32> to vector<34xf32>
    %467 = vector.shape_cast %466 : vector<34xf32> to vector<34x1xf32>
    %468 = tpu.reciprocal %467 {approx = true} : vector<34x1xf32> -> vector<34x1xf32>
    %469 = vector.broadcast %468 : vector<34x1xf32> to vector<34x34xf32>
    %470 = arith.mulf %465, %469 : vector<34x34xf32>
    %471 = arith.truncf %470 : vector<34x34xf32> to vector<34x34xbf16>
    %472 = arith.truncf %454 : vector<34x8xf32> to vector<34x8xbf16>
    %cst_352 = arith.constant dense<0.000000e+00> : vector<34x8xf32>
    %473 = tpu.matmul %471, %472, %cst_352 {dimension_numbers = #tpu.dot_dimension_numbers<[1], [0], [0], [1], [0, 0, 1, 1], [], []>} : vector<34x34xbf16>, vector<34x8xbf16>, vector<34x8xf32> -> vector<34x8xf32>
    %474 = arith.truncf %473 : vector<34x8xf32> to vector<34x8xbf16>
    %c1_353 = arith.constant 1 : index
    %c3_354 = arith.constant 3 : index
    %c0_355 = arith.constant 0 : index
    %c0_356 = arith.constant 0 : index
    %475 = vector.load %arg13[%c1_353, %c3_354, %c0_355, %c0_356] : memref<2x4x8x32xbf16, #tpu.memory_space<vmem>>, vector<1x1x8x32xbf16>
    %476 = vector.shape_cast %475 : vector<1x1x8x32xbf16> to vector<8x32xbf16>
    %cst_357 = arith.constant dense<0.000000e+00> : vector<34x32xf32>
    %477 = tpu.matmul %474, %476, %cst_357 {dimension_numbers = #tpu.dot_dimension_numbers<[1], [0], [0], [1], [0, 0, 1, 1], [], []>} : vector<34x8xbf16>, vector<8x32xbf16>, vector<34x32xf32> -> vector<34x32xf32>
    %478 = arith.addf %433, %477 : vector<34x32xf32>
    %479 = arith.addf %272, %478 : vector<34x32xf32>
    %c1_358 = arith.constant 1 : index
    %c0_359 = arith.constant 0 : index
    %c0_360 = arith.constant 0 : index
    %480 = vector.load %arg14[%c1_358, %c0_359, %c0_360] : memref<2x1x32xf32, #tpu.memory_space<vmem>>, vector<1x1x32xf32>
    %481 = vector.shape_cast %480 : vector<1x1x32xf32> to vector<1x32xf32>
    %482 = vector.broadcast %481 : vector<1x32xf32> to vector<34x32xf32>
    %483 = arith.addf %479, %482 : vector<34x32xf32>
    %c1_361 = arith.constant 1 : index
    %c0_362 = arith.constant 0 : index
    %c0_363 = arith.constant 0 : index
    %484 = vector.load %arg15[%c1_361, %c0_362, %c0_363] : memref<2x1x32xf32, #tpu.memory_space<vmem>>, vector<1x1x32xf32>
    %485 = vector.shape_cast %484 : vector<1x1x32xf32> to vector<1x32xf32>
    %c1_364 = arith.constant 1 : index
    %c0_365 = arith.constant 0 : index
    %c0_366 = arith.constant 0 : index
    %486 = vector.load %arg16[%c1_364, %c0_365, %c0_366] : memref<2x1x32xf32, #tpu.memory_space<vmem>>, vector<1x1x32xf32>
    %487 = vector.shape_cast %486 : vector<1x1x32xf32> to vector<1x32xf32>
    %cst_367 = arith.constant dense<0.000000e+00> : vector<34xf32>
    %488 = vector.multi_reduction <add>, %483, %cst_367 [1] : vector<34x32xf32> to vector<34xf32>
    %489 = vector.shape_cast %488 : vector<34xf32> to vector<34x1xf32>
    %cst_368 = arith.constant 3.200000e+01 : f32
    %490 = vector.broadcast %cst_368 : f32 to vector<34x1xf32>
    %491 = arith.divf %489, %490 : vector<34x1xf32>
    %492 = vector.broadcast %491 : vector<34x1xf32> to vector<34x32xf32>
    %493 = arith.subf %483, %492 : vector<34x32xf32>
    %494 = arith.mulf %493, %493 : vector<34x32xf32>
    %cst_369 = arith.constant dense<0.000000e+00> : vector<34xf32>
    %495 = vector.multi_reduction <add>, %494, %cst_369 [1] : vector<34x32xf32> to vector<34xf32>
    %496 = vector.shape_cast %495 : vector<34xf32> to vector<34x1xf32>
    %cst_370 = arith.constant 3.200000e+01 : f32
    %497 = vector.broadcast %cst_370 : f32 to vector<34x1xf32>
    %498 = arith.divf %496, %497 : vector<34x1xf32>
    %cst_371 = arith.constant 9.99999974E-6 : f32
    %499 = vector.broadcast %cst_371 : f32 to vector<34x1xf32>
    %500 = arith.addf %498, %499 : vector<34x1xf32>
    %501 = math.rsqrt %500 : vector<34x1xf32>
    %502 = vector.broadcast %501 : vector<34x1xf32> to vector<34x32xf32>
    %503 = arith.mulf %493, %502 : vector<34x32xf32>
    %504 = vector.broadcast %485 : vector<1x32xf32> to vector<34x32xf32>
    %505 = arith.mulf %503, %504 : vector<34x32xf32>
    %506 = vector.broadcast %487 : vector<1x32xf32> to vector<34x32xf32>
    %507 = arith.addf %505, %506 : vector<34x32xf32>
    %508 = arith.truncf %507 : vector<34x32xf32> to vector<34x32xbf16>
    %c1_372 = arith.constant 1 : index
    %c0_373 = arith.constant 0 : index
    %c0_374 = arith.constant 0 : index
    %509 = vector.load %arg17[%c1_372, %c0_373, %c0_374] : memref<2x32x128xbf16, #tpu.memory_space<vmem>>, vector<1x32x128xbf16>
    %510 = vector.shape_cast %509 : vector<1x32x128xbf16> to vector<32x128xbf16>
    %cst_375 = arith.constant dense<0.000000e+00> : vector<34x128xf32>
    %511 = tpu.matmul %508, %510, %cst_375 {dimension_numbers = #tpu.dot_dimension_numbers<[1], [0], [0], [1], [0, 0, 1, 1], [], []>} : vector<34x32xbf16>, vector<32x128xbf16>, vector<34x128xf32> -> vector<34x128xf32>
    %c1_376 = arith.constant 1 : index
    %c0_377 = arith.constant 0 : index
    %c0_378 = arith.constant 0 : index
    %512 = vector.load %arg18[%c1_376, %c0_377, %c0_378] : memref<2x1x128xf32, #tpu.memory_space<vmem>>, vector<1x1x128xf32>
    %513 = vector.shape_cast %512 : vector<1x1x128xf32> to vector<1x128xf32>
    %514 = vector.broadcast %513 : vector<1x128xf32> to vector<34x128xf32>
    %515 = arith.addf %511, %514 : vector<34x128xf32>
    %516 = arith.mulf %515, %515 : vector<34x128xf32>
    %517 = arith.mulf %515, %516 : vector<34x128xf32>
    %cst_379 = arith.constant 4.471500e-02 : f32
    %518 = vector.broadcast %cst_379 : f32 to vector<34x128xf32>
    %519 = arith.mulf %518, %517 : vector<34x128xf32>
    %520 = arith.addf %515, %519 : vector<34x128xf32>
    %cst_380 = arith.constant 0.797884583 : f32
    %521 = vector.broadcast %cst_380 : f32 to vector<34x128xf32>
    %522 = arith.mulf %521, %520 : vector<34x128xf32>
    %523 = math.tanh %522 : vector<34x128xf32>
    %cst_381 = arith.constant 1.000000e+00 : f32
    %524 = vector.broadcast %cst_381 : f32 to vector<34x128xf32>
    %525 = arith.addf %524, %523 : vector<34x128xf32>
    %cst_382 = arith.constant 5.000000e-01 : f32
    %526 = vector.broadcast %cst_382 : f32 to vector<34x128xf32>
    %527 = arith.mulf %526, %525 : vector<34x128xf32>
    %528 = arith.mulf %515, %527 : vector<34x128xf32>
    %529 = arith.truncf %528 : vector<34x128xf32> to vector<34x128xbf16>
    %c1_383 = arith.constant 1 : index
    %c0_384 = arith.constant 0 : index
    %c0_385 = arith.constant 0 : index
    %530 = vector.load %arg19[%c1_383, %c0_384, %c0_385] : memref<2x128x32xbf16, #tpu.memory_space<vmem>>, vector<1x128x32xbf16>
    %531 = vector.shape_cast %530 : vector<1x128x32xbf16> to vector<128x32xbf16>
    %cst_386 = arith.constant dense<0.000000e+00> : vector<34x32xf32>
    %532 = tpu.matmul %529, %531, %cst_386 {dimension_numbers = #tpu.dot_dimension_numbers<[1], [0], [0], [1], [0, 0, 1, 1], [], []>} : vector<34x128xbf16>, vector<128x32xbf16>, vector<34x32xf32> -> vector<34x32xf32>
    %c1_387 = arith.constant 1 : index
    %c0_388 = arith.constant 0 : index
    %c0_389 = arith.constant 0 : index
    %533 = vector.load %arg20[%c1_387, %c0_388, %c0_389] : memref<2x1x32xf32, #tpu.memory_space<vmem>>, vector<1x1x32xf32>
    %534 = vector.shape_cast %533 : vector<1x1x32xf32> to vector<1x32xf32>
    %535 = vector.broadcast %534 : vector<1x32xf32> to vector<34x32xf32>
    %536 = arith.addf %532, %535 : vector<34x32xf32>
    %537 = arith.addf %483, %536 : vector<34x32xf32>
    %538 = arith.truncf %537 : vector<34x32xf32> to vector<34x32xbf16>
    %c0_390 = arith.constant 0 : index
    %c0_391 = arith.constant 0 : index
    %539 = vector.load %arg21[%c0_390, %c0_391] : memref<32x128xbf16, #tpu.memory_space<vmem>>, vector<32x128xbf16>
    %cst_392 = arith.constant dense<0.000000e+00> : vector<34x128xf32>
    %540 = tpu.matmul %538, %539, %cst_392 {dimension_numbers = #tpu.dot_dimension_numbers<[1], [0], [0], [1], [0, 0, 1, 1], [], []>} : vector<34x32xbf16>, vector<32x128xbf16>, vector<34x128xf32> -> vector<34x128xf32>
    %c0_393 = arith.constant 0 : index
    %c0_394 = arith.constant 0 : index
    %541 = vector.load %arg22[%c0_393, %c0_394] : memref<1x128xf32, #tpu.memory_space<vmem>>, vector<1x128xf32>
    %542 = vector.broadcast %541 : vector<1x128xf32> to vector<34x128xf32>
    %543 = arith.addf %540, %542 : vector<34x128xf32>
    %544 = vector.extract_strided_slice %543 {offsets = [0, 0], sizes = [17, 128], strides = [1, 1]} : vector<34x128xf32> to vector<17x128xf32>
    %c0_395 = arith.constant 0 : index
    %c0_396 = arith.constant 0 : index
    %c0_397 = arith.constant 0 : index
    %545 = vector.load %arg23[%c0_395, %c0_396, %c0_397] : memref<2x17x128xf32, #tpu.memory_space<vmem>>, vector<1x17x128xf32>
    %546 = vector.shape_cast %545 : vector<1x17x128xf32> to vector<17x128xf32>
    %547 = vector.shape_cast %544 : vector<17x128xf32> to vector<1x17x128xf32>
    tpu.vector_store %arg23[%c0_395, %c0_396, %c0_397], %547 {strides = array<i32>} : memref<2x17x128xf32, #tpu.memory_space<vmem>>, vector<1x17x128xf32>,
    %548 = vector.extract_strided_slice %543 {offsets = [17, 0], sizes = [17, 128], strides = [1, 1]} : vector<34x128xf32> to vector<17x128xf32>
    %c1_398 = arith.constant 1 : index
    %c0_399 = arith.constant 0 : index
    %c0_400 = arith.constant 0 : index
    %549 = vector.load %arg23[%c1_398, %c0_399, %c0_400] : memref<2x17x128xf32, #tpu.memory_space<vmem>>, vector<1x17x128xf32>
    %550 = vector.shape_cast %549 : vector<1x17x128xf32> to vector<17x128xf32>
    %551 = vector.shape_cast %548 : vector<17x128xf32> to vector<1x17x128xf32>
    tpu.vector_store %arg23[%c1_398, %c0_399, %c0_400], %551 {strides = array<i32>} : memref<2x17x128xf32, #tpu.memory_space<vmem>>, vector<1x17x128xf32>,
    return
  }
  func.func @transform_0(%arg0: i32) -> (i32, i32, i32) {
    %c0_i32 = arith.constant 0 : i32
    %c0_i32_0 = arith.constant 0 : i32
    %c0_i32_1 = arith.constant 0 : i32
    return %arg0, %c0_i32, %c0_i32_0 : i32, i32, i32
  }
  func.func @transform_1(%arg0: i32) -> (i32, i32, i32) {
    %c0_i32 = arith.constant 0 : i32
    %c0_i32_0 = arith.constant 0 : i32
    %c0_i32_1 = arith.constant 0 : i32
    return %arg0, %c0_i32, %c0_i32_0 : i32, i32, i32
  }
  func.func @transform_2(%arg0: i32) -> (i32, i32) {
    %c0_i32 = arith.constant 0 : i32
    %c0_i32_0 = arith.constant 0 : i32
    %c0_i32_1 = arith.constant 0 : i32
    return %c0_i32, %c0_i32_0 : i32, i32
  }
  func.func @transform_3(%arg0: i32) -> (i32, i32) {
    %c0_i32 = arith.constant 0 : i32
    %c0_i32_0 = arith.constant 0 : i32
    %c0_i32_1 = arith.constant 0 : i32
    return %c0_i32, %c0_i32_0 : i32, i32
  }
  func.func @transform_4(%arg0: i32) -> (i32, i32, i32) {
    %c0_i32 = arith.constant 0 : i32
    %c0_i32_0 = arith.constant 0 : i32
    %c0_i32_1 = arith.constant 0 : i32
    %c0_i32_2 = arith.constant 0 : i32
    return %c0_i32, %c0_i32_0, %c0_i32_1 : i32, i32, i32
  }
  func.func @transform_5(%arg0: i32) -> (i32, i32, i32) {
    %c0_i32 = arith.constant 0 : i32
    %c0_i32_0 = arith.constant 0 : i32
    %c0_i32_1 = arith.constant 0 : i32
    %c0_i32_2 = arith.constant 0 : i32
    return %c0_i32, %c0_i32_0, %c0_i32_1 : i32, i32, i32
  }
  func.func @transform_6(%arg0: i32) -> (i32, i32, i32, i32) {
    %c0_i32 = arith.constant 0 : i32
    %c0_i32_0 = arith.constant 0 : i32
    %c0_i32_1 = arith.constant 0 : i32
    %c0_i32_2 = arith.constant 0 : i32
    %c0_i32_3 = arith.constant 0 : i32
    return %c0_i32, %c0_i32_0, %c0_i32_1, %c0_i32_2 : i32, i32, i32, i32
  }
  func.func @transform_7(%arg0: i32) -> (i32, i32, i32, i32) {
    %c0_i32 = arith.constant 0 : i32
    %c0_i32_0 = arith.constant 0 : i32
    %c0_i32_1 = arith.constant 0 : i32
    %c0_i32_2 = arith.constant 0 : i32
    %c0_i32_3 = arith.constant 0 : i32
    return %c0_i32, %c0_i32_0, %c0_i32_1, %c0_i32_2 : i32, i32, i32, i32
  }
  func.func @transform_8(%arg0: i32) -> (i32, i32, i32, i32) {
    %c0_i32 = arith.constant 0 : i32
    %c0_i32_0 = arith.constant 0 : i32
    %c0_i32_1 = arith.constant 0 : i32
    %c0_i32_2 = arith.constant 0 : i32
    %c0_i32_3 = arith.constant 0 : i32
    return %c0_i32, %c0_i32_0, %c0_i32_1, %c0_i32_2 : i32, i32, i32, i32
  }
  func.func @transform_9(%arg0: i32) -> (i32, i32, i32, i32) {
    %c0_i32 = arith.constant 0 : i32
    %c0_i32_0 = arith.constant 0 : i32
    %c0_i32_1 = arith.constant 0 : i32
    %c0_i32_2 = arith.constant 0 : i32
    %c0_i32_3 = arith.constant 0 : i32
    return %c0_i32, %c0_i32_0, %c0_i32_1, %c0_i32_2 : i32, i32, i32, i32
  }
  func.func @transform_10(%arg0: i32) -> (i32, i32, i32, i32) {
    %c0_i32 = arith.constant 0 : i32
    %c0_i32_0 = arith.constant 0 : i32
    %c0_i32_1 = arith.constant 0 : i32
    %c0_i32_2 = arith.constant 0 : i32
    %c0_i32_3 = arith.constant 0 : i32
    return %c0_i32, %c0_i32_0, %c0_i32_1, %c0_i32_2 : i32, i32, i32, i32
  }
  func.func @transform_11(%arg0: i32) -> (i32, i32, i32, i32) {
    %c0_i32 = arith.constant 0 : i32
    %c0_i32_0 = arith.constant 0 : i32
    %c0_i32_1 = arith.constant 0 : i32
    %c0_i32_2 = arith.constant 0 : i32
    %c0_i32_3 = arith.constant 0 : i32
    return %c0_i32, %c0_i32_0, %c0_i32_1, %c0_i32_2 : i32, i32, i32, i32
  }
  func.func @transform_12(%arg0: i32) -> (i32, i32, i32, i32) {
    %c0_i32 = arith.constant 0 : i32
    %c0_i32_0 = arith.constant 0 : i32
    %c0_i32_1 = arith.constant 0 : i32
    %c0_i32_2 = arith.constant 0 : i32
    %c0_i32_3 = arith.constant 0 : i32
    return %c0_i32, %c0_i32_0, %c0_i32_1, %c0_i32_2 : i32, i32, i32, i32
  }
  func.func @transform_13(%arg0: i32) -> (i32, i32, i32) {
    %c0_i32 = arith.constant 0 : i32
    %c0_i32_0 = arith.constant 0 : i32
    %c0_i32_1 = arith.constant 0 : i32
    %c0_i32_2 = arith.constant 0 : i32
    return %c0_i32, %c0_i32_0, %c0_i32_1 : i32, i32, i32
  }
  func.func @transform_14(%arg0: i32) -> (i32, i32, i32) {
    %c0_i32 = arith.constant 0 : i32
    %c0_i32_0 = arith.constant 0 : i32
    %c0_i32_1 = arith.constant 0 : i32
    %c0_i32_2 = arith.constant 0 : i32
    return %c0_i32, %c0_i32_0, %c0_i32_1 : i32, i32, i32
  }
  func.func @transform_15(%arg0: i32) -> (i32, i32, i32) {
    %c0_i32 = arith.constant 0 : i32
    %c0_i32_0 = arith.constant 0 : i32
    %c0_i32_1 = arith.constant 0 : i32
    %c0_i32_2 = arith.constant 0 : i32
    return %c0_i32, %c0_i32_0, %c0_i32_1 : i32, i32, i32
  }
  func.func @transform_16(%arg0: i32) -> (i32, i32, i32) {
    %c0_i32 = arith.constant 0 : i32
    %c0_i32_0 = arith.constant 0 : i32
    %c0_i32_1 = arith.constant 0 : i32
    %c0_i32_2 = arith.constant 0 : i32
    return %c0_i32, %c0_i32_0, %c0_i32_1 : i32, i32, i32
  }
  func.func @transform_17(%arg0: i32) -> (i32, i32, i32) {
    %c0_i32 = arith.constant 0 : i32
    %c0_i32_0 = arith.constant 0 : i32
    %c0_i32_1 = arith.constant 0 : i32
    %c0_i32_2 = arith.constant 0 : i32
    return %c0_i32, %c0_i32_0, %c0_i32_1 : i32, i32, i32
  }
  func.func @transform_18(%arg0: i32) -> (i32, i32, i32) {
    %c0_i32 = arith.constant 0 : i32
    %c0_i32_0 = arith.constant 0 : i32
    %c0_i32_1 = arith.constant 0 : i32
    %c0_i32_2 = arith.constant 0 : i32
    return %c0_i32, %c0_i32_0, %c0_i32_1 : i32, i32, i32
  }
  func.func @transform_19(%arg0: i32) -> (i32, i32, i32) {
    %c0_i32 = arith.constant 0 : i32
    %c0_i32_0 = arith.constant 0 : i32
    %c0_i32_1 = arith.constant 0 : i32
    %c0_i32_2 = arith.constant 0 : i32
    return %c0_i32, %c0_i32_0, %c0_i32_1 : i32, i32, i32
  }
  func.func @transform_20(%arg0: i32) -> (i32, i32) {
    %c0_i32 = arith.constant 0 : i32
    %c0_i32_0 = arith.constant 0 : i32
    %c0_i32_1 = arith.constant 0 : i32
    return %c0_i32, %c0_i32_0 : i32, i32
  }
  func.func @transform_21(%arg0: i32) -> (i32, i32) {
    %c0_i32 = arith.constant 0 : i32
    %c0_i32_0 = arith.constant 0 : i32
    %c0_i32_1 = arith.constant 0 : i32
    return %c0_i32, %c0_i32_0 : i32, i32
  }
  func.func @transform_22(%arg0: i32) -> (i32, i32, i32) {
    %c0_i32 = arith.constant 0 : i32
    %c0_i32_0 = arith.constant 0 : i32
    %c0_i32_1 = arith.constant 0 : i32
    return %arg0, %c0_i32, %c0_i32_0 : i32, i32, i32
  }
}

</mosaic_0001>

<llo_original>
// kernel: tile.7
$region0: #{tile.7}
  %s0 = inlined_call_operand.vmem [shape: f32[2,17,32], index: 0, kind: input, shape index: {}]
  %s1 = inlined_call_operand.vmem [shape: f32[34,32], index: 1, kind: output, shape index: {}]
  %v2 = vld [vmem:[%s0] sm:$0xff]
  %vm3 = vcmask 261120
  %4 = vst.msk [vmem:[%s1] sm:$0xff] %vm3, %v2
  %s5 = scalar_lea.vmem %s0, 8
  %v6 = vld [vmem:[%s5] sm:$0xff]
  %vm7 = vcmask 261120
  %s8 = scalar_lea.vmem %s1, 8
  %9 = vst.msk [vmem:[%s8] sm:$0xff] %vm7, %v6
  %s10 = scalar_lea.vmem %s0, 16
  %s11 = smov 3
  %v12 = vld [vmem:[%s10] ss:$8 sm:%s11]
  %vm13 = vcmask 261120
  %s14 = scalar_lea.vmem %s1, 16
  %15 = vst.msk [vmem:[%s14] sm:$0x3] %vm13, %v12
  %s16 = scalar_lea.vmem %s0, 25
  %v17 = vld [vmem:[%s16] sm:$0xff]
  %vm18 = vcmask 261120
  %s19 = scalar_lea.vmem %s1, 18
  %20 = vst.msk [vmem:[%s19] sm:$0xff] %vm18, %v17
  %s21 = scalar_lea.vmem %s0, 33
  %v22 = vld [vmem:[%s21] sm:$0xff]
  %vm23 = vcmask 261120
  %s24 = scalar_lea.vmem %s1, 26
  %25 = vst.msk [vmem:[%s24] sm:$0xff] %vm23, %v22

// kernel: mae_decoder_forward.1
$region0: #{mae_decoder_forward.1}
  #allocation0 [shape = 'u32[]', space=smem, size = 0x4, offset = 0x4, fixed_abs, tag = 'smem constant byte address 0x4 - core index']
  #allocation1 [shape = 'u32[144,128]{1,0:T(1,128)}', space=vmem, size = 0x12000, scoped, tag = 'internal scratch']
  %s0 = inlined_call_operand.vmem [shape: f32[2,34,12], index: 0, kind: input, shape index: {}]
  %s1 = inlined_call_operand.vmem [shape: f32[2,12,32], index: 1, kind: input, shape index: {}]
  %s2 = inlined_call_operand.vmem [shape: f32[34,32], index: 2, kind: input, shape index: {}]
  %s3 = inlined_call_operand.vmem [shape: f32[34,34], index: 3, kind: input, shape index: {}]
  %s4 = inlined_call_operand.vmem [shape: f32[2,1,32], index: 4, kind: input, shape index: {}]
  %s5 = inlined_call_operand.vmem [shape: f32[2,1,32], index: 5, kind: input, shape index: {}]
  %s6 = inlined_call_operand.vmem [shape: bf16[2,4,32,8], index: 6, kind: input, shape index: {}]
  %s7 = inlined_call_operand.vmem [shape: f32[2,4,1,8], index: 7, kind: input, shape index: {}]
  %s8 = inlined_call_operand.vmem [shape: bf16[2,4,32,8], index: 8, kind: input, shape index: {}]
  %s9 = inlined_call_operand.vmem [shape: f32[2,4,1,8], index: 9, kind: input, shape index: {}]
  %s10 = inlined_call_operand.vmem [shape: bf16[2,4,32,8], index: 10, kind: input, shape index: {}]
  %s11 = inlined_call_operand.vmem [shape: f32[2,4,1,8], index: 11, kind: input, shape index: {}]
  %s12 = inlined_call_operand.vmem [shape: bf16[2,4,8,32], index: 12, kind: input, shape index: {}]
  %s13 = inlined_call_operand.vmem [shape: f32[2,1,32], index: 13, kind: input, shape index: {}]
  %s14 = inlined_call_operand.vmem [shape: f32[2,1,32], index: 14, kind: input, shape index: {}]
  %s15 = inlined_call_operand.vmem [shape: f32[2,1,32], index: 15, kind: input, shape index: {}]
  %s16 = inlined_call_operand.vmem [shape: bf16[2,32,128], index: 16, kind: input, shape index: {}]
  %s17 = inlined_call_operand.vmem [shape: f32[2,1,128], index: 17, kind: input, shape index: {}]
  %s18 = inlined_call_operand.vmem [shape: bf16[2,128,32], index: 18, kind: input, shape index: {}]
  %s19 = inlined_call_operand.vmem [shape: f32[2,1,32], index: 19, kind: input, shape index: {}]
  %s20 = inlined_call_operand.vmem [shape: bf16[32,128], index: 20, kind: input, shape index: {}]
  %s21 = inlined_call_operand.vmem [shape: f32[1,128], index: 21, kind: input, shape index: {}]
  %s22 = inlined_call_operand.vmem [shape: f32[4,17,128], index: 22, kind: output, shape index: {}]
  %s23 = sld [smem:[#allocation0]]
  $region121: #{mae_decoder_forward.1} parent=0
    _
  %s25 = ssub.s32 1, %s23
  %s26 = scalar_select 0, %s25, %s23
  loop: start=0, step=1, limit=4
  $region2: #{mae_decoder_forward.1} parent=0 // loop_pre_header
    _
  $region3: #{mae_decoder_forward.1} parent=0 // loop_header
    %s28 = sphi 0, %s32
    %p29 = scmp.ge.s32.totalorder %s28, 4
    %s38 = sphi 0, %s40
    %s41 = sphi 0, %s38
    %s42 = sphi 0, %s41
    %s58 = sphi 0, %s42
    %s64 = sphi 0, %s66
    %s67 = sphi 0, %s64
    %s68 = sphi 0, %s67
    %s84 = sphi 0, %s68
    %s88 = sphi 0, %s88
    %s90 = sphi 0, %s88
    %s91 = sphi 0, %s90
    %s105 = sphi 0, %s91
    %s109 = sphi 0, %s109
    %s111 = sphi 0, %s109
    %s112 = sphi 0, %s111
    %s126 = sphi 0, %s112
    %s130 = sphi 0, %s130
    %s132 = sphi 0, %s130
    %s133 = sphi 0, %s132
    %s147 = sphi 0, %s133
    %s151 = sphi 0, %s151
    %s153 = sphi 0, %s151
    %s154 = sphi 0, %s153
    %s168 = sphi 0, %s154
    %s172 = sphi 0, %s172
    %s174 = sphi 0, %s172
    %s175 = sphi 0, %s174
    %s189 = sphi 0, %s175
    %s193 = sphi 0, %s193
    %s195 = sphi 0, %s193
    %s196 = sphi 0, %s195
    %s210 = sphi 0, %s196
    %s214 = sphi 0, %s214
    %s216 = sphi 0, %s214
    %s217 = sphi 0, %s216
    %s231 = sphi 0, %s217
    %s235 = sphi 0, %s235
    %s237 = sphi 0, %s235
    %s238 = sphi 0, %s237
    %s252 = sphi 0, %s238
    %s256 = sphi 0, %s256
    %s258 = sphi 0, %s256
    %s259 = sphi 0, %s258
    %s273 = sphi 0, %s259
    %s277 = sphi 0, %s277
    %s279 = sphi 0, %s277
    %s280 = sphi 0, %s279
    %s294 = sphi 0, %s280
    %s298 = sphi 0, %s298
    %s300 = sphi 0, %s298
    %s301 = sphi 0, %s300
    %s315 = sphi 0, %s301
    %s319 = sphi 0, %s319
    %s321 = sphi 0, %s319
    %s322 = sphi 0, %s321
    %s336 = sphi 0, %s322
    %s340 = sphi 0, %s340
    %s342 = sphi 0, %s340
    %s343 = sphi 0, %s342
    %s357 = sphi 0, %s343
    %s361 = sphi 0, %s361
    %s363 = sphi 0, %s361
    %s364 = sphi 0, %s363
    %s378 = sphi 0, %s364
    %s382 = sphi 0, %s382
    %s384 = sphi 0, %s382
    %s385 = sphi 0, %s384
    %s399 = sphi 0, %s385
    %s403 = sphi 0, %s403
    %s405 = sphi 0, %s403
    %s406 = sphi 0, %s405
    %s420 = sphi 0, %s406
    %s424 = sphi 0, %s424
    %s426 = sphi 0, %s424
    %s427 = sphi 0, %s426
    %s441 = sphi 0, %s427
    %s445 = sphi 0, %s445
    %s447 = sphi 0, %s445
    %s448 = sphi 0, %s447
    %s462 = sphi 0, %s448
    %s466 = sphi 0, %s466
    %s468 = sphi 0, %s466
    %s469 = sphi 0, %s468
    %s483 = sphi 0, %s469
    %s487 = sphi 0, %s487
    %s489 = sphi 0, %s487
    %s490 = sphi 0, %s489
    %s504 = sphi 0, %s490
    %s510 = sphi 0, %s512
    %s513 = sphi 0, %s510
    %s514 = sphi 0, %s513
    %s530 = sphi 0, %s514
  $region4: #{mae_decoder_forward.1} parent=0 // loop_header_branch
    %31 = sbr.rel (%p29) target = $region8
  $region5: #{mae_decoder_forward.1} parent=0 // loop_body
    %s33 = ssub.s32 %s28, 1
    %s34 = ssub.s32 %s28, 2
    %s35 = sadd.s32 %s28, 1
    %s36 = ssub.s32 %s28, %s35
    %p37 = scmp.eq.s32.totalorder %s36, 0
    %s39 = sadd.s32 %s38, 1
    %s40 = scalar_select %p37, %s38, %s39
    %p43 = pneg %p37
    %p44 = scmp.eq.s32.totalorder %s28, 1
    %p45 = por %p43, %p44
    %p46 = scmp.ne.s32.totalorder %s38, %s41
    %p47 = scmp.eq.s32.totalorder %s28, 0
    %p48 = por %p46, %p47
    %p49 = scmp.ne.s32.totalorder %s38, %s41
    %p50 = scmp.eq.s32.totalorder %s33, 1
    %p51 = por %p49, %p50
    %p52 = scmp.ne.s32.totalorder %s41, %s42
    %p53 = scmp.eq.s32.totalorder %s33, 0
    %p54 = por %p52, %p53
    %p55 = scmp.ne.s32.totalorder %s41, %s42
    %p56 = scmp.eq.s32.totalorder %s34, 1
    %p57 = por %p55, %p56
    %p59 = scmp.ne.s32.totalorder %s42, %s58
    %p60 = scmp.eq.s32.totalorder %s34, 0
    %p61 = por %p59, %p60
    %s62 = ssub.s32 %s28, %s35
    %p63 = scmp.eq.s32.totalorder %s62, 0
    %s65 = sadd.s32 %s64, 1
    %s66 = scalar_select %p63, %s64, %s65
    %p69 = pneg %p63
    %p70 = scmp.eq.s32.totalorder %s28, 1
    %p71 = por %p69, %p70
    %p72 = scmp.ne.s32.totalorder %s64, %s67
    %p73 = scmp.eq.s32.totalorder %s28, 0
    %p74 = por %p72, %p73
    %p75 = scmp.ne.s32.totalorder %s64, %s67
    %p76 = scmp.eq.s32.totalorder %s33, 1
    %p77 = por %p75, %p76
    %p78 = scmp.ne.s32.totalorder %s67, %s68
    %p79 = scmp.eq.s32.totalorder %s33, 0
    %p80 = por %p78, %p79
    %p81 = scmp.ne.s32.totalorder %s67, %s68
    %p82 = scmp.eq.s32.totalorder %s34, 1
    %p83 = por %p81, %p82
    %p85 = scmp.ne.s32.totalorder %s68, %s84
    %p86 = scmp.eq.s32.totalorder %s34, 0
    %p87 = por %p85, %p86
    %s89 = sadd.s32 %s88, 1
    %p92 = scmp.eq.s32.totalorder %s28, 1
    %p93 = scmp.ne.s32.totalorder %s88, %s90
    %p94 = scmp.eq.s32.totalorder %s28, 0
    %p95 = por %p93, %p94
    %p96 = scmp.ne.s32.totalorder %s88, %s90
    %p97 = scmp.eq.s32.totalorder %s33, 1
    %p98 = por %p96, %p97
    %p99 = scmp.ne.s32.totalorder %s90, %s91
    %p100 = scmp.eq.s32.totalorder %s33, 0
    %p101 = por %p99, %p100
    %p102 = scmp.ne.s32.totalorder %s90, %s91
    %p103 = scmp.eq.s32.totalorder %s34, 1
    %p104 = por %p102, %p103
    %p106 = scmp.ne.s32.totalorder %s91, %s105
    %p107 = scmp.eq.s32.totalorder %s34, 0
    %p108 = por %p106, %p107
    %s110 = sadd.s32 %s109, 1
    %p113 = scmp.eq.s32.totalorder %s28, 1
    %p114 = scmp.ne.s32.totalorder %s109, %s111
    %p115 = scmp.eq.s32.totalorder %s28, 0
    %p116 = por %p114, %p115
    %p117 = scmp.ne.s32.totalorder %s109, %s111
    %p118 = scmp.eq.s32.totalorder %s33, 1
    %p119 = por %p117, %p118
    %p120 = scmp.ne.s32.totalorder %s111, %s112
    %p121 = scmp.eq.s32.totalorder %s33, 0
    %p122 = por %p120, %p121
    %p123 = scmp.ne.s32.totalorder %s111, %s112
    %p124 = scmp.eq.s32.totalorder %s34, 1
    %p125 = por %p123, %p124
    %p127 = scmp.ne.s32.totalorder %s112, %s126
    %p128 = scmp.eq.s32.totalorder %s34, 0
    %p129 = por %p127, %p128
    %s131 = sadd.s32 %s130, 1
    %p134 = scmp.eq.s32.totalorder %s28, 1
    %p135 = scmp.ne.s32.totalorder %s130, %s132
    %p136 = scmp.eq.s32.totalorder %s28, 0
    %p137 = por %p135, %p136
    %p138 = scmp.ne.s32.totalorder %s130, %s132
    %p139 = scmp.eq.s32.totalorder %s33, 1
    %p140 = por %p138, %p139
    %p141 = scmp.ne.s32.totalorder %s132, %s133
    %p142 = scmp.eq.s32.totalorder %s33, 0
    %p143 = por %p141, %p142
    %p144 = scmp.ne.s32.totalorder %s132, %s133
    %p145 = scmp.eq.s32.totalorder %s34, 1
    %p146 = por %p144, %p145
    %p148 = scmp.ne.s32.totalorder %s133, %s147
    %p149 = scmp.eq.s32.totalorder %s34, 0
    %p150 = por %p148, %p149
    %s152 = sadd.s32 %s151, 1
    %p155 = scmp.eq.s32.totalorder %s28, 1
    %p156 = scmp.ne.s32.totalorder %s151, %s153
    %p157 = scmp.eq.s32.totalorder %s28, 0
    %p158 = por %p156, %p157
    %p159 = scmp.ne.s32.totalorder %s151, %s153
    %p160 = scmp.eq.s32.totalorder %s33, 1
    %p161 = por %p159, %p160
    %p162 = scmp.ne.s32.totalorder %s153, %s154
    %p163 = scmp.eq.s32.totalorder %s33, 0
    %p164 = por %p162, %p163
    %p165 = scmp.ne.s32.totalorder %s153, %s154
    %p166 = scmp.eq.s32.totalorder %s34, 1
    %p167 = por %p165, %p166
    %p169 = scmp.ne.s32.totalorder %s154, %s168
    %p170 = scmp.eq.s32.totalorder %s34, 0
    %p171 = por %p169, %p170
    %s173 = sadd.s32 %s172, 1
    %p176 = scmp.eq.s32.totalorder %s28, 1
    %p177 = scmp.ne.s32.totalorder %s172, %s174
    %p178 = scmp.eq.s32.totalorder %s28, 0
    %p179 = por %p177, %p178
    %p180 = scmp.ne.s32.totalorder %s172, %s174
    %p181 = scmp.eq.s32.totalorder %s33, 1
    %p182 = por %p180, %p181
    %p183 = scmp.ne.s32.totalorder %s174, %s175
    %p184 = scmp.eq.s32.totalorder %s33, 0
    %p185 = por %p183, %p184
    %p186 = scmp.ne.s32.totalorder %s174, %s175
    %p187 = scmp.eq.s32.totalorder %s34, 1
    %p188 = por %p186, %p187
    %p190 = scmp.ne.s32.totalorder %s175, %s189
    %p191 = scmp.eq.s32.totalorder %s34, 0
    %p192 = por %p190, %p191
    %s194 = sadd.s32 %s193, 1
    %p197 = scmp.eq.s32.totalorder %s28, 1
    %p198 = scmp.ne.s32.totalorder %s193, %s195
    %p199 = scmp.eq.s32.totalorder %s28, 0
    %p200 = por %p198, %p199
    %p201 = scmp.ne.s32.totalorder %s193, %s195
    %p202 = scmp.eq.s32.totalorder %s33, 1
    %p203 = por %p201, %p202
    %p204 = scmp.ne.s32.totalorder %s195, %s196
    %p205 = scmp.eq.s32.totalorder %s33, 0
    %p206 = por %p204, %p205
    %p207 = scmp.ne.s32.totalorder %s195, %s196
    %p208 = scmp.eq.s32.totalorder %s34, 1
    %p209 = por %p207, %p208
    %p211 = scmp.ne.s32.totalorder %s196, %s210
    %p212 = scmp.eq.s32.totalorder %s34, 0
    %p213 = por %p211, %p212
    %s215 = sadd.s32 %s214, 1
    %p218 = scmp.eq.s32.totalorder %s28, 1
    %p219 = scmp.ne.s32.totalorder %s214, %s216
    %p220 = scmp.eq.s32.totalorder %s28, 0
    %p221 = por %p219, %p220
    %p222 = scmp.ne.s32.totalorder %s214, %s216
    %p223 = scmp.eq.s32.totalorder %s33, 1
    %p224 = por %p222, %p223
    %p225 = scmp.ne.s32.totalorder %s216, %s217
    %p226 = scmp.eq.s32.totalorder %s33, 0
    %p227 = por %p225, %p226
    %p228 = scmp.ne.s32.totalorder %s216, %s217
    %p229 = scmp.eq.s32.totalorder %s34, 1
    %p230 = por %p228, %p229
    %p232 = scmp.ne.s32.totalorder %s217, %s231
    %p233 = scmp.eq.s32.totalorder %s34, 0
    %p234 = por %p232, %p233
    %s236 = sadd.s32 %s235, 1
    %p239 = scmp.eq.s32.totalorder %s28, 1
    %p240 = scmp.ne.s32.totalorder %s235, %s237
    %p241 = scmp.eq.s32.totalorder %s28, 0
    %p242 = por %p240, %p241
    %p243 = scmp.ne.s32.totalorder %s235, %s237
    %p244 = scmp.eq.s32.totalorder %s33, 1
    %p245 = por %p243, %p244
    %p246 = scmp.ne.s32.totalorder %s237, %s238
    %p247 = scmp.eq.s32.totalorder %s33, 0
    %p248 = por %p246, %p247
    %p249 = scmp.ne.s32.totalorder %s237, %s238
    %p250 = scmp.eq.s32.totalorder %s34, 1
    %p251 = por %p249, %p250
    %p253 = scmp.ne.s32.totalorder %s238, %s252
    %p254 = scmp.eq.s32.totalorder %s34, 0
    %p255 = por %p253, %p254
    %s257 = sadd.s32 %s256, 1
    %p260 = scmp.eq.s32.totalorder %s28, 1
    %p261 = scmp.ne.s32.totalorder %s256, %s258
    %p262 = scmp.eq.s32.totalorder %s28, 0
    %p263 = por %p261, %p262
    %p264 = scmp.ne.s32.totalorder %s256, %s258
    %p265 = scmp.eq.s32.totalorder %s33, 1
    %p266 = por %p264, %p265
    %p267 = scmp.ne.s32.totalorder %s258, %s259
    %p268 = scmp.eq.s32.totalorder %s33, 0
    %p269 = por %p267, %p268
    %p270 = scmp.ne.s32.totalorder %s258, %s259
    %p271 = scmp.eq.s32.totalorder %s34, 1
    %p272 = por %p270, %p271
    %p274 = scmp.ne.s32.totalorder %s259, %s273
    %p275 = scmp.eq.s32.totalorder %s34, 0
    %p276 = por %p274, %p275
    %s278 = sadd.s32 %s277, 1
    %p281 = scmp.eq.s32.totalorder %s28, 1
    %p282 = scmp.ne.s32.totalorder %s277, %s279
    %p283 = scmp.eq.s32.totalorder %s28, 0
    %p284 = por %p282, %p283
    %p285 = scmp.ne.s32.totalorder %s277, %s279
    %p286 = scmp.eq.s32.totalorder %s33, 1
    %p287 = por %p285, %p286
    %p288 = scmp.ne.s32.totalorder %s279, %s280
    %p289 = scmp.eq.s32.totalorder %s33, 0
    %p290 = por %p288, %p289
    %p291 = scmp.ne.s32.totalorder %s279, %s280
    %p292 = scmp.eq.s32.totalorder %s34, 1
    %p293 = por %p291, %p292
    %p295 = scmp.ne.s32.totalorder %s280, %s294
    %p296 = scmp.eq.s32.totalorder %s34, 0
    %p297 = por %p295, %p296
    %s299 = sadd.s32 %s298, 1
    %p302 = scmp.eq.s32.totalorder %s28, 1
    %p303 = scmp.ne.s32.totalorder %s298, %s300
    %p304 = scmp.eq.s32.totalorder %s28, 0
    %p305 = por %p303, %p304
    %p306 = scmp.ne.s32.totalorder %s298, %s300
    %p307 = scmp.eq.s32.totalorder %s33, 1
    %p308 = por %p306, %p307
    %p309 = scmp.ne.s32.totalorder %s300, %s301
    %p310 = scmp.eq.s32.totalorder %s33, 0
    %p311 = por %p309, %p310
    %p312 = scmp.ne.s32.totalorder %s300, %s301
    %p313 = scmp.eq.s32.totalorder %s34, 1
    %p314 = por %p312, %p313
    %p316 = scmp.ne.s32.totalorder %s301, %s315
    %p317 = scmp.eq.s32.totalorder %s34, 0
    %p318 = por %p316, %p317
    %s320 = sadd.s32 %s319, 1
    %p323 = scmp.eq.s32.totalorder %s28, 1
    %p324 = scmp.ne.s32.totalorder %s319, %s321
    %p325 = scmp.eq.s32.totalorder %s28, 0
    %p326 = por %p324, %p325
    %p327 = scmp.ne.s32.totalorder %s319, %s321
    %p328 = scmp.eq.s32.totalorder %s33, 1
    %p329 = por %p327, %p328
    %p330 = scmp.ne.s32.totalorder %s321, %s322
    %p331 = scmp.eq.s32.totalorder %s33, 0
    %p332 = por %p330, %p331
    %p333 = scmp.ne.s32.totalorder %s321, %s322
    %p334 = scmp.eq.s32.totalorder %s34, 1
    %p335 = por %p333, %p334
    %p337 = scmp.ne.s32.totalorder %s322, %s336
    %p338 = scmp.eq.s32.totalorder %s34, 0
    %p339 = por %p337, %p338
    %s341 = sadd.s32 %s340, 1
    %p344 = scmp.eq.s32.totalorder %s28, 1
    %p345 = scmp.ne.s32.totalorder %s340, %s342
    %p346 = scmp.eq.s32.totalorder %s28, 0
    %p347 = por %p345, %p346
    %p348 = scmp.ne.s32.totalorder %s340, %s342
    %p349 = scmp.eq.s32.totalorder %s33, 1
    %p350 = por %p348, %p349
    %p351 = scmp.ne.s32.totalorder %s342, %s343
    %p352 = scmp.eq.s32.totalorder %s33, 0
    %p353 = por %p351, %p352
    %p354 = scmp.ne.s32.totalorder %s342, %s343
    %p355 = scmp.eq.s32.totalorder %s34, 1
    %p356 = por %p354, %p355
    %p358 = scmp.ne.s32.totalorder %s343, %s357
    %p359 = scmp.eq.s32.totalorder %s34, 0
    %p360 = por %p358, %p359
    %s362 = sadd.s32 %s361, 1
    %p365 = scmp.eq.s32.totalorder %s28, 1
    %p366 = scmp.ne.s32.totalorder %s361, %s363
    %p367 = scmp.eq.s32.totalorder %s28, 0
    %p368 = por %p366, %p367
    %p369 = scmp.ne.s32.totalorder %s361, %s363
    %p370 = scmp.eq.s32.totalorder %s33, 1
    %p371 = por %p369, %p370
    %p372 = scmp.ne.s32.totalorder %s363, %s364
    %p373 = scmp.eq.s32.totalorder %s33, 0
    %p374 = por %p372, %p373
    %p375 = scmp.ne.s32.totalorder %s363, %s364
    %p376 = scmp.eq.s32.totalorder %s34, 1
    %p377 = por %p375, %p376
    %p379 = scmp.ne.s32.totalorder %s364, %s378
    %p380 = scmp.eq.s32.totalorder %s34, 0
    %p381 = por %p379, %p380
    %s383 = sadd.s32 %s382, 1
    %p386 = scmp.eq.s32.totalorder %s28, 1
    %p387 = scmp.ne.s32.totalorder %s382, %s384
    %p388 = scmp.eq.s32.totalorder %s28, 0
    %p389 = por %p387, %p388
    %p390 = scmp.ne.s32.totalorder %s382, %s384
    %p391 = scmp.eq.s32.totalorder %s33, 1
    %p392 = por %p390, %p391
    %p393 = scmp.ne.s32.totalorder %s384, %s385
    %p394 = scmp.eq.s32.totalorder %s33, 0
    %p395 = por %p393, %p394
    %p396 = scmp.ne.s32.totalorder %s384, %s385
    %p397 = scmp.eq.s32.totalorder %s34, 1
    %p398 = por %p396, %p397
    %p400 = scmp.ne.s32.totalorder %s385, %s399
    %p401 = scmp.eq.s32.totalorder %s34, 0
    %p402 = por %p400, %p401
    %s404 = sadd.s32 %s403, 1
    %p407 = scmp.eq.s32.totalorder %s28, 1
    %p408 = scmp.ne.s32.totalorder %s403, %s405
    %p409 = scmp.eq.s32.totalorder %s28, 0
    %p410 = por %p408, %p409
    %p411 = scmp.ne.s32.totalorder %s403, %s405
    %p412 = scmp.eq.s32.totalorder %s33, 1
    %p413 = por %p411, %p412
    %p414 = scmp.ne.s32.totalorder %s405, %s406
    %p415 = scmp.eq.s32.totalorder %s33, 0
    %p416 = por %p414, %p415
    %p417 = scmp.ne.s32.totalorder %s405, %s406
    %p418 = scmp.eq.s32.totalorder %s34, 1
    %p419 = por %p417, %p418
    %p421 = scmp.ne.s32.totalorder %s406, %s420
    %p422 = scmp.eq.s32.totalorder %s34, 0
    %p423 = por %p421, %p422
    %s425 = sadd.s32 %s424, 1
    %p428 = scmp.eq.s32.totalorder %s28, 1
    %p429 = scmp.ne.s32.totalorder %s424, %s426
    %p430 = scmp.eq.s32.totalorder %s28, 0
    %p431 = por %p429, %p430
    %p432 = scmp.ne.s32.totalorder %s424, %s426
    %p433 = scmp.eq.s32.totalorder %s33, 1
    %p434 = por %p432, %p433
    %p435 = scmp.ne.s32.totalorder %s426, %s427
    %p436 = scmp.eq.s32.totalorder %s33, 0
    %p437 = por %p435, %p436
    %p438 = scmp.ne.s32.totalorder %s426, %s427
    %p439 = scmp.eq.s32.totalorder %s34, 1
    %p440 = por %p438, %p439
    %p442 = scmp.ne.s32.totalorder %s427, %s441
    %p443 = scmp.eq.s32.totalorder %s34, 0
    %p444 = por %p442, %p443
    %s446 = sadd.s32 %s445, 1
    %p449 = scmp.eq.s32.totalorder %s28, 1
    %p450 = scmp.ne.s32.totalorder %s445, %s447
    %p451 = scmp.eq.s32.totalorder %s28, 0
    %p452 = por %p450, %p451
    %p453 = scmp.ne.s32.totalorder %s445, %s447
    %p454 = scmp.eq.s32.totalorder %s33, 1
    %p455 = por %p453, %p454
    %p456 = scmp.ne.s32.totalorder %s447, %s448
    %p457 = scmp.eq.s32.totalorder %s33, 0
    %p458 = por %p456, %p457
    %p459 = scmp.ne.s32.totalorder %s447, %s448
    %p460 = scmp.eq.s32.totalorder %s34, 1
    %p461 = por %p459, %p460
    %p463 = scmp.ne.s32.totalorder %s448, %s462
    %p464 = scmp.eq.s32.totalorder %s34, 0
    %p465 = por %p463, %p464
    %s467 = sadd.s32 %s466, 1
    %p470 = scmp.eq.s32.totalorder %s28, 1
    %p471 = scmp.ne.s32.totalorder %s466, %s468
    %p472 = scmp.eq.s32.totalorder %s28, 0
    %p473 = por %p471, %p472
    %p474 = scmp.ne.s32.totalorder %s466, %s468
    %p475 = scmp.eq.s32.totalorder %s33, 1
    %p476 = por %p474, %p475
    %p477 = scmp.ne.s32.totalorder %s468, %s469
    %p478 = scmp.eq.s32.totalorder %s33, 0
    %p479 = por %p477, %p478
    %p480 = scmp.ne.s32.totalorder %s468, %s469
    %p481 = scmp.eq.s32.totalorder %s34, 1
    %p482 = por %p480, %p481
    %p484 = scmp.ne.s32.totalorder %s469, %s483
    %p485 = scmp.eq.s32.totalorder %s34, 0
    %p486 = por %p484, %p485
    %s488 = sadd.s32 %s487, 1
    %p491 = scmp.eq.s32.totalorder %s28, 1
    %p492 = scmp.ne.s32.totalorder %s487, %s489
    %p493 = scmp.eq.s32.totalorder %s28, 0
    %p494 = por %p492, %p493
    %p495 = scmp.ne.s32.totalorder %s487, %s489
    %p496 = scmp.eq.s32.totalorder %s33, 1
    %p497 = por %p495, %p496
    %p498 = scmp.ne.s32.totalorder %s489, %s490
    %p499 = scmp.eq.s32.totalorder %s33, 0
    %p500 = por %p498, %p499
    %p501 = scmp.ne.s32.totalorder %s489, %s490
    %p502 = scmp.eq.s32.totalorder %s34, 1
    %p503 = por %p501, %p502
    %p505 = scmp.ne.s32.totalorder %s490, %s504
    %p506 = scmp.eq.s32.totalorder %s34, 0
    %p507 = por %p505, %p506
    %s508 = ssub.s32 %s28, %s35
    %p509 = scmp.eq.s32.totalorder %s508, 0
    %s511 = sadd.s32 %s510, 1
    %s512 = scalar_select %p509, %s510, %s511
    %p515 = pneg %p509
    %p516 = scmp.eq.s32.totalorder %s28, 1
    %p517 = por %p515, %p516
    %p518 = scmp.ne.s32.totalorder %s510, %s513
    %p519 = scmp.eq.s32.totalorder %s28, 0
    %p520 = por %p518, %p519
    %p521 = scmp.ne.s32.totalorder %s510, %s513
    %p522 = scmp.eq.s32.totalorder %s33, 1
    %p523 = por %p521, %p522
    %p524 = scmp.ne.s32.totalorder %s513, %s514
    %p525 = scmp.eq.s32.totalorder %s33, 0
    %p526 = por %p524, %p525
    %p527 = scmp.ne.s32.totalorder %s513, %s514
    %p528 = scmp.eq.s32.totalorder %s34, 1
    %p529 = por %p527, %p528
    %p531 = scmp.ne.s32.totalorder %s514, %s530
    %p532 = scmp.eq.s32.totalorder %s34, 0
    %p533 = por %p531, %p532
    %p534 = scmp.le.s32.totalorder 1, %s28
    %p535 = scmp.lt.s32.totalorder %s28, 3
    %p536 = pnand %p534, %p535
    %p537 = pneg %p536
    // Predicated region
    $region9: #{mae_decoder_forward.1} parent=5 // pred_check
      _
    $region10: #{mae_decoder_forward.1} parent=5 // pred_check_branch
      %539 = sbr.rel (%p536) target = $region12
    $region11: #{mae_decoder_forward.1} parent=5 // pred_region
      %s540 = ssub.s32 %s28, 1
      // Predicated region
      $region13: #{mae_decoder_forward.1} parent=11 // pred_check
        %p541 = pneg %p101
      $region14: #{mae_decoder_forward.1} parent=11 // pred_check_branch
        %543 = sbr.rel (%p541) target = $region16
      $region15: #{mae_decoder_forward.1} parent=11 // pred_region
        _
      $region16: #{mae_decoder_forward.1} parent=11 // pred_fallthru
        _
      // Predicated region
      $region17: #{mae_decoder_forward.1} parent=11 // pred_check
        %p544 = pneg %p122
      $region18: #{mae_decoder_forward.1} parent=11 // pred_check_branch
        %546 = sbr.rel (%p544) target = $region20
      $region19: #{mae_decoder_forward.1} parent=11 // pred_region
        _
      $region20: #{mae_decoder_forward.1} parent=11 // pred_fallthru
        _
      // Predicated region
      $region21: #{mae_decoder_forward.1} parent=11 // pred_check
        %p547 = pneg %p143
      $region22: #{mae_decoder_forward.1} parent=11 // pred_check_branch
        %549 = sbr.rel (%p547) target = $region24
      $region23: #{mae_decoder_forward.1} parent=11 // pred_region
        _
      $region24: #{mae_decoder_forward.1} parent=11 // pred_fallthru
        _
      // Predicated region
      $region25: #{mae_decoder_forward.1} parent=11 // pred_check
        %p550 = pneg %p164
      $region26: #{mae_decoder_forward.1} parent=11 // pred_check_branch
        %552 = sbr.rel (%p550) target = $region28
      $region27: #{mae_decoder_forward.1} parent=11 // pred_region
        _
      $region28: #{mae_decoder_forward.1} parent=11 // pred_fallthru
        _
      // Predicated region
      $region29: #{mae_decoder_forward.1} parent=11 // pred_check
        %p553 = pneg %p185
      $region30: #{mae_decoder_forward.1} parent=11 // pred_check_branch
        %555 = sbr.rel (%p553) target = $region32
      $region31: #{mae_decoder_forward.1} parent=11 // pred_region
        _
      $region32: #{mae_decoder_forward.1} parent=11 // pred_fallthru
        _
      // Predicated region
      $region33: #{mae_decoder_forward.1} parent=11 // pred_check
        %p556 = pneg %p206
      $region34: #{mae_decoder_forward.1} parent=11 // pred_check_branch
        %558 = sbr.rel (%p556) target = $region36
      $region35: #{mae_decoder_forward.1} parent=11 // pred_region
        _
      $region36: #{mae_decoder_forward.1} parent=11 // pred_fallthru
        _
      // Predicated region
      $region37: #{mae_decoder_forward.1} parent=11 // pred_check
        %p559 = pneg %p227
      $region38: #{mae_decoder_forward.1} parent=11 // pred_check_branch
        %561 = sbr.rel (%p559) target = $region40
      $region39: #{mae_decoder_forward.1} parent=11 // pred_region
        _
      $region40: #{mae_decoder_forward.1} parent=11 // pred_fallthru
        _
      // Predicated region
      $region41: #{mae_decoder_forward.1} parent=11 // pred_check
        %p562 = pneg %p248
      $region42: #{mae_decoder_forward.1} parent=11 // pred_check_branch
        %564 = sbr.rel (%p562) target = $region44
      $region43: #{mae_decoder_forward.1} parent=11 // pred_region
        _
      $region44: #{mae_decoder_forward.1} parent=11 // pred_fallthru
        _
      // Predicated region
      $region45: #{mae_decoder_forward.1} parent=11 // pred_check
        %p565 = pneg %p269
      $region46: #{mae_decoder_forward.1} parent=11 // pred_check_branch
        %567 = sbr.rel (%p565) target = $region48
      $region47: #{mae_decoder_forward.1} parent=11 // pred_region
        _
      $region48: #{mae_decoder_forward.1} parent=11 // pred_fallthru
        _
      // Predicated region
      $region49: #{mae_decoder_forward.1} parent=11 // pred_check
        %p568 = pneg %p290
      $region50: #{mae_decoder_forward.1} parent=11 // pred_check_branch
        %570 = sbr.rel (%p568) target = $region52
      $region51: #{mae_decoder_forward.1} parent=11 // pred_region
        _
      $region52: #{mae_decoder_forward.1} parent=11 // pred_fallthru
        _
      // Predicated region
      $region53: #{mae_decoder_forward.1} parent=11 // pred_check
        %p571 = pneg %p311
      $region54: #{mae_decoder_forward.1} parent=11 // pred_check_branch
        %573 = sbr.rel (%p571) target = $region56
      $region55: #{mae_decoder_forward.1} parent=11 // pred_region
        _
      $region56: #{mae_decoder_forward.1} parent=11 // pred_fallthru
        _
      // Predicated region
      $region57: #{mae_decoder_forward.1} parent=11 // pred_check
        %p574 = pneg %p332
      $region58: #{mae_decoder_forward.1} parent=11 // pred_check_branch
        %576 = sbr.rel (%p574) target = $region60
      $region59: #{mae_decoder_forward.1} parent=11 // pred_region
        _
      $region60: #{mae_decoder_forward.1} parent=11 // pred_fallthru
        _
      // Predicated region
      $region61: #{mae_decoder_forward.1} parent=11 // pred_check
        %p577 = pneg %p353
      $region62: #{mae_decoder_forward.1} parent=11 // pred_check_branch
        %579 = sbr.rel (%p577) target = $region64
      $region63: #{mae_decoder_forward.1} parent=11 // pred_region
        _
      $region64: #{mae_decoder_forward.1} parent=11 // pred_fallthru
        _
      // Predicated region
      $region65: #{mae_decoder_forward.1} parent=11 // pred_check
        %p580 = pneg %p374
      $region66: #{mae_decoder_forward.1} parent=11 // pred_check_branch
        %582 = sbr.rel (%p580) target = $region68
      $region67: #{mae_decoder_forward.1} parent=11 // pred_region
        _
      $region68: #{mae_decoder_forward.1} parent=11 // pred_fallthru
        _
      // Predicated region
      $region69: #{mae_decoder_forward.1} parent=11 // pred_check
        %p583 = pneg %p395
      $region70: #{mae_decoder_forward.1} parent=11 // pred_check_branch
        %585 = sbr.rel (%p583) target = $region72
      $region71: #{mae_decoder_forward.1} parent=11 // pred_region
        _
      $region72: #{mae_decoder_forward.1} parent=11 // pred_fallthru
        _
      // Predicated region
      $region73: #{mae_decoder_forward.1} parent=11 // pred_check
        %p586 = pneg %p416
      $region74: #{mae_decoder_forward.1} parent=11 // pred_check_branch
        %588 = sbr.rel (%p586) target = $region76
      $region75: #{mae_decoder_forward.1} parent=11 // pred_region
        _
      $region76: #{mae_decoder_forward.1} parent=11 // pred_fallthru
        _
      // Predicated region
      $region77: #{mae_decoder_forward.1} parent=11 // pred_check
        %p589 = pneg %p437
      $region78: #{mae_decoder_forward.1} parent=11 // pred_check_branch
        %591 = sbr.rel (%p589) target = $region80
      $region79: #{mae_decoder_forward.1} parent=11 // pred_region
        _
      $region80: #{mae_decoder_forward.1} parent=11 // pred_fallthru
        _
      // Predicated region
      $region81: #{mae_decoder_forward.1} parent=11 // pred_check
        %p592 = pneg %p458
      $region82: #{mae_decoder_forward.1} parent=11 // pred_check_branch
        %594 = sbr.rel (%p592) target = $region84
      $region83: #{mae_decoder_forward.1} parent=11 // pred_region
        _
      $region84: #{mae_decoder_forward.1} parent=11 // pred_fallthru
        _
      // Predicated region
      $region85: #{mae_decoder_forward.1} parent=11 // pred_check
        %p595 = pneg %p479
      $region86: #{mae_decoder_forward.1} parent=11 // pred_check_branch
        %597 = sbr.rel (%p595) target = $region88
      $region87: #{mae_decoder_forward.1} parent=11 // pred_region
        _
      $region88: #{mae_decoder_forward.1} parent=11 // pred_fallthru
        _
      // Predicated region
      $region89: #{mae_decoder_forward.1} parent=11 // pred_check
        %p598 = pneg %p500
      $region90: #{mae_decoder_forward.1} parent=11 // pred_check_branch
        %600 = sbr.rel (%p598) target = $region92
      $region91: #{mae_decoder_forward.1} parent=11 // pred_region
        _
      $region92: #{mae_decoder_forward.1} parent=11 // pred_fallthru
        _
    $region12: #{mae_decoder_forward.1} parent=5 // pred_fallthru
      _
    %p601 = scmp.lt.s32.totalorder %s28, 2
    // Predicated region
    $region93: #{mae_decoder_forward.1} parent=5 // pred_check
      %p602 = pneg %p601
    $region94: #{mae_decoder_forward.1} parent=5 // pred_check_branch
      %604 = sbr.rel (%p602) target = $region96
    $region95: #{mae_decoder_forward.1} parent=5 // pred_region
      // Predicated region
      $region97: #{mae_decoder_forward.1} parent=95 // pred_check
        %p605 = pneg %p48
      $region98: #{mae_decoder_forward.1} parent=95 // pred_check_branch
        %607 = sbr.rel (%p605) target = $region100
      $region99: #{mae_decoder_forward.1} parent=95 // pred_region
        %p608 = scmp.lt.s32.totalorder %s28, 1
        %s609 = scalar_select %p608, %s28, 1
        %s610 = smul.addr %s609, 5
        %s611 = smul.addr %s610, 8
        %s612 = scalar_lea.vmem %s0, %s611
      $region100: #{mae_decoder_forward.1} parent=95 // pred_fallthru
        _
      // Predicated region
      $region101: #{mae_decoder_forward.1} parent=95 // pred_check
        %p613 = pneg %p74
      $region102: #{mae_decoder_forward.1} parent=95 // pred_check_branch
        %615 = sbr.rel (%p613) target = $region104
      $region103: #{mae_decoder_forward.1} parent=95 // pred_region
        %p616 = scmp.lt.s32.totalorder %s28, 1
        %s617 = scalar_select %p616, %s28, 1
        %s618 = smul.addr %s617, 2
        %s619 = smul.addr %s618, 8
        %s620 = scalar_lea.vmem %s1, %s619
      $region104: #{mae_decoder_forward.1} parent=95 // pred_fallthru
        _
    $region96: #{mae_decoder_forward.1} parent=5 // pred_fallthru
      _
    %p621 = scmp.le.s32.totalorder 1, %s28
    %p622 = scmp.lt.s32.totalorder %s28, 3
    %p623 = pnand %p621, %p622
    %p624 = pneg %p623
    // Predicated region
    $region105: #{mae_decoder_forward.1} parent=5 // pred_check
      _
    $region106: #{mae_decoder_forward.1} parent=5 // pred_check_branch
      %626 = sbr.rel (%p623) target = $region108
    $region107: #{mae_decoder_forward.1} parent=5 // pred_region
      %s627 = ssub.s32 %s28, 1
      %p628 = scmp.lt.s32.totalorder %s33, 1
      %s629 = scalar_select %p628, %s33, 1
      %s630 = smul.addr %s629, 5
      %s631 = smul.addr %s630, 8
      %s632 = scalar_lea.vmem %s0, %s631
      %p633 = pneg %p54
      %p634 = pneg %p51
      %p635 = scmp.lt.s32.totalorder %s33, 1
      %s636 = scalar_select %p635, %s33, 1
      %s637 = smul.addr %s636, 2
      %s638 = smul.addr %s637, 8
      %s639 = scalar_lea.vmem %s1, %s638
      %p640 = pneg %p80
      %p641 = pneg %p77
      %p642 = pneg %p101
      %p643 = pneg %p98
      %p644 = pneg %p122
      %p645 = pneg %p119
      %p646 = pneg %p143
      %p647 = pneg %p140
      %p648 = pneg %p164
      %p649 = pneg %p161
      %p650 = pneg %p185
      %p651 = pneg %p182
      %p652 = pneg %p206
      %p653 = pneg %p203
      %p654 = pneg %p227
      %p655 = pneg %p224
      %p656 = pneg %p248
      %p657 = pneg %p245
      %p658 = pneg %p269
      %p659 = pneg %p266
      %p660 = pneg %p290
      %p661 = pneg %p287
      %p662 = pneg %p311
      %p663 = pneg %p308
      %p664 = pneg %p332
      %p665 = pneg %p329
      %p666 = pneg %p353
      %p667 = pneg %p350
      %p668 = pneg %p374
      %p669 = pneg %p371
      %p670 = pneg %p395
      %p671 = pneg %p392
      %p672 = pneg %p416
      %p673 = pneg %p413
      %p674 = pneg %p437
      %p675 = pneg %p434
      %p676 = pneg %p458
      %p677 = pneg %p455
      %p678 = pneg %p479
      %p679 = pneg %p476
      %p680 = pneg %p500
      %p681 = pneg %p497
      %p682 = pneg %p526
      %p683 = pneg %p523
      %s684 = smul.u32 2, %s33
      %p685 = scmp.lt.s32.totalorder %s684, 3
      %s686 = scalar_select %p685, %s684, 3
      %s687 = smul.addr %s686, 3
      %s688 = smul.addr %s687, 8
      %s689 = scalar_lea.vmem %s22, %s688
      %p690 = scmp.lt.s32.totalorder %s33, 1
      %s691 = scalar_select %p690, %s33, 1
      %s692 = smul.addr %s691, 5
      %s693 = smul.addr %s692, 8
      %s694 = scalar_lea.vmem %s0, %s693
      %p695 = scmp.lt.s32.totalorder %s33, 1
      %s696 = scalar_select %p695, %s33, 1
      %s697 = smul.addr %s696, 2
      %s698 = smul.addr %s697, 8
      %s699 = scalar_lea.vmem %s1, %s698
      %s700 = smul.u32 2, %s33
      %p701 = scmp.lt.s32.totalorder %s700, 3
      %s702 = scalar_select %p701, %s700, 3
      %s703 = smul.addr %s702, 3
      %s704 = smul.addr %s703, 8
      %s705 = scalar_lea.vmem %s22, %s704
      %s706 = smul.u32 2, %s33
      %v708 = vld [vmem:[%s694] sm:$0xff]
      %v709 = vld [vmem:[%s694 + $0x8] sm:$0xff]
      %v710 = vld [vmem:[%s694 + $0x10] sm:$0xff]
      %v711 = vld [vmem:[%s694 + $0x18] sm:$0xff]
      %v712 = vld [vmem:[%s694 + $0x20] sm:$0x3]
      %v713 = vld [vmem:[%s699] sm:$0xff]
      %v714 = vld [vmem:[%s699 + $0x8] sm:$0xf]
      %v715 = vld [vmem:[%s2] sm:$0xff]
      %v716 = vld [vmem:[%s2 + $0x8] sm:$0xff]
      %v717 = vld [vmem:[%s2 + $0x10] sm:$0xff]
      %v718 = vld [vmem:[%s2 + $0x18] sm:$0xff]
      %v719 = vld [vmem:[%s2 + $0x20] sm:$0x3]
      %vm720 = vcmask 97280
      %v722 = vsel %vm720, %v708, 0
      %v725 = vsel %vm720, %v709, 0
      %v728 = vsel %vm720, %v710, 0
      %v731 = vsel %vm720, %v711, 0
      %v734 = vsel %vm720, %v712, 0
      %vm736 = vcmask 1043456
      %v738 = vsel %vm736, %v714, 0
      %740 = vmatprep.subr.mxu0 0.0
      %741 = vmatpush1.msra.mxu0 %v713
      %742 = vmatprep.subr.mxu0 0.0
      %743 = vmatpush1.msra.mxu0 %v738
      %744 = vmatprep.subr.mxu0 0.0
      %745 = vmatpush1.msra.mxu0 0.0
      %746 = vmatprep.subr.mxu0 0.0
      %747 = vmatpush1.msra.mxu0 0.0
      %748 = vmatprep.subr.mxu0 0.0
      %749 = vmatpush1.msra.mxu0 0.0
      %750 = vmatprep.subr.mxu0 0.0
      %751 = vmatpush1.msra.mxu0 0.0
      %752 = vmatprep.subr.mxu0 0.0
      %753 = vmatpush1.msra.mxu0 0.0
      %754 = vmatprep.subr.mxu0 0.0
      %755 = vmatpush1.msra.mxu0 0.0
      %756 = vmatprep.subr.mxu0 0.0
      %757 = vmatpush1.msra.mxu0 0.0
      %758 = vmatprep.subr.mxu0 0.0
      %759 = vmatpush1.msra.mxu0 0.0
      %760 = vmatprep.subr.mxu0 0.0
      %761 = vmatpush1.msra.mxu0 0.0
      %762 = vmatprep.subr.mxu0 0.0
      %763 = vmatpush1.msra.mxu0 0.0
      %764 = vmatprep.subr.mxu0 0.0
      %765 = vmatpush1.msra.mxu0 0.0
      %766 = vmatprep.subr.mxu0 0.0
      %767 = vmatpush1.msra.mxu0 0.0
      %768 = vmatprep.subr.mxu0 0.0
      %769 = vmatpush1.msra.mxu0 0.0
      %770 = vmatprep.subr.mxu0 0.0
      %771 = vmatpush1.msra.mxu0 0.0
      %772 = vmatprep.subr.mxu0 0.0
      %773 = vmatpush1.msra.mxu0 0.0
      %774 = vmatprep.subr.mxu0 0.0
      %775 = vmatpush1.msra.mxu0 0.0
      %776 = vmatprep.subr.mxu0 0.0
      %777 = vmatpush1.msra.mxu0 0.0
      %778 = vmatprep.subr.mxu0 0.0
      %779 = vmatpush1.msra.mxu0 0.0
      %780 = vmatprep.subr.mxu0 0.0
      %781 = vmatpush1.msra.mxu0 0.0
      %782 = vmatprep.subr.mxu0 0.0
      %783 = vmatpush1.msra.mxu0 0.0
      %784 = vmatprep.subr.mxu0 0.0
      %785 = vmatpush1.msra.mxu0 0.0
      %786 = vmatprep.subr.mxu0 0.0
      %787 = vmatpush1.msra.mxu0 0.0
      %788 = vmatprep.subr.mxu0 0.0
      %789 = vmatpush1.msra.mxu0 0.0
      %790 = vmatprep.subr.mxu0 0.0
      %791 = vmatpush1.msra.mxu0 0.0
      %792 = vmatprep.subr.mxu0 0.0
      %793 = vmatpush1.msra.mxu0 0.0
      %794 = vmatprep.subr.mxu0 0.0
      %795 = vmatpush1.msra.mxu0 0.0
      %796 = vmatprep.subr.mxu0 0.0
      %797 = vmatpush1.msra.mxu0 0.0
      %798 = vmatprep.subr.mxu0 0.0
      %799 = vmatpush1.msra.mxu0 0.0
      %800 = vmatprep.subr.mxu0 0.0
      %801 = vmatpush1.msra.mxu0 0.0
      %802 = vmatprep.subr.mxu0 0.0
      %803 = vmatpush1.msra.mxu0 0.0
      %804 = vmatprep.mubr.f32.mxu0 0.0
      %805 = vmatmul.mubr.f32.gmra.mrb[0].mxu0 %v722
      %v806 = vpop.f32.mrb[0].mxu0
      %v807 = vadd.f32 %v715, %v806
      %v808 = vpop.f32.mrb[0].mxu0
      %809 = vmatprep.mubr.f32.mxu0 0.0
      %810 = vmatmul.mubr.f32.gmra.mrb[0].mxu0 %v725
      %v811 = vpop.f32.mrb[0].mxu0
      %v812 = vadd.f32 %v716, %v811
      %v813 = vpop.f32.mrb[0].mxu0
      %814 = vmatprep.mubr.f32.mxu0 0.0
      %815 = vmatmul.mubr.f32.gmra.mrb[0].mxu0 %v728
      %v816 = vpop.f32.mrb[0].mxu0
      %v817 = vadd.f32 %v717, %v816
      %v818 = vpop.f32.mrb[0].mxu0
      %819 = vmatprep.mubr.f32.mxu0 0.0
      %820 = vmatmul.mubr.f32.gmra.mrb[0].mxu0 %v731
      %v821 = vpop.f32.mrb[0].mxu0
      %v822 = vadd.f32 %v718, %v821
      %v823 = vpop.f32.mrb[0].mxu0
      %824 = vmatprep.mubr.f32.mxu0 0.0
      %825 = vmatmul.mubr.f32.gmra.mrb[0].mxu0 %v734
      %v826 = vpop.f32.mrb[0].mxu0
      %v827 = vadd.f32 %v719, %v826
      %v828 = vpop.f32.mrb[0].mxu0
      %829 = vdwg.mxu0
      %v830 = vld [vmem:[%s3] sm:$0xff]
      %v831 = vld [vmem:[%s3 + $0x8] sm:$0xff]
      %v832 = vld [vmem:[%s3 + $0x10] sm:$0xff]
      %v833 = vld [vmem:[%s3 + $0x18] sm:$0xff]
      %v834 = vld [vmem:[%s3 + $0x20] sm:$0x3]
      %v835 = vld [vmem:[%s4] sm:$0x1]
      %v836 = vld [vmem:[%s5] sm:$0x1]
      %vm837 = vcmask 261120
      %v838 = vsel %vm837, %v807, 0.0
      %839 = vadd.xlane.f32.xlu0 %v838
      %v840 = vpop.xlane.xlu0 %839
      %v841 = vsel %vm837, %v812, 0.0
      %842 = vadd.xlane.f32.xlu0 %v841
      %v843 = vpop.xlane.xlu0 %842
      %v844 = vsel %vm837, %v817, 0.0
      %845 = vadd.xlane.f32.xlu0 %v844
      %v846 = vpop.xlane.xlu0 %845
      %v847 = vsel %vm837, %v822, 0.0
      %848 = vadd.xlane.f32.xlu0 %v847
      %v849 = vpop.xlane.xlu0 %848
      %vm850 = vcmask 254976
      %v851 = vsel %vm850, %v827, 0.0
      %852 = vadd.xlane.f32.xlu0 %v851
      %v853 = vpop.xlane.xlu0 %852
      %v854 = vrcp.pop 32.0
      %v855 = vmul.f32 %v840, %v854
      %v856 = vmul.f32 %v843, %v854
      %v857 = vmul.f32 %v846, %v854
      %v858 = vmul.f32 %v849, %v854
      %v859 = vmul.f32 %v853, %v854
      %v860 = vsub.f32 %v807, %v855
      %v861 = vsub.f32 %v812, %v856
      %v862 = vsub.f32 %v817, %v857
      %v863 = vsub.f32 %v822, %v858
      %v864 = vsub.f32 %v827, %v859
      %v865 = vmul.f32 %v860, %v860
      %v866 = vmul.f32 %v861, %v861
      %v867 = vmul.f32 %v862, %v862
      %v868 = vmul.f32 %v863, %v863
      %v869 = vmul.f32 %v864, %v864
      %v870 = vsel %vm837, %v865, 0.0
      %871 = vadd.xlane.f32.xlu0 %v870
      %v872 = vpop.xlane.xlu0 %871
      %v873 = vsel %vm837, %v866, 0.0
      %874 = vadd.xlane.f32.xlu0 %v873
      %v875 = vpop.xlane.xlu0 %874
      %v876 = vsel %vm837, %v867, 0.0
      %877 = vadd.xlane.f32.xlu0 %v876
      %v878 = vpop.xlane.xlu0 %877
      %v879 = vsel %vm837, %v868, 0.0
      %880 = vadd.xlane.f32.xlu0 %v879
      %v881 = vpop.xlane.xlu0 %880
      %v882 = vsel %vm850, %v869, 0.0
      %883 = vadd.xlane.f32.xlu0 %v882
      %v884 = vpop.xlane.xlu0 %883
      %v885 = vmul.f32 %v872, %v854
      %v886 = vmul.f32 %v875, %v854
      %v887 = vmul.f32 %v878, %v854
      %v888 = vmul.f32 %v881, %v854
      %v889 = vmul.f32 %v884, %v854
      %v890 = vadd.f32 %v885, 1e-05
      %v891 = vadd.f32 %v886, 1e-05
      %v892 = vadd.f32 %v887, 1e-05
      %v893 = vadd.f32 %v888, 1e-05
      %v894 = vadd.f32 %v889, 1e-05
      %v895 = vrsqrt.pop %v890
      %v896 = vrsqrt.pop %v891
      %v897 = vrsqrt.pop %v892
      %v898 = vrsqrt.pop %v893
      %v899 = vrsqrt.pop %v894
      %v900 = vmul.f32 %v860, %v895
      %v901 = vmul.f32 %v861, %v896
      %v902 = vmul.f32 %v862, %v897
      %v903 = vmul.f32 %v863, %v898
      %v904 = vmul.f32 %v864, %v899
      %v906 = vlaneseq
      %v907 = vshrl.u32 %v906, 7
      %v908 = vsub.s32 0, %v907
      %v909 = vrot.slane %v835, %v908
      %v911 = vmul.f32 %v900, %v909
      %v912 = vmul.f32 %v901, %v909
      %v913 = vmul.f32 %v902, %v909
      %v914 = vmul.f32 %v903, %v909
      %v915 = vmul.f32 %v904, %v909
      %v917 = vlaneseq
      %v918 = vshrl.u32 %v917, 7
      %v919 = vsub.s32 0, %v918
      %v920 = vrot.slane %v836, %v919
      %v922 = vadd.f32 %v911, %v920
      %v923 = vadd.f32 %v912, %v920
      %v924 = vadd.f32 %v913, %v920
      %v925 = vadd.f32 %v914, %v920
      %v926 = vadd.f32 %v915, %v920
      %v927 = vpack.c.bf16 %v923, %v922
      %v928 = vpack.c.bf16 %v925, %v924
      %v929 = vpack.c.bf16 %v926, %v926
      %v930 = vld [vmem:[%s6] sm:$0xf]
      %v931 = vld [vmem:[%s6 + $0x4] sm:$0xf]
      %v932 = vld [vmem:[%s6 + $0x8] sm:$0xf]
      %v933 = vld [vmem:[%s6 + $0xc] sm:$0xf]
      %v934 = vld [vmem:[%s7] sm:$0x1]
      %v936 = vlaneseq
      %v937 = vshrl.u32 %v936, 7
      %v938 = vsub.s32 0, %v937
      %v939 = vrot.slane %v934, %v938
      %v945 = vunpack.c.l.b16 %v930
      %v946 = vunpack.c.l.b16 %v931
      %v947 = vunpack.c.l.b16 %v932
      %v948 = vunpack.c.l.b16 %v933
      %v949 = vpack.c.b16 %v946, %v945
      %v950 = vpack.c.b16 %v948, %v947
      %v954 = vsel %vm837, %v927, 0
      %v957 = vsel %vm837, %v928, 0
      %v960 = vsel %vm837, %v929, 0
      %962 = vmatprep.subr.bf16.mxu0 0
      %963 = vmatpush1.bf16.msra.mxu0 %v949
      %964 = vmatprep.subr.bf16.mxu0 0
      %965 = vmatpush1.bf16.msra.mxu0 %v950
      %966 = vmatprep.subr.bf16.mxu0 0
      %967 = vmatpush1.bf16.msra.mxu0 0
      %968 = vmatprep.subr.bf16.mxu0 0
      %969 = vmatpush1.bf16.msra.mxu0 0
      %970 = vmatprep.subr.bf16.mxu0 0
      %971 = vmatpush1.bf16.msra.mxu0 0
      %972 = vmatprep.subr.bf16.mxu0 0
      %973 = vmatpush1.bf16.msra.mxu0 0
      %974 = vmatprep.subr.bf16.mxu0 0
      %975 = vmatpush1.bf16.msra.mxu0 0
      %976 = vmatprep.subr.bf16.mxu0 0
      %977 = vmatpush1.bf16.msra.mxu0 0
      %978 = vmatprep.subr.bf16.mxu0 0
      %979 = vmatpush1.bf16.msra.mxu0 0
      %980 = vmatprep.subr.bf16.mxu0 0
      %981 = vmatpush1.bf16.msra.mxu0 0
      %982 = vmatprep.subr.bf16.mxu0 0
      %983 = vmatpush1.bf16.msra.mxu0 0
      %984 = vmatprep.subr.bf16.mxu0 0
      %985 = vmatpush1.bf16.msra.mxu0 0
      %986 = vmatprep.subr.bf16.mxu0 0
      %987 = vmatpush1.bf16.msra.mxu0 0
      %988 = vmatprep.subr.bf16.mxu0 0
      %989 = vmatpush1.bf16.msra.mxu0 0
      %990 = vmatprep.subr.bf16.mxu0 0
      %991 = vmatpush1.bf16.msra.mxu0 0
      %992 = vmatprep.subr.bf16.mxu0 0
      %993 = vmatpush1.bf16.msra.mxu0 0
      %994 = vmatprep.mubr.bf16.mxu0 0
      %995 = vmatmul.mubr.bf16.gmra.mrb[0].mxu0 %v954
      %v996 = vpop.f32.mrb[0].mxu0
      %v997 = vadd.f32 %v939, %v996
      %v998 = vpop.f32.mrb[0].mxu0
      %v999 = vpop.f32.mrb[0].mxu0
      %v1000 = vadd.f32 %v939, %v999
      %v1001 = vpop.f32.mrb[0].mxu0
      %1002 = vmatprep.mubr.bf16.mxu0 0
      %1003 = vmatmul.mubr.bf16.gmra.mrb[0].mxu0 %v957
      %v1004 = vpop.f32.mrb[0].mxu0
      %v1005 = vadd.f32 %v939, %v1004
      %v1006 = vpop.f32.mrb[0].mxu0
      %v1007 = vpop.f32.mrb[0].mxu0
      %v1008 = vadd.f32 %v939, %v1007
      %v1009 = vpop.f32.mrb[0].mxu0
      %1010 = vmatprep.mubr.bf16.mxu0 0
      %1011 = vmatmul.mubr.bf16.gmra.mrb[0].mxu0 %v960
      %v1012 = vpop.f32.mrb[0].mxu0
      %v1013 = vadd.f32 %v939, %v1012
      %v1014 = vpop.f32.mrb[0].mxu0
      %v1015 = vpop.f32.mrb[0].mxu0
      %v1016 = vpop.f32.mrb[0].mxu0
      %1017 = vdwg.mxu0
      %v1018 = vld [vmem:[%s8] sm:$0xf]
      %v1019 = vld [vmem:[%s8 + $0x4] sm:$0xf]
      %v1020 = vld [vmem:[%s8 + $0x8] sm:$0xf]
      %v1021 = vld [vmem:[%s8 + $0xc] sm:$0xf]
      %v1022 = vld [vmem:[%s9] sm:$0x1]
      %v1024 = vlaneseq
      %v1025 = vshrl.u32 %v1024, 7
      %v1026 = vsub.s32 0, %v1025
      %v1027 = vrot.slane %v1022, %v1026
      %v1033 = vunpack.c.l.b16 %v1018
      %v1034 = vunpack.c.l.b16 %v1019
      %v1035 = vunpack.c.l.b16 %v1020
      %v1036 = vunpack.c.l.b16 %v1021
      %v1037 = vpack.c.b16 %v1034, %v1033
      %v1038 = vpack.c.b16 %v1036, %v1035
      %1041 = vmatprep.subr.bf16.mxu0 0
      %1042 = vmatpush1.bf16.msra.mxu0 %v1037
      %1043 = vmatprep.subr.bf16.mxu0 0
      %1044 = vmatpush1.bf16.msra.mxu0 %v1038
      %1045 = vmatprep.subr.bf16.mxu0 0
      %1046 = vmatpush1.bf16.msra.mxu0 0
      %1047 = vmatprep.subr.bf16.mxu0 0
      %1048 = vmatpush1.bf16.msra.mxu0 0
      %1049 = vmatprep.subr.bf16.mxu0 0
      %1050 = vmatpush1.bf16.msra.mxu0 0
      %1051 = vmatprep.subr.bf16.mxu0 0
      %1052 = vmatpush1.bf16.msra.mxu0 0
      %1053 = vmatprep.subr.bf16.mxu0 0
      %1054 = vmatpush1.bf16.msra.mxu0 0
      %1055 = vmatprep.subr.bf16.mxu0 0
      %1056 = vmatpush1.bf16.msra.mxu0 0
      %1057 = vmatprep.subr.bf16.mxu0 0
      %1058 = vmatpush1.bf16.msra.mxu0 0
      %1059 = vmatprep.subr.bf16.mxu0 0
      %1060 = vmatpush1.bf16.msra.mxu0 0
      %1061 = vmatprep.subr.bf16.mxu0 0
      %1062 = vmatpush1.bf16.msra.mxu0 0
      %1063 = vmatprep.subr.bf16.mxu0 0
      %1064 = vmatpush1.bf16.msra.mxu0 0
      %1065 = vmatprep.subr.bf16.mxu0 0
      %1066 = vmatpush1.bf16.msra.mxu0 0
      %1067 = vmatprep.subr.bf16.mxu0 0
      %1068 = vmatpush1.bf16.msra.mxu0 0
      %1069 = vmatprep.subr.bf16.mxu0 0
      %1070 = vmatpush1.bf16.msra.mxu0 0
      %1071 = vmatprep.subr.bf16.mxu0 0
      %1072 = vmatpush1.bf16.msra.mxu0 0
      %1073 = vmatprep.mubr.bf16.mxu0 0
      %1074 = vmatmul.mubr.bf16.gmra.mrb[0].mxu0 %v954
      %v1075 = vpop.f32.mrb[0].mxu0
      %v1076 = vadd.f32 %v1027, %v1075
      %v1077 = vpop.f32.mrb[0].mxu0
      %v1078 = vpop.f32.mrb[0].mxu0
      %v1079 = vadd.f32 %v1027, %v1078
      %v1080 = vpop.f32.mrb[0].mxu0
      %1081 = vmatprep.mubr.bf16.mxu0 0
      %1082 = vmatmul.mubr.bf16.gmra.mrb[0].mxu0 %v957
      %v1083 = vpop.f32.mrb[0].mxu0
      %v1084 = vadd.f32 %v1027, %v1083
      %v1085 = vpop.f32.mrb[0].mxu0
      %v1086 = vpop.f32.mrb[0].mxu0
      %v1087 = vadd.f32 %v1027, %v1086
      %v1088 = vpop.f32.mrb[0].mxu0
      %1089 = vmatprep.mubr.bf16.mxu0 0
      %1090 = vmatmul.mubr.bf16.gmra.mrb[0].mxu0 %v960
      %v1091 = vpop.f32.mrb[0].mxu0
      %v1092 = vadd.f32 %v1027, %v1091
      %v1093 = vpop.f32.mrb[0].mxu0
      %v1094 = vpop.f32.mrb[0].mxu0
      %v1095 = vpop.f32.mrb[0].mxu0
      %1096 = vdwg.mxu0
      %v1097 = vld [vmem:[%s10] sm:$0xf]
      %v1098 = vld [vmem:[%s10 + $0x4] sm:$0xf]
      %v1099 = vld [vmem:[%s10 + $0x8] sm:$0xf]
      %v1100 = vld [vmem:[%s10 + $0xc] sm:$0xf]
      %v1101 = vld [vmem:[%s11] sm:$0x1]
      %v1103 = vlaneseq
      %v1104 = vshrl.u32 %v1103, 7
      %v1105 = vsub.s32 0, %v1104
      %v1106 = vrot.slane %v1101, %v1105
      %v1112 = vunpack.c.l.b16 %v1097
      %v1113 = vunpack.c.l.b16 %v1098
      %v1114 = vunpack.c.l.b16 %v1099
      %v1115 = vunpack.c.l.b16 %v1100
      %v1116 = vpack.c.b16 %v1113, %v1112
      %v1117 = vpack.c.b16 %v1115, %v1114
      %1120 = vmatprep.subr.bf16.mxu0 0
      %1121 = vmatpush1.bf16.msra.mxu0 %v1116
      %1122 = vmatprep.subr.bf16.mxu0 0
      %1123 = vmatpush1.bf16.msra.mxu0 %v1117
      %1124 = vmatprep.subr.bf16.mxu0 0
      %1125 = vmatpush1.bf16.msra.mxu0 0
      %1126 = vmatprep.subr.bf16.mxu0 0
      %1127 = vmatpush1.bf16.msra.mxu0 0
      %1128 = vmatprep.subr.bf16.mxu0 0
      %1129 = vmatpush1.bf16.msra.mxu0 0
      %1130 = vmatprep.subr.bf16.mxu0 0
      %1131 = vmatpush1.bf16.msra.mxu0 0
      %1132 = vmatprep.subr.bf16.mxu0 0
      %1133 = vmatpush1.bf16.msra.mxu0 0
      %1134 = vmatprep.subr.bf16.mxu0 0
      %1135 = vmatpush1.bf16.msra.mxu0 0
      %1136 = vmatprep.subr.bf16.mxu0 0
      %1137 = vmatpush1.bf16.msra.mxu0 0
      %1138 = vmatprep.subr.bf16.mxu0 0
      %1139 = vmatpush1.bf16.msra.mxu0 0
      %1140 = vmatprep.subr.bf16.mxu0 0
      %1141 = vmatpush1.bf16.msra.mxu0 0
      %1142 = vmatprep.subr.bf16.mxu0 0
      %1143 = vmatpush1.bf16.msra.mxu0 0
      %1144 = vmatprep.subr.bf16.mxu0 0
      %1145 = vmatpush1.bf16.msra.mxu0 0
      %1146 = vmatprep.subr.bf16.mxu0 0
      %1147 = vmatpush1.bf16.msra.mxu0 0
      %1148 = vmatprep.subr.bf16.mxu0 0
      %1149 = vmatpush1.bf16.msra.mxu0 0
      %1150 = vmatprep.subr.bf16.mxu0 0
      %1151 = vmatpush1.bf16.msra.mxu0 0
      %1152 = vmatprep.mubr.bf16.mxu0 0
      %1153 = vmatmul.mubr.bf16.gmra.mrb[0].mxu0 %v954
      %v1154 = vpop.f32.mrb[0].mxu0
      %v1155 = vadd.f32 %v1106, %v1154
      %v1156 = vpop.f32.mrb[0].mxu0
      %v1157 = vpop.f32.mrb[0].mxu0
      %v1158 = vadd.f32 %v1106, %v1157
      %v1159 = vpop.f32.mrb[0].mxu0
      %1160 = vmatprep.mubr.bf16.mxu0 0
      %1161 = vmatmul.mubr.bf16.gmra.mrb[0].mxu0 %v957
      %v1162 = vpop.f32.mrb[0].mxu0
      %v1163 = vadd.f32 %v1106, %v1162
      %v1164 = vpop.f32.mrb[0].mxu0
      %v1165 = vpop.f32.mrb[0].mxu0
      %v1166 = vadd.f32 %v1106, %v1165
      %v1167 = vpop.f32.mrb[0].mxu0
      %1168 = vmatprep.mubr.bf16.mxu0 0
      %1169 = vmatmul.mubr.bf16.gmra.mrb[0].mxu0 %v960
      %v1170 = vpop.f32.mrb[0].mxu0
      %v1171 = vadd.f32 %v1106, %v1170
      %v1172 = vpop.f32.mrb[0].mxu0
      %v1173 = vpop.f32.mrb[0].mxu0
      %v1174 = vpop.f32.mrb[0].mxu0
      %1175 = vdwg.mxu0
      %v1176 = vpack.c.bf16 %v1000, %v997
      %v1177 = vpack.c.bf16 %v1008, %v1005
      %v1178 = vpack.c.bf16 %v1013, %v1013
      %v1179 = vpack.c.bf16 %v1079, %v1076
      %v1180 = vpack.c.bf16 %v1087, %v1084
      %v1181 = vpack.c.bf16 %v1092, %v1092
      %vm1182 = vcmask 64512
      %v1184 = vsel %vm1182, %v1176, 0
      %v1187 = vsel %vm1182, %v1177, 0
      %v1190 = vsel %vm1182, %v1178, 0
      %v1193 = vsel %vm1182, %v1179, 0
      %v1196 = vsel %vm1182, %v1180, 0
      %v1199 = vsel %vm1182, %v1181, 0
      %1201 = vmatprep.subr.bf16.mxu0 0
      %1202 = vmatpush1.bf16.xpose.msra.mxu0 %v1193
      %1203 = vmatprep.subr.bf16.mxu0 0
      %1204 = vmatpush1.bf16.xpose.msra.mxu0 %v1196
      %1205 = vmatprep.subr.bf16.mxu0 0
      %1206 = vmatpush1.bf16.xpose.msra.mxu0 %v1199
      %1207 = vmatprep.subr.bf16.mxu0 0
      %1208 = vmatpush1.bf16.xpose.msra.mxu0 0
      %1209 = vmatprep.subr.bf16.mxu0 0
      %1210 = vmatpush1.bf16.xpose.msra.mxu0 0
      %1211 = vmatprep.subr.bf16.mxu0 0
      %1212 = vmatpush1.bf16.xpose.msra.mxu0 0
      %1213 = vmatprep.subr.bf16.mxu0 0
      %1214 = vmatpush1.bf16.xpose.msra.mxu0 0
      %1215 = vmatprep.subr.bf16.mxu0 0
      %1216 = vmatpush1.bf16.xpose.msra.mxu0 0
      %1217 = vmatprep.subr.bf16.mxu0 0
      %1218 = vmatpush1.bf16.xpose.msra.mxu0 0
      %1219 = vmatprep.subr.bf16.mxu0 0
      %1220 = vmatpush1.bf16.xpose.msra.mxu0 0
      %1221 = vmatprep.subr.bf16.mxu0 0
      %1222 = vmatpush1.bf16.xpose.msra.mxu0 0
      %1223 = vmatprep.subr.bf16.mxu0 0
      %1224 = vmatpush1.bf16.xpose.msra.mxu0 0
      %1225 = vmatprep.subr.bf16.mxu0 0
      %1226 = vmatpush1.bf16.xpose.msra.mxu0 0
      %1227 = vmatprep.subr.bf16.mxu0 0
      %1228 = vmatpush1.bf16.xpose.msra.mxu0 0
      %1229 = vmatprep.subr.bf16.mxu0 0
      %1230 = vmatpush1.bf16.xpose.msra.mxu0 0
      %1231 = vmatprep.subr.bf16.mxu0 0
      %1232 = vmatpush1.bf16.xpose.msra.mxu0 0
      %1233 = vmatprep.mubr.bf16.mxu0 0
      %1234 = vmatmul.mubr.bf16.gmra.mrb[0].mxu0 %v1184
      %v1235 = vpop.f32.mrb[0].mxu0
      %v1236 = vadd.f32 0.0, %v1235
      %v1237 = vpop.f32.mrb[0].mxu0
      %v1238 = vpop.f32.mrb[0].mxu0
      %v1239 = vadd.f32 0.0, %v1238
      %v1240 = vpop.f32.mrb[0].mxu0
      %1241 = vmatprep.mubr.bf16.mxu0 0
      %1242 = vmatmul.mubr.bf16.gmra.mrb[0].mxu0 %v1187
      %v1243 = vpop.f32.mrb[0].mxu0
      %v1244 = vadd.f32 0.0, %v1243
      %v1245 = vpop.f32.mrb[0].mxu0
      %v1246 = vpop.f32.mrb[0].mxu0
      %v1247 = vadd.f32 0.0, %v1246
      %v1248 = vpop.f32.mrb[0].mxu0
      %1249 = vmatprep.mubr.bf16.mxu0 0
      %1250 = vmatmul.mubr.bf16.gmra.mrb[0].mxu0 %v1190
      %v1251 = vpop.f32.mrb[0].mxu0
      %v1252 = vadd.f32 0.0, %v1251
      %v1253 = vpop.f32.mrb[0].mxu0
      %v1254 = vpop.f32.mrb[0].mxu0
      %v1255 = vpop.f32.mrb[0].mxu0
      %1256 = vdwg.mxu0
      %v1257 = vmul.f32 %v1236, 0.35355338
      %v1258 = vmul.f32 %v1239, 0.35355338
      %v1259 = vmul.f32 %v1244, 0.35355338
      %v1260 = vmul.f32 %v1247, 0.35355338
      %v1261 = vmul.f32 %v1252, 0.35355338
      %v1262 = vadd.f32 %v1257, %v830
      %v1263 = vadd.f32 %v1258, %v831
      %v1264 = vadd.f32 %v1259, %v832
      %v1265 = vadd.f32 %v1260, %v833
      %v1266 = vadd.f32 %v1261, %v834
      %vm1267 = vcmask 277504
      %v1268 = vsel %vm1267, %v1262, -inf
      %1269 = vmax.xlane.f32.xlu0 %v1268
      %v1270 = vpop.xlane.xlu0 %1269
      %v1271 = vsel %vm1267, %v1263, -inf
      %1272 = vmax.xlane.f32.xlu0 %v1271
      %v1273 = vpop.xlane.xlu0 %1272
      %v1274 = vsel %vm1267, %v1264, -inf
      %1275 = vmax.xlane.f32.xlu0 %v1274
      %v1276 = vpop.xlane.xlu0 %1275
      %v1277 = vsel %vm1267, %v1265, -inf
      %1278 = vmax.xlane.f32.xlu0 %v1277
      %v1279 = vpop.xlane.xlu0 %1278
      %vm1280 = vcmask 271360
      %v1281 = vsel %vm1280, %v1266, -inf
      %1282 = vmax.xlane.f32.xlu0 %v1281
      %v1283 = vpop.xlane.xlu0 %1282
      %v1284 = vsub.f32 %v1262, %v1270
      %v1285 = vsub.f32 %v1263, %v1273
      %v1286 = vsub.f32 %v1264, %v1276
      %v1287 = vsub.f32 %v1265, %v1279
      %v1288 = vsub.f32 %v1266, %v1283
      %v1289 = vmul.f32 %v1284, 1.442695
      %v1290 = vpow.pop %v1289
      %v1291 = vmul.f32 %v1285, 1.442695
      %v1292 = vpow.pop %v1291
      %v1293 = vmul.f32 %v1286, 1.442695
      %v1294 = vpow.pop %v1293
      %v1295 = vmul.f32 %v1287, 1.442695
      %v1296 = vpow.pop %v1295
      %v1297 = vmul.f32 %v1288, 1.442695
      %v1298 = vpow.pop %v1297
      %v1299 = vsel %vm1267, %v1290, 0.0
      %1300 = vadd.xlane.f32.xlu0 %v1299
      %v1301 = vpop.xlane.xlu0 %1300
      %v1302 = vsel %vm1267, %v1292, 0.0
      %1303 = vadd.xlane.f32.xlu0 %v1302
      %v1304 = vpop.xlane.xlu0 %1303
      %v1305 = vsel %vm1267, %v1294, 0.0
      %1306 = vadd.xlane.f32.xlu0 %v1305
      %v1307 = vpop.xlane.xlu0 %1306
      %v1308 = vsel %vm1267, %v1296, 0.0
      %1309 = vadd.xlane.f32.xlu0 %v1308
      %v1310 = vpop.xlane.xlu0 %1309
      %v1311 = vsel %vm1280, %v1298, 0.0
      %1312 = vadd.xlane.f32.xlu0 %v1311
      %v1313 = vpop.xlane.xlu0 %1312
      %v1314 = vrcp.pop %v1301
      %v1315 = vrcp.pop %v1304
      %v1316 = vrcp.pop %v1307
      %v1317 = vrcp.pop %v1310
      %v1318 = vrcp.pop %v1313
      %v1319 = vmul.f32 %v1290, %v1314
      %v1320 = vmul.f32 %v1292, %v1315
      %v1321 = vmul.f32 %v1294, %v1316
      %v1322 = vmul.f32 %v1296, %v1317
      %v1323 = vmul.f32 %v1298, %v1318
      %v1324 = vpack.c.bf16 %v1320, %v1319
      %v1325 = vpack.c.bf16 %v1322, %v1321
      %v1326 = vpack.c.bf16 %v1323, %v1323
      %v1327 = vpack.c.bf16 %v1158, %v1155
      %v1328 = vpack.c.bf16 %v1166, %v1163
      %v1329 = vpack.c.bf16 %v1171, %v1171
      %v1331 = vsel %vm1267, %v1324, 0
      %v1334 = vsel %vm1267, %v1325, 0
      %v1337 = vsel %vm1267, %v1326, 0
      %vm1339 = vcmask 1040384
      %v1341 = vsel %vm1339, %v1329, 0
      %1343 = vmatprep.subr.bf16.mxu0 0
      %1344 = vmatpush1.bf16.msra.mxu0 %v1327
      %1345 = vmatprep.subr.bf16.mxu0 0
      %1346 = vmatpush1.bf16.msra.mxu0 %v1328
      %1347 = vmatprep.subr.bf16.mxu0 0
      %1348 = vmatpush1.bf16.msra.mxu0 %v1341
      %1349 = vmatprep.subr.bf16.mxu0 0
      %1350 = vmatpush1.bf16.msra.mxu0 0
      %1351 = vmatprep.subr.bf16.mxu0 0
      %1352 = vmatpush1.bf16.msra.mxu0 0
      %1353 = vmatprep.subr.bf16.mxu0 0
      %1354 = vmatpush1.bf16.msra.mxu0 0
      %1355 = vmatprep.subr.bf16.mxu0 0
      %1356 = vmatpush1.bf16.msra.mxu0 0
      %1357 = vmatprep.subr.bf16.mxu0 0
      %1358 = vmatpush1.bf16.msra.mxu0 0
      %1359 = vmatprep.subr.bf16.mxu0 0
      %1360 = vmatpush1.bf16.msra.mxu0 0
      %1361 = vmatprep.subr.bf16.mxu0 0
      %1362 = vmatpush1.bf16.msra.mxu0 0
      %1363 = vmatprep.subr.bf16.mxu0 0
      %1364 = vmatpush1.bf16.msra.mxu0 0
      %1365 = vmatprep.subr.bf16.mxu0 0
      %1366 = vmatpush1.bf16.msra.mxu0 0
      %1367 = vmatprep.subr.bf16.mxu0 0
      %1368 = vmatpush1.bf16.msra.mxu0 0
      %1369 = vmatprep.subr.bf16.mxu0 0
      %1370 = vmatpush1.bf16.msra.mxu0 0
      %1371 = vmatprep.subr.bf16.mxu0 0
      %1372 = vmatpush1.bf16.msra.mxu0 0
      %1373 = vmatprep.subr.bf16.mxu0 0
      %1374 = vmatpush1.bf16.msra.mxu0 0
      %1375 = vmatprep.mubr.bf16.mxu0 0
      %1376 = vmatmul.mubr.bf16.gmra.mrb[0].mxu0 %v1331
      %v1377 = vpop.f32.mrb[0].mxu0
      %v1378 = vadd.f32 0.0, %v1377
      %v1379 = vpop.f32.mrb[0].mxu0
      %v1380 = vpop.f32.mrb[0].mxu0
      %v1381 = vadd.f32 0.0, %v1380
      %v1382 = vpop.f32.mrb[0].mxu0
      %1383 = vmatprep.mubr.bf16.mxu0 0
      %1384 = vmatmul.mubr.bf16.gmra.mrb[0].mxu0 %v1334
      %v1385 = vpop.f32.mrb[0].mxu0
      %v1386 = vadd.f32 0.0, %v1385
      %v1387 = vpop.f32.mrb[0].mxu0
      %v1388 = vpop.f32.mrb[0].mxu0
      %v1389 = vadd.f32 0.0, %v1388
      %v1390 = vpop.f32.mrb[0].mxu0
      %1391 = vmatprep.mubr.bf16.mxu0 0
      %1392 = vmatmul.mubr.bf16.gmra.mrb[0].mxu0 %v1337
      %v1393 = vpop.f32.mrb[0].mxu0
      %v1394 = vadd.f32 0.0, %v1393
      %v1395 = vpop.f32.mrb[0].mxu0
      %v1396 = vpop.f32.mrb[0].mxu0
      %v1397 = vpop.f32.mrb[0].mxu0
      %1398 = vdwg.mxu0
      %v1399 = vpack.c.bf16 %v1381, %v1378
      %v1400 = vpack.c.bf16 %v1389, %v1386
      %v1401 = vpack.c.bf16 %v1394, %v1394
      %v1402 = vld [vmem:[%s12] sm:$0xf]
      %s1403 = scalar_lea.vmem %s6, 16
      %v1404 = vld [vmem:[%s1403] sm:$0xf]
      %v1405 = vld [vmem:[%s1403 + $0x4] sm:$0xf]
      %v1406 = vld [vmem:[%s1403 + $0x8] sm:$0xf]
      %v1407 = vld [vmem:[%s1403 + $0xc] sm:$0xf]
      %s1408 = scalar_lea.vmem %s7, 1
      %v1409 = vld [vmem:[%s1408] sm:$0x1]
      %v1411 = vlaneseq
      %v1412 = vshrl.u32 %v1411, 7
      %v1413 = vsub.s32 0, %v1412
      %v1414 = vrot.slane %v1409, %v1413
      %v1420 = vunpack.c.l.b16 %v1404
      %v1421 = vunpack.c.l.b16 %v1405
      %v1422 = vunpack.c.l.b16 %v1406
      %v1423 = vunpack.c.l.b16 %v1407
      %v1424 = vpack.c.b16 %v1421, %v1420
      %v1425 = vpack.c.b16 %v1423, %v1422
      %1428 = vmatprep.subr.bf16.mxu0 0
      %1429 = vmatpush1.bf16.msra.mxu0 %v1424
      %1430 = vmatprep.subr.bf16.mxu0 0
      %1431 = vmatpush1.bf16.msra.mxu0 %v1425
      %1432 = vmatprep.subr.bf16.mxu0 0
      %1433 = vmatpush1.bf16.msra.mxu0 0
      %1434 = vmatprep.subr.bf16.mxu0 0
      %1435 = vmatpush1.bf16.msra.mxu0 0
      %1436 = vmatprep.subr.bf16.mxu0 0
      %1437 = vmatpush1.bf16.msra.mxu0 0
      %1438 = vmatprep.subr.bf16.mxu0 0
      %1439 = vmatpush1.bf16.msra.mxu0 0
      %1440 = vmatprep.subr.bf16.mxu0 0
      %1441 = vmatpush1.bf16.msra.mxu0 0
      %1442 = vmatprep.subr.bf16.mxu0 0
      %1443 = vmatpush1.bf16.msra.mxu0 0
      %1444 = vmatprep.subr.bf16.mxu0 0
      %1445 = vmatpush1.bf16.msra.mxu0 0
      %1446 = vmatprep.subr.bf16.mxu0 0
      %1447 = vmatpush1.bf16.msra.mxu0 0
      %1448 = vmatprep.subr.bf16.mxu0 0
      %1449 = vmatpush1.bf16.msra.mxu0 0
      %1450 = vmatprep.subr.bf16.mxu0 0
      %1451 = vmatpush1.bf16.msra.mxu0 0
      %1452 = vmatprep.subr.bf16.mxu0 0
      %1453 = vmatpush1.bf16.msra.mxu0 0
      %1454 = vmatprep.subr.bf16.mxu0 0
      %1455 = vmatpush1.bf16.msra.mxu0 0
      %1456 = vmatprep.subr.bf16.mxu0 0
      %1457 = vmatpush1.bf16.msra.mxu0 0
      %1458 = vmatprep.subr.bf16.mxu0 0
      %1459 = vmatpush1.bf16.msra.mxu0 0
      %1460 = vmatprep.mubr.bf16.mxu0 0
      %1461 = vmatmul.mubr.bf16.gmra.mrb[0].mxu0 %v954
      %v1462 = vpop.f32.mrb[0].mxu0
      %v1463 = vadd.f32 %v1414, %v1462
      %v1464 = vpop.f32.mrb[0].mxu0
      %v1465 = vpop.f32.mrb[0].mxu0
      %v1466 = vadd.f32 %v1414, %v1465
      %v1467 = vpop.f32.mrb[0].mxu0
      %1468 = vmatprep.mubr.bf16.mxu0 0
      %1469 = vmatmul.mubr.bf16.gmra.mrb[0].mxu0 %v957
      %v1470 = vpop.f32.mrb[0].mxu0
      %v1471 = vadd.f32 %v1414, %v1470
      %v1472 = vpop.f32.mrb[0].mxu0
      %v1473 = vpop.f32.mrb[0].mxu0
      %v1474 = vadd.f32 %v1414, %v1473
      %v1475 = vpop.f32.mrb[0].mxu0
      %1476 = vmatprep.mubr.bf16.mxu0 0
      %1477 = vmatmul.mubr.bf16.gmra.mrb[0].mxu0 %v960
      %v1478 = vpop.f32.mrb[0].mxu0
      %v1479 = vadd.f32 %v1414, %v1478
      %v1480 = vpop.f32.mrb[0].mxu0
      %v1481 = vpop.f32.mrb[0].mxu0
      %v1482 = vpop.f32.mrb[0].mxu0
      %1483 = vdwg.mxu0
      %s1484 = scalar_lea.vmem %s8, 16
      %v1485 = vld [vmem:[%s1484] sm:$0xf]
      %v1486 = vld [vmem:[%s1484 + $0x4] sm:$0xf]
      %v1487 = vld [vmem:[%s1484 + $0x8] sm:$0xf]
      %v1488 = vld [vmem:[%s1484 + $0xc] sm:$0xf]
      %s1489 = scalar_lea.vmem %s9, 1
      %v1490 = vld [vmem:[%s1489] sm:$0x1]
      %v1492 = vlaneseq
      %v1493 = vshrl.u32 %v1492, 7
      %v1494 = vsub.s32 0, %v1493
      %v1495 = vrot.slane %v1490, %v1494
      %v1501 = vunpack.c.l.b16 %v1485
      %v1502 = vunpack.c.l.b16 %v1486
      %v1503 = vunpack.c.l.b16 %v1487
      %v1504 = vunpack.c.l.b16 %v1488
      %v1505 = vpack.c.b16 %v1502, %v1501
      %v1506 = vpack.c.b16 %v1504, %v1503
      %1509 = vmatprep.subr.bf16.mxu0 0
      %1510 = vmatpush1.bf16.msra.mxu0 %v1505
      %1511 = vmatprep.subr.bf16.mxu0 0
      %1512 = vmatpush1.bf16.msra.mxu0 %v1506
      %1513 = vmatprep.subr.bf16.mxu0 0
      %1514 = vmatpush1.bf16.msra.mxu0 0
      %1515 = vmatprep.subr.bf16.mxu0 0
      %1516 = vmatpush1.bf16.msra.mxu0 0
      %1517 = vmatprep.subr.bf16.mxu0 0
      %1518 = vmatpush1.bf16.msra.mxu0 0
      %1519 = vmatprep.subr.bf16.mxu0 0
      %1520 = vmatpush1.bf16.msra.mxu0 0
      %1521 = vmatprep.subr.bf16.mxu0 0
      %1522 = vmatpush1.bf16.msra.mxu0 0
      %1523 = vmatprep.subr.bf16.mxu0 0
      %1524 = vmatpush1.bf16.msra.mxu0 0
      %1525 = vmatprep.subr.bf16.mxu0 0
      %1526 = vmatpush1.bf16.msra.mxu0 0
      %1527 = vmatprep.subr.bf16.mxu0 0
      %1528 = vmatpush1.bf16.msra.mxu0 0
      %1529 = vmatprep.subr.bf16.mxu0 0
      %1530 = vmatpush1.bf16.msra.mxu0 0
      %1531 = vmatprep.subr.bf16.mxu0 0
      %1532 = vmatpush1.bf16.msra.mxu0 0
      %1533 = vmatprep.subr.bf16.mxu0 0
      %1534 = vmatpush1.bf16.msra.mxu0 0
      %1535 = vmatprep.subr.bf16.mxu0 0
      %1536 = vmatpush1.bf16.msra.mxu0 0
      %1537 = vmatprep.subr.bf16.mxu0 0
      %1538 = vmatpush1.bf16.msra.mxu0 0
      %1539 = vmatprep.subr.bf16.mxu0 0
      %1540 = vmatpush1.bf16.msra.mxu0 0
      %1541 = vmatprep.mubr.bf16.mxu0 0
      %1542 = vmatmul.mubr.bf16.gmra.mrb[0].mxu0 %v954
      %v1543 = vpop.f32.mrb[0].mxu0
      %v1544 = vadd.f32 %v1495, %v1543
      %v1545 = vpop.f32.mrb[0].mxu0
      %v1546 = vpop.f32.mrb[0].mxu0
      %v1547 = vadd.f32 %v1495, %v1546
      %v1548 = vpop.f32.mrb[0].mxu0
      %1549 = vmatprep.mubr.bf16.mxu0 0
      %1550 = vmatmul.mubr.bf16.gmra.mrb[0].mxu0 %v957
      %v1551 = vpop.f32.mrb[0].mxu0
      %v1552 = vadd.f32 %v1495, %v1551
      %v1553 = vpop.f32.mrb[0].mxu0
      %v1554 = vpop.f32.mrb[0].mxu0
      %v1555 = vadd.f32 %v1495, %v1554
      %v1556 = vpop.f32.mrb[0].mxu0
      %1557 = vmatprep.mubr.bf16.mxu0 0
      %1558 = vmatmul.mubr.bf16.gmra.mrb[0].mxu0 %v960
      %v1559 = vpop.f32.mrb[0].mxu0
      %v1560 = vadd.f32 %v1495, %v1559
      %v1561 = vpop.f32.mrb[0].mxu0
      %v1562 = vpop.f32.mrb[0].mxu0
      %v1563 = vpop.f32.mrb[0].mxu0
      %1564 = vdwg.mxu0
      %s1565 = scalar_lea.vmem %s10, 16
      %v1566 = vld [vmem:[%s1565] sm:$0xf]
      %v1567 = vld [vmem:[%s1565 + $0x4] sm:$0xf]
      %v1568 = vld [vmem:[%s1565 + $0x8] sm:$0xf]
      %v1569 = vld [vmem:[%s1565 + $0xc] sm:$0xf]
      %s1570 = scalar_lea.vmem %s11, 1
      %v1571 = vld [vmem:[%s1570] sm:$0x1]
      %v1573 = vlaneseq
      %v1574 = vshrl.u32 %v1573, 7
      %v1575 = vsub.s32 0, %v1574
      %v1576 = vrot.slane %v1571, %v1575
      %v1582 = vunpack.c.l.b16 %v1566
      %v1583 = vunpack.c.l.b16 %v1567
      %v1584 = vunpack.c.l.b16 %v1568
      %v1585 = vunpack.c.l.b16 %v1569
      %v1586 = vpack.c.b16 %v1583, %v1582
      %v1587 = vpack.c.b16 %v1585, %v1584
      %1590 = vmatprep.subr.bf16.mxu0 0
      %1591 = vmatpush1.bf16.msra.mxu0 %v1586
      %1592 = vmatprep.subr.bf16.mxu0 0
      %1593 = vmatpush1.bf16.msra.mxu0 %v1587
      %1594 = vmatprep.subr.bf16.mxu0 0
      %1595 = vmatpush1.bf16.msra.mxu0 0
      %1596 = vmatprep.subr.bf16.mxu0 0
      %1597 = vmatpush1.bf16.msra.mxu0 0
      %1598 = vmatprep.subr.bf16.mxu0 0
      %1599 = vmatpush1.bf16.msra.mxu0 0
      %1600 = vmatprep.subr.bf16.mxu0 0
      %1601 = vmatpush1.bf16.msra.mxu0 0
      %1602 = vmatprep.subr.bf16.mxu0 0
      %1603 = vmatpush1.bf16.msra.mxu0 0
      %1604 = vmatprep.subr.bf16.mxu0 0
      %1605 = vmatpush1.bf16.msra.mxu0 0
      %1606 = vmatprep.subr.bf16.mxu0 0
      %1607 = vmatpush1.bf16.msra.mxu0 0
      %1608 = vmatprep.subr.bf16.mxu0 0
      %1609 = vmatpush1.bf16.msra.mxu0 0
      %1610 = vmatprep.subr.bf16.mxu0 0
      %1611 = vmatpush1.bf16.msra.mxu0 0
      %1612 = vmatprep.subr.bf16.mxu0 0
      %1613 = vmatpush1.bf16.msra.mxu0 0
      %1614 = vmatprep.subr.bf16.mxu0 0
      %1615 = vmatpush1.bf16.msra.mxu0 0
      %1616 = vmatprep.subr.bf16.mxu0 0
      %1617 = vmatpush1.bf16.msra.mxu0 0
      %1618 = vmatprep.subr.bf16.mxu0 0
      %1619 = vmatpush1.bf16.msra.mxu0 0
      %1620 = vmatprep.subr.bf16.mxu0 0
      %1621 = vmatpush1.bf16.msra.mxu0 0
      %1622 = vmatprep.mubr.bf16.mxu0 0
      %1623 = vmatmul.mubr.bf16.gmra.mrb[0].mxu0 %v954
      %v1624 = vpop.f32.mrb[0].mxu0
      %v1625 = vadd.f32 %v1576, %v1624
      %v1626 = vpop.f32.mrb[0].mxu0
      %v1627 = vpop.f32.mrb[0].mxu0
      %v1628 = vadd.f32 %v1576, %v1627
      %v1629 = vpop.f32.mrb[0].mxu0
      %1630 = vmatprep.mubr.bf16.mxu0 0
      %1631 = vmatmul.mubr.bf16.gmra.mrb[0].mxu0 %v957
      %v1632 = vpop.f32.mrb[0].mxu0
      %v1633 = vadd.f32 %v1576, %v1632
      %v1634 = vpop.f32.mrb[0].mxu0
      %v1635 = vpop.f32.mrb[0].mxu0
      %v1636 = vadd.f32 %v1576, %v1635
      %v1637 = vpop.f32.mrb[0].mxu0
      %1638 = vmatprep.mubr.bf16.mxu0 0
      %1639 = vmatmul.mubr.bf16.gmra.mrb[0].mxu0 %v960
      %v1640 = vpop.f32.mrb[0].mxu0
      %v1641 = vadd.f32 %v1576, %v1640
      %v1642 = vpop.f32.mrb[0].mxu0
      %v1643 = vpop.f32.mrb[0].mxu0
      %v1644 = vpop.f32.mrb[0].mxu0
      %1645 = vdwg.mxu0
      %v1646 = vpack.c.bf16 %v1466, %v1463
      %v1647 = vpack.c.bf16 %v1474, %v1471
      %v1648 = vpack.c.bf16 %v1479, %v1479
      %v1649 = vpack.c.bf16 %v1547, %v1544
      %v1650 = vpack.c.bf16 %v1555, %v1552
      %v1651 = vpack.c.bf16 %v1560, %v1560
      %v1653 = vsel %vm1182, %v1646, 0
      %v1656 = vsel %vm1182, %v1647, 0
      %v1659 = vsel %vm1182, %v1648, 0
      %v1662 = vsel %vm1182, %v1649, 0
      %v1665 = vsel %vm1182, %v1650, 0
      %v1668 = vsel %vm1182, %v1651, 0
      %1670 = vmatprep.subr.bf16.mxu0 0
      %1671 = vmatpush1.bf16.xpose.msra.mxu0 %v1662
      %1672 = vmatprep.subr.bf16.mxu0 0
      %1673 = vmatpush1.bf16.xpose.msra.mxu0 %v1665
      %1674 = vmatprep.subr.bf16.mxu0 0
      %1675 = vmatpush1.bf16.xpose.msra.mxu0 %v1668
      %1676 = vmatprep.subr.bf16.mxu0 0
      %1677 = vmatpush1.bf16.xpose.msra.mxu0 0
      %1678 = vmatprep.subr.bf16.mxu0 0
      %1679 = vmatpush1.bf16.xpose.msra.mxu0 0
      %1680 = vmatprep.subr.bf16.mxu0 0
      %1681 = vmatpush1.bf16.xpose.msra.mxu0 0
      %1682 = vmatprep.subr.bf16.mxu0 0
      %1683 = vmatpush1.bf16.xpose.msra.mxu0 0
      %1684 = vmatprep.subr.bf16.mxu0 0
      %1685 = vmatpush1.bf16.xpose.msra.mxu0 0
      %1686 = vmatprep.subr.bf16.mxu0 0
      %1687 = vmatpush1.bf16.xpose.msra.mxu0 0
      %1688 = vmatprep.subr.bf16.mxu0 0
      %1689 = vmatpush1.bf16.xpose.msra.mxu0 0
      %1690 = vmatprep.subr.bf16.mxu0 0
      %1691 = vmatpush1.bf16.xpose.msra.mxu0 0
      %1692 = vmatprep.subr.bf16.mxu0 0
      %1693 = vmatpush1.bf16.xpose.msra.mxu0 0
      %1694 = vmatprep.subr.bf16.mxu0 0
      %1695 = vmatpush1.bf16.xpose.msra.mxu0 0
      %1696 = vmatprep.subr.bf16.mxu0 0
      %1697 = vmatpush1.bf16.xpose.msra.mxu0 0
      %1698 = vmatprep.subr.bf16.mxu0 0
      %1699 = vmatpush1.bf16.xpose.msra.mxu0 0
      %1700 = vmatprep.subr.bf16.mxu0 0
      %1701 = vmatpush1.bf16.xpose.msra.mxu0 0
      %1702 = vmatprep.mubr.bf16.mxu0 0
      %1703 = vmatmul.mubr.bf16.gmra.mrb[0].mxu0 %v1653
      %v1704 = vpop.f32.mrb[0].mxu0
      %v1705 = vadd.f32 0.0, %v1704
      %v1706 = vpop.f32.mrb[0].mxu0
      %v1707 = vpop.f32.mrb[0].mxu0
      %v1708 = vadd.f32 0.0, %v1707
      %v1709 = vpop.f32.mrb[0].mxu0
      %1710 = vmatprep.mubr.bf16.mxu0 0
      %1711 = vmatmul.mubr.bf16.gmra.mrb[0].mxu0 %v1656
      %v1712 = vpop.f32.mrb[0].mxu0
      %v1713 = vadd.f32 0.0, %v1712
      %v1714 = vpop.f32.mrb[0].mxu0
      %v1715 = vpop.f32.mrb[0].mxu0
      %v1716 = vadd.f32 0.0, %v1715
      %v1717 = vpop.f32.mrb[0].mxu0
      %1718 = vmatprep.mubr.bf16.mxu0 0
      %1719 = vmatmul.mubr.bf16.gmra.mrb[0].mxu0 %v1659
      %v1720 = vpop.f32.mrb[0].mxu0
      %v1721 = vadd.f32 0.0, %v1720
      %v1722 = vpop.f32.mrb[0].mxu0
      %v1723 = vpop.f32.mrb[0].mxu0
      %v1724 = vpop.f32.mrb[0].mxu0
      %1725 = vdwg.mxu0
      %v1726 = vmul.f32 %v1705, 0.35355338
      %v1727 = vmul.f32 %v1708, 0.35355338
      %v1728 = vmul.f32 %v1713, 0.35355338
      %v1729 = vmul.f32 %v1716, 0.35355338
      %v1730 = vmul.f32 %v1721, 0.35355338
      %v1731 = vadd.f32 %v1726, %v830
      %v1732 = vadd.f32 %v1727, %v831
      %v1733 = vadd.f32 %v1728, %v832
      %v1734 = vadd.f32 %v1729, %v833
      %v1735 = vadd.f32 %v1730, %v834
      %v1736 = vsel %vm1267, %v1731, -inf
      %1737 = vmax.xlane.f32.xlu0 %v1736
      %v1738 = vpop.xlane.xlu0 %1737
      %v1739 = vsel %vm1267, %v1732, -inf
      %1740 = vmax.xlane.f32.xlu0 %v1739
      %v1741 = vpop.xlane.xlu0 %1740
      %v1742 = vsel %vm1267, %v1733, -inf
      %1743 = vmax.xlane.f32.xlu0 %v1742
      %v1744 = vpop.xlane.xlu0 %1743
      %v1745 = vsel %vm1267, %v1734, -inf
      %1746 = vmax.xlane.f32.xlu0 %v1745
      %v1747 = vpop.xlane.xlu0 %1746
      %v1748 = vsel %vm1280, %v1735, -inf
      %1749 = vmax.xlane.f32.xlu0 %v1748
      %v1750 = vpop.xlane.xlu0 %1749
      %v1751 = vsub.f32 %v1731, %v1738
      %v1752 = vsub.f32 %v1732, %v1741
      %v1753 = vsub.f32 %v1733, %v1744
      %v1754 = vsub.f32 %v1734, %v1747
      %v1755 = vsub.f32 %v1735, %v1750
      %v1756 = vmul.f32 %v1751, 1.442695
      %v1757 = vpow.pop %v1756
      %v1758 = vmul.f32 %v1752, 1.442695
      %v1759 = vpow.pop %v1758
      %v1760 = vmul.f32 %v1753, 1.442695
      %v1761 = vpow.pop %v1760
      %v1762 = vmul.f32 %v1754, 1.442695
      %v1763 = vpow.pop %v1762
      %v1764 = vmul.f32 %v1755, 1.442695
      %v1765 = vpow.pop %v1764
      %v1766 = vsel %vm1267, %v1757, 0.0
      %1767 = vadd.xlane.f32.xlu0 %v1766
      %v1768 = vpop.xlane.xlu0 %1767
      %v1769 = vsel %vm1267, %v1759, 0.0
      %1770 = vadd.xlane.f32.xlu0 %v1769
      %v1771 = vpop.xlane.xlu0 %1770
      %v1772 = vsel %vm1267, %v1761, 0.0
      %1773 = vadd.xlane.f32.xlu0 %v1772
      %v1774 = vpop.xlane.xlu0 %1773
      %v1775 = vsel %vm1267, %v1763, 0.0
      %1776 = vadd.xlane.f32.xlu0 %v1775
      %v1777 = vpop.xlane.xlu0 %1776
      %v1778 = vsel %vm1280, %v1765, 0.0
      %1779 = vadd.xlane.f32.xlu0 %v1778
      %v1780 = vpop.xlane.xlu0 %1779
      %v1781 = vrcp.pop %v1768
      %v1782 = vrcp.pop %v1771
      %v1783 = vrcp.pop %v1774
      %v1784 = vrcp.pop %v1777
      %v1785 = vrcp.pop %v1780
      %v1786 = vmul.f32 %v1757, %v1781
      %v1787 = vmul.f32 %v1759, %v1782
      %v1788 = vmul.f32 %v1761, %v1783
      %v1789 = vmul.f32 %v1763, %v1784
      %v1790 = vmul.f32 %v1765, %v1785
      %v1791 = vpack.c.bf16 %v1787, %v1786
      %v1792 = vpack.c.bf16 %v1789, %v1788
      %v1793 = vpack.c.bf16 %v1790, %v1790
      %v1794 = vpack.c.bf16 %v1628, %v1625
      %v1795 = vpack.c.bf16 %v1636, %v1633
      %v1796 = vpack.c.bf16 %v1641, %v1641
      %v1798 = vsel %vm1267, %v1791, 0
      %v1801 = vsel %vm1267, %v1792, 0
      %v1804 = vsel %vm1267, %v1793, 0
      %v1807 = vsel %vm1339, %v1796, 0
      %1809 = vmatprep.subr.bf16.mxu0 0
      %1810 = vmatpush1.bf16.msra.mxu0 %v1794
      %1811 = vmatprep.subr.bf16.mxu0 0
      %1812 = vmatpush1.bf16.msra.mxu0 %v1795
      %1813 = vmatprep.subr.bf16.mxu0 0
      %1814 = vmatpush1.bf16.msra.mxu0 %v1807
      %1815 = vmatprep.subr.bf16.mxu0 0
      %1816 = vmatpush1.bf16.msra.mxu0 0
      %1817 = vmatprep.subr.bf16.mxu0 0
      %1818 = vmatpush1.bf16.msra.mxu0 0
      %1819 = vmatprep.subr.bf16.mxu0 0
      %1820 = vmatpush1.bf16.msra.mxu0 0
      %1821 = vmatprep.subr.bf16.mxu0 0
      %1822 = vmatpush1.bf16.msra.mxu0 0
      %1823 = vmatprep.subr.bf16.mxu0 0
      %1824 = vmatpush1.bf16.msra.mxu0 0
      %1825 = vmatprep.subr.bf16.mxu0 0
      %1826 = vmatpush1.bf16.msra.mxu0 0
      %1827 = vmatprep.subr.bf16.mxu0 0
      %1828 = vmatpush1.bf16.msra.mxu0 0
      %1829 = vmatprep.subr.bf16.mxu0 0
      %1830 = vmatpush1.bf16.msra.mxu0 0
      %1831 = vmatprep.subr.bf16.mxu0 0
      %1832 = vmatpush1.bf16.msra.mxu0 0
      %1833 = vmatprep.subr.bf16.mxu0 0
      %1834 = vmatpush1.bf16.msra.mxu0 0
      %1835 = vmatprep.subr.bf16.mxu0 0
      %1836 = vmatpush1.bf16.msra.mxu0 0
      %1837 = vmatprep.subr.bf16.mxu0 0
      %1838 = vmatpush1.bf16.msra.mxu0 0
      %1839 = vmatprep.subr.bf16.mxu0 0
      %1840 = vmatpush1.bf16.msra.mxu0 0
      %1841 = vmatprep.mubr.bf16.mxu0 0
      %1842 = vmatmul.mubr.bf16.gmra.mrb[0].mxu0 %v1798
      %v1843 = vpop.f32.mrb[0].mxu0
      %v1844 = vadd.f32 0.0, %v1843
      %v1845 = vpop.f32.mrb[0].mxu0
      %v1846 = vpop.f32.mrb[0].mxu0
      %v1847 = vadd.f32 0.0, %v1846
      %v1848 = vpop.f32.mrb[0].mxu0
      %1849 = vmatprep.mubr.bf16.mxu0 0
      %1850 = vmatmul.mubr.bf16.gmra.mrb[0].mxu0 %v1801
      %v1851 = vpop.f32.mrb[0].mxu0
      %v1852 = vadd.f32 0.0, %v1851
      %v1853 = vpop.f32.mrb[0].mxu0
      %v1854 = vpop.f32.mrb[0].mxu0
      %v1855 = vadd.f32 0.0, %v1854
      %v1856 = vpop.f32.mrb[0].mxu0
      %1857 = vmatprep.mubr.bf16.mxu0 0
      %1858 = vmatmul.mubr.bf16.gmra.mrb[0].mxu0 %v1804
      %v1859 = vpop.f32.mrb[0].mxu0
      %v1860 = vadd.f32 0.0, %v1859
      %v1861 = vpop.f32.mrb[0].mxu0
      %v1862 = vpop.f32.mrb[0].mxu0
      %v1863 = vpop.f32.mrb[0].mxu0
      %1864 = vdwg.mxu0
      %v1865 = vpack.c.bf16 %v1847, %v1844
      %v1866 = vpack.c.bf16 %v1855, %v1852
      %v1867 = vpack.c.bf16 %v1860, %v1860
      %s1868 = scalar_lea.vmem %s12, 4
      %v1869 = vld [vmem:[%s1868] sm:$0xf]
      %v1871 = vsel %vm1182, %v1865, 0
      %v1874 = vsel %vm1182, %v1866, 0
      %v1877 = vsel %vm1182, %v1867, 0
      %v1880 = vsel %vm736, %v1869, 0
      %1882 = vmatprep.subr.bf16.mxu0 0
      %1883 = vmatpush1.bf16.msra.mxu0 %v1880
      %1884 = vmatprep.subr.bf16.mxu0 0
      %1885 = vmatpush1.bf16.msra.mxu0 0
      %1886 = vmatprep.subr.bf16.mxu0 0
      %1887 = vmatpush1.bf16.msra.mxu0 0
      %1888 = vmatprep.subr.bf16.mxu0 0
      %1889 = vmatpush1.bf16.msra.mxu0 0
      %1890 = vmatprep.subr.bf16.mxu0 0
      %1891 = vmatpush1.bf16.msra.mxu0 0
      %1892 = vmatprep.subr.bf16.mxu0 0
      %1893 = vmatpush1.bf16.msra.mxu0 0
      %1894 = vmatprep.subr.bf16.mxu0 0
      %1895 = vmatpush1.bf16.msra.mxu0 0
      %1896 = vmatprep.subr.bf16.mxu0 0
      %1897 = vmatpush1.bf16.msra.mxu0 0
      %1898 = vmatprep.subr.bf16.mxu0 0
      %1899 = vmatpush1.bf16.msra.mxu0 0
      %1900 = vmatprep.subr.bf16.mxu0 0
      %1901 = vmatpush1.bf16.msra.mxu0 0
      %1902 = vmatprep.subr.bf16.mxu0 0
      %1903 = vmatpush1.bf16.msra.mxu0 0
      %1904 = vmatprep.subr.bf16.mxu0 0
      %1905 = vmatpush1.bf16.msra.mxu0 0
      %1906 = vmatprep.subr.bf16.mxu0 0
      %1907 = vmatpush1.bf16.msra.mxu0 0
      %1908 = vmatprep.subr.bf16.mxu0 0
      %1909 = vmatpush1.bf16.msra.mxu0 0
      %1910 = vmatprep.subr.bf16.mxu0 0
      %1911 = vmatpush1.bf16.msra.mxu0 0
      %1912 = vmatprep.subr.bf16.mxu0 0
      %1913 = vmatpush1.bf16.msra.mxu0 0
      %1914 = vmatprep.mubr.bf16.mxu0 0
      %1915 = vmatmul.mubr.bf16.gmra.mrb[0].mxu0 %v1871
      %v1916 = vpop.f32.mrb[0].mxu0
      %v1917 = vadd.f32 0.0, %v1916
      %v1918 = vpop.f32.mrb[0].mxu0
      %v1919 = vpop.f32.mrb[0].mxu0
      %v1920 = vadd.f32 0.0, %v1919
      %v1921 = vpop.f32.mrb[0].mxu0
      %1922 = vmatprep.mubr.bf16.mxu0 0
      %1923 = vmatmul.mubr.bf16.gmra.mrb[0].mxu0 %v1874
      %v1924 = vpop.f32.mrb[0].mxu0
      %v1925 = vadd.f32 0.0, %v1924
      %v1926 = vpop.f32.mrb[0].mxu0
      %v1927 = vpop.f32.mrb[0].mxu0
      %v1928 = vadd.f32 0.0, %v1927
      %v1929 = vpop.f32.mrb[0].mxu0
      %1930 = vmatprep.mubr.bf16.mxu0 0
      %1931 = vmatmul.mubr.bf16.gmra.mrb[0].mxu0 %v1877
      %v1932 = vpop.f32.mrb[0].mxu0
      %v1933 = vadd.f32 0.0, %v1932
      %v1934 = vpop.f32.mrb[0].mxu0
      %v1935 = vpop.f32.mrb[0].mxu0
      %v1936 = vpop.f32.mrb[0].mxu0
      %1937 = vdwg.mxu0
      %v1939 = vsel %vm1182, %v1399, 0
      %v1942 = vsel %vm1182, %v1400, 0
      %v1945 = vsel %vm1182, %v1401, 0
      %v1948 = vsel %vm736, %v1402, 0
      %1950 = vmatprep.subr.bf16.mxu0 0
      %1951 = vmatpush1.bf16.msra.mxu0 %v1948
      %1952 = vmatprep.subr.bf16.mxu0 0
      %1953 = vmatpush1.bf16.msra.mxu0 0
      %1954 = vmatprep.subr.bf16.mxu0 0
      %1955 = vmatpush1.bf16.msra.mxu0 0
      %1956 = vmatprep.subr.bf16.mxu0 0
      %1957 = vmatpush1.bf16.msra.mxu0 0
      %1958 = vmatprep.subr.bf16.mxu0 0
      %1959 = vmatpush1.bf16.msra.mxu0 0
      %1960 = vmatprep.subr.bf16.mxu0 0
      %1961 = vmatpush1.bf16.msra.mxu0 0
      %1962 = vmatprep.subr.bf16.mxu0 0
      %1963 = vmatpush1.bf16.msra.mxu0 0
      %1964 = vmatprep.subr.bf16.mxu0 0
      %1965 = vmatpush1.bf16.msra.mxu0 0
      %1966 = vmatprep.subr.bf16.mxu0 0
      %1967 = vmatpush1.bf16.msra.mxu0 0
      %1968 = vmatprep.subr.bf16.mxu0 0
      %1969 = vmatpush1.bf16.msra.mxu0 0
      %1970 = vmatprep.subr.bf16.mxu0 0
      %1971 = vmatpush1.bf16.msra.mxu0 0
      %1972 = vmatprep.subr.bf16.mxu0 0
      %1973 = vmatpush1.bf16.msra.mxu0 0
      %1974 = vmatprep.subr.bf16.mxu0 0
      %1975 = vmatpush1.bf16.msra.mxu0 0
      %1976 = vmatprep.subr.bf16.mxu0 0
      %1977 = vmatpush1.bf16.msra.mxu0 0
      %1978 = vmatprep.subr.bf16.mxu0 0
      %1979 = vmatpush1.bf16.msra.mxu0 0
      %1980 = vmatprep.subr.bf16.mxu0 0
      %1981 = vmatpush1.bf16.msra.mxu0 0
      %1982 = vmatprep.mubr.bf16.mxu0 0
      %1983 = vmatmul.mubr.bf16.gmra.mrb[0].mxu0 %v1939
      %v1984 = vpop.f32.mrb[0].mxu0
      %v1985 = vadd.f32 %v1917, %v1984
      %v1986 = vpop.f32.mrb[0].mxu0
      %v1987 = vpop.f32.mrb[0].mxu0
      %v1988 = vadd.f32 %v1920, %v1987
      %v1989 = vpop.f32.mrb[0].mxu0
      %1990 = vmatprep.mubr.bf16.mxu0 0
      %1991 = vmatmul.mubr.bf16.gmra.mrb[0].mxu0 %v1942
      %v1992 = vpop.f32.mrb[0].mxu0
      %v1993 = vadd.f32 %v1925, %v1992
      %v1994 = vpop.f32.mrb[0].mxu0
      %v1995 = vpop.f32.mrb[0].mxu0
      %v1996 = vadd.f32 %v1928, %v1995
      %v1997 = vpop.f32.mrb[0].mxu0
      %1998 = vmatprep.mubr.bf16.mxu0 0
      %1999 = vmatmul.mubr.bf16.gmra.mrb[0].mxu0 %v1945
      %v2000 = vpop.f32.mrb[0].mxu0
      %v2001 = vadd.f32 %v1933, %v2000
      %v2002 = vpop.f32.mrb[0].mxu0
      %v2003 = vpop.f32.mrb[0].mxu0
      %v2004 = vpop.f32.mrb[0].mxu0
      %2005 = vdwg.mxu0
      %s2006 = scalar_lea.vmem %s6, 32
      %v2007 = vld [vmem:[%s2006] sm:$0xf]
      %v2008 = vld [vmem:[%s2006 + $0x4] sm:$0xf]
      %v2009 = vld [vmem:[%s2006 + $0x8] sm:$0xf]
      %v2010 = vld [vmem:[%s2006 + $0xc] sm:$0xf]
      %s2011 = scalar_lea.vmem %s7, 2
      %v2012 = vld [vmem:[%s2011] sm:$0x1]
      %v2014 = vlaneseq
      %v2015 = vshrl.u32 %v2014, 7
      %v2016 = vsub.s32 0, %v2015
      %v2017 = vrot.slane %v2012, %v2016
      %v2023 = vunpack.c.l.b16 %v2007
      %v2024 = vunpack.c.l.b16 %v2008
      %v2025 = vunpack.c.l.b16 %v2009
      %v2026 = vunpack.c.l.b16 %v2010
      %v2027 = vpack.c.b16 %v2024, %v2023
      %v2028 = vpack.c.b16 %v2026, %v2025
      %2031 = vmatprep.subr.bf16.mxu0 0
      %2032 = vmatpush1.bf16.msra.mxu0 %v2027
      %2033 = vmatprep.subr.bf16.mxu0 0
      %2034 = vmatpush1.bf16.msra.mxu0 %v2028
      %2035 = vmatprep.subr.bf16.mxu0 0
      %2036 = vmatpush1.bf16.msra.mxu0 0
      %2037 = vmatprep.subr.bf16.mxu0 0
      %2038 = vmatpush1.bf16.msra.mxu0 0
      %2039 = vmatprep.subr.bf16.mxu0 0
      %2040 = vmatpush1.bf16.msra.mxu0 0
      %2041 = vmatprep.subr.bf16.mxu0 0
      %2042 = vmatpush1.bf16.msra.mxu0 0
      %2043 = vmatprep.subr.bf16.mxu0 0
      %2044 = vmatpush1.bf16.msra.mxu0 0
      %2045 = vmatprep.subr.bf16.mxu0 0
      %2046 = vmatpush1.bf16.msra.mxu0 0
      %2047 = vmatprep.subr.bf16.mxu0 0
      %2048 = vmatpush1.bf16.msra.mxu0 0
      %2049 = vmatprep.subr.bf16.mxu0 0
      %2050 = vmatpush1.bf16.msra.mxu0 0
      %2051 = vmatprep.subr.bf16.mxu0 0
      %2052 = vmatpush1.bf16.msra.mxu0 0
      %2053 = vmatprep.subr.bf16.mxu0 0
      %2054 = vmatpush1.bf16.msra.mxu0 0
      %2055 = vmatprep.subr.bf16.mxu0 0
      %2056 = vmatpush1.bf16.msra.mxu0 0
      %2057 = vmatprep.subr.bf16.mxu0 0
      %2058 = vmatpush1.bf16.msra.mxu0 0
      %2059 = vmatprep.subr.bf16.mxu0 0
      %2060 = vmatpush1.bf16.msra.mxu0 0
      %2061 = vmatprep.subr.bf16.mxu0 0
      %2062 = vmatpush1.bf16.msra.mxu0 0
      %2063 = vmatprep.mubr.bf16.mxu0 0
      %2064 = vmatmul.mubr.bf16.gmra.mrb[0].mxu0 %v954
      %v2065 = vpop.f32.mrb[0].mxu0
      %v2066 = vadd.f32 %v2017, %v2065
      %v2067 = vpop.f32.mrb[0].mxu0
      %v2068 = vpop.f32.mrb[0].mxu0
      %v2069 = vadd.f32 %v2017, %v2068
      %v2070 = vpop.f32.mrb[0].mxu0
      %2071 = vmatprep.mubr.bf16.mxu0 0
      %2072 = vmatmul.mubr.bf16.gmra.mrb[0].mxu0 %v957
      %v2073 = vpop.f32.mrb[0].mxu0
      %v2074 = vadd.f32 %v2017, %v2073
      %v2075 = vpop.f32.mrb[0].mxu0
      %v2076 = vpop.f32.mrb[0].mxu0
      %v2077 = vadd.f32 %v2017, %v2076
      %v2078 = vpop.f32.mrb[0].mxu0
      %2079 = vmatprep.mubr.bf16.mxu0 0
      %2080 = vmatmul.mubr.bf16.gmra.mrb[0].mxu0 %v960
      %v2081 = vpop.f32.mrb[0].mxu0
      %v2082 = vadd.f32 %v2017, %v2081
      %v2083 = vpop.f32.mrb[0].mxu0
      %v2084 = vpop.f32.mrb[0].mxu0
      %v2085 = vpop.f32.mrb[0].mxu0
      %2086 = vdwg.mxu0
      %s2087 = scalar_lea.vmem %s8, 32
      %v2088 = vld [vmem:[%s2087] sm:$0xf]
      %v2089 = vld [vmem:[%s2087 + $0x4] sm:$0xf]
      %v2090 = vld [vmem:[%s2087 + $0x8] sm:$0xf]
      %v2091 = vld [vmem:[%s2087 + $0xc] sm:$0xf]
      %s2092 = scalar_lea.vmem %s9, 2
      %v2093 = vld [vmem:[%s2092] sm:$0x1]
      %v2095 = vlaneseq
      %v2096 = vshrl.u32 %v2095, 7
      %v2097 = vsub.s32 0, %v2096
      %v2098 = vrot.slane %v2093, %v2097
      %v2104 = vunpack.c.l.b16 %v2088
      %v2105 = vunpack.c.l.b16 %v2089
      %v2106 = vunpack.c.l.b16 %v2090
      %v2107 = vunpack.c.l.b16 %v2091
      %v2108 = vpack.c.b16 %v2105, %v2104
      %v2109 = vpack.c.b16 %v2107, %v2106
      %2112 = vmatprep.subr.bf16.mxu0 0
      %2113 = vmatpush1.bf16.msra.mxu0 %v2108
      %2114 = vmatprep.subr.bf16.mxu0 0
      %2115 = vmatpush1.bf16.msra.mxu0 %v2109
      %2116 = vmatprep.subr.bf16.mxu0 0
      %2117 = vmatpush1.bf16.msra.mxu0 0
      %2118 = vmatprep.subr.bf16.mxu0 0
      %2119 = vmatpush1.bf16.msra.mxu0 0
      %2120 = vmatprep.subr.bf16.mxu0 0
      %2121 = vmatpush1.bf16.msra.mxu0 0
      %2122 = vmatprep.subr.bf16.mxu0 0
      %2123 = vmatpush1.bf16.msra.mxu0 0
      %2124 = vmatprep.subr.bf16.mxu0 0
      %2125 = vmatpush1.bf16.msra.mxu0 0
      %2126 = vmatprep.subr.bf16.mxu0 0
      %2127 = vmatpush1.bf16.msra.mxu0 0
      %2128 = vmatprep.subr.bf16.mxu0 0
      %2129 = vmatpush1.bf16.msra.mxu0 0
      %2130 = vmatprep.subr.bf16.mxu0 0
      %2131 = vmatpush1.bf16.msra.mxu0 0
      %2132 = vmatprep.subr.bf16.mxu0 0
      %2133 = vmatpush1.bf16.msra.mxu0 0
      %2134 = vmatprep.subr.bf16.mxu0 0
      %2135 = vmatpush1.bf16.msra.mxu0 0
      %2136 = vmatprep.subr.bf16.mxu0 0
      %2137 = vmatpush1.bf16.msra.mxu0 0
      %2138 = vmatprep.subr.bf16.mxu0 0
      %2139 = vmatpush1.bf16.msra.mxu0 0
      %2140 = vmatprep.subr.bf16.mxu0 0
      %2141 = vmatpush1.bf16.msra.mxu0 0
      %2142 = vmatprep.subr.bf16.mxu0 0
      %2143 = vmatpush1.bf16.msra.mxu0 0
      %2144 = vmatprep.mubr.bf16.mxu0 0
      %2145 = vmatmul.mubr.bf16.gmra.mrb[0].mxu0 %v954
      %v2146 = vpop.f32.mrb[0].mxu0
      %v2147 = vadd.f32 %v2098, %v2146
      %v2148 = vpop.f32.mrb[0].mxu0
      %v2149 = vpop.f32.mrb[0].mxu0
      %v2150 = vadd.f32 %v2098, %v2149
      %v2151 = vpop.f32.mrb[0].mxu0
      %2152 = vmatprep.mubr.bf16.mxu0 0
      %2153 = vmatmul.mubr.bf16.gmra.mrb[0].mxu0 %v957
      %v2154 = vpop.f32.mrb[0].mxu0
      %v2155 = vadd.f32 %v2098, %v2154
      %v2156 = vpop.f32.mrb[0].mxu0
      %v2157 = vpop.f32.mrb[0].mxu0
      %v2158 = vadd.f32 %v2098, %v2157
      %v2159 = vpop.f32.mrb[0].mxu0
      %2160 = vmatprep.mubr.bf16.mxu0 0
      %2161 = vmatmul.mubr.bf16.gmra.mrb[0].mxu0 %v960
      %v2162 = vpop.f32.mrb[0].mxu0
      %v2163 = vadd.f32 %v2098, %v2162
      %v2164 = vpop.f32.mrb[0].mxu0
      %v2165 = vpop.f32.mrb[0].mxu0
      %v2166 = vpop.f32.mrb[0].mxu0
      %2167 = vdwg.mxu0
      %s2168 = scalar_lea.vmem %s10, 32
      %v2169 = vld [vmem:[%s2168] sm:$0xf]
      %v2170 = vld [vmem:[%s2168 + $0x4] sm:$0xf]
      %v2171 = vld [vmem:[%s2168 + $0x8] sm:$0xf]
      %v2172 = vld [vmem:[%s2168 + $0xc] sm:$0xf]
      %s2173 = scalar_lea.vmem %s11, 2
      %v2174 = vld [vmem:[%s2173] sm:$0x1]
      %v2176 = vlaneseq
      %v2177 = vshrl.u32 %v2176, 7
      %v2178 = vsub.s32 0, %v2177
      %v2179 = vrot.slane %v2174, %v2178
      %v2185 = vunpack.c.l.b16 %v2169
      %v2186 = vunpack.c.l.b16 %v2170
      %v2187 = vunpack.c.l.b16 %v2171
      %v2188 = vunpack.c.l.b16 %v2172
      %v2189 = vpack.c.b16 %v2186, %v2185
      %v2190 = vpack.c.b16 %v2188, %v2187
      %2193 = vmatprep.subr.bf16.mxu0 0
      %2194 = vmatpush1.bf16.msra.mxu0 %v2189
      %2195 = vmatprep.subr.bf16.mxu0 0
      %2196 = vmatpush1.bf16.msra.mxu0 %v2190
      %2197 = vmatprep.subr.bf16.mxu0 0
      %2198 = vmatpush1.bf16.msra.mxu0 0
      %2199 = vmatprep.subr.bf16.mxu0 0
      %2200 = vmatpush1.bf16.msra.mxu0 0
      %2201 = vmatprep.subr.bf16.mxu0 0
      %2202 = vmatpush1.bf16.msra.mxu0 0
      %2203 = vmatprep.subr.bf16.mxu0 0
      %2204 = vmatpush1.bf16.msra.mxu0 0
      %2205 = vmatprep.subr.bf16.mxu0 0
      %2206 = vmatpush1.bf16.msra.mxu0 0
      %2207 = vmatprep.subr.bf16.mxu0 0
      %2208 = vmatpush1.bf16.msra.mxu0 0
      %2209 = vmatprep.subr.bf16.mxu0 0
      %2210 = vmatpush1.bf16.msra.mxu0 0
      %2211 = vmatprep.subr.bf16.mxu0 0
      %2212 = vmatpush1.bf16.msra.mxu0 0
      %2213 = vmatprep.subr.bf16.mxu0 0
      %2214 = vmatpush1.bf16.msra.mxu0 0
      %2215 = vmatprep.subr.bf16.mxu0 0
      %2216 = vmatpush1.bf16.msra.mxu0 0
      %2217 = vmatprep.subr.bf16.mxu0 0
      %2218 = vmatpush1.bf16.msra.mxu0 0
      %2219 = vmatprep.subr.bf16.mxu0 0
      %2220 = vmatpush1.bf16.msra.mxu0 0
      %2221 = vmatprep.subr.bf16.mxu0 0
      %2222 = vmatpush1.bf16.msra.mxu0 0
      %2223 = vmatprep.subr.bf16.mxu0 0
      %2224 = vmatpush1.bf16.msra.mxu0 0
      %2225 = vmatprep.mubr.bf16.mxu0 0
      %2226 = vmatmul.mubr.bf16.gmra.mrb[0].mxu0 %v954
      %v2227 = vpop.f32.mrb[0].mxu0
      %v2228 = vadd.f32 %v2179, %v2227
      %v2229 = vpop.f32.mrb[0].mxu0
      %v2230 = vpop.f32.mrb[0].mxu0
      %v2231 = vadd.f32 %v2179, %v2230
      %v2232 = vpop.f32.mrb[0].mxu0
      %2233 = vmatprep.mubr.bf16.mxu0 0
      %2234 = vmatmul.mubr.bf16.gmra.mrb[0].mxu0 %v957
      %v2235 = vpop.f32.mrb[0].mxu0
      %v2236 = vadd.f32 %v2179, %v2235
      %v2237 = vpop.f32.mrb[0].mxu0
      %v2238 = vpop.f32.mrb[0].mxu0
      %v2239 = vadd.f32 %v2179, %v2238
      %v2240 = vpop.f32.mrb[0].mxu0
      %2241 = vmatprep.mubr.bf16.mxu0 0
      %2242 = vmatmul.mubr.bf16.gmra.mrb[0].mxu0 %v960
      %v2243 = vpop.f32.mrb[0].mxu0
      %v2244 = vadd.f32 %v2179, %v2243
      %v2245 = vpop.f32.mrb[0].mxu0
      %v2246 = vpop.f32.mrb[0].mxu0
      %v2247 = vpop.f32.mrb[0].mxu0
      %2248 = vdwg.mxu0
      %v2249 = vpack.c.bf16 %v2069, %v2066
      %v2250 = vpack.c.bf16 %v2077, %v2074
      %v2251 = vpack.c.bf16 %v2082, %v2082
      %v2252 = vpack.c.bf16 %v2150, %v2147
      %v2253 = vpack.c.bf16 %v2158, %v2155
      %v2254 = vpack.c.bf16 %v2163, %v2163
      %v2256 = vsel %vm1182, %v2249, 0
      %v2259 = vsel %vm1182, %v2250, 0
      %v2262 = vsel %vm1182, %v2251, 0
      %v2265 = vsel %vm1182, %v2252, 0
      %v2268 = vsel %vm1182, %v2253, 0
      %v2271 = vsel %vm1182, %v2254, 0
      %2273 = vmatprep.subr.bf16.mxu0 0
      %2274 = vmatpush1.bf16.xpose.msra.mxu0 %v2265
      %2275 = vmatprep.subr.bf16.mxu0 0
      %2276 = vmatpush1.bf16.xpose.msra.mxu0 %v2268
      %2277 = vmatprep.subr.bf16.mxu0 0
      %2278 = vmatpush1.bf16.xpose.msra.mxu0 %v2271
      %2279 = vmatprep.subr.bf16.mxu0 0
      %2280 = vmatpush1.bf16.xpose.msra.mxu0 0
      %2281 = vmatprep.subr.bf16.mxu0 0
      %2282 = vmatpush1.bf16.xpose.msra.mxu0 0
      %2283 = vmatprep.subr.bf16.mxu0 0
      %2284 = vmatpush1.bf16.xpose.msra.mxu0 0
      %2285 = vmatprep.subr.bf16.mxu0 0
      %2286 = vmatpush1.bf16.xpose.msra.mxu0 0
      %2287 = vmatprep.subr.bf16.mxu0 0
      %2288 = vmatpush1.bf16.xpose.msra.mxu0 0
      %2289 = vmatprep.subr.bf16.mxu0 0
      %2290 = vmatpush1.bf16.xpose.msra.mxu0 0
      %2291 = vmatprep.subr.bf16.mxu0 0
      %2292 = vmatpush1.bf16.xpose.msra.mxu0 0
      %2293 = vmatprep.subr.bf16.mxu0 0
      %2294 = vmatpush1.bf16.xpose.msra.mxu0 0
      %2295 = vmatprep.subr.bf16.mxu0 0
      %2296 = vmatpush1.bf16.xpose.msra.mxu0 0
      %2297 = vmatprep.subr.bf16.mxu0 0
      %2298 = vmatpush1.bf16.xpose.msra.mxu0 0
      %2299 = vmatprep.subr.bf16.mxu0 0
      %2300 = vmatpush1.bf16.xpose.msra.mxu0 0
      %2301 = vmatprep.subr.bf16.mxu0 0
      %2302 = vmatpush1.bf16.xpose.msra.mxu0 0
      %2303 = vmatprep.subr.bf16.mxu0 0
      %2304 = vmatpush1.bf16.xpose.msra.mxu0 0
      %2305 = vmatprep.mubr.bf16.mxu0 0
      %2306 = vmatmul.mubr.bf16.gmra.mrb[0].mxu0 %v2256
      %v2307 = vpop.f32.mrb[0].mxu0
      %v2308 = vadd.f32 0.0, %v2307
      %v2309 = vpop.f32.mrb[0].mxu0
      %v2310 = vpop.f32.mrb[0].mxu0
      %v2311 = vadd.f32 0.0, %v2310
      %v2312 = vpop.f32.mrb[0].mxu0
      %2313 = vmatprep.mubr.bf16.mxu0 0
      %2314 = vmatmul.mubr.bf16.gmra.mrb[0].mxu0 %v2259
      %v2315 = vpop.f32.mrb[0].mxu0
      %v2316 = vadd.f32 0.0, %v2315
      %v2317 = vpop.f32.mrb[0].mxu0
      %v2318 = vpop.f32.mrb[0].mxu0
      %v2319 = vadd.f32 0.0, %v2318
      %v2320 = vpop.f32.mrb[0].mxu0
      %2321 = vmatprep.mubr.bf16.mxu0 0
      %2322 = vmatmul.mubr.bf16.gmra.mrb[0].mxu0 %v2262
      %v2323 = vpop.f32.mrb[0].mxu0
      %v2324 = vadd.f32 0.0, %v2323
      %v2325 = vpop.f32.mrb[0].mxu0
      %v2326 = vpop.f32.mrb[0].mxu0
      %v2327 = vpop.f32.mrb[0].mxu0
      %2328 = vdwg.mxu0
      %v2329 = vmul.f32 %v2308, 0.35355338
      %v2330 = vmul.f32 %v2311, 0.35355338
      %v2331 = vmul.f32 %v2316, 0.35355338
      %v2332 = vmul.f32 %v2319, 0.35355338
      %v2333 = vmul.f32 %v2324, 0.35355338
      %v2334 = vadd.f32 %v2329, %v830
      %v2335 = vadd.f32 %v2330, %v831
      %v2336 = vadd.f32 %v2331, %v832
      %v2337 = vadd.f32 %v2332, %v833
      %v2338 = vadd.f32 %v2333, %v834
      %v2339 = vsel %vm1267, %v2334, -inf
      %2340 = vmax.xlane.f32.xlu0 %v2339
      %v2341 = vpop.xlane.xlu0 %2340
      %v2342 = vsel %vm1267, %v2335, -inf
      %2343 = vmax.xlane.f32.xlu0 %v2342
      %v2344 = vpop.xlane.xlu0 %2343
      %v2345 = vsel %vm1267, %v2336, -inf
      %2346 = vmax.xlane.f32.xlu0 %v2345
      %v2347 = vpop.xlane.xlu0 %2346
      %v2348 = vsel %vm1267, %v2337, -inf
      %2349 = vmax.xlane.f32.xlu0 %v2348
      %v2350 = vpop.xlane.xlu0 %2349
      %v2351 = vsel %vm1280, %v2338, -inf
      %2352 = vmax.xlane.f32.xlu0 %v2351
      %v2353 = vpop.xlane.xlu0 %2352
      %v2354 = vsub.f32 %v2334, %v2341
      %v2355 = vsub.f32 %v2335, %v2344
      %v2356 = vsub.f32 %v2336, %v2347
      %v2357 = vsub.f32 %v2337, %v2350
      %v2358 = vsub.f32 %v2338, %v2353
      %v2359 = vmul.f32 %v2354, 1.442695
      %v2360 = vpow.pop %v2359
      %v2361 = vmul.f32 %v2355, 1.442695
      %v2362 = vpow.pop %v2361
      %v2363 = vmul.f32 %v2356, 1.442695
      %v2364 = vpow.pop %v2363
      %v2365 = vmul.f32 %v2357, 1.442695
      %v2366 = vpow.pop %v2365
      %v2367 = vmul.f32 %v2358, 1.442695
      %v2368 = vpow.pop %v2367
      %v2369 = vsel %vm1267, %v2360, 0.0
      %2370 = vadd.xlane.f32.xlu0 %v2369
      %v2371 = vpop.xlane.xlu0 %2370
      %v2372 = vsel %vm1267, %v2362, 0.0
      %2373 = vadd.xlane.f32.xlu0 %v2372
      %v2374 = vpop.xlane.xlu0 %2373
      %v2375 = vsel %vm1267, %v2364, 0.0
      %2376 = vadd.xlane.f32.xlu0 %v2375
      %v2377 = vpop.xlane.xlu0 %2376
      %v2378 = vsel %vm1267, %v2366, 0.0
      %2379 = vadd.xlane.f32.xlu0 %v2378
      %v2380 = vpop.xlane.xlu0 %2379
      %v2381 = vsel %vm1280, %v2368, 0.0
      %2382 = vadd.xlane.f32.xlu0 %v2381
      %v2383 = vpop.xlane.xlu0 %2382
      %v2384 = vrcp.pop %v2371
      %v2385 = vrcp.pop %v2374
      %v2386 = vrcp.pop %v2377
      %v2387 = vrcp.pop %v2380
      %v2388 = vrcp.pop %v2383
      %v2389 = vmul.f32 %v2360, %v2384
      %v2390 = vmul.f32 %v2362, %v2385
      %v2391 = vmul.f32 %v2364, %v2386
      %v2392 = vmul.f32 %v2366, %v2387
      %v2393 = vmul.f32 %v2368, %v2388
      %v2394 = vpack.c.bf16 %v2390, %v2389
      %v2395 = vpack.c.bf16 %v2392, %v2391
      %v2396 = vpack.c.bf16 %v2393, %v2393
      %v2397 = vpack.c.bf16 %v2231, %v2228
      %v2398 = vpack.c.bf16 %v2239, %v2236
      %v2399 = vpack.c.bf16 %v2244, %v2244
      %v2401 = vsel %vm1267, %v2394, 0
      %v2404 = vsel %vm1267, %v2395, 0
      %v2407 = vsel %vm1267, %v2396, 0
      %v2410 = vsel %vm1339, %v2399, 0
      %2412 = vmatprep.subr.bf16.mxu0 0
      %2413 = vmatpush1.bf16.msra.mxu0 %v2397
      %2414 = vmatprep.subr.bf16.mxu0 0
      %2415 = vmatpush1.bf16.msra.mxu0 %v2398
      %2416 = vmatprep.subr.bf16.mxu0 0
      %2417 = vmatpush1.bf16.msra.mxu0 %v2410
      %2418 = vmatprep.subr.bf16.mxu0 0
      %2419 = vmatpush1.bf16.msra.mxu0 0
      %2420 = vmatprep.subr.bf16.mxu0 0
      %2421 = vmatpush1.bf16.msra.mxu0 0
      %2422 = vmatprep.subr.bf16.mxu0 0
      %2423 = vmatpush1.bf16.msra.mxu0 0
      %2424 = vmatprep.subr.bf16.mxu0 0
      %2425 = vmatpush1.bf16.msra.mxu0 0
      %2426 = vmatprep.subr.bf16.mxu0 0
      %2427 = vmatpush1.bf16.msra.mxu0 0
      %2428 = vmatprep.subr.bf16.mxu0 0
      %2429 = vmatpush1.bf16.msra.mxu0 0
      %2430 = vmatprep.subr.bf16.mxu0 0
      %2431 = vmatpush1.bf16.msra.mxu0 0
      %2432 = vmatprep.subr.bf16.mxu0 0
      %2433 = vmatpush1.bf16.msra.mxu0 0
      %2434 = vmatprep.subr.bf16.mxu0 0
      %2435 = vmatpush1.bf16.msra.mxu0 0
      %2436 = vmatprep.subr.bf16.mxu0 0
      %2437 = vmatpush1.bf16.msra.mxu0 0
      %2438 = vmatprep.subr.bf16.mxu0 0
      %2439 = vmatpush1.bf16.msra.mxu0 0
      %2440 = vmatprep.subr.bf16.mxu0 0
      %2441 = vmatpush1.bf16.msra.mxu0 0
      %2442 = vmatprep.subr.bf16.mxu0 0
      %2443 = vmatpush1.bf16.msra.mxu0 0
      %2444 = vmatprep.mubr.bf16.mxu0 0
      %2445 = vmatmul.mubr.bf16.gmra.mrb[0].mxu0 %v2401
      %v2446 = vpop.f32.mrb[0].mxu0
      %v2447 = vadd.f32 0.0, %v2446
      %v2448 = vpop.f32.mrb[0].mxu0
      %v2449 = vpop.f32.mrb[0].mxu0
      %v2450 = vadd.f32 0.0, %v2449
      %v2451 = vpop.f32.mrb[0].mxu0
      %2452 = vmatprep.mubr.bf16.mxu0 0
      %2453 = vmatmul.mubr.bf16.gmra.mrb[0].mxu0 %v2404
      %v2454 = vpop.f32.mrb[0].mxu0
      %v2455 = vadd.f32 0.0, %v2454
      %v2456 = vpop.f32.mrb[0].mxu0
      %v2457 = vpop.f32.mrb[0].mxu0
      %v2458 = vadd.f32 0.0, %v2457
      %v2459 = vpop.f32.mrb[0].mxu0
      %2460 = vmatprep.mubr.bf16.mxu0 0
      %2461 = vmatmul.mubr.bf16.gmra.mrb[0].mxu0 %v2407
      %v2462 = vpop.f32.mrb[0].mxu0
      %v2463 = vadd.f32 0.0, %v2462
      %v2464 = vpop.f32.mrb[0].mxu0
      %v2465 = vpop.f32.mrb[0].mxu0
      %v2466 = vpop.f32.mrb[0].mxu0
      %2467 = vdwg.mxu0
      %v2468 = vpack.c.bf16 %v2450, %v2447
      %v2469 = vpack.c.bf16 %v2458, %v2455
      %v2470 = vpack.c.bf16 %v2463, %v2463
      %s2471 = scalar_lea.vmem %s12, 8
      %v2472 = vld [vmem:[%s2471] sm:$0xf]
      %v2474 = vsel %vm1182, %v2468, 0
      %v2477 = vsel %vm1182, %v2469, 0
      %v2480 = vsel %vm1182, %v2470, 0
      %v2483 = vsel %vm736, %v2472, 0
      %2485 = vmatprep.subr.bf16.mxu0 0
      %2486 = vmatpush1.bf16.msra.mxu0 %v2483
      %2487 = vmatprep.subr.bf16.mxu0 0
      %2488 = vmatpush1.bf16.msra.mxu0 0
      %2489 = vmatprep.subr.bf16.mxu0 0
      %2490 = vmatpush1.bf16.msra.mxu0 0
      %2491 = vmatprep.subr.bf16.mxu0 0
      %2492 = vmatpush1.bf16.msra.mxu0 0
      %2493 = vmatprep.subr.bf16.mxu0 0
      %2494 = vmatpush1.bf16.msra.mxu0 0
      %2495 = vmatprep.subr.bf16.mxu0 0
      %2496 = vmatpush1.bf16.msra.mxu0 0
      %2497 = vmatprep.subr.bf16.mxu0 0
      %2498 = vmatpush1.bf16.msra.mxu0 0
      %2499 = vmatprep.subr.bf16.mxu0 0
      %2500 = vmatpush1.bf16.msra.mxu0 0
      %2501 = vmatprep.subr.bf16.mxu0 0
      %2502 = vmatpush1.bf16.msra.mxu0 0
      %2503 = vmatprep.subr.bf16.mxu0 0
      %2504 = vmatpush1.bf16.msra.mxu0 0
      %2505 = vmatprep.subr.bf16.mxu0 0
      %2506 = vmatpush1.bf16.msra.mxu0 0
      %2507 = vmatprep.subr.bf16.mxu0 0
      %2508 = vmatpush1.bf16.msra.mxu0 0
      %2509 = vmatprep.subr.bf16.mxu0 0
      %2510 = vmatpush1.bf16.msra.mxu0 0
      %2511 = vmatprep.subr.bf16.mxu0 0
      %2512 = vmatpush1.bf16.msra.mxu0 0
      %2513 = vmatprep.subr.bf16.mxu0 0
      %2514 = vmatpush1.bf16.msra.mxu0 0
      %2515 = vmatprep.subr.bf16.mxu0 0
      %2516 = vmatpush1.bf16.msra.mxu0 0
      %2517 = vmatprep.mubr.bf16.mxu0 0
      %2518 = vmatmul.mubr.bf16.gmra.mrb[0].mxu0 %v2474
      %v2519 = vpop.f32.mrb[0].mxu0
      %v2520 = vadd.f32 0.0, %v2519
      %v2521 = vpop.f32.mrb[0].mxu0
      %v2522 = vpop.f32.mrb[0].mxu0
      %v2523 = vadd.f32 0.0, %v2522
      %v2524 = vpop.f32.mrb[0].mxu0
      %2525 = vmatprep.mubr.bf16.mxu0 0
      %2526 = vmatmul.mubr.bf16.gmra.mrb[0].mxu0 %v2477
      %v2527 = vpop.f32.mrb[0].mxu0
      %v2528 = vadd.f32 0.0, %v2527
      %v2529 = vpop.f32.mrb[0].mxu0
      %v2530 = vpop.f32.mrb[0].mxu0
      %v2531 = vadd.f32 0.0, %v2530
      %v2532 = vpop.f32.mrb[0].mxu0
      %2533 = vmatprep.mubr.bf16.mxu0 0
      %2534 = vmatmul.mubr.bf16.gmra.mrb[0].mxu0 %v2480
      %v2535 = vpop.f32.mrb[0].mxu0
      %v2536 = vadd.f32 0.0, %v2535
      %v2537 = vpop.f32.mrb[0].mxu0
      %v2538 = vpop.f32.mrb[0].mxu0
      %v2539 = vpop.f32.mrb[0].mxu0
      %2540 = vdwg.mxu0
      %v2541 = vadd.f32 %v1985, %v2520
      %v2542 = vadd.f32 %v1988, %v2523
      %v2543 = vadd.f32 %v1993, %v2528
      %v2544 = vadd.f32 %v1996, %v2531
      %v2545 = vadd.f32 %v2001, %v2536
      %s2546 = scalar_lea.vmem %s6, 48
      %v2547 = vld [vmem:[%s2546] sm:$0xf]
      %v2548 = vld [vmem:[%s2546 + $0x4] sm:$0xf]
      %v2549 = vld [vmem:[%s2546 + $0x8] sm:$0xf]
      %v2550 = vld [vmem:[%s2546 + $0xc] sm:$0xf]
      %s2551 = scalar_lea.vmem %s7, 3
      %v2552 = vld [vmem:[%s2551] sm:$0x1]
      %v2554 = vlaneseq
      %v2555 = vshrl.u32 %v2554, 7
      %v2556 = vsub.s32 0, %v2555
      %v2557 = vrot.slane %v2552, %v2556
      %v2563 = vunpack.c.l.b16 %v2547
      %v2564 = vunpack.c.l.b16 %v2548
      %v2565 = vunpack.c.l.b16 %v2549
      %v2566 = vunpack.c.l.b16 %v2550
      %v2567 = vpack.c.b16 %v2564, %v2563
      %v2568 = vpack.c.b16 %v2566, %v2565
      %2571 = vmatprep.subr.bf16.mxu0 0
      %2572 = vmatpush1.bf16.msra.mxu0 %v2567
      %2573 = vmatprep.subr.bf16.mxu0 0
      %2574 = vmatpush1.bf16.msra.mxu0 %v2568
      %2575 = vmatprep.subr.bf16.mxu0 0
      %2576 = vmatpush1.bf16.msra.mxu0 0
      %2577 = vmatprep.subr.bf16.mxu0 0
      %2578 = vmatpush1.bf16.msra.mxu0 0
      %2579 = vmatprep.subr.bf16.mxu0 0
      %2580 = vmatpush1.bf16.msra.mxu0 0
      %2581 = vmatprep.subr.bf16.mxu0 0
      %2582 = vmatpush1.bf16.msra.mxu0 0
      %2583 = vmatprep.subr.bf16.mxu0 0
      %2584 = vmatpush1.bf16.msra.mxu0 0
      %2585 = vmatprep.subr.bf16.mxu0 0
      %2586 = vmatpush1.bf16.msra.mxu0 0
      %2587 = vmatprep.subr.bf16.mxu0 0
      %2588 = vmatpush1.bf16.msra.mxu0 0
      %2589 = vmatprep.subr.bf16.mxu0 0
      %2590 = vmatpush1.bf16.msra.mxu0 0
      %2591 = vmatprep.subr.bf16.mxu0 0
      %2592 = vmatpush1.bf16.msra.mxu0 0
      %2593 = vmatprep.subr.bf16.mxu0 0
      %2594 = vmatpush1.bf16.msra.mxu0 0
      %2595 = vmatprep.subr.bf16.mxu0 0
      %2596 = vmatpush1.bf16.msra.mxu0 0
      %2597 = vmatprep.subr.bf16.mxu0 0
      %2598 = vmatpush1.bf16.msra.mxu0 0
      %2599 = vmatprep.subr.bf16.mxu0 0
      %2600 = vmatpush1.bf16.msra.mxu0 0
      %2601 = vmatprep.subr.bf16.mxu0 0
      %2602 = vmatpush1.bf16.msra.mxu0 0
      %2603 = vmatprep.mubr.bf16.mxu0 0
      %2604 = vmatmul.mubr.bf16.gmra.mrb[0].mxu0 %v954
      %v2605 = vpop.f32.mrb[0].mxu0
      %v2606 = vadd.f32 %v2557, %v2605
      %v2607 = vpop.f32.mrb[0].mxu0
      %v2608 = vpop.f32.mrb[0].mxu0
      %v2609 = vadd.f32 %v2557, %v2608
      %v2610 = vpop.f32.mrb[0].mxu0
      %2611 = vmatprep.mubr.bf16.mxu0 0
      %2612 = vmatmul.mubr.bf16.gmra.mrb[0].mxu0 %v957
      %v2613 = vpop.f32.mrb[0].mxu0
      %v2614 = vadd.f32 %v2557, %v2613
      %v2615 = vpop.f32.mrb[0].mxu0
      %v2616 = vpop.f32.mrb[0].mxu0
      %v2617 = vadd.f32 %v2557, %v2616
      %v2618 = vpop.f32.mrb[0].mxu0
      %2619 = vmatprep.mubr.bf16.mxu0 0
      %2620 = vmatmul.mubr.bf16.gmra.mrb[0].mxu0 %v960
      %v2621 = vpop.f32.mrb[0].mxu0
      %v2622 = vadd.f32 %v2557, %v2621
      %v2623 = vpop.f32.mrb[0].mxu0
      %v2624 = vpop.f32.mrb[0].mxu0
      %v2625 = vpop.f32.mrb[0].mxu0
      %2626 = vdwg.mxu0
      %s2627 = scalar_lea.vmem %s8, 48
      %v2628 = vld [vmem:[%s2627] sm:$0xf]
      %v2629 = vld [vmem:[%s2627 + $0x4] sm:$0xf]
      %v2630 = vld [vmem:[%s2627 + $0x8] sm:$0xf]
      %v2631 = vld [vmem:[%s2627 + $0xc] sm:$0xf]
      %s2632 = scalar_lea.vmem %s9, 3
      %v2633 = vld [vmem:[%s2632] sm:$0x1]
      %v2635 = vlaneseq
      %v2636 = vshrl.u32 %v2635, 7
      %v2637 = vsub.s32 0, %v2636
      %v2638 = vrot.slane %v2633, %v2637
      %v2644 = vunpack.c.l.b16 %v2628
      %v2645 = vunpack.c.l.b16 %v2629
      %v2646 = vunpack.c.l.b16 %v2630
      %v2647 = vunpack.c.l.b16 %v2631
      %v2648 = vpack.c.b16 %v2645, %v2644
      %v2649 = vpack.c.b16 %v2647, %v2646
      %2652 = vmatprep.subr.bf16.mxu0 0
      %2653 = vmatpush1.bf16.msra.mxu0 %v2648
      %2654 = vmatprep.subr.bf16.mxu0 0
      %2655 = vmatpush1.bf16.msra.mxu0 %v2649
      %2656 = vmatprep.subr.bf16.mxu0 0
      %2657 = vmatpush1.bf16.msra.mxu0 0
      %2658 = vmatprep.subr.bf16.mxu0 0
      %2659 = vmatpush1.bf16.msra.mxu0 0
      %2660 = vmatprep.subr.bf16.mxu0 0
      %2661 = vmatpush1.bf16.msra.mxu0 0
      %2662 = vmatprep.subr.bf16.mxu0 0
      %2663 = vmatpush1.bf16.msra.mxu0 0
      %2664 = vmatprep.subr.bf16.mxu0 0
      %2665 = vmatpush1.bf16.msra.mxu0 0
      %2666 = vmatprep.subr.bf16.mxu0 0
      %2667 = vmatpush1.bf16.msra.mxu0 0
      %2668 = vmatprep.subr.bf16.mxu0 0
      %2669 = vmatpush1.bf16.msra.mxu0 0
      %2670 = vmatprep.subr.bf16.mxu0 0
      %2671 = vmatpush1.bf16.msra.mxu0 0
      %2672 = vmatprep.subr.bf16.mxu0 0
      %2673 = vmatpush1.bf16.msra.mxu0 0
      %2674 = vmatprep.subr.bf16.mxu0 0
      %2675 = vmatpush1.bf16.msra.mxu0 0
      %2676 = vmatprep.subr.bf16.mxu0 0
      %2677 = vmatpush1.bf16.msra.mxu0 0
      %2678 = vmatprep.subr.bf16.mxu0 0
      %2679 = vmatpush1.bf16.msra.mxu0 0
      %2680 = vmatprep.subr.bf16.mxu0 0
      %2681 = vmatpush1.bf16.msra.mxu0 0
      %2682 = vmatprep.subr.bf16.mxu0 0
      %2683 = vmatpush1.bf16.msra.mxu0 0
      %2684 = vmatprep.mubr.bf16.mxu0 0
      %2685 = vmatmul.mubr.bf16.gmra.mrb[0].mxu0 %v954
      %v2686 = vpop.f32.mrb[0].mxu0
      %v2687 = vadd.f32 %v2638, %v2686
      %v2688 = vpop.f32.mrb[0].mxu0
      %v2689 = vpop.f32.mrb[0].mxu0
      %v2690 = vadd.f32 %v2638, %v2689
      %v2691 = vpop.f32.mrb[0].mxu0
      %2692 = vmatprep.mubr.bf16.mxu0 0
      %2693 = vmatmul.mubr.bf16.gmra.mrb[0].mxu0 %v957
      %v2694 = vpop.f32.mrb[0].mxu0
      %v2695 = vadd.f32 %v2638, %v2694
      %v2696 = vpop.f32.mrb[0].mxu0
      %v2697 = vpop.f32.mrb[0].mxu0
      %v2698 = vadd.f32 %v2638, %v2697
      %v2699 = vpop.f32.mrb[0].mxu0
      %2700 = vmatprep.mubr.bf16.mxu0 0
      %2701 = vmatmul.mubr.bf16.gmra.mrb[0].mxu0 %v960
      %v2702 = vpop.f32.mrb[0].mxu0
      %v2703 = vadd.f32 %v2638, %v2702
      %v2704 = vpop.f32.mrb[0].mxu0
      %v2705 = vpop.f32.mrb[0].mxu0
      %v2706 = vpop.f32.mrb[0].mxu0
      %2707 = vdwg.mxu0
      %s2708 = scalar_lea.vmem %s10, 48
      %v2709 = vld [vmem:[%s2708] sm:$0xf]
      %v2710 = vld [vmem:[%s2708 + $0x4] sm:$0xf]
      %v2711 = vld [vmem:[%s2708 + $0x8] sm:$0xf]
      %v2712 = vld [vmem:[%s2708 + $0xc] sm:$0xf]
      %s2713 = scalar_lea.vmem %s11, 3
      %v2714 = vld [vmem:[%s2713] sm:$0x1]
      %v2716 = vlaneseq
      %v2717 = vshrl.u32 %v2716, 7
      %v2718 = vsub.s32 0, %v2717
      %v2719 = vrot.slane %v2714, %v2718
      %v2725 = vunpack.c.l.b16 %v2709
      %v2726 = vunpack.c.l.b16 %v2710
      %v2727 = vunpack.c.l.b16 %v2711
      %v2728 = vunpack.c.l.b16 %v2712
      %v2729 = vpack.c.b16 %v2726, %v2725
      %v2730 = vpack.c.b16 %v2728, %v2727
      %2733 = vmatprep.subr.bf16.mxu0 0
      %2734 = vmatpush1.bf16.msra.mxu0 %v2729
      %2735 = vmatprep.subr.bf16.mxu0 0
      %2736 = vmatpush1.bf16.msra.mxu0 %v2730
      %2737 = vmatprep.subr.bf16.mxu0 0
      %2738 = vmatpush1.bf16.msra.mxu0 0
      %2739 = vmatprep.subr.bf16.mxu0 0
      %2740 = vmatpush1.bf16.msra.mxu0 0
      %2741 = vmatprep.subr.bf16.mxu0 0
      %2742 = vmatpush1.bf16.msra.mxu0 0
      %2743 = vmatprep.subr.bf16.mxu0 0
      %2744 = vmatpush1.bf16.msra.mxu0 0
      %2745 = vmatprep.subr.bf16.mxu0 0
      %2746 = vmatpush1.bf16.msra.mxu0 0
      %2747 = vmatprep.subr.bf16.mxu0 0
      %2748 = vmatpush1.bf16.msra.mxu0 0
      %2749 = vmatprep.subr.bf16.mxu0 0
      %2750 = vmatpush1.bf16.msra.mxu0 0
      %2751 = vmatprep.subr.bf16.mxu0 0
      %2752 = vmatpush1.bf16.msra.mxu0 0
      %2753 = vmatprep.subr.bf16.mxu0 0
      %2754 = vmatpush1.bf16.msra.mxu0 0
      %2755 = vmatprep.subr.bf16.mxu0 0
      %2756 = vmatpush1.bf16.msra.mxu0 0
      %2757 = vmatprep.subr.bf16.mxu0 0
      %2758 = vmatpush1.bf16.msra.mxu0 0
      %2759 = vmatprep.subr.bf16.mxu0 0
      %2760 = vmatpush1.bf16.msra.mxu0 0
      %2761 = vmatprep.subr.bf16.mxu0 0
      %2762 = vmatpush1.bf16.msra.mxu0 0
      %2763 = vmatprep.subr.bf16.mxu0 0
      %2764 = vmatpush1.bf16.msra.mxu0 0
      %2765 = vmatprep.mubr.bf16.mxu0 0
      %2766 = vmatmul.mubr.bf16.gmra.mrb[0].mxu0 %v954
      %v2767 = vpop.f32.mrb[0].mxu0
      %v2768 = vadd.f32 %v2719, %v2767
      %v2769 = vpop.f32.mrb[0].mxu0
      %v2770 = vpop.f32.mrb[0].mxu0
      %v2771 = vadd.f32 %v2719, %v2770
      %v2772 = vpop.f32.mrb[0].mxu0
      %2773 = vmatprep.mubr.bf16.mxu0 0
      %2774 = vmatmul.mubr.bf16.gmra.mrb[0].mxu0 %v957
      %v2775 = vpop.f32.mrb[0].mxu0
      %v2776 = vadd.f32 %v2719, %v2775
      %v2777 = vpop.f32.mrb[0].mxu0
      %v2778 = vpop.f32.mrb[0].mxu0
      %v2779 = vadd.f32 %v2719, %v2778
      %v2780 = vpop.f32.mrb[0].mxu0
      %2781 = vmatprep.mubr.bf16.mxu0 0
      %2782 = vmatmul.mubr.bf16.gmra.mrb[0].mxu0 %v960
      %v2783 = vpop.f32.mrb[0].mxu0
      %v2784 = vadd.f32 %v2719, %v2783
      %v2785 = vpop.f32.mrb[0].mxu0
      %v2786 = vpop.f32.mrb[0].mxu0
      %v2787 = vpop.f32.mrb[0].mxu0
      %2788 = vdwg.mxu0
      %v2789 = vpack.c.bf16 %v2609, %v2606
      %v2790 = vpack.c.bf16 %v2617, %v2614
      %v2791 = vpack.c.bf16 %v2622, %v2622
      %v2792 = vpack.c.bf16 %v2690, %v2687
      %v2793 = vpack.c.bf16 %v2698, %v2695
      %v2794 = vpack.c.bf16 %v2703, %v2703
      %v2796 = vsel %vm1182, %v2789, 0
      %v2799 = vsel %vm1182, %v2790, 0
      %v2802 = vsel %vm1182, %v2791, 0
      %v2805 = vsel %vm1182, %v2792, 0
      %v2808 = vsel %vm1182, %v2793, 0
      %v2811 = vsel %vm1182, %v2794, 0
      %2813 = vmatprep.subr.bf16.mxu0 0
      %2814 = vmatpush1.bf16.xpose.msra.mxu0 %v2805
      %2815 = vmatprep.subr.bf16.mxu0 0
      %2816 = vmatpush1.bf16.xpose.msra.mxu0 %v2808
      %2817 = vmatprep.subr.bf16.mxu0 0
      %2818 = vmatpush1.bf16.xpose.msra.mxu0 %v2811
      %2819 = vmatprep.subr.bf16.mxu0 0
      %2820 = vmatpush1.bf16.xpose.msra.mxu0 0
      %2821 = vmatprep.subr.bf16.mxu0 0
      %2822 = vmatpush1.bf16.xpose.msra.mxu0 0
      %2823 = vmatprep.subr.bf16.mxu0 0
      %2824 = vmatpush1.bf16.xpose.msra.mxu0 0
      %2825 = vmatprep.subr.bf16.mxu0 0
      %2826 = vmatpush1.bf16.xpose.msra.mxu0 0
      %2827 = vmatprep.subr.bf16.mxu0 0
      %2828 = vmatpush1.bf16.xpose.msra.mxu0 0
      %2829 = vmatprep.subr.bf16.mxu0 0
      %2830 = vmatpush1.bf16.xpose.msra.mxu0 0
      %2831 = vmatprep.subr.bf16.mxu0 0
      %2832 = vmatpush1.bf16.xpose.msra.mxu0 0
      %2833 = vmatprep.subr.bf16.mxu0 0
      %2834 = vmatpush1.bf16.xpose.msra.mxu0 0
      %2835 = vmatprep.subr.bf16.mxu0 0
      %2836 = vmatpush1.bf16.xpose.msra.mxu0 0
      %2837 = vmatprep.subr.bf16.mxu0 0
      %2838 = vmatpush1.bf16.xpose.msra.mxu0 0
      %2839 = vmatprep.subr.bf16.mxu0 0
      %2840 = vmatpush1.bf16.xpose.msra.mxu0 0
      %2841 = vmatprep.subr.bf16.mxu0 0
      %2842 = vmatpush1.bf16.xpose.msra.mxu0 0
      %2843 = vmatprep.subr.bf16.mxu0 0
      %2844 = vmatpush1.bf16.xpose.msra.mxu0 0
      %2845 = vmatprep.mubr.bf16.mxu0 0
      %2846 = vmatmul.mubr.bf16.gmra.mrb[0].mxu0 %v2796
      %v2847 = vpop.f32.mrb[0].mxu0
      %v2848 = vadd.f32 0.0, %v2847
      %v2849 = vpop.f32.mrb[0].mxu0
      %v2850 = vpop.f32.mrb[0].mxu0
      %v2851 = vadd.f32 0.0, %v2850
      %v2852 = vpop.f32.mrb[0].mxu0
      %2853 = vmatprep.mubr.bf16.mxu0 0
      %2854 = vmatmul.mubr.bf16.gmra.mrb[0].mxu0 %v2799
      %v2855 = vpop.f32.mrb[0].mxu0
      %v2856 = vadd.f32 0.0, %v2855
      %v2857 = vpop.f32.mrb[0].mxu0
      %v2858 = vpop.f32.mrb[0].mxu0
      %v2859 = vadd.f32 0.0, %v2858
      %v2860 = vpop.f32.mrb[0].mxu0
      %2861 = vmatprep.mubr.bf16.mxu0 0
      %2862 = vmatmul.mubr.bf16.gmra.mrb[0].mxu0 %v2802
      %v2863 = vpop.f32.mrb[0].mxu0
      %v2864 = vadd.f32 0.0, %v2863
      %v2865 = vpop.f32.mrb[0].mxu0
      %v2866 = vpop.f32.mrb[0].mxu0
      %v2867 = vpop.f32.mrb[0].mxu0
      %2868 = vdwg.mxu0
      %v2869 = vmul.f32 %v2848, 0.35355338
      %v2870 = vmul.f32 %v2851, 0.35355338
      %v2871 = vmul.f32 %v2856, 0.35355338
      %v2872 = vmul.f32 %v2859, 0.35355338
      %v2873 = vmul.f32 %v2864, 0.35355338
      %v2874 = vadd.f32 %v2869, %v830
      %v2875 = vadd.f32 %v2870, %v831
      %v2876 = vadd.f32 %v2871, %v832
      %v2877 = vadd.f32 %v2872, %v833
      %v2878 = vadd.f32 %v2873, %v834
      %v2879 = vsel %vm1267, %v2874, -inf
      %2880 = vmax.xlane.f32.xlu0 %v2879
      %v2881 = vpop.xlane.xlu0 %2880
      %v2882 = vsel %vm1267, %v2875, -inf
      %2883 = vmax.xlane.f32.xlu0 %v2882
      %v2884 = vpop.xlane.xlu0 %2883
      %v2885 = vsel %vm1267, %v2876, -inf
      %2886 = vmax.xlane.f32.xlu0 %v2885
      %v2887 = vpop.xlane.xlu0 %2886
      %v2888 = vsel %vm1267, %v2877, -inf
      %2889 = vmax.xlane.f32.xlu0 %v2888
      %v2890 = vpop.xlane.xlu0 %2889
      %v2891 = vsel %vm1280, %v2878, -inf
      %2892 = vmax.xlane.f32.xlu0 %v2891
      %v2893 = vpop.xlane.xlu0 %2892
      %v2894 = vsub.f32 %v2874, %v2881
      %v2895 = vsub.f32 %v2875, %v2884
      %v2896 = vsub.f32 %v2876, %v2887
      %v2897 = vsub.f32 %v2877, %v2890
      %v2898 = vsub.f32 %v2878, %v2893
      %v2899 = vmul.f32 %v2894, 1.442695
      %v2900 = vpow.pop %v2899
      %v2901 = vmul.f32 %v2895, 1.442695
      %v2902 = vpow.pop %v2901
      %v2903 = vmul.f32 %v2896, 1.442695
      %v2904 = vpow.pop %v2903
      %v2905 = vmul.f32 %v2897, 1.442695
      %v2906 = vpow.pop %v2905
      %v2907 = vmul.f32 %v2898, 1.442695
      %v2908 = vpow.pop %v2907
      %v2909 = vsel %vm1267, %v2900, 0.0
      %2910 = vadd.xlane.f32.xlu0 %v2909
      %v2911 = vpop.xlane.xlu0 %2910
      %v2912 = vsel %vm1267, %v2902, 0.0
      %2913 = vadd.xlane.f32.xlu0 %v2912
      %v2914 = vpop.xlane.xlu0 %2913
      %v2915 = vsel %vm1267, %v2904, 0.0
      %2916 = vadd.xlane.f32.xlu0 %v2915
      %v2917 = vpop.xlane.xlu0 %2916
      %v2918 = vsel %vm1267, %v2906, 0.0
      %2919 = vadd.xlane.f32.xlu0 %v2918
      %v2920 = vpop.xlane.xlu0 %2919
      %v2921 = vsel %vm1280, %v2908, 0.0
      %2922 = vadd.xlane.f32.xlu0 %v2921
      %v2923 = vpop.xlane.xlu0 %2922
      %v2924 = vrcp.pop %v2911
      %v2925 = vrcp.pop %v2914
      %v2926 = vrcp.pop %v2917
      %v2927 = vrcp.pop %v2920
      %v2928 = vrcp.pop %v2923
      %v2929 = vmul.f32 %v2900, %v2924
      %v2930 = vmul.f32 %v2902, %v2925
      %v2931 = vmul.f32 %v2904, %v2926
      %v2932 = vmul.f32 %v2906, %v2927
      %v2933 = vmul.f32 %v2908, %v2928
      %v2934 = vpack.c.bf16 %v2930, %v2929
      %v2935 = vpack.c.bf16 %v2932, %v2931
      %v2936 = vpack.c.bf16 %v2933, %v2933
      %v2937 = vpack.c.bf16 %v2771, %v2768
      %v2938 = vpack.c.bf16 %v2779, %v2776
      %v2939 = vpack.c.bf16 %v2784, %v2784
      %v2941 = vsel %vm1267, %v2934, 0
      %v2944 = vsel %vm1267, %v2935, 0
      %v2947 = vsel %vm1267, %v2936, 0
      %v2950 = vsel %vm1339, %v2939, 0
      %2952 = vmatprep.subr.bf16.mxu0 0
      %2953 = vmatpush1.bf16.msra.mxu0 %v2937
      %2954 = vmatprep.subr.bf16.mxu0 0
      %2955 = vmatpush1.bf16.msra.mxu0 %v2938
      %2956 = vmatprep.subr.bf16.mxu0 0
      %2957 = vmatpush1.bf16.msra.mxu0 %v2950
      %2958 = vmatprep.subr.bf16.mxu0 0
      %2959 = vmatpush1.bf16.msra.mxu0 0
      %2960 = vmatprep.subr.bf16.mxu0 0
      %2961 = vmatpush1.bf16.msra.mxu0 0
      %2962 = vmatprep.subr.bf16.mxu0 0
      %2963 = vmatpush1.bf16.msra.mxu0 0
      %2964 = vmatprep.subr.bf16.mxu0 0
      %2965 = vmatpush1.bf16.msra.mxu0 0
      %2966 = vmatprep.subr.bf16.mxu0 0
      %2967 = vmatpush1.bf16.msra.mxu0 0
      %2968 = vmatprep.subr.bf16.mxu0 0
      %2969 = vmatpush1.bf16.msra.mxu0 0
      %2970 = vmatprep.subr.bf16.mxu0 0
      %2971 = vmatpush1.bf16.msra.mxu0 0
      %2972 = vmatprep.subr.bf16.mxu0 0
      %2973 = vmatpush1.bf16.msra.mxu0 0
      %2974 = vmatprep.subr.bf16.mxu0 0
      %2975 = vmatpush1.bf16.msra.mxu0 0
      %2976 = vmatprep.subr.bf16.mxu0 0
      %2977 = vmatpush1.bf16.msra.mxu0 0
      %2978 = vmatprep.subr.bf16.mxu0 0
      %2979 = vmatpush1.bf16.msra.mxu0 0
      %2980 = vmatprep.subr.bf16.mxu0 0
      %2981 = vmatpush1.bf16.msra.mxu0 0
      %2982 = vmatprep.subr.bf16.mxu0 0
      %2983 = vmatpush1.bf16.msra.mxu0 0
      %2984 = vmatprep.mubr.bf16.mxu0 0
      %2985 = vmatmul.mubr.bf16.gmra.mrb[0].mxu0 %v2941
      %v2986 = vpop.f32.mrb[0].mxu0
      %v2987 = vadd.f32 0.0, %v2986
      %v2988 = vpop.f32.mrb[0].mxu0
      %v2989 = vpop.f32.mrb[0].mxu0
      %v2990 = vadd.f32 0.0, %v2989
      %v2991 = vpop.f32.mrb[0].mxu0
      %2992 = vmatprep.mubr.bf16.mxu0 0
      %2993 = vmatmul.mubr.bf16.gmra.mrb[0].mxu0 %v2944
      %v2994 = vpop.f32.mrb[0].mxu0
      %v2995 = vadd.f32 0.0, %v2994
      %v2996 = vpop.f32.mrb[0].mxu0
      %v2997 = vpop.f32.mrb[0].mxu0
      %v2998 = vadd.f32 0.0, %v2997
      %v2999 = vpop.f32.mrb[0].mxu0
      %3000 = vmatprep.mubr.bf16.mxu0 0
      %3001 = vmatmul.mubr.bf16.gmra.mrb[0].mxu0 %v2947
      %v3002 = vpop.f32.mrb[0].mxu0
      %v3003 = vadd.f32 0.0, %v3002
      %v3004 = vpop.f32.mrb[0].mxu0
      %v3005 = vpop.f32.mrb[0].mxu0
      %v3006 = vpop.f32.mrb[0].mxu0
      %3007 = vdwg.mxu0
      %v3008 = vpack.c.bf16 %v2990, %v2987
      %v3009 = vpack.c.bf16 %v2998, %v2995
      %v3010 = vpack.c.bf16 %v3003, %v3003
      %s3011 = scalar_lea.vmem %s12, 12
      %v3012 = vld [vmem:[%s3011] sm:$0xf]
      %v3014 = vsel %vm1182, %v3008, 0
      %v3017 = vsel %vm1182, %v3009, 0
      %v3020 = vsel %vm1182, %v3010, 0
      %v3023 = vsel %vm736, %v3012, 0
      %3025 = vmatprep.subr.bf16.mxu0 0
      %3026 = vmatpush1.bf16.msra.mxu0 %v3023
      %3027 = vmatprep.subr.bf16.mxu0 0
      %3028 = vmatpush1.bf16.msra.mxu0 0
      %3029 = vmatprep.subr.bf16.mxu0 0
      %3030 = vmatpush1.bf16.msra.mxu0 0
      %3031 = vmatprep.subr.bf16.mxu0 0
      %3032 = vmatpush1.bf16.msra.mxu0 0
      %3033 = vmatprep.subr.bf16.mxu0 0
      %3034 = vmatpush1.bf16.msra.mxu0 0
      %3035 = vmatprep.subr.bf16.mxu0 0
      %3036 = vmatpush1.bf16.msra.mxu0 0
      %3037 = vmatprep.subr.bf16.mxu0 0
      %3038 = vmatpush1.bf16.msra.mxu0 0
      %3039 = vmatprep.subr.bf16.mxu0 0
      %3040 = vmatpush1.bf16.msra.mxu0 0
      %3041 = vmatprep.subr.bf16.mxu0 0
      %3042 = vmatpush1.bf16.msra.mxu0 0
      %3043 = vmatprep.subr.bf16.mxu0 0
      %3044 = vmatpush1.bf16.msra.mxu0 0
      %3045 = vmatprep.subr.bf16.mxu0 0
      %3046 = vmatpush1.bf16.msra.mxu0 0
      %3047 = vmatprep.subr.bf16.mxu0 0
      %3048 = vmatpush1.bf16.msra.mxu0 0
      %3049 = vmatprep.subr.bf16.mxu0 0
      %3050 = vmatpush1.bf16.msra.mxu0 0
      %3051 = vmatprep.subr.bf16.mxu0 0
      %3052 = vmatpush1.bf16.msra.mxu0 0
      %3053 = vmatprep.subr.bf16.mxu0 0
      %3054 = vmatpush1.bf16.msra.mxu0 0
      %3055 = vmatprep.subr.bf16.mxu0 0
      %3056 = vmatpush1.bf16.msra.mxu0 0
      %3057 = vmatprep.mubr.bf16.mxu0 0
      %3058 = vmatmul.mubr.bf16.gmra.mrb[0].mxu0 %v3014
      %v3059 = vpop.f32.mrb[0].mxu0
      %v3060 = vadd.f32 0.0, %v3059
      %v3061 = vpop.f32.mrb[0].mxu0
      %v3062 = vpop.f32.mrb[0].mxu0
      %v3063 = vadd.f32 0.0, %v3062
      %v3064 = vpop.f32.mrb[0].mxu0
      %3065 = vmatprep.mubr.bf16.mxu0 0
      %3066 = vmatmul.mubr.bf16.gmra.mrb[0].mxu0 %v3017
      %v3067 = vpop.f32.mrb[0].mxu0
      %v3068 = vadd.f32 0.0, %v3067
      %v3069 = vpop.f32.mrb[0].mxu0
      %v3070 = vpop.f32.mrb[0].mxu0
      %v3071 = vadd.f32 0.0, %v3070
      %v3072 = vpop.f32.mrb[0].mxu0
      %3073 = vmatprep.mubr.bf16.mxu0 0
      %3074 = vmatmul.mubr.bf16.gmra.mrb[0].mxu0 %v3020
      %v3075 = vpop.f32.mrb[0].mxu0
      %v3076 = vadd.f32 0.0, %v3075
      %v3077 = vpop.f32.mrb[0].mxu0
      %v3078 = vpop.f32.mrb[0].mxu0
      %v3079 = vpop.f32.mrb[0].mxu0
      %3080 = vdwg.mxu0
      %v3081 = vadd.f32 %v2541, %v3060
      %v3082 = vadd.f32 %v2542, %v3063
      %v3083 = vadd.f32 %v2543, %v3068
      %v3084 = vadd.f32 %v2544, %v3071
      %v3085 = vadd.f32 %v2545, %v3076
      %v3086 = vadd.f32 %v807, %v3081
      %v3087 = vadd.f32 %v812, %v3082
      %v3088 = vadd.f32 %v817, %v3083
      %v3089 = vadd.f32 %v822, %v3084
      %v3090 = vadd.f32 %v827, %v3085
      %v3091 = vld [vmem:[%s13] sm:$0x1]
      %v3093 = vlaneseq
      %v3094 = vshrl.u32 %v3093, 7
      %v3095 = vsub.s32 0, %v3094
      %v3096 = vrot.slane %v3091, %v3095
      %v3098 = vadd.f32 %v3086, %v3096
      %v3099 = vadd.f32 %v3087, %v3096
      %v3100 = vadd.f32 %v3088, %v3096
      %v3101 = vadd.f32 %v3089, %v3096
      %v3102 = vadd.f32 %v3090, %v3096
      %v3103 = vld [vmem:[%s14] sm:$0x1]
      %v3104 = vld [vmem:[%s15] sm:$0x1]
      %v3105 = vsel %vm837, %v3098, 0.0
      %3106 = vadd.xlane.f32.xlu0 %v3105
      %v3107 = vpop.xlane.xlu0 %3106
      %v3108 = vsel %vm837, %v3099, 0.0
      %3109 = vadd.xlane.f32.xlu0 %v3108
      %v3110 = vpop.xlane.xlu0 %3109
      %v3111 = vsel %vm837, %v3100, 0.0
      %3112 = vadd.xlane.f32.xlu0 %v3111
      %v3113 = vpop.xlane.xlu0 %3112
      %v3114 = vsel %vm837, %v3101, 0.0
      %3115 = vadd.xlane.f32.xlu0 %v3114
      %v3116 = vpop.xlane.xlu0 %3115
      %v3117 = vsel %vm850, %v3102, 0.0
      %3118 = vadd.xlane.f32.xlu0 %v3117
      %v3119 = vpop.xlane.xlu0 %3118
      %v3120 = vmul.f32 %v3107, %v854
      %v3121 = vmul.f32 %v3110, %v854
      %v3122 = vmul.f32 %v3113, %v854
      %v3123 = vmul.f32 %v3116, %v854
      %v3124 = vmul.f32 %v3119, %v854
      %v3125 = vsub.f32 %v3098, %v3120
      %v3126 = vsub.f32 %v3099, %v3121
      %v3127 = vsub.f32 %v3100, %v3122
      %v3128 = vsub.f32 %v3101, %v3123
      %v3129 = vsub.f32 %v3102, %v3124
      %v3130 = vmul.f32 %v3125, %v3125
      %v3131 = vmul.f32 %v3126, %v3126
      %v3132 = vmul.f32 %v3127, %v3127
      %v3133 = vmul.f32 %v3128, %v3128
      %v3134 = vmul.f32 %v3129, %v3129
      %v3135 = vsel %vm837, %v3130, 0.0
      %3136 = vadd.xlane.f32.xlu0 %v3135
      %v3137 = vpop.xlane.xlu0 %3136
      %v3138 = vsel %vm837, %v3131, 0.0
      %3139 = vadd.xlane.f32.xlu0 %v3138
      %v3140 = vpop.xlane.xlu0 %3139
      %v3141 = vsel %vm837, %v3132, 0.0
      %3142 = vadd.xlane.f32.xlu0 %v3141
      %v3143 = vpop.xlane.xlu0 %3142
      %v3144 = vsel %vm837, %v3133, 0.0
      %3145 = vadd.xlane.f32.xlu0 %v3144
      %v3146 = vpop.xlane.xlu0 %3145
      %v3147 = vsel %vm850, %v3134, 0.0
      %3148 = vadd.xlane.f32.xlu0 %v3147
      %v3149 = vpop.xlane.xlu0 %3148
      %v3150 = vmul.f32 %v3137, %v854
      %v3151 = vmul.f32 %v3140, %v854
      %v3152 = vmul.f32 %v3143, %v854
      %v3153 = vmul.f32 %v3146, %v854
      %v3154 = vmul.f32 %v3149, %v854
      %v3155 = vadd.f32 %v3150, 1e-05
      %v3156 = vadd.f32 %v3151, 1e-05
      %v3157 = vadd.f32 %v3152, 1e-05
      %v3158 = vadd.f32 %v3153, 1e-05
      %v3159 = vadd.f32 %v3154, 1e-05
      %v3160 = vrsqrt.pop %v3155
      %v3161 = vrsqrt.pop %v3156
      %v3162 = vrsqrt.pop %v3157
      %v3163 = vrsqrt.pop %v3158
      %v3164 = vrsqrt.pop %v3159
      %v3165 = vmul.f32 %v3125, %v3160
      %v3166 = vmul.f32 %v3126, %v3161
      %v3167 = vmul.f32 %v3127, %v3162
      %v3168 = vmul.f32 %v3128, %v3163
      %v3169 = vmul.f32 %v3129, %v3164
      %v3171 = vlaneseq
      %v3172 = vshrl.u32 %v3171, 7
      %v3173 = vsub.s32 0, %v3172
      %v3174 = vrot.slane %v3103, %v3173
      %v3176 = vmul.f32 %v3165, %v3174
      %v3177 = vmul.f32 %v3166, %v3174
      %v3178 = vmul.f32 %v3167, %v3174
      %v3179 = vmul.f32 %v3168, %v3174
      %v3180 = vmul.f32 %v3169, %v3174
      %v3182 = vlaneseq
      %v3183 = vshrl.u32 %v3182, 7
      %v3184 = vsub.s32 0, %v3183
      %v3185 = vrot.slane %v3104, %v3184
      %v3187 = vadd.f32 %v3176, %v3185
      %v3188 = vadd.f32 %v3177, %v3185
      %v3189 = vadd.f32 %v3178, %v3185
      %v3190 = vadd.f32 %v3179, %v3185
      %v3191 = vadd.f32 %v3180, %v3185
      %v3192 = vpack.c.bf16 %v3188, %v3187
      %v3193 = vpack.c.bf16 %v3190, %v3189
      %v3194 = vpack.c.bf16 %v3191, %v3191
      %v3195 = vld [vmem:[%s16] sm:$0xf]
      %v3196 = vld [vmem:[%s16 + $0x4] sm:$0xf]
      %v3197 = vld [vmem:[%s16 + $0x8] sm:$0xf]
      %v3198 = vld [vmem:[%s16 + $0xc] sm:$0xf]
      %v3199 = vld [vmem:[%s17] sm:$0x1]
      %v3201 = vlaneseq
      %v3202 = vshrl.u32 %v3201, 7
      %v3203 = vsub.s32 0, %v3202
      %v3204 = vrot.slane %v3199, %v3203
      %v3210 = vunpack.c.l.b16 %v3195
      %v3211 = vunpack.c.l.b16 %v3196
      %v3212 = vunpack.c.l.b16 %v3197
      %v3213 = vunpack.c.l.b16 %v3198
      %v3214 = vpack.c.b16 %v3211, %v3210
      %v3215 = vpack.c.b16 %v3213, %v3212
      %v3219 = vsel %vm837, %v3192, 0
      %v3222 = vsel %vm837, %v3193, 0
      %v3225 = vsel %vm837, %v3194, 0
      %3227 = vmatprep.subr.bf16.mxu0 0
      %3228 = vmatpush1.bf16.msra.mxu0 %v3214
      %3229 = vmatprep.subr.bf16.mxu0 0
      %3230 = vmatpush1.bf16.msra.mxu0 %v3215
      %3231 = vmatprep.subr.bf16.mxu0 0
      %3232 = vmatpush1.bf16.msra.mxu0 0
      %3233 = vmatprep.subr.bf16.mxu0 0
      %3234 = vmatpush1.bf16.msra.mxu0 0
      %3235 = vmatprep.subr.bf16.mxu0 0
      %3236 = vmatpush1.bf16.msra.mxu0 0
      %3237 = vmatprep.subr.bf16.mxu0 0
      %3238 = vmatpush1.bf16.msra.mxu0 0
      %3239 = vmatprep.subr.bf16.mxu0 0
      %3240 = vmatpush1.bf16.msra.mxu0 0
      %3241 = vmatprep.subr.bf16.mxu0 0
      %3242 = vmatpush1.bf16.msra.mxu0 0
      %3243 = vmatprep.subr.bf16.mxu0 0
      %3244 = vmatpush1.bf16.msra.mxu0 0
      %3245 = vmatprep.subr.bf16.mxu0 0
      %3246 = vmatpush1.bf16.msra.mxu0 0
      %3247 = vmatprep.subr.bf16.mxu0 0
      %3248 = vmatpush1.bf16.msra.mxu0 0
      %3249 = vmatprep.subr.bf16.mxu0 0
      %3250 = vmatpush1.bf16.msra.mxu0 0
      %3251 = vmatprep.subr.bf16.mxu0 0
      %3252 = vmatpush1.bf16.msra.mxu0 0
      %3253 = vmatprep.subr.bf16.mxu0 0
      %3254 = vmatpush1.bf16.msra.mxu0 0
      %3255 = vmatprep.subr.bf16.mxu0 0
      %3256 = vmatpush1.bf16.msra.mxu0 0
      %3257 = vmatprep.subr.bf16.mxu0 0
      %3258 = vmatpush1.bf16.msra.mxu0 0
      %3259 = vmatprep.mubr.bf16.mxu0 0
      %3260 = vmatmul.mubr.bf16.gmra.mrb[0].mxu0 %v3219
      %v3261 = vpop.f32.mrb[0].mxu0
      %v3262 = vadd.f32 %v3204, %v3261
      %v3263 = vpop.f32.mrb[0].mxu0
      %v3264 = vpop.f32.mrb[0].mxu0
      %v3265 = vadd.f32 %v3204, %v3264
      %v3266 = vpop.f32.mrb[0].mxu0
      %3267 = vmatprep.mubr.bf16.mxu0 0
      %3268 = vmatmul.mubr.bf16.gmra.mrb[0].mxu0 %v3222
      %v3269 = vpop.f32.mrb[0].mxu0
      %v3270 = vadd.f32 %v3204, %v3269
      %v3271 = vpop.f32.mrb[0].mxu0
      %v3272 = vpop.f32.mrb[0].mxu0
      %v3273 = vadd.f32 %v3204, %v3272
      %v3274 = vpop.f32.mrb[0].mxu0
      %3275 = vmatprep.mubr.bf16.mxu0 0
      %3276 = vmatmul.mubr.bf16.gmra.mrb[0].mxu0 %v3225
      %v3277 = vpop.f32.mrb[0].mxu0
      %v3278 = vadd.f32 %v3204, %v3277
      %v3279 = vpop.f32.mrb[0].mxu0
      %v3280 = vpop.f32.mrb[0].mxu0
      %v3281 = vpop.f32.mrb[0].mxu0
      %3282 = vdwg.mxu0
      %v3283 = vmul.f32 %v3262, %v3262
      %v3284 = vmul.f32 %v3265, %v3265
      %v3285 = vmul.f32 %v3270, %v3270
      %v3286 = vmul.f32 %v3273, %v3273
      %v3287 = vmul.f32 %v3278, %v3278
      %v3288 = vmul.f32 %v3262, %v3283
      %v3289 = vmul.f32 %v3265, %v3284
      %v3290 = vmul.f32 %v3270, %v3285
      %v3291 = vmul.f32 %v3273, %v3286
      %v3292 = vmul.f32 %v3278, %v3287
      %v3293 = vmul.f32 %v3288, 0.044715
      %v3294 = vmul.f32 %v3289, 0.044715
      %v3295 = vmul.f32 %v3290, 0.044715
      %v3296 = vmul.f32 %v3291, 0.044715
      %v3297 = vmul.f32 %v3292, 0.044715
      %v3298 = vadd.f32 %v3262, %v3293
      %v3299 = vadd.f32 %v3265, %v3294
      %v3300 = vadd.f32 %v3270, %v3295
      %v3301 = vadd.f32 %v3273, %v3296
      %v3302 = vadd.f32 %v3278, %v3297
      %v3303 = vmul.f32 %v3298, 0.7978846
      %v3304 = vmul.f32 %v3299, 0.7978846
      %v3305 = vmul.f32 %v3300, 0.7978846
      %v3306 = vmul.f32 %v3301, 0.7978846
      %v3307 = vmul.f32 %v3302, 0.7978846
      %v3308 = vtanh.pop %v3303
      %v3309 = vtanh.pop %v3304
      %v3310 = vtanh.pop %v3305
      %v3311 = vtanh.pop %v3306
      %v3312 = vtanh.pop %v3307
      %v3313 = vadd.f32 %v3308, 1.0
      %v3314 = vadd.f32 %v3309, 1.0
      %v3315 = vadd.f32 %v3310, 1.0
      %v3316 = vadd.f32 %v3311, 1.0
      %v3317 = vadd.f32 %v3312, 1.0
      %v3318 = vmul.f32 %v3313, 0.5
      %v3319 = vmul.f32 %v3314, 0.5
      %v3320 = vmul.f32 %v3315, 0.5
      %v3321 = vmul.f32 %v3316, 0.5
      %v3322 = vmul.f32 %v3317, 0.5
      %v3323 = vmul.f32 %v3262, %v3318
      %v3324 = vmul.f32 %v3265, %v3319
      %v3325 = vmul.f32 %v3270, %v3320
      %v3326 = vmul.f32 %v3273, %v3321
      %v3327 = vmul.f32 %v3278, %v3322
      %v3328 = vpack.c.bf16 %v3324, %v3323
      %v3329 = vpack.c.bf16 %v3326, %v3325
      %v3330 = vpack.c.bf16 %v3327, %v3327
      %v3331 = vld [vmem:[%s18] sm:$0xf]
      %v3332 = vld [vmem:[%s18 + $0x4] sm:$0xf]
      %v3333 = vld [vmem:[%s18 + $0x8] sm:$0xf]
      %v3334 = vld [vmem:[%s18 + $0xc] sm:$0xf]
      %v3335 = vld [vmem:[%s18 + $0x10] sm:$0xf]
      %v3336 = vld [vmem:[%s18 + $0x14] sm:$0xf]
      %v3337 = vld [vmem:[%s18 + $0x18] sm:$0xf]
      %v3338 = vld [vmem:[%s18 + $0x1c] sm:$0xf]
      %v3339 = vld [vmem:[%s18 + $0x20] sm:$0xf]
      %v3340 = vld [vmem:[%s18 + $0x24] sm:$0xf]
      %v3341 = vld [vmem:[%s18 + $0x28] sm:$0xf]
      %v3342 = vld [vmem:[%s18 + $0x2c] sm:$0xf]
      %v3343 = vld [vmem:[%s18 + $0x30] sm:$0xf]
      %v3344 = vld [vmem:[%s18 + $0x34] sm:$0xf]
      %v3345 = vld [vmem:[%s18 + $0x38] sm:$0xf]
      %v3346 = vld [vmem:[%s18 + $0x3c] sm:$0xf]
      %v3347 = vld [vmem:[%s19] sm:$0x1]
      %v3349 = vlaneseq
      %v3350 = vshrl.u32 %v3349, 7
      %v3351 = vsub.s32 0, %v3350
      %v3352 = vrot.slane %v3347, %v3351
      %v3370 = vunpack.c.l.b16 %v3331
      %v3371 = vunpack.c.l.b16 %v3332
      %v3372 = vunpack.c.l.b16 %v3333
      %v3373 = vunpack.c.l.b16 %v3334
      %v3374 = vunpack.c.l.b16 %v3335
      %v3375 = vunpack.c.l.b16 %v3336
      %v3376 = vunpack.c.l.b16 %v3337
      %v3377 = vunpack.c.l.b16 %v3338
      %v3378 = vunpack.c.l.b16 %v3339
      %v3379 = vunpack.c.l.b16 %v3340
      %v3380 = vunpack.c.l.b16 %v3341
      %v3381 = vunpack.c.l.b16 %v3342
      %v3382 = vunpack.c.l.b16 %v3343
      %v3383 = vunpack.c.l.b16 %v3344
      %v3384 = vunpack.c.l.b16 %v3345
      %v3385 = vunpack.c.l.b16 %v3346
      %v3386 = vpack.c.b16 %v3371, %v3370
      %v3387 = vpack.c.b16 %v3373, %v3372
      %v3388 = vpack.c.b16 %v3375, %v3374
      %v3389 = vpack.c.b16 %v3377, %v3376
      %v3390 = vpack.c.b16 %v3379, %v3378
      %v3391 = vpack.c.b16 %v3381, %v3380
      %v3392 = vpack.c.b16 %v3383, %v3382
      %v3393 = vpack.c.b16 %v3385, %v3384
      %3402 = vmatprep.subr.bf16.mxu0 0
      %3403 = vmatpush1.bf16.msra.mxu0 %v3386
      %3404 = vmatprep.subr.bf16.mxu0 0
      %3405 = vmatpush1.bf16.msra.mxu0 %v3387
      %3406 = vmatprep.subr.bf16.mxu0 0
      %3407 = vmatpush1.bf16.msra.mxu0 %v3388
      %3408 = vmatprep.subr.bf16.mxu0 0
      %3409 = vmatpush1.bf16.msra.mxu0 %v3389
      %3410 = vmatprep.subr.bf16.mxu0 0
      %3411 = vmatpush1.bf16.msra.mxu0 %v3390
      %3412 = vmatprep.subr.bf16.mxu0 0
      %3413 = vmatpush1.bf16.msra.mxu0 %v3391
      %3414 = vmatprep.subr.bf16.mxu0 0
      %3415 = vmatpush1.bf16.msra.mxu0 %v3392
      %3416 = vmatprep.subr.bf16.mxu0 0
      %3417 = vmatpush1.bf16.msra.mxu0 %v3393
      %3418 = vmatprep.subr.bf16.mxu0 0
      %3419 = vmatpush1.bf16.msra.mxu0 0
      %3420 = vmatprep.subr.bf16.mxu0 0
      %3421 = vmatpush1.bf16.msra.mxu0 0
      %3422 = vmatprep.subr.bf16.mxu0 0
      %3423 = vmatpush1.bf16.msra.mxu0 0
      %3424 = vmatprep.subr.bf16.mxu0 0
      %3425 = vmatpush1.bf16.msra.mxu0 0
      %3426 = vmatprep.subr.bf16.mxu0 0
      %3427 = vmatpush1.bf16.msra.mxu0 0
      %3428 = vmatprep.subr.bf16.mxu0 0
      %3429 = vmatpush1.bf16.msra.mxu0 0
      %3430 = vmatprep.subr.bf16.mxu0 0
      %3431 = vmatpush1.bf16.msra.mxu0 0
      %3432 = vmatprep.subr.bf16.mxu0 0
      %3433 = vmatpush1.bf16.msra.mxu0 0
      %3434 = vmatprep.mubr.bf16.mxu0 0
      %3435 = vmatmul.mubr.bf16.gmra.mrb[0].mxu0 %v3328
      %v3436 = vpop.f32.mrb[0].mxu0
      %v3437 = vadd.f32 %v3352, %v3436
      %v3438 = vpop.f32.mrb[0].mxu0
      %v3439 = vpop.f32.mrb[0].mxu0
      %v3440 = vadd.f32 %v3352, %v3439
      %v3441 = vpop.f32.mrb[0].mxu0
      %3442 = vmatprep.mubr.bf16.mxu0 0
      %3443 = vmatmul.mubr.bf16.gmra.mrb[0].mxu0 %v3329
      %v3444 = vpop.f32.mrb[0].mxu0
      %v3445 = vadd.f32 %v3352, %v3444
      %v3446 = vpop.f32.mrb[0].mxu0
      %v3447 = vpop.f32.mrb[0].mxu0
      %v3448 = vadd.f32 %v3352, %v3447
      %v3449 = vpop.f32.mrb[0].mxu0
      %3450 = vmatprep.mubr.bf16.mxu0 0
      %3451 = vmatmul.mubr.bf16.gmra.mrb[0].mxu0 %v3330
      %v3452 = vpop.f32.mrb[0].mxu0
      %v3453 = vadd.f32 %v3352, %v3452
      %v3454 = vpop.f32.mrb[0].mxu0
      %v3455 = vpop.f32.mrb[0].mxu0
      %v3456 = vpop.f32.mrb[0].mxu0
      %3457 = vdwg.mxu0
      %v3458 = vadd.f32 %v3098, %v3437
      %v3459 = vadd.f32 %v3099, %v3440
      %v3460 = vadd.f32 %v3100, %v3445
      %v3461 = vadd.f32 %v3101, %v3448
      %v3462 = vadd.f32 %v3102, %v3453
      %s3463 = scalar_lea.vmem %s4, 1
      %v3464 = vld [vmem:[%s3463] sm:$0x1]
      %s3465 = scalar_lea.vmem %s5, 1
      %v3466 = vld [vmem:[%s3465] sm:$0x1]
      %v3467 = vsel %vm837, %v3458, 0.0
      %3468 = vadd.xlane.f32.xlu0 %v3467
      %v3469 = vpop.xlane.xlu0 %3468
      %v3470 = vsel %vm837, %v3459, 0.0
      %3471 = vadd.xlane.f32.xlu0 %v3470
      %v3472 = vpop.xlane.xlu0 %3471
      %v3473 = vsel %vm837, %v3460, 0.0
      %3474 = vadd.xlane.f32.xlu0 %v3473
      %v3475 = vpop.xlane.xlu0 %3474
      %v3476 = vsel %vm837, %v3461, 0.0
      %3477 = vadd.xlane.f32.xlu0 %v3476
      %v3478 = vpop.xlane.xlu0 %3477
      %v3479 = vsel %vm850, %v3462, 0.0
      %3480 = vadd.xlane.f32.xlu0 %v3479
      %v3481 = vpop.xlane.xlu0 %3480
      %v3482 = vmul.f32 %v3469, %v854
      %v3483 = vmul.f32 %v3472, %v854
      %v3484 = vmul.f32 %v3475, %v854
      %v3485 = vmul.f32 %v3478, %v854
      %v3486 = vmul.f32 %v3481, %v854
      %v3487 = vsub.f32 %v3458, %v3482
      %v3488 = vsub.f32 %v3459, %v3483
      %v3489 = vsub.f32 %v3460, %v3484
      %v3490 = vsub.f32 %v3461, %v3485
      %v3491 = vsub.f32 %v3462, %v3486
      %v3492 = vmul.f32 %v3487, %v3487
      %v3493 = vmul.f32 %v3488, %v3488
      %v3494 = vmul.f32 %v3489, %v3489
      %v3495 = vmul.f32 %v3490, %v3490
      %v3496 = vmul.f32 %v3491, %v3491
      %v3497 = vsel %vm837, %v3492, 0.0
      %3498 = vadd.xlane.f32.xlu0 %v3497
      %v3499 = vpop.xlane.xlu0 %3498
      %v3500 = vsel %vm837, %v3493, 0.0
      %3501 = vadd.xlane.f32.xlu0 %v3500
      %v3502 = vpop.xlane.xlu0 %3501
      %v3503 = vsel %vm837, %v3494, 0.0
      %3504 = vadd.xlane.f32.xlu0 %v3503
      %v3505 = vpop.xlane.xlu0 %3504
      %v3506 = vsel %vm837, %v3495, 0.0
      %3507 = vadd.xlane.f32.xlu0 %v3506
      %v3508 = vpop.xlane.xlu0 %3507
      %v3509 = vsel %vm850, %v3496, 0.0
      %3510 = vadd.xlane.f32.xlu0 %v3509
      %v3511 = vpop.xlane.xlu0 %3510
      %v3512 = vmul.f32 %v3499, %v854
      %v3513 = vmul.f32 %v3502, %v854
      %v3514 = vmul.f32 %v3505, %v854
      %v3515 = vmul.f32 %v3508, %v854
      %v3516 = vmul.f32 %v3511, %v854
      %v3517 = vadd.f32 %v3512, 1e-05
      %v3518 = vadd.f32 %v3513, 1e-05
      %v3519 = vadd.f32 %v3514, 1e-05
      %v3520 = vadd.f32 %v3515, 1e-05
      %v3521 = vadd.f32 %v3516, 1e-05
      %v3522 = vrsqrt.pop %v3517
      %v3523 = vrsqrt.pop %v3518
      %v3524 = vrsqrt.pop %v3519
      %v3525 = vrsqrt.pop %v3520
      %v3526 = vrsqrt.pop %v3521
      %v3527 = vmul.f32 %v3487, %v3522
      %v3528 = vmul.f32 %v3488, %v3523
      %v3529 = vmul.f32 %v3489, %v3524
      %v3530 = vmul.f32 %v3490, %v3525
      %v3531 = vmul.f32 %v3491, %v3526
      %v3533 = vlaneseq
      %v3534 = vshrl.u32 %v3533, 7
      %v3535 = vsub.s32 0, %v3534
      %v3536 = vrot.slane %v3464, %v3535
      %v3538 = vmul.f32 %v3527, %v3536
      %v3539 = vmul.f32 %v3528, %v3536
      %v3540 = vmul.f32 %v3529, %v3536
      %v3541 = vmul.f32 %v3530, %v3536
      %v3542 = vmul.f32 %v3531, %v3536
      %v3544 = vlaneseq
      %v3545 = vshrl.u32 %v3544, 7
      %v3546 = vsub.s32 0, %v3545
      %v3547 = vrot.slane %v3466, %v3546
      %v3549 = vadd.f32 %v3538, %v3547
      %v3550 = vadd.f32 %v3539, %v3547
      %v3551 = vadd.f32 %v3540, %v3547
      %v3552 = vadd.f32 %v3541, %v3547
      %v3553 = vadd.f32 %v3542, %v3547
      %v3554 = vpack.c.bf16 %v3550, %v3549
      %v3555 = vpack.c.bf16 %v3552, %v3551
      %v3556 = vpack.c.bf16 %v3553, %v3553
      %s3557 = scalar_lea.vmem %s6, 64
      %v3558 = vld [vmem:[%s3557] sm:$0xf]
      %v3559 = vld [vmem:[%s3557 + $0x4] sm:$0xf]
      %v3560 = vld [vmem:[%s3557 + $0x8] sm:$0xf]
      %v3561 = vld [vmem:[%s3557 + $0xc] sm:$0xf]
      %s3562 = scalar_lea.vmem %s7, 4
      %v3563 = vld [vmem:[%s3562] sm:$0x1]
      %v3565 = vlaneseq
      %v3566 = vshrl.u32 %v3565, 7
      %v3567 = vsub.s32 0, %v3566
      %v3568 = vrot.slane %v3563, %v3567
      %v3574 = vunpack.c.l.b16 %v3558
      %v3575 = vunpack.c.l.b16 %v3559
      %v3576 = vunpack.c.l.b16 %v3560
      %v3577 = vunpack.c.l.b16 %v3561
      %v3578 = vpack.c.b16 %v3575, %v3574
      %v3579 = vpack.c.b16 %v3577, %v3576
      %v3583 = vsel %vm837, %v3554, 0
      %v3586 = vsel %vm837, %v3555, 0
      %v3589 = vsel %vm837, %v3556, 0
      %3591 = vmatprep.subr.bf16.mxu0 0
      %3592 = vmatpush1.bf16.msra.mxu0 %v3578
      %3593 = vmatprep.subr.bf16.mxu0 0
      %3594 = vmatpush1.bf16.msra.mxu0 %v3579
      %3595 = vmatprep.subr.bf16.mxu0 0
      %3596 = vmatpush1.bf16.msra.mxu0 0
      %3597 = vmatprep.subr.bf16.mxu0 0
      %3598 = vmatpush1.bf16.msra.mxu0 0
      %3599 = vmatprep.subr.bf16.mxu0 0
      %3600 = vmatpush1.bf16.msra.mxu0 0
      %3601 = vmatprep.subr.bf16.mxu0 0
      %3602 = vmatpush1.bf16.msra.mxu0 0
      %3603 = vmatprep.subr.bf16.mxu0 0
      %3604 = vmatpush1.bf16.msra.mxu0 0
      %3605 = vmatprep.subr.bf16.mxu0 0
      %3606 = vmatpush1.bf16.msra.mxu0 0
      %3607 = vmatprep.subr.bf16.mxu0 0
      %3608 = vmatpush1.bf16.msra.mxu0 0
      %3609 = vmatprep.subr.bf16.mxu0 0
      %3610 = vmatpush1.bf16.msra.mxu0 0
      %3611 = vmatprep.subr.bf16.mxu0 0
      %3612 = vmatpush1.bf16.msra.mxu0 0
      %3613 = vmatprep.subr.bf16.mxu0 0
      %3614 = vmatpush1.bf16.msra.mxu0 0
      %3615 = vmatprep.subr.bf16.mxu0 0
      %3616 = vmatpush1.bf16.msra.mxu0 0
      %3617 = vmatprep.subr.bf16.mxu0 0
      %3618 = vmatpush1.bf16.msra.mxu0 0
      %3619 = vmatprep.subr.bf16.mxu0 0
      %3620 = vmatpush1.bf16.msra.mxu0 0
      %3621 = vmatprep.subr.bf16.mxu0 0
      %3622 = vmatpush1.bf16.msra.mxu0 0
      %3623 = vmatprep.mubr.bf16.mxu0 0
      %3624 = vmatmul.mubr.bf16.gmra.mrb[0].mxu0 %v3583
      %v3625 = vpop.f32.mrb[0].mxu0
      %v3626 = vadd.f32 %v3568, %v3625
      %v3627 = vpop.f32.mrb[0].mxu0
      %v3628 = vpop.f32.mrb[0].mxu0
      %v3629 = vadd.f32 %v3568, %v3628
      %v3630 = vpop.f32.mrb[0].mxu0
      %3631 = vmatprep.mubr.bf16.mxu0 0
      %3632 = vmatmul.mubr.bf16.gmra.mrb[0].mxu0 %v3586
      %v3633 = vpop.f32.mrb[0].mxu0
      %v3634 = vadd.f32 %v3568, %v3633
      %v3635 = vpop.f32.mrb[0].mxu0
      %v3636 = vpop.f32.mrb[0].mxu0
      %v3637 = vadd.f32 %v3568, %v3636
      %v3638 = vpop.f32.mrb[0].mxu0
      %3639 = vmatprep.mubr.bf16.mxu0 0
      %3640 = vmatmul.mubr.bf16.gmra.mrb[0].mxu0 %v3589
      %v3641 = vpop.f32.mrb[0].mxu0
      %v3642 = vadd.f32 %v3568, %v3641
      %v3643 = vpop.f32.mrb[0].mxu0
      %v3644 = vpop.f32.mrb[0].mxu0
      %v3645 = vpop.f32.mrb[0].mxu0
      %3646 = vdwg.mxu0
      %s3647 = scalar_lea.vmem %s8, 64
      %v3648 = vld [vmem:[%s3647] sm:$0xf]
      %v3649 = vld [vmem:[%s3647 + $0x4] sm:$0xf]
      %v3650 = vld [vmem:[%s3647 + $0x8] sm:$0xf]
      %v3651 = vld [vmem:[%s3647 + $0xc] sm:$0xf]
      %s3652 = scalar_lea.vmem %s9, 4
      %v3653 = vld [vmem:[%s3652] sm:$0x1]
      %v3655 = vlaneseq
      %v3656 = vshrl.u32 %v3655, 7
      %v3657 = vsub.s32 0, %v3656
      %v3658 = vrot.slane %v3653, %v3657
      %v3664 = vunpack.c.l.b16 %v3648
      %v3665 = vunpack.c.l.b16 %v3649
      %v3666 = vunpack.c.l.b16 %v3650
      %v3667 = vunpack.c.l.b16 %v3651
      %v3668 = vpack.c.b16 %v3665, %v3664
      %v3669 = vpack.c.b16 %v3667, %v3666
      %3672 = vmatprep.subr.bf16.mxu0 0
      %3673 = vmatpush1.bf16.msra.mxu0 %v3668
      %3674 = vmatprep.subr.bf16.mxu0 0
      %3675 = vmatpush1.bf16.msra.mxu0 %v3669
      %3676 = vmatprep.subr.bf16.mxu0 0
      %3677 = vmatpush1.bf16.msra.mxu0 0
      %3678 = vmatprep.subr.bf16.mxu0 0
      %3679 = vmatpush1.bf16.msra.mxu0 0
      %3680 = vmatprep.subr.bf16.mxu0 0
      %3681 = vmatpush1.bf16.msra.mxu0 0
      %3682 = vmatprep.subr.bf16.mxu0 0
      %3683 = vmatpush1.bf16.msra.mxu0 0
      %3684 = vmatprep.subr.bf16.mxu0 0
      %3685 = vmatpush1.bf16.msra.mxu0 0
      %3686 = vmatprep.subr.bf16.mxu0 0
      %3687 = vmatpush1.bf16.msra.mxu0 0
      %3688 = vmatprep.subr.bf16.mxu0 0
      %3689 = vmatpush1.bf16.msra.mxu0 0
      %3690 = vmatprep.subr.bf16.mxu0 0
      %3691 = vmatpush1.bf16.msra.mxu0 0
      %3692 = vmatprep.subr.bf16.mxu0 0
      %3693 = vmatpush1.bf16.msra.mxu0 0
      %3694 = vmatprep.subr.bf16.mxu0 0
      %3695 = vmatpush1.bf16.msra.mxu0 0
      %3696 = vmatprep.subr.bf16.mxu0 0
      %3697 = vmatpush1.bf16.msra.mxu0 0
      %3698 = vmatprep.subr.bf16.mxu0 0
      %3699 = vmatpush1.bf16.msra.mxu0 0
      %3700 = vmatprep.subr.bf16.mxu0 0
      %3701 = vmatpush1.bf16.msra.mxu0 0
      %3702 = vmatprep.subr.bf16.mxu0 0
      %3703 = vmatpush1.bf16.msra.mxu0 0
      %3704 = vmatprep.mubr.bf16.mxu0 0
      %3705 = vmatmul.mubr.bf16.gmra.mrb[0].mxu0 %v3583
      %v3706 = vpop.f32.mrb[0].mxu0
      %v3707 = vadd.f32 %v3658, %v3706
      %v3708 = vpop.f32.mrb[0].mxu0
      %v3709 = vpop.f32.mrb[0].mxu0
      %v3710 = vadd.f32 %v3658, %v3709
      %v3711 = vpop.f32.mrb[0].mxu0
      %3712 = vmatprep.mubr.bf16.mxu0 0
      %3713 = vmatmul.mubr.bf16.gmra.mrb[0].mxu0 %v3586
      %v3714 = vpop.f32.mrb[0].mxu0
      %v3715 = vadd.f32 %v3658, %v3714
      %v3716 = vpop.f32.mrb[0].mxu0
      %v3717 = vpop.f32.mrb[0].mxu0
      %v3718 = vadd.f32 %v3658, %v3717
      %v3719 = vpop.f32.mrb[0].mxu0
      %3720 = vmatprep.mubr.bf16.mxu0 0
      %3721 = vmatmul.mubr.bf16.gmra.mrb[0].mxu0 %v3589
      %v3722 = vpop.f32.mrb[0].mxu0
      %v3723 = vadd.f32 %v3658, %v3722
      %v3724 = vpop.f32.mrb[0].mxu0
      %v3725 = vpop.f32.mrb[0].mxu0
      %v3726 = vpop.f32.mrb[0].mxu0
      %3727 = vdwg.mxu0
      %s3728 = scalar_lea.vmem %s10, 64
      %v3729 = vld [vmem:[%s3728] sm:$0xf]
      %v3730 = vld [vmem:[%s3728 + $0x4] sm:$0xf]
      %v3731 = vld [vmem:[%s3728 + $0x8] sm:$0xf]
      %v3732 = vld [vmem:[%s3728 + $0xc] sm:$0xf]
      %s3733 = scalar_lea.vmem %s11, 4
      %v3734 = vld [vmem:[%s3733] sm:$0x1]
      %v3736 = vlaneseq
      %v3737 = vshrl.u32 %v3736, 7
      %v3738 = vsub.s32 0, %v3737
      %v3739 = vrot.slane %v3734, %v3738
      %v3745 = vunpack.c.l.b16 %v3729
      %v3746 = vunpack.c.l.b16 %v3730
      %v3747 = vunpack.c.l.b16 %v3731
      %v3748 = vunpack.c.l.b16 %v3732
      %v3749 = vpack.c.b16 %v3746, %v3745
      %v3750 = vpack.c.b16 %v3748, %v3747
      %3753 = vmatprep.subr.bf16.mxu0 0
      %3754 = vmatpush1.bf16.msra.mxu0 %v3749
      %3755 = vmatprep.subr.bf16.mxu0 0
      %3756 = vmatpush1.bf16.msra.mxu0 %v3750
      %3757 = vmatprep.subr.bf16.mxu0 0
      %3758 = vmatpush1.bf16.msra.mxu0 0
      %3759 = vmatprep.subr.bf16.mxu0 0
      %3760 = vmatpush1.bf16.msra.mxu0 0
      %3761 = vmatprep.subr.bf16.mxu0 0
      %3762 = vmatpush1.bf16.msra.mxu0 0
      %3763 = vmatprep.subr.bf16.mxu0 0
      %3764 = vmatpush1.bf16.msra.mxu0 0
      %3765 = vmatprep.subr.bf16.mxu0 0
      %3766 = vmatpush1.bf16.msra.mxu0 0
      %3767 = vmatprep.subr.bf16.mxu0 0
      %3768 = vmatpush1.bf16.msra.mxu0 0
      %3769 = vmatprep.subr.bf16.mxu0 0
      %3770 = vmatpush1.bf16.msra.mxu0 0
      %3771 = vmatprep.subr.bf16.mxu0 0
      %3772 = vmatpush1.bf16.msra.mxu0 0
      %3773 = vmatprep.subr.bf16.mxu0 0
      %3774 = vmatpush1.bf16.msra.mxu0 0
      %3775 = vmatprep.subr.bf16.mxu0 0
      %3776 = vmatpush1.bf16.msra.mxu0 0
      %3777 = vmatprep.subr.bf16.mxu0 0
      %3778 = vmatpush1.bf16.msra.mxu0 0
      %3779 = vmatprep.subr.bf16.mxu0 0
      %3780 = vmatpush1.bf16.msra.mxu0 0
      %3781 = vmatprep.subr.bf16.mxu0 0
      %3782 = vmatpush1.bf16.msra.mxu0 0
      %3783 = vmatprep.subr.bf16.mxu0 0
      %3784 = vmatpush1.bf16.msra.mxu0 0
      %3785 = vmatprep.mubr.bf16.mxu0 0
      %3786 = vmatmul.mubr.bf16.gmra.mrb[0].mxu0 %v3583
      %v3787 = vpop.f32.mrb[0].mxu0
      %v3788 = vadd.f32 %v3739, %v3787
      %v3789 = vpop.f32.mrb[0].mxu0
      %v3790 = vpop.f32.mrb[0].mxu0
      %v3791 = vadd.f32 %v3739, %v3790
      %v3792 = vpop.f32.mrb[0].mxu0
      %3793 = vmatprep.mubr.bf16.mxu0 0
      %3794 = vmatmul.mubr.bf16.gmra.mrb[0].mxu0 %v3586
      %v3795 = vpop.f32.mrb[0].mxu0
      %v3796 = vadd.f32 %v3739, %v3795
      %v3797 = vpop.f32.mrb[0].mxu0
      %v3798 = vpop.f32.mrb[0].mxu0
      %v3799 = vadd.f32 %v3739, %v3798
      %v3800 = vpop.f32.mrb[0].mxu0
      %3801 = vmatprep.mubr.bf16.mxu0 0
      %3802 = vmatmul.mubr.bf16.gmra.mrb[0].mxu0 %v3589
      %v3803 = vpop.f32.mrb[0].mxu0
      %v3804 = vadd.f32 %v3739, %v3803
      %v3805 = vpop.f32.mrb[0].mxu0
      %v3806 = vpop.f32.mrb[0].mxu0
      %v3807 = vpop.f32.mrb[0].mxu0
      %3808 = vdwg.mxu0
      %v3809 = vpack.c.bf16 %v3629, %v3626
      %v3810 = vpack.c.bf16 %v3637, %v3634
      %v3811 = vpack.c.bf16 %v3642, %v3642
      %v3812 = vpack.c.bf16 %v3710, %v3707
      %v3813 = vpack.c.bf16 %v3718, %v3715
      %v3814 = vpack.c.bf16 %v3723, %v3723
      %v3816 = vsel %vm1182, %v3809, 0
      %v3819 = vsel %vm1182, %v3810, 0
      %v3822 = vsel %vm1182, %v3811, 0
      %v3825 = vsel %vm1182, %v3812, 0
      %v3828 = vsel %vm1182, %v3813, 0
      %v3831 = vsel %vm1182, %v3814, 0
      %3833 = vmatprep.subr.bf16.mxu0 0
      %3834 = vmatpush1.bf16.xpose.msra.mxu0 %v3825
      %3835 = vmatprep.subr.bf16.mxu0 0
      %3836 = vmatpush1.bf16.xpose.msra.mxu0 %v3828
      %3837 = vmatprep.subr.bf16.mxu0 0
      %3838 = vmatpush1.bf16.xpose.msra.mxu0 %v3831
      %3839 = vmatprep.subr.bf16.mxu0 0
      %3840 = vmatpush1.bf16.xpose.msra.mxu0 0
      %3841 = vmatprep.subr.bf16.mxu0 0
      %3842 = vmatpush1.bf16.xpose.msra.mxu0 0
      %3843 = vmatprep.subr.bf16.mxu0 0
      %3844 = vmatpush1.bf16.xpose.msra.mxu0 0
      %3845 = vmatprep.subr.bf16.mxu0 0
      %3846 = vmatpush1.bf16.xpose.msra.mxu0 0
      %3847 = vmatprep.subr.bf16.mxu0 0
      %3848 = vmatpush1.bf16.xpose.msra.mxu0 0
      %3849 = vmatprep.subr.bf16.mxu0 0
      %3850 = vmatpush1.bf16.xpose.msra.mxu0 0
      %3851 = vmatprep.subr.bf16.mxu0 0
      %3852 = vmatpush1.bf16.xpose.msra.mxu0 0
      %3853 = vmatprep.subr.bf16.mxu0 0
      %3854 = vmatpush1.bf16.xpose.msra.mxu0 0
      %3855 = vmatprep.subr.bf16.mxu0 0
      %3856 = vmatpush1.bf16.xpose.msra.mxu0 0
      %3857 = vmatprep.subr.bf16.mxu0 0
      %3858 = vmatpush1.bf16.xpose.msra.mxu0 0
      %3859 = vmatprep.subr.bf16.mxu0 0
      %3860 = vmatpush1.bf16.xpose.msra.mxu0 0
      %3861 = vmatprep.subr.bf16.mxu0 0
      %3862 = vmatpush1.bf16.xpose.msra.mxu0 0
      %3863 = vmatprep.subr.bf16.mxu0 0
      %3864 = vmatpush1.bf16.xpose.msra.mxu0 0
      %3865 = vmatprep.mubr.bf16.mxu0 0
      %3866 = vmatmul.mubr.bf16.gmra.mrb[0].mxu0 %v3816
      %v3867 = vpop.f32.mrb[0].mxu0
      %v3868 = vadd.f32 0.0, %v3867
      %v3869 = vpop.f32.mrb[0].mxu0
      %v3870 = vpop.f32.mrb[0].mxu0
      %v3871 = vadd.f32 0.0, %v3870
      %v3872 = vpop.f32.mrb[0].mxu0
      %3873 = vmatprep.mubr.bf16.mxu0 0
      %3874 = vmatmul.mubr.bf16.gmra.mrb[0].mxu0 %v3819
      %v3875 = vpop.f32.mrb[0].mxu0
      %v3876 = vadd.f32 0.0, %v3875
      %v3877 = vpop.f32.mrb[0].mxu0
      %v3878 = vpop.f32.mrb[0].mxu0
      %v3879 = vadd.f32 0.0, %v3878
      %v3880 = vpop.f32.mrb[0].mxu0
      %3881 = vmatprep.mubr.bf16.mxu0 0
      %3882 = vmatmul.mubr.bf16.gmra.mrb[0].mxu0 %v3822
      %v3883 = vpop.f32.mrb[0].mxu0
      %v3884 = vadd.f32 0.0, %v3883
      %v3885 = vpop.f32.mrb[0].mxu0
      %v3886 = vpop.f32.mrb[0].mxu0
      %v3887 = vpop.f32.mrb[0].mxu0
      %3888 = vdwg.mxu0
      %v3889 = vmul.f32 %v3868, 0.35355338
      %v3890 = vmul.f32 %v3871, 0.35355338
      %v3891 = vmul.f32 %v3876, 0.35355338
      %v3892 = vmul.f32 %v3879, 0.35355338
      %v3893 = vmul.f32 %v3884, 0.35355338
      %v3894 = vadd.f32 %v3889, %v830
      %v3895 = vadd.f32 %v3890, %v831
      %v3896 = vadd.f32 %v3891, %v832
      %v3897 = vadd.f32 %v3892, %v833
      %v3898 = vadd.f32 %v3893, %v834
      %v3899 = vsel %vm1267, %v3894, -inf
      %3900 = vmax.xlane.f32.xlu0 %v3899
      %v3901 = vpop.xlane.xlu0 %3900
      %v3902 = vsel %vm1267, %v3895, -inf
      %3903 = vmax.xlane.f32.xlu0 %v3902
      %v3904 = vpop.xlane.xlu0 %3903
      %v3905 = vsel %vm1267, %v3896, -inf
      %3906 = vmax.xlane.f32.xlu0 %v3905
      %v3907 = vpop.xlane.xlu0 %3906
      %v3908 = vsel %vm1267, %v3897, -inf
      %3909 = vmax.xlane.f32.xlu0 %v3908
      %v3910 = vpop.xlane.xlu0 %3909
      %v3911 = vsel %vm1280, %v3898, -inf
      %3912 = vmax.xlane.f32.xlu0 %v3911
      %v3913 = vpop.xlane.xlu0 %3912
      %v3914 = vsub.f32 %v3894, %v3901
      %v3915 = vsub.f32 %v3895, %v3904
      %v3916 = vsub.f32 %v3896, %v3907
      %v3917 = vsub.f32 %v3897, %v3910
      %v3918 = vsub.f32 %v3898, %v3913
      %v3919 = vmul.f32 %v3914, 1.442695
      %v3920 = vpow.pop %v3919
      %v3921 = vmul.f32 %v3915, 1.442695
      %v3922 = vpow.pop %v3921
      %v3923 = vmul.f32 %v3916, 1.442695
      %v3924 = vpow.pop %v3923
      %v3925 = vmul.f32 %v3917, 1.442695
      %v3926 = vpow.pop %v3925
      %v3927 = vmul.f32 %v3918, 1.442695
      %v3928 = vpow.pop %v3927
      %v3929 = vsel %vm1267, %v3920, 0.0
      %3930 = vadd.xlane.f32.xlu0 %v3929
      %v3931 = vpop.xlane.xlu0 %3930
      %v3932 = vsel %vm1267, %v3922, 0.0
      %3933 = vadd.xlane.f32.xlu0 %v3932
      %v3934 = vpop.xlane.xlu0 %3933
      %v3935 = vsel %vm1267, %v3924, 0.0
      %3936 = vadd.xlane.f32.xlu0 %v3935
      %v3937 = vpop.xlane.xlu0 %3936
      %v3938 = vsel %vm1267, %v3926, 0.0
      %3939 = vadd.xlane.f32.xlu0 %v3938
      %v3940 = vpop.xlane.xlu0 %3939
      %v3941 = vsel %vm1280, %v3928, 0.0
      %3942 = vadd.xlane.f32.xlu0 %v3941
      %v3943 = vpop.xlane.xlu0 %3942
      %v3944 = vrcp.pop %v3931
      %v3945 = vrcp.pop %v3934
      %v3946 = vrcp.pop %v3937
      %v3947 = vrcp.pop %v3940
      %v3948 = vrcp.pop %v3943
      %v3949 = vmul.f32 %v3920, %v3944
      %v3950 = vmul.f32 %v3922, %v3945
      %v3951 = vmul.f32 %v3924, %v3946
      %v3952 = vmul.f32 %v3926, %v3947
      %v3953 = vmul.f32 %v3928, %v3948
      %v3954 = vpack.c.bf16 %v3950, %v3949
      %v3955 = vpack.c.bf16 %v3952, %v3951
      %v3956 = vpack.c.bf16 %v3953, %v3953
      %v3957 = vpack.c.bf16 %v3791, %v3788
      %v3958 = vpack.c.bf16 %v3799, %v3796
      %v3959 = vpack.c.bf16 %v3804, %v3804
      %v3961 = vsel %vm1267, %v3954, 0
      %v3964 = vsel %vm1267, %v3955, 0
      %v3967 = vsel %vm1267, %v3956, 0
      %v3970 = vsel %vm1339, %v3959, 0
      %3972 = vmatprep.subr.bf16.mxu0 0
      %3973 = vmatpush1.bf16.msra.mxu0 %v3957
      %3974 = vmatprep.subr.bf16.mxu0 0
      %3975 = vmatpush1.bf16.msra.mxu0 %v3958
      %3976 = vmatprep.subr.bf16.mxu0 0
      %3977 = vmatpush1.bf16.msra.mxu0 %v3970
      %3978 = vmatprep.subr.bf16.mxu0 0
      %3979 = vmatpush1.bf16.msra.mxu0 0
      %3980 = vmatprep.subr.bf16.mxu0 0
      %3981 = vmatpush1.bf16.msra.mxu0 0
      %3982 = vmatprep.subr.bf16.mxu0 0
      %3983 = vmatpush1.bf16.msra.mxu0 0
      %3984 = vmatprep.subr.bf16.mxu0 0
      %3985 = vmatpush1.bf16.msra.mxu0 0
      %3986 = vmatprep.subr.bf16.mxu0 0
      %3987 = vmatpush1.bf16.msra.mxu0 0
      %3988 = vmatprep.subr.bf16.mxu0 0
      %3989 = vmatpush1.bf16.msra.mxu0 0
      %3990 = vmatprep.subr.bf16.mxu0 0
      %3991 = vmatpush1.bf16.msra.mxu0 0
      %3992 = vmatprep.subr.bf16.mxu0 0
      %3993 = vmatpush1.bf16.msra.mxu0 0
      %3994 = vmatprep.subr.bf16.mxu0 0
      %3995 = vmatpush1.bf16.msra.mxu0 0
      %3996 = vmatprep.subr.bf16.mxu0 0
      %3997 = vmatpush1.bf16.msra.mxu0 0
      %3998 = vmatprep.subr.bf16.mxu0 0
      %3999 = vmatpush1.bf16.msra.mxu0 0
      %4000 = vmatprep.subr.bf16.mxu0 0
      %4001 = vmatpush1.bf16.msra.mxu0 0
      %4002 = vmatprep.subr.bf16.mxu0 0
      %4003 = vmatpush1.bf16.msra.mxu0 0
      %4004 = vmatprep.mubr.bf16.mxu0 0
      %4005 = vmatmul.mubr.bf16.gmra.mrb[0].mxu0 %v3961
      %v4006 = vpop.f32.mrb[0].mxu0
      %v4007 = vadd.f32 0.0, %v4006
      %v4008 = vpop.f32.mrb[0].mxu0
      %v4009 = vpop.f32.mrb[0].mxu0
      %v4010 = vadd.f32 0.0, %v4009
      %v4011 = vpop.f32.mrb[0].mxu0
      %4012 = vmatprep.mubr.bf16.mxu0 0
      %4013 = vmatmul.mubr.bf16.gmra.mrb[0].mxu0 %v3964
      %v4014 = vpop.f32.mrb[0].mxu0
      %v4015 = vadd.f32 0.0, %v4014
      %v4016 = vpop.f32.mrb[0].mxu0
      %v4017 = vpop.f32.mrb[0].mxu0
      %v4018 = vadd.f32 0.0, %v4017
      %v4019 = vpop.f32.mrb[0].mxu0
      %4020 = vmatprep.mubr.bf16.mxu0 0
      %4021 = vmatmul.mubr.bf16.gmra.mrb[0].mxu0 %v3967
      %v4022 = vpop.f32.mrb[0].mxu0
      %v4023 = vadd.f32 0.0, %v4022
      %v4024 = vpop.f32.mrb[0].mxu0
      %v4025 = vpop.f32.mrb[0].mxu0
      %v4026 = vpop.f32.mrb[0].mxu0
      %4027 = vdwg.mxu0
      %v4028 = vpack.c.bf16 %v4010, %v4007
      %v4029 = vpack.c.bf16 %v4018, %v4015
      %v4030 = vpack.c.bf16 %v4023, %v4023
      %s4031 = scalar_lea.vmem %s12, 16
      %v4032 = vld [vmem:[%s4031] sm:$0xf]
      %s4033 = scalar_lea.vmem %s6, 80
      %v4034 = vld [vmem:[%s4033] sm:$0xf]
      %v4035 = vld [vmem:[%s4033 + $0x4] sm:$0xf]
      %v4036 = vld [vmem:[%s4033 + $0x8] sm:$0xf]
      %v4037 = vld [vmem:[%s4033 + $0xc] sm:$0xf]
      %s4038 = scalar_lea.vmem %s7, 5
      %v4039 = vld [vmem:[%s4038] sm:$0x1]
      %v4041 = vlaneseq
      %v4042 = vshrl.u32 %v4041, 7
      %v4043 = vsub.s32 0, %v4042
      %v4044 = vrot.slane %v4039, %v4043
      %v4050 = vunpack.c.l.b16 %v4034
      %v4051 = vunpack.c.l.b16 %v4035
      %v4052 = vunpack.c.l.b16 %v4036
      %v4053 = vunpack.c.l.b16 %v4037
      %v4054 = vpack.c.b16 %v4051, %v4050
      %v4055 = vpack.c.b16 %v4053, %v4052
      %4058 = vmatprep.subr.bf16.mxu0 0
      %4059 = vmatpush1.bf16.msra.mxu0 %v4054
      %4060 = vmatprep.subr.bf16.mxu0 0
      %4061 = vmatpush1.bf16.msra.mxu0 %v4055
      %4062 = vmatprep.subr.bf16.mxu0 0
      %4063 = vmatpush1.bf16.msra.mxu0 0
      %4064 = vmatprep.subr.bf16.mxu0 0
      %4065 = vmatpush1.bf16.msra.mxu0 0
      %4066 = vmatprep.subr.bf16.mxu0 0
      %4067 = vmatpush1.bf16.msra.mxu0 0
      %4068 = vmatprep.subr.bf16.mxu0 0
      %4069 = vmatpush1.bf16.msra.mxu0 0
      %4070 = vmatprep.subr.bf16.mxu0 0
      %4071 = vmatpush1.bf16.msra.mxu0 0
      %4072 = vmatprep.subr.bf16.mxu0 0
      %4073 = vmatpush1.bf16.msra.mxu0 0
      %4074 = vmatprep.subr.bf16.mxu0 0
      %4075 = vmatpush1.bf16.msra.mxu0 0
      %4076 = vmatprep.subr.bf16.mxu0 0
      %4077 = vmatpush1.bf16.msra.mxu0 0
      %4078 = vmatprep.subr.bf16.mxu0 0
      %4079 = vmatpush1.bf16.msra.mxu0 0
      %4080 = vmatprep.subr.bf16.mxu0 0
      %4081 = vmatpush1.bf16.msra.mxu0 0
      %4082 = vmatprep.subr.bf16.mxu0 0
      %4083 = vmatpush1.bf16.msra.mxu0 0
      %4084 = vmatprep.subr.bf16.mxu0 0
      %4085 = vmatpush1.bf16.msra.mxu0 0
      %4086 = vmatprep.subr.bf16.mxu0 0
      %4087 = vmatpush1.bf16.msra.mxu0 0
      %4088 = vmatprep.subr.bf16.mxu0 0
      %4089 = vmatpush1.bf16.msra.mxu0 0
      %4090 = vmatprep.mubr.bf16.mxu0 0
      %4091 = vmatmul.mubr.bf16.gmra.mrb[0].mxu0 %v3583
      %v4092 = vpop.f32.mrb[0].mxu0
      %v4093 = vadd.f32 %v4044, %v4092
      %v4094 = vpop.f32.mrb[0].mxu0
      %v4095 = vpop.f32.mrb[0].mxu0
      %v4096 = vadd.f32 %v4044, %v4095
      %v4097 = vpop.f32.mrb[0].mxu0
      %4098 = vmatprep.mubr.bf16.mxu0 0
      %4099 = vmatmul.mubr.bf16.gmra.mrb[0].mxu0 %v3586
      %v4100 = vpop.f32.mrb[0].mxu0
      %v4101 = vadd.f32 %v4044, %v4100
      %v4102 = vpop.f32.mrb[0].mxu0
      %v4103 = vpop.f32.mrb[0].mxu0
      %v4104 = vadd.f32 %v4044, %v4103
      %v4105 = vpop.f32.mrb[0].mxu0
      %4106 = vmatprep.mubr.bf16.mxu0 0
      %4107 = vmatmul.mubr.bf16.gmra.mrb[0].mxu0 %v3589
      %v4108 = vpop.f32.mrb[0].mxu0
      %v4109 = vadd.f32 %v4044, %v4108
      %v4110 = vpop.f32.mrb[0].mxu0
      %v4111 = vpop.f32.mrb[0].mxu0
      %v4112 = vpop.f32.mrb[0].mxu0
      %4113 = vdwg.mxu0
      %s4114 = scalar_lea.vmem %s8, 80
      %v4115 = vld [vmem:[%s4114] sm:$0xf]
      %v4116 = vld [vmem:[%s4114 + $0x4] sm:$0xf]
      %v4117 = vld [vmem:[%s4114 + $0x8] sm:$0xf]
      %v4118 = vld [vmem:[%s4114 + $0xc] sm:$0xf]
      %s4119 = scalar_lea.vmem %s9, 5
      %v4120 = vld [vmem:[%s4119] sm:$0x1]
      %v4122 = vlaneseq
      %v4123 = vshrl.u32 %v4122, 7
      %v4124 = vsub.s32 0, %v4123
      %v4125 = vrot.slane %v4120, %v4124
      %v4131 = vunpack.c.l.b16 %v4115
      %v4132 = vunpack.c.l.b16 %v4116
      %v4133 = vunpack.c.l.b16 %v4117
      %v4134 = vunpack.c.l.b16 %v4118
      %v4135 = vpack.c.b16 %v4132, %v4131
      %v4136 = vpack.c.b16 %v4134, %v4133
      %4139 = vmatprep.subr.bf16.mxu0 0
      %4140 = vmatpush1.bf16.msra.mxu0 %v4135
      %4141 = vmatprep.subr.bf16.mxu0 0
      %4142 = vmatpush1.bf16.msra.mxu0 %v4136
      %4143 = vmatprep.subr.bf16.mxu0 0
      %4144 = vmatpush1.bf16.msra.mxu0 0
      %4145 = vmatprep.subr.bf16.mxu0 0
      %4146 = vmatpush1.bf16.msra.mxu0 0
      %4147 = vmatprep.subr.bf16.mxu0 0
      %4148 = vmatpush1.bf16.msra.mxu0 0
      %4149 = vmatprep.subr.bf16.mxu0 0
      %4150 = vmatpush1.bf16.msra.mxu0 0
      %4151 = vmatprep.subr.bf16.mxu0 0
      %4152 = vmatpush1.bf16.msra.mxu0 0
      %4153 = vmatprep.subr.bf16.mxu0 0
      %4154 = vmatpush1.bf16.msra.mxu0 0
      %4155 = vmatprep.subr.bf16.mxu0 0
      %4156 = vmatpush1.bf16.msra.mxu0 0
      %4157 = vmatprep.subr.bf16.mxu0 0
      %4158 = vmatpush1.bf16.msra.mxu0 0
      %4159 = vmatprep.subr.bf16.mxu0 0
      %4160 = vmatpush1.bf16.msra.mxu0 0
      %4161 = vmatprep.subr.bf16.mxu0 0
      %4162 = vmatpush1.bf16.msra.mxu0 0
      %4163 = vmatprep.subr.bf16.mxu0 0
      %4164 = vmatpush1.bf16.msra.mxu0 0
      %4165 = vmatprep.subr.bf16.mxu0 0
      %4166 = vmatpush1.bf16.msra.mxu0 0
      %4167 = vmatprep.subr.bf16.mxu0 0
      %4168 = vmatpush1.bf16.msra.mxu0 0
      %4169 = vmatprep.subr.bf16.mxu0 0
      %4170 = vmatpush1.bf16.msra.mxu0 0
      %4171 = vmatprep.mubr.bf16.mxu0 0
      %4172 = vmatmul.mubr.bf16.gmra.mrb[0].mxu0 %v3583
      %v4173 = vpop.f32.mrb[0].mxu0
      %v4174 = vadd.f32 %v4125, %v4173
      %v4175 = vpop.f32.mrb[0].mxu0
      %v4176 = vpop.f32.mrb[0].mxu0
      %v4177 = vadd.f32 %v4125, %v4176
      %v4178 = vpop.f32.mrb[0].mxu0
      %4179 = vmatprep.mubr.bf16.mxu0 0
      %4180 = vmatmul.mubr.bf16.gmra.mrb[0].mxu0 %v3586
      %v4181 = vpop.f32.mrb[0].mxu0
      %v4182 = vadd.f32 %v4125, %v4181
      %v4183 = vpop.f32.mrb[0].mxu0
      %v4184 = vpop.f32.mrb[0].mxu0
      %v4185 = vadd.f32 %v4125, %v4184
      %v4186 = vpop.f32.mrb[0].mxu0
      %4187 = vmatprep.mubr.bf16.mxu0 0
      %4188 = vmatmul.mubr.bf16.gmra.mrb[0].mxu0 %v3589
      %v4189 = vpop.f32.mrb[0].mxu0
      %v4190 = vadd.f32 %v4125, %v4189
      %v4191 = vpop.f32.mrb[0].mxu0
      %v4192 = vpop.f32.mrb[0].mxu0
      %v4193 = vpop.f32.mrb[0].mxu0
      %4194 = vdwg.mxu0
      %s4195 = scalar_lea.vmem %s10, 80
      %v4196 = vld [vmem:[%s4195] sm:$0xf]
      %v4197 = vld [vmem:[%s4195 + $0x4] sm:$0xf]
      %v4198 = vld [vmem:[%s4195 + $0x8] sm:$0xf]
      %v4199 = vld [vmem:[%s4195 + $0xc] sm:$0xf]
      %s4200 = scalar_lea.vmem %s11, 5
      %v4201 = vld [vmem:[%s4200] sm:$0x1]
      %v4203 = vlaneseq
      %v4204 = vshrl.u32 %v4203, 7
      %v4205 = vsub.s32 0, %v4204
      %v4206 = vrot.slane %v4201, %v4205
      %v4212 = vunpack.c.l.b16 %v4196
      %v4213 = vunpack.c.l.b16 %v4197
      %v4214 = vunpack.c.l.b16 %v4198
      %v4215 = vunpack.c.l.b16 %v4199
      %v4216 = vpack.c.b16 %v4213, %v4212
      %v4217 = vpack.c.b16 %v4215, %v4214
      %4220 = vmatprep.subr.bf16.mxu0 0
      %4221 = vmatpush1.bf16.msra.mxu0 %v4216
      %4222 = vmatprep.subr.bf16.mxu0 0
      %4223 = vmatpush1.bf16.msra.mxu0 %v4217
      %4224 = vmatprep.subr.bf16.mxu0 0
      %4225 = vmatpush1.bf16.msra.mxu0 0
      %4226 = vmatprep.subr.bf16.mxu0 0
      %4227 = vmatpush1.bf16.msra.mxu0 0
      %4228 = vmatprep.subr.bf16.mxu0 0
      %4229 = vmatpush1.bf16.msra.mxu0 0
      %4230 = vmatprep.subr.bf16.mxu0 0
      %4231 = vmatpush1.bf16.msra.mxu0 0
      %4232 = vmatprep.subr.bf16.mxu0 0
      %4233 = vmatpush1.bf16.msra.mxu0 0
      %4234 = vmatprep.subr.bf16.mxu0 0
      %4235 = vmatpush1.bf16.msra.mxu0 0
      %4236 = vmatprep.subr.bf16.mxu0 0
      %4237 = vmatpush1.bf16.msra.mxu0 0
      %4238 = vmatprep.subr.bf16.mxu0 0
      %4239 = vmatpush1.bf16.msra.mxu0 0
      %4240 = vmatprep.subr.bf16.mxu0 0
      %4241 = vmatpush1.bf16.msra.mxu0 0
      %4242 = vmatprep.subr.bf16.mxu0 0
      %4243 = vmatpush1.bf16.msra.mxu0 0
      %4244 = vmatprep.subr.bf16.mxu0 0
      %4245 = vmatpush1.bf16.msra.mxu0 0
      %4246 = vmatprep.subr.bf16.mxu0 0
      %4247 = vmatpush1.bf16.msra.mxu0 0
      %4248 = vmatprep.subr.bf16.mxu0 0
      %4249 = vmatpush1.bf16.msra.mxu0 0
      %4250 = vmatprep.subr.bf16.mxu0 0
      %4251 = vmatpush1.bf16.msra.mxu0 0
      %4252 = vmatprep.mubr.bf16.mxu0 0
      %4253 = vmatmul.mubr.bf16.gmra.mrb[0].mxu0 %v3583
      %v4254 = vpop.f32.mrb[0].mxu0
      %v4255 = vadd.f32 %v4206, %v4254
      %v4256 = vpop.f32.mrb[0].mxu0
      %v4257 = vpop.f32.mrb[0].mxu0
      %v4258 = vadd.f32 %v4206, %v4257
      %v4259 = vpop.f32.mrb[0].mxu0
      %4260 = vmatprep.mubr.bf16.mxu0 0
      %4261 = vmatmul.mubr.bf16.gmra.mrb[0].mxu0 %v3586
      %v4262 = vpop.f32.mrb[0].mxu0
      %v4263 = vadd.f32 %v4206, %v4262
      %v4264 = vpop.f32.mrb[0].mxu0
      %v4265 = vpop.f32.mrb[0].mxu0
      %v4266 = vadd.f32 %v4206, %v4265
      %v4267 = vpop.f32.mrb[0].mxu0
      %4268 = vmatprep.mubr.bf16.mxu0 0
      %4269 = vmatmul.mubr.bf16.gmra.mrb[0].mxu0 %v3589
      %v4270 = vpop.f32.mrb[0].mxu0
      %v4271 = vadd.f32 %v4206, %v4270
      %v4272 = vpop.f32.mrb[0].mxu0
      %v4273 = vpop.f32.mrb[0].mxu0
      %v4274 = vpop.f32.mrb[0].mxu0
      %4275 = vdwg.mxu0
      %v4276 = vpack.c.bf16 %v4096, %v4093
      %v4277 = vpack.c.bf16 %v4104, %v4101
      %v4278 = vpack.c.bf16 %v4109, %v4109
      %v4279 = vpack.c.bf16 %v4177, %v4174
      %v4280 = vpack.c.bf16 %v4185, %v4182
      %v4281 = vpack.c.bf16 %v4190, %v4190
      %v4283 = vsel %vm1182, %v4276, 0
      %v4286 = vsel %vm1182, %v4277, 0
      %v4289 = vsel %vm1182, %v4278, 0
      %v4292 = vsel %vm1182, %v4279, 0
      %v4295 = vsel %vm1182, %v4280, 0
      %v4298 = vsel %vm1182, %v4281, 0
      %4300 = vmatprep.subr.bf16.mxu0 0
      %4301 = vmatpush1.bf16.xpose.msra.mxu0 %v4292
      %4302 = vmatprep.subr.bf16.mxu0 0
      %4303 = vmatpush1.bf16.xpose.msra.mxu0 %v4295
      %4304 = vmatprep.subr.bf16.mxu0 0
      %4305 = vmatpush1.bf16.xpose.msra.mxu0 %v4298
      %4306 = vmatprep.subr.bf16.mxu0 0
      %4307 = vmatpush1.bf16.xpose.msra.mxu0 0
      %4308 = vmatprep.subr.bf16.mxu0 0
      %4309 = vmatpush1.bf16.xpose.msra.mxu0 0
      %4310 = vmatprep.subr.bf16.mxu0 0
      %4311 = vmatpush1.bf16.xpose.msra.mxu0 0
      %4312 = vmatprep.subr.bf16.mxu0 0
      %4313 = vmatpush1.bf16.xpose.msra.mxu0 0
      %4314 = vmatprep.subr.bf16.mxu0 0
      %4315 = vmatpush1.bf16.xpose.msra.mxu0 0
      %4316 = vmatprep.subr.bf16.mxu0 0
      %4317 = vmatpush1.bf16.xpose.msra.mxu0 0
      %4318 = vmatprep.subr.bf16.mxu0 0
      %4319 = vmatpush1.bf16.xpose.msra.mxu0 0
      %4320 = vmatprep.subr.bf16.mxu0 0
      %4321 = vmatpush1.bf16.xpose.msra.mxu0 0
      %4322 = vmatprep.subr.bf16.mxu0 0
      %4323 = vmatpush1.bf16.xpose.msra.mxu0 0
      %4324 = vmatprep.subr.bf16.mxu0 0
      %4325 = vmatpush1.bf16.xpose.msra.mxu0 0
      %4326 = vmatprep.subr.bf16.mxu0 0
      %4327 = vmatpush1.bf16.xpose.msra.mxu0 0
      %4328 = vmatprep.subr.bf16.mxu0 0
      %4329 = vmatpush1.bf16.xpose.msra.mxu0 0
      %4330 = vmatprep.subr.bf16.mxu0 0
      %4331 = vmatpush1.bf16.xpose.msra.mxu0 0
      %4332 = vmatprep.mubr.bf16.mxu0 0
      %4333 = vmatmul.mubr.bf16.gmra.mrb[0].mxu0 %v4283
      %v4334 = vpop.f32.mrb[0].mxu0
      %v4335 = vadd.f32 0.0, %v4334
      %v4336 = vpop.f32.mrb[0].mxu0
      %v4337 = vpop.f32.mrb[0].mxu0
      %v4338 = vadd.f32 0.0, %v4337
      %v4339 = vpop.f32.mrb[0].mxu0
      %4340 = vmatprep.mubr.bf16.mxu0 0
      %4341 = vmatmul.mubr.bf16.gmra.mrb[0].mxu0 %v4286
      %v4342 = vpop.f32.mrb[0].mxu0
      %v4343 = vadd.f32 0.0, %v4342
      %v4344 = vpop.f32.mrb[0].mxu0
      %v4345 = vpop.f32.mrb[0].mxu0
      %v4346 = vadd.f32 0.0, %v4345
      %v4347 = vpop.f32.mrb[0].mxu0
      %4348 = vmatprep.mubr.bf16.mxu0 0
      %4349 = vmatmul.mubr.bf16.gmra.mrb[0].mxu0 %v4289
      %v4350 = vpop.f32.mrb[0].mxu0
      %v4351 = vadd.f32 0.0, %v4350
      %v4352 = vpop.f32.mrb[0].mxu0
      %v4353 = vpop.f32.mrb[0].mxu0
      %v4354 = vpop.f32.mrb[0].mxu0
      %4355 = vdwg.mxu0
      %v4356 = vmul.f32 %v4335, 0.35355338
      %v4357 = vmul.f32 %v4338, 0.35355338
      %v4358 = vmul.f32 %v4343, 0.35355338
      %v4359 = vmul.f32 %v4346, 0.35355338
      %v4360 = vmul.f32 %v4351, 0.35355338
      %v4361 = vadd.f32 %v4356, %v830
      %v4362 = vadd.f32 %v4357, %v831
      %v4363 = vadd.f32 %v4358, %v832
      %v4364 = vadd.f32 %v4359, %v833
      %v4365 = vadd.f32 %v4360, %v834
      %v4366 = vsel %vm1267, %v4361, -inf
      %4367 = vmax.xlane.f32.xlu0 %v4366
      %v4368 = vpop.xlane.xlu0 %4367
      %v4369 = vsel %vm1267, %v4362, -inf
      %4370 = vmax.xlane.f32.xlu0 %v4369
      %v4371 = vpop.xlane.xlu0 %4370
      %v4372 = vsel %vm1267, %v4363, -inf
      %4373 = vmax.xlane.f32.xlu0 %v4372
      %v4374 = vpop.xlane.xlu0 %4373
      %v4375 = vsel %vm1267, %v4364, -inf
      %4376 = vmax.xlane.f32.xlu0 %v4375
      %v4377 = vpop.xlane.xlu0 %4376
      %v4378 = vsel %vm1280, %v4365, -inf
      %4379 = vmax.xlane.f32.xlu0 %v4378
      %v4380 = vpop.xlane.xlu0 %4379
      %v4381 = vsub.f32 %v4361, %v4368
      %v4382 = vsub.f32 %v4362, %v4371
      %v4383 = vsub.f32 %v4363, %v4374
      %v4384 = vsub.f32 %v4364, %v4377
      %v4385 = vsub.f32 %v4365, %v4380
      %v4386 = vmul.f32 %v4381, 1.442695
      %v4387 = vpow.pop %v4386
      %v4388 = vmul.f32 %v4382, 1.442695
      %v4389 = vpow.pop %v4388
      %v4390 = vmul.f32 %v4383, 1.442695
      %v4391 = vpow.pop %v4390
      %v4392 = vmul.f32 %v4384, 1.442695
      %v4393 = vpow.pop %v4392
      %v4394 = vmul.f32 %v4385, 1.442695
      %v4395 = vpow.pop %v4394
      %v4396 = vsel %vm1267, %v4387, 0.0
      %4397 = vadd.xlane.f32.xlu0 %v4396
      %v4398 = vpop.xlane.xlu0 %4397
      %v4399 = vsel %vm1267, %v4389, 0.0
      %4400 = vadd.xlane.f32.xlu0 %v4399
      %v4401 = vpop.xlane.xlu0 %4400
      %v4402 = vsel %vm1267, %v4391, 0.0
      %4403 = vadd.xlane.f32.xlu0 %v4402
      %v4404 = vpop.xlane.xlu0 %4403
      %v4405 = vsel %vm1267, %v4393, 0.0
      %4406 = vadd.xlane.f32.xlu0 %v4405
      %v4407 = vpop.xlane.xlu0 %4406
      %v4408 = vsel %vm1280, %v4395, 0.0
      %4409 = vadd.xlane.f32.xlu0 %v4408
      %v4410 = vpop.xlane.xlu0 %4409
      %v4411 = vrcp.pop %v4398
      %v4412 = vrcp.pop %v4401
      %v4413 = vrcp.pop %v4404
      %v4414 = vrcp.pop %v4407
      %v4415 = vrcp.pop %v4410
      %v4416 = vmul.f32 %v4387, %v4411
      %v4417 = vmul.f32 %v4389, %v4412
      %v4418 = vmul.f32 %v4391, %v4413
      %v4419 = vmul.f32 %v4393, %v4414
      %v4420 = vmul.f32 %v4395, %v4415
      %v4421 = vpack.c.bf16 %v4417, %v4416
      %v4422 = vpack.c.bf16 %v4419, %v4418
      %v4423 = vpack.c.bf16 %v4420, %v4420
      %v4424 = vpack.c.bf16 %v4258, %v4255
      %v4425 = vpack.c.bf16 %v4266, %v4263
      %v4426 = vpack.c.bf16 %v4271, %v4271
      %v4428 = vsel %vm1267, %v4421, 0
      %v4431 = vsel %vm1267, %v4422, 0
      %v4434 = vsel %vm1267, %v4423, 0
      %v4437 = vsel %vm1339, %v4426, 0
      %4439 = vmatprep.subr.bf16.mxu0 0
      %4440 = vmatpush1.bf16.msra.mxu0 %v4424
      %4441 = vmatprep.subr.bf16.mxu0 0
      %4442 = vmatpush1.bf16.msra.mxu0 %v4425
      %4443 = vmatprep.subr.bf16.mxu0 0
      %4444 = vmatpush1.bf16.msra.mxu0 %v4437
      %4445 = vmatprep.subr.bf16.mxu0 0
      %4446 = vmatpush1.bf16.msra.mxu0 0
      %4447 = vmatprep.subr.bf16.mxu0 0
      %4448 = vmatpush1.bf16.msra.mxu0 0
      %4449 = vmatprep.subr.bf16.mxu0 0
      %4450 = vmatpush1.bf16.msra.mxu0 0
      %4451 = vmatprep.subr.bf16.mxu0 0
      %4452 = vmatpush1.bf16.msra.mxu0 0
      %4453 = vmatprep.subr.bf16.mxu0 0
      %4454 = vmatpush1.bf16.msra.mxu0 0
      %4455 = vmatprep.subr.bf16.mxu0 0
      %4456 = vmatpush1.bf16.msra.mxu0 0
      %4457 = vmatprep.subr.bf16.mxu0 0
      %4458 = vmatpush1.bf16.msra.mxu0 0
      %4459 = vmatprep.subr.bf16.mxu0 0
      %4460 = vmatpush1.bf16.msra.mxu0 0
      %4461 = vmatprep.subr.bf16.mxu0 0
      %4462 = vmatpush1.bf16.msra.mxu0 0
      %4463 = vmatprep.subr.bf16.mxu0 0
      %4464 = vmatpush1.bf16.msra.mxu0 0
      %4465 = vmatprep.subr.bf16.mxu0 0
      %4466 = vmatpush1.bf16.msra.mxu0 0
      %4467 = vmatprep.subr.bf16.mxu0 0
      %4468 = vmatpush1.bf16.msra.mxu0 0
      %4469 = vmatprep.subr.bf16.mxu0 0
      %4470 = vmatpush1.bf16.msra.mxu0 0
      %4471 = vmatprep.mubr.bf16.mxu0 0
      %4472 = vmatmul.mubr.bf16.gmra.mrb[0].mxu0 %v4428
      %v4473 = vpop.f32.mrb[0].mxu0
      %v4474 = vadd.f32 0.0, %v4473
      %v4475 = vpop.f32.mrb[0].mxu0
      %v4476 = vpop.f32.mrb[0].mxu0
      %v4477 = vadd.f32 0.0, %v4476
      %v4478 = vpop.f32.mrb[0].mxu0
      %4479 = vmatprep.mubr.bf16.mxu0 0
      %4480 = vmatmul.mubr.bf16.gmra.mrb[0].mxu0 %v4431
      %v4481 = vpop.f32.mrb[0].mxu0
      %v4482 = vadd.f32 0.0, %v4481
      %v4483 = vpop.f32.mrb[0].mxu0
      %v4484 = vpop.f32.mrb[0].mxu0
      %v4485 = vadd.f32 0.0, %v4484
      %v4486 = vpop.f32.mrb[0].mxu0
      %4487 = vmatprep.mubr.bf16.mxu0 0
      %4488 = vmatmul.mubr.bf16.gmra.mrb[0].mxu0 %v4434
      %v4489 = vpop.f32.mrb[0].mxu0
      %v4490 = vadd.f32 0.0, %v4489
      %v4491 = vpop.f32.mrb[0].mxu0
      %v4492 = vpop.f32.mrb[0].mxu0
      %v4493 = vpop.f32.mrb[0].mxu0
      %4494 = vdwg.mxu0
      %v4495 = vpack.c.bf16 %v4477, %v4474
      %v4496 = vpack.c.bf16 %v4485, %v4482
      %v4497 = vpack.c.bf16 %v4490, %v4490
      %s4498 = scalar_lea.vmem %s12, 20
      %v4499 = vld [vmem:[%s4498] sm:$0xf]
      %v4501 = vsel %vm1182, %v4495, 0
      %v4504 = vsel %vm1182, %v4496, 0
      %v4507 = vsel %vm1182, %v4497, 0
      %v4510 = vsel %vm736, %v4499, 0
      %4512 = vmatprep.subr.bf16.mxu0 0
      %4513 = vmatpush1.bf16.msra.mxu0 %v4510
      %4514 = vmatprep.subr.bf16.mxu0 0
      %4515 = vmatpush1.bf16.msra.mxu0 0
      %4516 = vmatprep.subr.bf16.mxu0 0
      %4517 = vmatpush1.bf16.msra.mxu0 0
      %4518 = vmatprep.subr.bf16.mxu0 0
      %4519 = vmatpush1.bf16.msra.mxu0 0
      %4520 = vmatprep.subr.bf16.mxu0 0
      %4521 = vmatpush1.bf16.msra.mxu0 0
      %4522 = vmatprep.subr.bf16.mxu0 0
      %4523 = vmatpush1.bf16.msra.mxu0 0
      %4524 = vmatprep.subr.bf16.mxu0 0
      %4525 = vmatpush1.bf16.msra.mxu0 0
      %4526 = vmatprep.subr.bf16.mxu0 0
      %4527 = vmatpush1.bf16.msra.mxu0 0
      %4528 = vmatprep.subr.bf16.mxu0 0
      %4529 = vmatpush1.bf16.msra.mxu0 0
      %4530 = vmatprep.subr.bf16.mxu0 0
      %4531 = vmatpush1.bf16.msra.mxu0 0
      %4532 = vmatprep.subr.bf16.mxu0 0
      %4533 = vmatpush1.bf16.msra.mxu0 0
      %4534 = vmatprep.subr.bf16.mxu0 0
      %4535 = vmatpush1.bf16.msra.mxu0 0
      %4536 = vmatprep.subr.bf16.mxu0 0
      %4537 = vmatpush1.bf16.msra.mxu0 0
      %4538 = vmatprep.subr.bf16.mxu0 0
      %4539 = vmatpush1.bf16.msra.mxu0 0
      %4540 = vmatprep.subr.bf16.mxu0 0
      %4541 = vmatpush1.bf16.msra.mxu0 0
      %4542 = vmatprep.subr.bf16.mxu0 0
      %4543 = vmatpush1.bf16.msra.mxu0 0
      %4544 = vmatprep.mubr.bf16.mxu0 0
      %4545 = vmatmul.mubr.bf16.gmra.mrb[0].mxu0 %v4501
      %v4546 = vpop.f32.mrb[0].mxu0
      %v4547 = vadd.f32 0.0, %v4546
      %v4548 = vpop.f32.mrb[0].mxu0
      %v4549 = vpop.f32.mrb[0].mxu0
      %v4550 = vadd.f32 0.0, %v4549
      %v4551 = vpop.f32.mrb[0].mxu0
      %4552 = vmatprep.mubr.bf16.mxu0 0
      %4553 = vmatmul.mubr.bf16.gmra.mrb[0].mxu0 %v4504
      %v4554 = vpop.f32.mrb[0].mxu0
      %v4555 = vadd.f32 0.0, %v4554
      %v4556 = vpop.f32.mrb[0].mxu0
      %v4557 = vpop.f32.mrb[0].mxu0
      %v4558 = vadd.f32 0.0, %v4557
      %v4559 = vpop.f32.mrb[0].mxu0
      %4560 = vmatprep.mubr.bf16.mxu0 0
      %4561 = vmatmul.mubr.bf16.gmra.mrb[0].mxu0 %v4507
      %v4562 = vpop.f32.mrb[0].mxu0
      %v4563 = vadd.f32 0.0, %v4562
      %v4564 = vpop.f32.mrb[0].mxu0
      %v4565 = vpop.f32.mrb[0].mxu0
      %v4566 = vpop.f32.mrb[0].mxu0
      %4567 = vdwg.mxu0
      %v4569 = vsel %vm1182, %v4028, 0
      %v4572 = vsel %vm1182, %v4029, 0
      %v4575 = vsel %vm1182, %v4030, 0
      %v4578 = vsel %vm736, %v4032, 0
      %4580 = vmatprep.subr.bf16.mxu0 0
      %4581 = vmatpush1.bf16.msra.mxu0 %v4578
      %4582 = vmatprep.subr.bf16.mxu0 0
      %4583 = vmatpush1.bf16.msra.mxu0 0
      %4584 = vmatprep.subr.bf16.mxu0 0
      %4585 = vmatpush1.bf16.msra.mxu0 0
      %4586 = vmatprep.subr.bf16.mxu0 0
      %4587 = vmatpush1.bf16.msra.mxu0 0
      %4588 = vmatprep.subr.bf16.mxu0 0
      %4589 = vmatpush1.bf16.msra.mxu0 0
      %4590 = vmatprep.subr.bf16.mxu0 0
      %4591 = vmatpush1.bf16.msra.mxu0 0
      %4592 = vmatprep.subr.bf16.mxu0 0
      %4593 = vmatpush1.bf16.msra.mxu0 0
      %4594 = vmatprep.subr.bf16.mxu0 0
      %4595 = vmatpush1.bf16.msra.mxu0 0
      %4596 = vmatprep.subr.bf16.mxu0 0
      %4597 = vmatpush1.bf16.msra.mxu0 0
      %4598 = vmatprep.subr.bf16.mxu0 0
      %4599 = vmatpush1.bf16.msra.mxu0 0
      %4600 = vmatprep.subr.bf16.mxu0 0
      %4601 = vmatpush1.bf16.msra.mxu0 0
      %4602 = vmatprep.subr.bf16.mxu0 0
      %4603 = vmatpush1.bf16.msra.mxu0 0
      %4604 = vmatprep.subr.bf16.mxu0 0
      %4605 = vmatpush1.bf16.msra.mxu0 0
      %4606 = vmatprep.subr.bf16.mxu0 0
      %4607 = vmatpush1.bf16.msra.mxu0 0
      %4608 = vmatprep.subr.bf16.mxu0 0
      %4609 = vmatpush1.bf16.msra.mxu0 0
      %4610 = vmatprep.subr.bf16.mxu0 0
      %4611 = vmatpush1.bf16.msra.mxu0 0
      %4612 = vmatprep.mubr.bf16.mxu0 0
      %4613 = vmatmul.mubr.bf16.gmra.mrb[0].mxu0 %v4569
      %v4614 = vpop.f32.mrb[0].mxu0
      %v4615 = vadd.f32 %v4547, %v4614
      %v4616 = vpop.f32.mrb[0].mxu0
      %v4617 = vpop.f32.mrb[0].mxu0
      %v4618 = vadd.f32 %v4550, %v4617
      %v4619 = vpop.f32.mrb[0].mxu0
      %4620 = vmatprep.mubr.bf16.mxu0 0
      %4621 = vmatmul.mubr.bf16.gmra.mrb[0].mxu0 %v4572
      %v4622 = vpop.f32.mrb[0].mxu0
      %v4623 = vadd.f32 %v4555, %v4622
      %v4624 = vpop.f32.mrb[0].mxu0
      %v4625 = vpop.f32.mrb[0].mxu0
      %v4626 = vadd.f32 %v4558, %v4625
      %v4627 = vpop.f32.mrb[0].mxu0
      %4628 = vmatprep.mubr.bf16.mxu0 0
      %4629 = vmatmul.mubr.bf16.gmra.mrb[0].mxu0 %v4575
      %v4630 = vpop.f32.mrb[0].mxu0
      %v4631 = vadd.f32 %v4563, %v4630
      %v4632 = vpop.f32.mrb[0].mxu0
      %v4633 = vpop.f32.mrb[0].mxu0
      %v4634 = vpop.f32.mrb[0].mxu0
      %4635 = vdwg.mxu0
      %s4636 = scalar_lea.vmem %s6, 96
      %v4637 = vld [vmem:[%s4636] sm:$0xf]
      %v4638 = vld [vmem:[%s4636 + $0x4] sm:$0xf]
      %v4639 = vld [vmem:[%s4636 + $0x8] sm:$0xf]
      %v4640 = vld [vmem:[%s4636 + $0xc] sm:$0xf]
      %s4641 = scalar_lea.vmem %s7, 6
      %v4642 = vld [vmem:[%s4641] sm:$0x1]
      %v4644 = vlaneseq
      %v4645 = vshrl.u32 %v4644, 7
      %v4646 = vsub.s32 0, %v4645
      %v4647 = vrot.slane %v4642, %v4646
      %v4653 = vunpack.c.l.b16 %v4637
      %v4654 = vunpack.c.l.b16 %v4638
      %v4655 = vunpack.c.l.b16 %v4639
      %v4656 = vunpack.c.l.b16 %v4640
      %v4657 = vpack.c.b16 %v4654, %v4653
      %v4658 = vpack.c.b16 %v4656, %v4655
      %4661 = vmatprep.subr.bf16.mxu0 0
      %4662 = vmatpush1.bf16.msra.mxu0 %v4657
      %4663 = vmatprep.subr.bf16.mxu0 0
      %4664 = vmatpush1.bf16.msra.mxu0 %v4658
      %4665 = vmatprep.subr.bf16.mxu0 0
      %4666 = vmatpush1.bf16.msra.mxu0 0
      %4667 = vmatprep.subr.bf16.mxu0 0
      %4668 = vmatpush1.bf16.msra.mxu0 0
      %4669 = vmatprep.subr.bf16.mxu0 0
      %4670 = vmatpush1.bf16.msra.mxu0 0
      %4671 = vmatprep.subr.bf16.mxu0 0
      %4672 = vmatpush1.bf16.msra.mxu0 0
      %4673 = vmatprep.subr.bf16.mxu0 0
      %4674 = vmatpush1.bf16.msra.mxu0 0
      %4675 = vmatprep.subr.bf16.mxu0 0
      %4676 = vmatpush1.bf16.msra.mxu0 0
      %4677 = vmatprep.subr.bf16.mxu0 0
      %4678 = vmatpush1.bf16.msra.mxu0 0
      %4679 = vmatprep.subr.bf16.mxu0 0
      %4680 = vmatpush1.bf16.msra.mxu0 0
      %4681 = vmatprep.subr.bf16.mxu0 0
      %4682 = vmatpush1.bf16.msra.mxu0 0
      %4683 = vmatprep.subr.bf16.mxu0 0
      %4684 = vmatpush1.bf16.msra.mxu0 0
      %4685 = vmatprep.subr.bf16.mxu0 0
      %4686 = vmatpush1.bf16.msra.mxu0 0
      %4687 = vmatprep.subr.bf16.mxu0 0
      %4688 = vmatpush1.bf16.msra.mxu0 0
      %4689 = vmatprep.subr.bf16.mxu0 0
      %4690 = vmatpush1.bf16.msra.mxu0 0
      %4691 = vmatprep.subr.bf16.mxu0 0
      %4692 = vmatpush1.bf16.msra.mxu0 0
      %4693 = vmatprep.mubr.bf16.mxu0 0
      %4694 = vmatmul.mubr.bf16.gmra.mrb[0].mxu0 %v3583
      %v4695 = vpop.f32.mrb[0].mxu0
      %v4696 = vadd.f32 %v4647, %v4695
      %v4697 = vpop.f32.mrb[0].mxu0
      %v4698 = vpop.f32.mrb[0].mxu0
      %v4699 = vadd.f32 %v4647, %v4698
      %v4700 = vpop.f32.mrb[0].mxu0
      %4701 = vmatprep.mubr.bf16.mxu0 0
      %4702 = vmatmul.mubr.bf16.gmra.mrb[0].mxu0 %v3586
      %v4703 = vpop.f32.mrb[0].mxu0
      %v4704 = vadd.f32 %v4647, %v4703
      %v4705 = vpop.f32.mrb[0].mxu0
      %v4706 = vpop.f32.mrb[0].mxu0
      %v4707 = vadd.f32 %v4647, %v4706
      %v4708 = vpop.f32.mrb[0].mxu0
      %4709 = vmatprep.mubr.bf16.mxu0 0
      %4710 = vmatmul.mubr.bf16.gmra.mrb[0].mxu0 %v3589
      %v4711 = vpop.f32.mrb[0].mxu0
      %v4712 = vadd.f32 %v4647, %v4711
      %v4713 = vpop.f32.mrb[0].mxu0
      %v4714 = vpop.f32.mrb[0].mxu0
      %v4715 = vpop.f32.mrb[0].mxu0
      %4716 = vdwg.mxu0
      %s4717 = scalar_lea.vmem %s8, 96
      %v4718 = vld [vmem:[%s4717] sm:$0xf]
      %v4719 = vld [vmem:[%s4717 + $0x4] sm:$0xf]
      %v4720 = vld [vmem:[%s4717 + $0x8] sm:$0xf]
      %v4721 = vld [vmem:[%s4717 + $0xc] sm:$0xf]
      %s4722 = scalar_lea.vmem %s9, 6
      %v4723 = vld [vmem:[%s4722] sm:$0x1]
      %v4725 = vlaneseq
      %v4726 = vshrl.u32 %v4725, 7
      %v4727 = vsub.s32 0, %v4726
      %v4728 = vrot.slane %v4723, %v4727
      %v4734 = vunpack.c.l.b16 %v4718
      %v4735 = vunpack.c.l.b16 %v4719
      %v4736 = vunpack.c.l.b16 %v4720
      %v4737 = vunpack.c.l.b16 %v4721
      %v4738 = vpack.c.b16 %v4735, %v4734
      %v4739 = vpack.c.b16 %v4737, %v4736
      %4742 = vmatprep.subr.bf16.mxu0 0
      %4743 = vmatpush1.bf16.msra.mxu0 %v4738
      %4744 = vmatprep.subr.bf16.mxu0 0
      %4745 = vmatpush1.bf16.msra.mxu0 %v4739
      %4746 = vmatprep.subr.bf16.mxu0 0
      %4747 = vmatpush1.bf16.msra.mxu0 0
      %4748 = vmatprep.subr.bf16.mxu0 0
      %4749 = vmatpush1.bf16.msra.mxu0 0
      %4750 = vmatprep.subr.bf16.mxu0 0
      %4751 = vmatpush1.bf16.msra.mxu0 0
      %4752 = vmatprep.subr.bf16.mxu0 0
      %4753 = vmatpush1.bf16.msra.mxu0 0
      %4754 = vmatprep.subr.bf16.mxu0 0
      %4755 = vmatpush1.bf16.msra.mxu0 0
      %4756 = vmatprep.subr.bf16.mxu0 0
      %4757 = vmatpush1.bf16.msra.mxu0 0
      %4758 = vmatprep.subr.bf16.mxu0 0
      %4759 = vmatpush1.bf16.msra.mxu0 0
      %4760 = vmatprep.subr.bf16.mxu0 0
      %4761 = vmatpush1.bf16.msra.mxu0 0
      %4762 = vmatprep.subr.bf16.mxu0 0
      %4763 = vmatpush1.bf16.msra.mxu0 0
      %4764 = vmatprep.subr.bf16.mxu0 0
      %4765 = vmatpush1.bf16.msra.mxu0 0
      %4766 = vmatprep.subr.bf16.mxu0 0
      %4767 = vmatpush1.bf16.msra.mxu0 0
      %4768 = vmatprep.subr.bf16.mxu0 0
      %4769 = vmatpush1.bf16.msra.mxu0 0
      %4770 = vmatprep.subr.bf16.mxu0 0
      %4771 = vmatpush1.bf16.msra.mxu0 0
      %4772 = vmatprep.subr.bf16.mxu0 0
      %4773 = vmatpush1.bf16.msra.mxu0 0
      %4774 = vmatprep.mubr.bf16.mxu0 0
      %4775 = vmatmul.mubr.bf16.gmra.mrb[0].mxu0 %v3583
      %v4776 = vpop.f32.mrb[0].mxu0
      %v4777 = vadd.f32 %v4728, %v4776
      %v4778 = vpop.f32.mrb[0].mxu0
      %v4779 = vpop.f32.mrb[0].mxu0
      %v4780 = vadd.f32 %v4728, %v4779
      %v4781 = vpop.f32.mrb[0].mxu0
      %4782 = vmatprep.mubr.bf16.mxu0 0
      %4783 = vmatmul.mubr.bf16.gmra.mrb[0].mxu0 %v3586
      %v4784 = vpop.f32.mrb[0].mxu0
      %v4785 = vadd.f32 %v4728, %v4784
      %v4786 = vpop.f32.mrb[0].mxu0
      %v4787 = vpop.f32.mrb[0].mxu0
      %v4788 = vadd.f32 %v4728, %v4787
      %v4789 = vpop.f32.mrb[0].mxu0
      %4790 = vmatprep.mubr.bf16.mxu0 0
      %4791 = vmatmul.mubr.bf16.gmra.mrb[0].mxu0 %v3589
      %v4792 = vpop.f32.mrb[0].mxu0
      %v4793 = vadd.f32 %v4728, %v4792
      %v4794 = vpop.f32.mrb[0].mxu0
      %v4795 = vpop.f32.mrb[0].mxu0
      %v4796 = vpop.f32.mrb[0].mxu0
      %4797 = vdwg.mxu0
      %s4798 = scalar_lea.vmem %s10, 96
      %v4799 = vld [vmem:[%s4798] sm:$0xf]
      %v4800 = vld [vmem:[%s4798 + $0x4] sm:$0xf]
      %v4801 = vld [vmem:[%s4798 + $0x8] sm:$0xf]
      %v4802 = vld [vmem:[%s4798 + $0xc] sm:$0xf]
      %s4803 = scalar_lea.vmem %s11, 6
      %v4804 = vld [vmem:[%s4803] sm:$0x1]
      %v4806 = vlaneseq
      %v4807 = vshrl.u32 %v4806, 7
      %v4808 = vsub.s32 0, %v4807
      %v4809 = vrot.slane %v4804, %v4808
      %v4815 = vunpack.c.l.b16 %v4799
      %v4816 = vunpack.c.l.b16 %v4800
      %v4817 = vunpack.c.l.b16 %v4801
      %v4818 = vunpack.c.l.b16 %v4802
      %v4819 = vpack.c.b16 %v4816, %v4815
      %v4820 = vpack.c.b16 %v4818, %v4817
      %4823 = vmatprep.subr.bf16.mxu0 0
      %4824 = vmatpush1.bf16.msra.mxu0 %v4819
      %4825 = vmatprep.subr.bf16.mxu0 0
      %4826 = vmatpush1.bf16.msra.mxu0 %v4820
      %4827 = vmatprep.subr.bf16.mxu0 0
      %4828 = vmatpush1.bf16.msra.mxu0 0
      %4829 = vmatprep.subr.bf16.mxu0 0
      %4830 = vmatpush1.bf16.msra.mxu0 0
      %4831 = vmatprep.subr.bf16.mxu0 0
      %4832 = vmatpush1.bf16.msra.mxu0 0
      %4833 = vmatprep.subr.bf16.mxu0 0
      %4834 = vmatpush1.bf16.msra.mxu0 0
      %4835 = vmatprep.subr.bf16.mxu0 0
      %4836 = vmatpush1.bf16.msra.mxu0 0
      %4837 = vmatprep.subr.bf16.mxu0 0
      %4838 = vmatpush1.bf16.msra.mxu0 0
      %4839 = vmatprep.subr.bf16.mxu0 0
      %4840 = vmatpush1.bf16.msra.mxu0 0
      %4841 = vmatprep.subr.bf16.mxu0 0
      %4842 = vmatpush1.bf16.msra.mxu0 0
      %4843 = vmatprep.subr.bf16.mxu0 0
      %4844 = vmatpush1.bf16.msra.mxu0 0
      %4845 = vmatprep.subr.bf16.mxu0 0
      %4846 = vmatpush1.bf16.msra.mxu0 0
      %4847 = vmatprep.subr.bf16.mxu0 0
      %4848 = vmatpush1.bf16.msra.mxu0 0
      %4849 = vmatprep.subr.bf16.mxu0 0
      %4850 = vmatpush1.bf16.msra.mxu0 0
      %4851 = vmatprep.subr.bf16.mxu0 0
      %4852 = vmatpush1.bf16.msra.mxu0 0
      %4853 = vmatprep.subr.bf16.mxu0 0
      %4854 = vmatpush1.bf16.msra.mxu0 0
      %4855 = vmatprep.mubr.bf16.mxu0 0
      %4856 = vmatmul.mubr.bf16.gmra.mrb[0].mxu0 %v3583
      %v4857 = vpop.f32.mrb[0].mxu0
      %v4858 = vadd.f32 %v4809, %v4857
      %v4859 = vpop.f32.mrb[0].mxu0
      %v4860 = vpop.f32.mrb[0].mxu0
      %v4861 = vadd.f32 %v4809, %v4860
      %v4862 = vpop.f32.mrb[0].mxu0
      %4863 = vmatprep.mubr.bf16.mxu0 0
      %4864 = vmatmul.mubr.bf16.gmra.mrb[0].mxu0 %v3586
      %v4865 = vpop.f32.mrb[0].mxu0
      %v4866 = vadd.f32 %v4809, %v4865
      %v4867 = vpop.f32.mrb[0].mxu0
      %v4868 = vpop.f32.mrb[0].mxu0
      %v4869 = vadd.f32 %v4809, %v4868
      %v4870 = vpop.f32.mrb[0].mxu0
      %4871 = vmatprep.mubr.bf16.mxu0 0
      %4872 = vmatmul.mubr.bf16.gmra.mrb[0].mxu0 %v3589
      %v4873 = vpop.f32.mrb[0].mxu0
      %v4874 = vadd.f32 %v4809, %v4873
      %v4875 = vpop.f32.mrb[0].mxu0
      %v4876 = vpop.f32.mrb[0].mxu0
      %v4877 = vpop.f32.mrb[0].mxu0
      %4878 = vdwg.mxu0
      %v4879 = vpack.c.bf16 %v4699, %v4696
      %v4880 = vpack.c.bf16 %v4707, %v4704
      %v4881 = vpack.c.bf16 %v4712, %v4712
      %v4882 = vpack.c.bf16 %v4780, %v4777
      %v4883 = vpack.c.bf16 %v4788, %v4785
      %v4884 = vpack.c.bf16 %v4793, %v4793
      %v4886 = vsel %vm1182, %v4879, 0
      %v4889 = vsel %vm1182, %v4880, 0
      %v4892 = vsel %vm1182, %v4881, 0
      %v4895 = vsel %vm1182, %v4882, 0
      %v4898 = vsel %vm1182, %v4883, 0
      %v4901 = vsel %vm1182, %v4884, 0
      %4903 = vmatprep.subr.bf16.mxu0 0
      %4904 = vmatpush1.bf16.xpose.msra.mxu0 %v4895
      %4905 = vmatprep.subr.bf16.mxu0 0
      %4906 = vmatpush1.bf16.xpose.msra.mxu0 %v4898
      %4907 = vmatprep.subr.bf16.mxu0 0
      %4908 = vmatpush1.bf16.xpose.msra.mxu0 %v4901
      %4909 = vmatprep.subr.bf16.mxu0 0
      %4910 = vmatpush1.bf16.xpose.msra.mxu0 0
      %4911 = vmatprep.subr.bf16.mxu0 0
      %4912 = vmatpush1.bf16.xpose.msra.mxu0 0
      %4913 = vmatprep.subr.bf16.mxu0 0
      %4914 = vmatpush1.bf16.xpose.msra.mxu0 0
      %4915 = vmatprep.subr.bf16.mxu0 0
      %4916 = vmatpush1.bf16.xpose.msra.mxu0 0
      %4917 = vmatprep.subr.bf16.mxu0 0
      %4918 = vmatpush1.bf16.xpose.msra.mxu0 0
      %4919 = vmatprep.subr.bf16.mxu0 0
      %4920 = vmatpush1.bf16.xpose.msra.mxu0 0
      %4921 = vmatprep.subr.bf16.mxu0 0
      %4922 = vmatpush1.bf16.xpose.msra.mxu0 0
      %4923 = vmatprep.subr.bf16.mxu0 0
      %4924 = vmatpush1.bf16.xpose.msra.mxu0 0
      %4925 = vmatprep.subr.bf16.mxu0 0
      %4926 = vmatpush1.bf16.xpose.msra.mxu0 0
      %4927 = vmatprep.subr.bf16.mxu0 0
      %4928 = vmatpush1.bf16.xpose.msra.mxu0 0
      %4929 = vmatprep.subr.bf16.mxu0 0
      %4930 = vmatpush1.bf16.xpose.msra.mxu0 0
      %4931 = vmatprep.subr.bf16.mxu0 0
      %4932 = vmatpush1.bf16.xpose.msra.mxu0 0
      %4933 = vmatprep.subr.bf16.mxu0 0
      %4934 = vmatpush1.bf16.xpose.msra.mxu0 0
      %4935 = vmatprep.mubr.bf16.mxu0 0
      %4936 = vmatmul.mubr.bf16.gmra.mrb[0].mxu0 %v4886
      %v4937 = vpop.f32.mrb[0].mxu0
      %v4938 = vadd.f32 0.0, %v4937
      %v4939 = vpop.f32.mrb[0].mxu0
      %v4940 = vpop.f32.mrb[0].mxu0
      %v4941 = vadd.f32 0.0, %v4940
      %v4942 = vpop.f32.mrb[0].mxu0
      %4943 = vmatprep.mubr.bf16.mxu0 0
      %4944 = vmatmul.mubr.bf16.gmra.mrb[0].mxu0 %v4889
      %v4945 = vpop.f32.mrb[0].mxu0
      %v4946 = vadd.f32 0.0, %v4945
      %v4947 = vpop.f32.mrb[0].mxu0
      %v4948 = vpop.f32.mrb[0].mxu0
      %v4949 = vadd.f32 0.0, %v4948
      %v4950 = vpop.f32.mrb[0].mxu0
      %4951 = vmatprep.mubr.bf16.mxu0 0
      %4952 = vmatmul.mubr.bf16.gmra.mrb[0].mxu0 %v4892
      %v4953 = vpop.f32.mrb[0].mxu0
      %v4954 = vadd.f32 0.0, %v4953
      %v4955 = vpop.f32.mrb[0].mxu0
      %v4956 = vpop.f32.mrb[0].mxu0
      %v4957 = vpop.f32.mrb[0].mxu0
      %4958 = vdwg.mxu0
      %v4959 = vmul.f32 %v4938, 0.35355338
      %v4960 = vmul.f32 %v4941, 0.35355338
      %v4961 = vmul.f32 %v4946, 0.35355338
      %v4962 = vmul.f32 %v4949, 0.35355338
      %v4963 = vmul.f32 %v4954, 0.35355338
      %v4964 = vadd.f32 %v4959, %v830
      %v4965 = vadd.f32 %v4960, %v831
      %v4966 = vadd.f32 %v4961, %v832
      %v4967 = vadd.f32 %v4962, %v833
      %v4968 = vadd.f32 %v4963, %v834
      %v4969 = vsel %vm1267, %v4964, -inf
      %4970 = vmax.xlane.f32.xlu0 %v4969
      %v4971 = vpop.xlane.xlu0 %4970
      %v4972 = vsel %vm1267, %v4965, -inf
      %4973 = vmax.xlane.f32.xlu0 %v4972
      %v4974 = vpop.xlane.xlu0 %4973
      %v4975 = vsel %vm1267, %v4966, -inf
      %4976 = vmax.xlane.f32.xlu0 %v4975
      %v4977 = vpop.xlane.xlu0 %4976
      %v4978 = vsel %vm1267, %v4967, -inf
      %4979 = vmax.xlane.f32.xlu0 %v4978
      %v4980 = vpop.xlane.xlu0 %4979
      %v4981 = vsel %vm1280, %v4968, -inf
      %4982 = vmax.xlane.f32.xlu0 %v4981
      %v4983 = vpop.xlane.xlu0 %4982
      %v4984 = vsub.f32 %v4964, %v4971
      %v4985 = vsub.f32 %v4965, %v4974
      %v4986 = vsub.f32 %v4966, %v4977
      %v4987 = vsub.f32 %v4967, %v4980
      %v4988 = vsub.f32 %v4968, %v4983
      %v4989 = vmul.f32 %v4984, 1.442695
      %v4990 = vpow.pop %v4989
      %v4991 = vmul.f32 %v4985, 1.442695
      %v4992 = vpow.pop %v4991
      %v4993 = vmul.f32 %v4986, 1.442695
      %v4994 = vpow.pop %v4993
      %v4995 = vmul.f32 %v4987, 1.442695
      %v4996 = vpow.pop %v4995
      %v4997 = vmul.f32 %v4988, 1.442695
      %v4998 = vpow.pop %v4997
      %v4999 = vsel %vm1267, %v4990, 0.0
      %5000 = vadd.xlane.f32.xlu0 %v4999
      %v5001 = vpop.xlane.xlu0 %5000
      %v5002 = vsel %vm1267, %v4992, 0.0
      %5003 = vadd.xlane.f32.xlu0 %v5002
      %v5004 = vpop.xlane.xlu0 %5003
      %v5005 = vsel %vm1267, %v4994, 0.0
      %5006 = vadd.xlane.f32.xlu0 %v5005
      %v5007 = vpop.xlane.xlu0 %5006
      %v5008 = vsel %vm1267, %v4996, 0.0
      %5009 = vadd.xlane.f32.xlu0 %v5008
      %v5010 = vpop.xlane.xlu0 %5009
      %v5011 = vsel %vm1280, %v4998, 0.0
      %5012 = vadd.xlane.f32.xlu0 %v5011
      %v5013 = vpop.xlane.xlu0 %5012
      %v5014 = vrcp.pop %v5001
      %v5015 = vrcp.pop %v5004
      %v5016 = vrcp.pop %v5007
      %v5017 = vrcp.pop %v5010
      %v5018 = vrcp.pop %v5013
      %v5019 = vmul.f32 %v4990, %v5014
      %v5020 = vmul.f32 %v4992, %v5015
      %v5021 = vmul.f32 %v4994, %v5016
      %v5022 = vmul.f32 %v4996, %v5017
      %v5023 = vmul.f32 %v4998, %v5018
      %v5024 = vpack.c.bf16 %v5020, %v5019
      %v5025 = vpack.c.bf16 %v5022, %v5021
      %v5026 = vpack.c.bf16 %v5023, %v5023
      %v5027 = vpack.c.bf16 %v4861, %v4858
      %v5028 = vpack.c.bf16 %v4869, %v4866
      %v5029 = vpack.c.bf16 %v4874, %v4874
      %v5031 = vsel %vm1267, %v5024, 0
      %v5034 = vsel %vm1267, %v5025, 0
      %v5037 = vsel %vm1267, %v5026, 0
      %v5040 = vsel %vm1339, %v5029, 0
      %5042 = vmatprep.subr.bf16.mxu0 0
      %5043 = vmatpush1.bf16.msra.mxu0 %v5027
      %5044 = vmatprep.subr.bf16.mxu0 0
      %5045 = vmatpush1.bf16.msra.mxu0 %v5028
      %5046 = vmatprep.subr.bf16.mxu0 0
      %5047 = vmatpush1.bf16.msra.mxu0 %v5040
      %5048 = vmatprep.subr.bf16.mxu0 0
      %5049 = vmatpush1.bf16.msra.mxu0 0
      %5050 = vmatprep.subr.bf16.mxu0 0
      %5051 = vmatpush1.bf16.msra.mxu0 0
      %5052 = vmatprep.subr.bf16.mxu0 0
      %5053 = vmatpush1.bf16.msra.mxu0 0
      %5054 = vmatprep.subr.bf16.mxu0 0
      %5055 = vmatpush1.bf16.msra.mxu0 0
      %5056 = vmatprep.subr.bf16.mxu0 0
      %5057 = vmatpush1.bf16.msra.mxu0 0
      %5058 = vmatprep.subr.bf16.mxu0 0
      %5059 = vmatpush1.bf16.msra.mxu0 0
      %5060 = vmatprep.subr.bf16.mxu0 0
      %5061 = vmatpush1.bf16.msra.mxu0 0
      %5062 = vmatprep.subr.bf16.mxu0 0
      %5063 = vmatpush1.bf16.msra.mxu0 0
      %5064 = vmatprep.subr.bf16.mxu0 0
      %5065 = vmatpush1.bf16.msra.mxu0 0
      %5066 = vmatprep.subr.bf16.mxu0 0
      %5067 = vmatpush1.bf16.msra.mxu0 0
      %5068 = vmatprep.subr.bf16.mxu0 0
      %5069 = vmatpush1.bf16.msra.mxu0 0
      %5070 = vmatprep.subr.bf16.mxu0 0
      %5071 = vmatpush1.bf16.msra.mxu0 0
      %5072 = vmatprep.subr.bf16.mxu0 0
      %5073 = vmatpush1.bf16.msra.mxu0 0
      %5074 = vmatprep.mubr.bf16.mxu0 0
      %5075 = vmatmul.mubr.bf16.gmra.mrb[0].mxu0 %v5031
      %v5076 = vpop.f32.mrb[0].mxu0
      %v5077 = vadd.f32 0.0, %v5076
      %v5078 = vpop.f32.mrb[0].mxu0
      %v5079 = vpop.f32.mrb[0].mxu0
      %v5080 = vadd.f32 0.0, %v5079
      %v5081 = vpop.f32.mrb[0].mxu0
      %5082 = vmatprep.mubr.bf16.mxu0 0
      %5083 = vmatmul.mubr.bf16.gmra.mrb[0].mxu0 %v5034
      %v5084 = vpop.f32.mrb[0].mxu0
      %v5085 = vadd.f32 0.0, %v5084
      %v5086 = vpop.f32.mrb[0].mxu0
      %v5087 = vpop.f32.mrb[0].mxu0
      %v5088 = vadd.f32 0.0, %v5087
      %v5089 = vpop.f32.mrb[0].mxu0
      %5090 = vmatprep.mubr.bf16.mxu0 0
      %5091 = vmatmul.mubr.bf16.gmra.mrb[0].mxu0 %v5037
      %v5092 = vpop.f32.mrb[0].mxu0
      %v5093 = vadd.f32 0.0, %v5092
      %v5094 = vpop.f32.mrb[0].mxu0
      %v5095 = vpop.f32.mrb[0].mxu0
      %v5096 = vpop.f32.mrb[0].mxu0
      %5097 = vdwg.mxu0
      %v5098 = vpack.c.bf16 %v5080, %v5077
      %v5099 = vpack.c.bf16 %v5088, %v5085
      %v5100 = vpack.c.bf16 %v5093, %v5093
      %s5101 = scalar_lea.vmem %s12, 24
      %v5102 = vld [vmem:[%s5101] sm:$0xf]
      %v5104 = vsel %vm1182, %v5098, 0
      %v5107 = vsel %vm1182, %v5099, 0
      %v5110 = vsel %vm1182, %v5100, 0
      %v5113 = vsel %vm736, %v5102, 0
      %5115 = vmatprep.subr.bf16.mxu0 0
      %5116 = vmatpush1.bf16.msra.mxu0 %v5113
      %5117 = vmatprep.subr.bf16.mxu0 0
      %5118 = vmatpush1.bf16.msra.mxu0 0
      %5119 = vmatprep.subr.bf16.mxu0 0
      %5120 = vmatpush1.bf16.msra.mxu0 0
      %5121 = vmatprep.subr.bf16.mxu0 0
      %5122 = vmatpush1.bf16.msra.mxu0 0
      %5123 = vmatprep.subr.bf16.mxu0 0
      %5124 = vmatpush1.bf16.msra.mxu0 0
      %5125 = vmatprep.subr.bf16.mxu0 0
      %5126 = vmatpush1.bf16.msra.mxu0 0
      %5127 = vmatprep.subr.bf16.mxu0 0
      %5128 = vmatpush1.bf16.msra.mxu0 0
      %5129 = vmatprep.subr.bf16.mxu0 0
      %5130 = vmatpush1.bf16.msra.mxu0 0
      %5131 = vmatprep.subr.bf16.mxu0 0
      %5132 = vmatpush1.bf16.msra.mxu0 0
      %5133 = vmatprep.subr.bf16.mxu0 0
      %5134 = vmatpush1.bf16.msra.mxu0 0
      %5135 = vmatprep.subr.bf16.mxu0 0
      %5136 = vmatpush1.bf16.msra.mxu0 0
      %5137 = vmatprep.subr.bf16.mxu0 0
      %5138 = vmatpush1.bf16.msra.mxu0 0
      %5139 = vmatprep.subr.bf16.mxu0 0
      %5140 = vmatpush1.bf16.msra.mxu0 0
      %5141 = vmatprep.subr.bf16.mxu0 0
      %5142 = vmatpush1.bf16.msra.mxu0 0
      %5143 = vmatprep.subr.bf16.mxu0 0
      %5144 = vmatpush1.bf16.msra.mxu0 0
      %5145 = vmatprep.subr.bf16.mxu0 0
      %5146 = vmatpush1.bf16.msra.mxu0 0
      %5147 = vmatprep.mubr.bf16.mxu0 0
      %5148 = vmatmul.mubr.bf16.gmra.mrb[0].mxu0 %v5104
      %v5149 = vpop.f32.mrb[0].mxu0
      %v5150 = vadd.f32 0.0, %v5149
      %v5151 = vpop.f32.mrb[0].mxu0
      %v5152 = vpop.f32.mrb[0].mxu0
      %v5153 = vadd.f32 0.0, %v5152
      %v5154 = vpop.f32.mrb[0].mxu0
      %5155 = vmatprep.mubr.bf16.mxu0 0
      %5156 = vmatmul.mubr.bf16.gmra.mrb[0].mxu0 %v5107
      %v5157 = vpop.f32.mrb[0].mxu0
      %v5158 = vadd.f32 0.0, %v5157
      %v5159 = vpop.f32.mrb[0].mxu0
      %v5160 = vpop.f32.mrb[0].mxu0
      %v5161 = vadd.f32 0.0, %v5160
      %v5162 = vpop.f32.mrb[0].mxu0
      %5163 = vmatprep.mubr.bf16.mxu0 0
      %5164 = vmatmul.mubr.bf16.gmra.mrb[0].mxu0 %v5110
      %v5165 = vpop.f32.mrb[0].mxu0
      %v5166 = vadd.f32 0.0, %v5165
      %v5167 = vpop.f32.mrb[0].mxu0
      %v5168 = vpop.f32.mrb[0].mxu0
      %v5169 = vpop.f32.mrb[0].mxu0
      %5170 = vdwg.mxu0
      %v5171 = vadd.f32 %v4615, %v5150
      %v5172 = vadd.f32 %v4618, %v5153
      %v5173 = vadd.f32 %v4623, %v5158
      %v5174 = vadd.f32 %v4626, %v5161
      %v5175 = vadd.f32 %v4631, %v5166
      %s5176 = scalar_lea.vmem %s6, 112
      %v5177 = vld [vmem:[%s5176] sm:$0xf]
      %v5178 = vld [vmem:[%s5176 + $0x4] sm:$0xf]
      %v5179 = vld [vmem:[%s5176 + $0x8] sm:$0xf]
      %v5180 = vld [vmem:[%s5176 + $0xc] sm:$0xf]
      %s5181 = scalar_lea.vmem %s7, 7
      %v5182 = vld [vmem:[%s5181] sm:$0x1]
      %v5184 = vlaneseq
      %v5185 = vshrl.u32 %v5184, 7
      %v5186 = vsub.s32 0, %v5185
      %v5187 = vrot.slane %v5182, %v5186
      %v5193 = vunpack.c.l.b16 %v5177
      %v5194 = vunpack.c.l.b16 %v5178
      %v5195 = vunpack.c.l.b16 %v5179
      %v5196 = vunpack.c.l.b16 %v5180
      %v5197 = vpack.c.b16 %v5194, %v5193
      %v5198 = vpack.c.b16 %v5196, %v5195
      %5201 = vmatprep.subr.bf16.mxu0 0
      %5202 = vmatpush1.bf16.msra.mxu0 %v5197
      %5203 = vmatprep.subr.bf16.mxu0 0
      %5204 = vmatpush1.bf16.msra.mxu0 %v5198
      %5205 = vmatprep.subr.bf16.mxu0 0
      %5206 = vmatpush1.bf16.msra.mxu0 0
      %5207 = vmatprep.subr.bf16.mxu0 0
      %5208 = vmatpush1.bf16.msra.mxu0 0
      %5209 = vmatprep.subr.bf16.mxu0 0
      %5210 = vmatpush1.bf16.msra.mxu0 0
      %5211 = vmatprep.subr.bf16.mxu0 0
      %5212 = vmatpush1.bf16.msra.mxu0 0
      %5213 = vmatprep.subr.bf16.mxu0 0
      %5214 = vmatpush1.bf16.msra.mxu0 0
      %5215 = vmatprep.subr.bf16.mxu0 0
      %5216 = vmatpush1.bf16.msra.mxu0 0
      %5217 = vmatprep.subr.bf16.mxu0 0
      %5218 = vmatpush1.bf16.msra.mxu0 0
      %5219 = vmatprep.subr.bf16.mxu0 0
      %5220 = vmatpush1.bf16.msra.mxu0 0
      %5221 = vmatprep.subr.bf16.mxu0 0
      %5222 = vmatpush1.bf16.msra.mxu0 0
      %5223 = vmatprep.subr.bf16.mxu0 0
      %5224 = vmatpush1.bf16.msra.mxu0 0
      %5225 = vmatprep.subr.bf16.mxu0 0
      %5226 = vmatpush1.bf16.msra.mxu0 0
      %5227 = vmatprep.subr.bf16.mxu0 0
      %5228 = vmatpush1.bf16.msra.mxu0 0
      %5229 = vmatprep.subr.bf16.mxu0 0
      %5230 = vmatpush1.bf16.msra.mxu0 0
      %5231 = vmatprep.subr.bf16.mxu0 0
      %5232 = vmatpush1.bf16.msra.mxu0 0
      %5233 = vmatprep.mubr.bf16.mxu0 0
      %5234 = vmatmul.mubr.bf16.gmra.mrb[0].mxu0 %v3583
      %v5235 = vpop.f32.mrb[0].mxu0
      %v5236 = vadd.f32 %v5187, %v5235
      %v5237 = vpop.f32.mrb[0].mxu0
      %v5238 = vpop.f32.mrb[0].mxu0
      %v5239 = vadd.f32 %v5187, %v5238
      %v5240 = vpop.f32.mrb[0].mxu0
      %5241 = vmatprep.mubr.bf16.mxu0 0
      %5242 = vmatmul.mubr.bf16.gmra.mrb[0].mxu0 %v3586
      %v5243 = vpop.f32.mrb[0].mxu0
      %v5244 = vadd.f32 %v5187, %v5243
      %v5245 = vpop.f32.mrb[0].mxu0
      %v5246 = vpop.f32.mrb[0].mxu0
      %v5247 = vadd.f32 %v5187, %v5246
      %v5248 = vpop.f32.mrb[0].mxu0
      %5249 = vmatprep.mubr.bf16.mxu0 0
      %5250 = vmatmul.mubr.bf16.gmra.mrb[0].mxu0 %v3589
      %v5251 = vpop.f32.mrb[0].mxu0
      %v5252 = vadd.f32 %v5187, %v5251
      %v5253 = vpop.f32.mrb[0].mxu0
      %v5254 = vpop.f32.mrb[0].mxu0
      %v5255 = vpop.f32.mrb[0].mxu0
      %5256 = vdwg.mxu0
      %s5257 = scalar_lea.vmem %s8, 112
      %v5258 = vld [vmem:[%s5257] sm:$0xf]
      %v5259 = vld [vmem:[%s5257 + $0x4] sm:$0xf]
      %v5260 = vld [vmem:[%s5257 + $0x8] sm:$0xf]
      %v5261 = vld [vmem:[%s5257 + $0xc] sm:$0xf]
      %s5262 = scalar_lea.vmem %s9, 7
      %v5263 = vld [vmem:[%s5262] sm:$0x1]
      %v5265 = vlaneseq
      %v5266 = vshrl.u32 %v5265, 7
      %v5267 = vsub.s32 0, %v5266
      %v5268 = vrot.slane %v5263, %v5267
      %v5274 = vunpack.c.l.b16 %v5258
      %v5275 = vunpack.c.l.b16 %v5259
      %v5276 = vunpack.c.l.b16 %v5260
      %v5277 = vunpack.c.l.b16 %v5261
      %v5278 = vpack.c.b16 %v5275, %v5274
      %v5279 = vpack.c.b16 %v5277, %v5276
      %5282 = vmatprep.subr.bf16.mxu0 0
      %5283 = vmatpush1.bf16.msra.mxu0 %v5278
      %5284 = vmatprep.subr.bf16.mxu0 0
      %5285 = vmatpush1.bf16.msra.mxu0 %v5279
      %5286 = vmatprep.subr.bf16.mxu0 0
      %5287 = vmatpush1.bf16.msra.mxu0 0
      %5288 = vmatprep.subr.bf16.mxu0 0
      %5289 = vmatpush1.bf16.msra.mxu0 0
      %5290 = vmatprep.subr.bf16.mxu0 0
      %5291 = vmatpush1.bf16.msra.mxu0 0
      %5292 = vmatprep.subr.bf16.mxu0 0
      %5293 = vmatpush1.bf16.msra.mxu0 0
      %5294 = vmatprep.subr.bf16.mxu0 0
      %5295 = vmatpush1.bf16.msra.mxu0 0
      %5296 = vmatprep.subr.bf16.mxu0 0
      %5297 = vmatpush1.bf16.msra.mxu0 0
      %5298 = vmatprep.subr.bf16.mxu0 0
      %5299 = vmatpush1.bf16.msra.mxu0 0
      %5300 = vmatprep.subr.bf16.mxu0 0
      %5301 = vmatpush1.bf16.msra.mxu0 0
      %5302 = vmatprep.subr.bf16.mxu0 0
      %5303 = vmatpush1.bf16.msra.mxu0 0
      %5304 = vmatprep.subr.bf16.mxu0 0
      %5305 = vmatpush1.bf16.msra.mxu0 0
      %5306 = vmatprep.subr.bf16.mxu0 0
      %5307 = vmatpush1.bf16.msra.mxu0 0
      %5308 = vmatprep.subr.bf16.mxu0 0
      %5309 = vmatpush1.bf16.msra.mxu0 0
      %5310 = vmatprep.subr.bf16.mxu0 0
      %5311 = vmatpush1.bf16.msra.mxu0 0
      %5312 = vmatprep.subr.bf16.mxu0 0
      %5313 = vmatpush1.bf16.msra.mxu0 0
      %5314 = vmatprep.mubr.bf16.mxu0 0
      %5315 = vmatmul.mubr.bf16.gmra.mrb[0].mxu0 %v3583
      %v5316 = vpop.f32.mrb[0].mxu0
      %v5317 = vadd.f32 %v5268, %v5316
      %v5318 = vpop.f32.mrb[0].mxu0
      %v5319 = vpop.f32.mrb[0].mxu0
      %v5320 = vadd.f32 %v5268, %v5319
      %v5321 = vpop.f32.mrb[0].mxu0
      %5322 = vmatprep.mubr.bf16.mxu0 0
      %5323 = vmatmul.mubr.bf16.gmra.mrb[0].mxu0 %v3586
      %v5324 = vpop.f32.mrb[0].mxu0
      %v5325 = vadd.f32 %v5268, %v5324
      %v5326 = vpop.f32.mrb[0].mxu0
      %v5327 = vpop.f32.mrb[0].mxu0
      %v5328 = vadd.f32 %v5268, %v5327
      %v5329 = vpop.f32.mrb[0].mxu0
      %5330 = vmatprep.mubr.bf16.mxu0 0
      %5331 = vmatmul.mubr.bf16.gmra.mrb[0].mxu0 %v3589
      %v5332 = vpop.f32.mrb[0].mxu0
      %v5333 = vadd.f32 %v5268, %v5332
      %v5334 = vpop.f32.mrb[0].mxu0
      %v5335 = vpop.f32.mrb[0].mxu0
      %v5336 = vpop.f32.mrb[0].mxu0
      %5337 = vdwg.mxu0
      %s5338 = scalar_lea.vmem %s10, 112
      %v5339 = vld [vmem:[%s5338] sm:$0xf]
      %v5340 = vld [vmem:[%s5338 + $0x4] sm:$0xf]
      %v5341 = vld [vmem:[%s5338 + $0x8] sm:$0xf]
      %v5342 = vld [vmem:[%s5338 + $0xc] sm:$0xf]
      %s5343 = scalar_lea.vmem %s11, 7
      %v5344 = vld [vmem:[%s5343] sm:$0x1]
      %v5346 = vlaneseq
      %v5347 = vshrl.u32 %v5346, 7
      %v5348 = vsub.s32 0, %v5347
      %v5349 = vrot.slane %v5344, %v5348
      %v5355 = vunpack.c.l.b16 %v5339
      %v5356 = vunpack.c.l.b16 %v5340
      %v5357 = vunpack.c.l.b16 %v5341
      %v5358 = vunpack.c.l.b16 %v5342
      %v5359 = vpack.c.b16 %v5356, %v5355
      %v5360 = vpack.c.b16 %v5358, %v5357
      %5363 = vmatprep.subr.bf16.mxu0 0
      %5364 = vmatpush1.bf16.msra.mxu0 %v5359
      %5365 = vmatprep.subr.bf16.mxu0 0
      %5366 = vmatpush1.bf16.msra.mxu0 %v5360
      %5367 = vmatprep.subr.bf16.mxu0 0
      %5368 = vmatpush1.bf16.msra.mxu0 0
      %5369 = vmatprep.subr.bf16.mxu0 0
      %5370 = vmatpush1.bf16.msra.mxu0 0
      %5371 = vmatprep.subr.bf16.mxu0 0
      %5372 = vmatpush1.bf16.msra.mxu0 0
      %5373 = vmatprep.subr.bf16.mxu0 0
      %5374 = vmatpush1.bf16.msra.mxu0 0
      %5375 = vmatprep.subr.bf16.mxu0 0
      %5376 = vmatpush1.bf16.msra.mxu0 0
      %5377 = vmatprep.subr.bf16.mxu0 0
      %5378 = vmatpush1.bf16.msra.mxu0 0
      %5379 = vmatprep.subr.bf16.mxu0 0
      %5380 = vmatpush1.bf16.msra.mxu0 0
      %5381 = vmatprep.subr.bf16.mxu0 0
      %5382 = vmatpush1.bf16.msra.mxu0 0
      %5383 = vmatprep.subr.bf16.mxu0 0
      %5384 = vmatpush1.bf16.msra.mxu0 0
      %5385 = vmatprep.subr.bf16.mxu0 0
      %5386 = vmatpush1.bf16.msra.mxu0 0
      %5387 = vmatprep.subr.bf16.mxu0 0
      %5388 = vmatpush1.bf16.msra.mxu0 0
      %5389 = vmatprep.subr.bf16.mxu0 0
      %5390 = vmatpush1.bf16.msra.mxu0 0
      %5391 = vmatprep.subr.bf16.mxu0 0
      %5392 = vmatpush1.bf16.msra.mxu0 0
      %5393 = vmatprep.subr.bf16.mxu0 0
      %5394 = vmatpush1.bf16.msra.mxu0 0
      %5395 = vmatprep.mubr.bf16.mxu0 0
      %5396 = vmatmul.mubr.bf16.gmra.mrb[0].mxu0 %v3583
      %v5397 = vpop.f32.mrb[0].mxu0
      %v5398 = vadd.f32 %v5349, %v5397
      %v5399 = vpop.f32.mrb[0].mxu0
      %v5400 = vpop.f32.mrb[0].mxu0
      %v5401 = vadd.f32 %v5349, %v5400
      %v5402 = vpop.f32.mrb[0].mxu0
      %5403 = vmatprep.mubr.bf16.mxu0 0
      %5404 = vmatmul.mubr.bf16.gmra.mrb[0].mxu0 %v3586
      %v5405 = vpop.f32.mrb[0].mxu0
      %v5406 = vadd.f32 %v5349, %v5405
      %v5407 = vpop.f32.mrb[0].mxu0
      %v5408 = vpop.f32.mrb[0].mxu0
      %v5409 = vadd.f32 %v5349, %v5408
      %v5410 = vpop.f32.mrb[0].mxu0
      %5411 = vmatprep.mubr.bf16.mxu0 0
      %5412 = vmatmul.mubr.bf16.gmra.mrb[0].mxu0 %v3589
      %v5413 = vpop.f32.mrb[0].mxu0
      %v5414 = vadd.f32 %v5349, %v5413
      %v5415 = vpop.f32.mrb[0].mxu0
      %v5416 = vpop.f32.mrb[0].mxu0
      %v5417 = vpop.f32.mrb[0].mxu0
      %5418 = vdwg.mxu0
      %v5419 = vpack.c.bf16 %v5239, %v5236
      %v5420 = vpack.c.bf16 %v5247, %v5244
      %v5421 = vpack.c.bf16 %v5252, %v5252
      %v5422 = vpack.c.bf16 %v5320, %v5317
      %v5423 = vpack.c.bf16 %v5328, %v5325
      %v5424 = vpack.c.bf16 %v5333, %v5333
      %v5426 = vsel %vm1182, %v5419, 0
      %v5429 = vsel %vm1182, %v5420, 0
      %v5432 = vsel %vm1182, %v5421, 0
      %v5435 = vsel %vm1182, %v5422, 0
      %v5438 = vsel %vm1182, %v5423, 0
      %v5441 = vsel %vm1182, %v5424, 0
      %5443 = vmatprep.subr.bf16.mxu0 0
      %5444 = vmatpush1.bf16.xpose.msra.mxu0 %v5435
      %5445 = vmatprep.subr.bf16.mxu0 0
      %5446 = vmatpush1.bf16.xpose.msra.mxu0 %v5438
      %5447 = vmatprep.subr.bf16.mxu0 0
      %5448 = vmatpush1.bf16.xpose.msra.mxu0 %v5441
      %5449 = vmatprep.subr.bf16.mxu0 0
      %5450 = vmatpush1.bf16.xpose.msra.mxu0 0
      %5451 = vmatprep.subr.bf16.mxu0 0
      %5452 = vmatpush1.bf16.xpose.msra.mxu0 0
      %5453 = vmatprep.subr.bf16.mxu0 0
      %5454 = vmatpush1.bf16.xpose.msra.mxu0 0
      %5455 = vmatprep.subr.bf16.mxu0 0
      %5456 = vmatpush1.bf16.xpose.msra.mxu0 0
      %5457 = vmatprep.subr.bf16.mxu0 0
      %5458 = vmatpush1.bf16.xpose.msra.mxu0 0
      %5459 = vmatprep.subr.bf16.mxu0 0
      %5460 = vmatpush1.bf16.xpose.msra.mxu0 0
      %5461 = vmatprep.subr.bf16.mxu0 0
      %5462 = vmatpush1.bf16.xpose.msra.mxu0 0
      %5463 = vmatprep.subr.bf16.mxu0 0
      %5464 = vmatpush1.bf16.xpose.msra.mxu0 0
      %5465 = vmatprep.subr.bf16.mxu0 0
      %5466 = vmatpush1.bf16.xpose.msra.mxu0 0
      %5467 = vmatprep.subr.bf16.mxu0 0
      %5468 = vmatpush1.bf16.xpose.msra.mxu0 0
      %5469 = vmatprep.subr.bf16.mxu0 0
      %5470 = vmatpush1.bf16.xpose.msra.mxu0 0
      %5471 = vmatprep.subr.bf16.mxu0 0
      %5472 = vmatpush1.bf16.xpose.msra.mxu0 0
      %5473 = vmatprep.subr.bf16.mxu0 0
      %5474 = vmatpush1.bf16.xpose.msra.mxu0 0
      %5475 = vmatprep.mubr.bf16.mxu0 0
      %5476 = vmatmul.mubr.bf16.gmra.mrb[0].mxu0 %v5426
      %v5477 = vpop.f32.mrb[0].mxu0
      %v5478 = vadd.f32 0.0, %v5477
      %v5479 = vpop.f32.mrb[0].mxu0
      %v5480 = vpop.f32.mrb[0].mxu0
      %v5481 = vadd.f32 0.0, %v5480
      %v5482 = vpop.f32.mrb[0].mxu0
      %5483 = vmatprep.mubr.bf16.mxu0 0
      %5484 = vmatmul.mubr.bf16.gmra.mrb[0].mxu0 %v5429
      %v5485 = vpop.f32.mrb[0].mxu0
      %v5486 = vadd.f32 0.0, %v5485
      %v5487 = vpop.f32.mrb[0].mxu0
      %v5488 = vpop.f32.mrb[0].mxu0
      %v5489 = vadd.f32 0.0, %v5488
      %v5490 = vpop.f32.mrb[0].mxu0
      %5491 = vmatprep.mubr.bf16.mxu0 0
      %5492 = vmatmul.mubr.bf16.gmra.mrb[0].mxu0 %v5432
      %v5493 = vpop.f32.mrb[0].mxu0
      %v5494 = vadd.f32 0.0, %v5493
      %v5495 = vpop.f32.mrb[0].mxu0
      %v5496 = vpop.f32.mrb[0].mxu0
      %v5497 = vpop.f32.mrb[0].mxu0
      %5498 = vdwg.mxu0
      %v5499 = vmul.f32 %v5478, 0.35355338
      %v5500 = vmul.f32 %v5481, 0.35355338
      %v5501 = vmul.f32 %v5486, 0.35355338
      %v5502 = vmul.f32 %v5489, 0.35355338
      %v5503 = vmul.f32 %v5494, 0.35355338
      %v5504 = vadd.f32 %v5499, %v830
      %v5505 = vadd.f32 %v5500, %v831
      %v5506 = vadd.f32 %v5501, %v832
      %v5507 = vadd.f32 %v5502, %v833
      %v5508 = vadd.f32 %v5503, %v834
      %v5509 = vsel %vm1267, %v5504, -inf
      %5510 = vmax.xlane.f32.xlu0 %v5509
      %v5511 = vpop.xlane.xlu0 %5510
      %v5512 = vsel %vm1267, %v5505, -inf
      %5513 = vmax.xlane.f32.xlu0 %v5512
      %v5514 = vpop.xlane.xlu0 %5513
      %v5515 = vsel %vm1267, %v5506, -inf
      %5516 = vmax.xlane.f32.xlu0 %v5515
      %v5517 = vpop.xlane.xlu0 %5516
      %v5518 = vsel %vm1267, %v5507, -inf
      %5519 = vmax.xlane.f32.xlu0 %v5518
      %v5520 = vpop.xlane.xlu0 %5519
      %v5521 = vsel %vm1280, %v5508, -inf
      %5522 = vmax.xlane.f32.xlu0 %v5521
      %v5523 = vpop.xlane.xlu0 %5522
      %v5524 = vsub.f32 %v5504, %v5511
      %v5525 = vsub.f32 %v5505, %v5514
      %v5526 = vsub.f32 %v5506, %v5517
      %v5527 = vsub.f32 %v5507, %v5520
      %v5528 = vsub.f32 %v5508, %v5523
      %v5529 = vmul.f32 %v5524, 1.442695
      %v5530 = vpow.pop %v5529
      %v5531 = vmul.f32 %v5525, 1.442695
      %v5532 = vpow.pop %v5531
      %v5533 = vmul.f32 %v5526, 1.442695
      %v5534 = vpow.pop %v5533
      %v5535 = vmul.f32 %v5527, 1.442695
      %v5536 = vpow.pop %v5535
      %v5537 = vmul.f32 %v5528, 1.442695
      %v5538 = vpow.pop %v5537
      %v5539 = vsel %vm1267, %v5530, 0.0
      %5540 = vadd.xlane.f32.xlu0 %v5539
      %v5541 = vpop.xlane.xlu0 %5540
      %v5542 = vsel %vm1267, %v5532, 0.0
      %5543 = vadd.xlane.f32.xlu0 %v5542
      %v5544 = vpop.xlane.xlu0 %5543
      %v5545 = vsel %vm1267, %v5534, 0.0
      %5546 = vadd.xlane.f32.xlu0 %v5545
      %v5547 = vpop.xlane.xlu0 %5546
      %v5548 = vsel %vm1267, %v5536, 0.0
      %5549 = vadd.xlane.f32.xlu0 %v5548
      %v5550 = vpop.xlane.xlu0 %5549
      %v5551 = vsel %vm1280, %v5538, 0.0
      %5552 = vadd.xlane.f32.xlu0 %v5551
      %v5553 = vpop.xlane.xlu0 %5552
      %v5554 = vrcp.pop %v5541
      %v5555 = vrcp.pop %v5544
      %v5556 = vrcp.pop %v5547
      %v5557 = vrcp.pop %v5550
      %v5558 = vrcp.pop %v5553
      %v5559 = vmul.f32 %v5530, %v5554
      %v5560 = vmul.f32 %v5532, %v5555
      %v5561 = vmul.f32 %v5534, %v5556
      %v5562 = vmul.f32 %v5536, %v5557
      %v5563 = vmul.f32 %v5538, %v5558
      %v5564 = vpack.c.bf16 %v5560, %v5559
      %v5565 = vpack.c.bf16 %v5562, %v5561
      %v5566 = vpack.c.bf16 %v5563, %v5563
      %v5567 = vpack.c.bf16 %v5401, %v5398
      %v5568 = vpack.c.bf16 %v5409, %v5406
      %v5569 = vpack.c.bf16 %v5414, %v5414
      %v5571 = vsel %vm1267, %v5564, 0
      %v5574 = vsel %vm1267, %v5565, 0
      %v5577 = vsel %vm1267, %v5566, 0
      %v5580 = vsel %vm1339, %v5569, 0
      %5582 = vmatprep.subr.bf16.mxu0 0
      %5583 = vmatpush1.bf16.msra.mxu0 %v5567
      %5584 = vmatprep.subr.bf16.mxu0 0
      %5585 = vmatpush1.bf16.msra.mxu0 %v5568
      %5586 = vmatprep.subr.bf16.mxu0 0
      %5587 = vmatpush1.bf16.msra.mxu0 %v5580
      %5588 = vmatprep.subr.bf16.mxu0 0
      %5589 = vmatpush1.bf16.msra.mxu0 0
      %5590 = vmatprep.subr.bf16.mxu0 0
      %5591 = vmatpush1.bf16.msra.mxu0 0
      %5592 = vmatprep.subr.bf16.mxu0 0
      %5593 = vmatpush1.bf16.msra.mxu0 0
      %5594 = vmatprep.subr.bf16.mxu0 0
      %5595 = vmatpush1.bf16.msra.mxu0 0
      %5596 = vmatprep.subr.bf16.mxu0 0
      %5597 = vmatpush1.bf16.msra.mxu0 0
      %5598 = vmatprep.subr.bf16.mxu0 0
      %5599 = vmatpush1.bf16.msra.mxu0 0
      %5600 = vmatprep.subr.bf16.mxu0 0
      %5601 = vmatpush1.bf16.msra.mxu0 0
      %5602 = vmatprep.subr.bf16.mxu0 0
      %5603 = vmatpush1.bf16.msra.mxu0 0
      %5604 = vmatprep.subr.bf16.mxu0 0
      %5605 = vmatpush1.bf16.msra.mxu0 0
      %5606 = vmatprep.subr.bf16.mxu0 0
      %5607 = vmatpush1.bf16.msra.mxu0 0
      %5608 = vmatprep.subr.bf16.mxu0 0
      %5609 = vmatpush1.bf16.msra.mxu0 0
      %5610 = vmatprep.subr.bf16.mxu0 0
      %5611 = vmatpush1.bf16.msra.mxu0 0
      %5612 = vmatprep.subr.bf16.mxu0 0
      %5613 = vmatpush1.bf16.msra.mxu0 0
      %5614 = vmatprep.mubr.bf16.mxu0 0
      %5615 = vmatmul.mubr.bf16.gmra.mrb[0].mxu0 %v5571
      %v5616 = vpop.f32.mrb[0].mxu0
      %v5617 = vadd.f32 0.0, %v5616
      %v5618 = vpop.f32.mrb[0].mxu0
      %v5619 = vpop.f32.mrb[0].mxu0
      %v5620 = vadd.f32 0.0, %v5619
      %v5621 = vpop.f32.mrb[0].mxu0
      %5622 = vmatprep.mubr.bf16.mxu0 0
      %5623 = vmatmul.mubr.bf16.gmra.mrb[0].mxu0 %v5574
      %v5624 = vpop.f32.mrb[0].mxu0
      %v5625 = vadd.f32 0.0, %v5624
      %v5626 = vpop.f32.mrb[0].mxu0
      %v5627 = vpop.f32.mrb[0].mxu0
      %v5628 = vadd.f32 0.0, %v5627
      %v5629 = vpop.f32.mrb[0].mxu0
      %5630 = vmatprep.mubr.bf16.mxu0 0
      %5631 = vmatmul.mubr.bf16.gmra.mrb[0].mxu0 %v5577
      %v5632 = vpop.f32.mrb[0].mxu0
      %v5633 = vadd.f32 0.0, %v5632
      %v5634 = vpop.f32.mrb[0].mxu0
      %v5635 = vpop.f32.mrb[0].mxu0
      %v5636 = vpop.f32.mrb[0].mxu0
      %5637 = vdwg.mxu0
      %v5638 = vpack.c.bf16 %v5620, %v5617
      %v5639 = vpack.c.bf16 %v5628, %v5625
      %v5640 = vpack.c.bf16 %v5633, %v5633
      %s5641 = scalar_lea.vmem %s12, 28
      %v5642 = vld [vmem:[%s5641] sm:$0xf]
      %v5644 = vsel %vm1182, %v5638, 0
      %v5647 = vsel %vm1182, %v5639, 0
      %v5650 = vsel %vm1182, %v5640, 0
      %v5653 = vsel %vm736, %v5642, 0
      %5655 = vmatprep.subr.bf16.mxu0 0
      %5656 = vmatpush1.bf16.msra.mxu0 %v5653
      %5657 = vmatprep.subr.bf16.mxu0 0
      %5658 = vmatpush1.bf16.msra.mxu0 0
      %5659 = vmatprep.subr.bf16.mxu0 0
      %5660 = vmatpush1.bf16.msra.mxu0 0
      %5661 = vmatprep.subr.bf16.mxu0 0
      %5662 = vmatpush1.bf16.msra.mxu0 0
      %5663 = vmatprep.subr.bf16.mxu0 0
      %5664 = vmatpush1.bf16.msra.mxu0 0
      %5665 = vmatprep.subr.bf16.mxu0 0
      %5666 = vmatpush1.bf16.msra.mxu0 0
      %5667 = vmatprep.subr.bf16.mxu0 0
      %5668 = vmatpush1.bf16.msra.mxu0 0
      %5669 = vmatprep.subr.bf16.mxu0 0
      %5670 = vmatpush1.bf16.msra.mxu0 0
      %5671 = vmatprep.subr.bf16.mxu0 0
      %5672 = vmatpush1.bf16.msra.mxu0 0
      %5673 = vmatprep.subr.bf16.mxu0 0
      %5674 = vmatpush1.bf16.msra.mxu0 0
      %5675 = vmatprep.subr.bf16.mxu0 0
      %5676 = vmatpush1.bf16.msra.mxu0 0
      %5677 = vmatprep.subr.bf16.mxu0 0
      %5678 = vmatpush1.bf16.msra.mxu0 0
      %5679 = vmatprep.subr.bf16.mxu0 0
      %5680 = vmatpush1.bf16.msra.mxu0 0
      %5681 = vmatprep.subr.bf16.mxu0 0
      %5682 = vmatpush1.bf16.msra.mxu0 0
      %5683 = vmatprep.subr.bf16.mxu0 0
      %5684 = vmatpush1.bf16.msra.mxu0 0
      %5685 = vmatprep.subr.bf16.mxu0 0
      %5686 = vmatpush1.bf16.msra.mxu0 0
      %5687 = vmatprep.mubr.bf16.mxu0 0
      %5688 = vmatmul.mubr.bf16.gmra.mrb[0].mxu0 %v5644
      %v5689 = vpop.f32.mrb[0].mxu0
      %v5690 = vadd.f32 0.0, %v5689
      %v5691 = vpop.f32.mrb[0].mxu0
      %v5692 = vpop.f32.mrb[0].mxu0
      %v5693 = vadd.f32 0.0, %v5692
      %v5694 = vpop.f32.mrb[0].mxu0
      %5695 = vmatprep.mubr.bf16.mxu0 0
      %5696 = vmatmul.mubr.bf16.gmra.mrb[0].mxu0 %v5647
      %v5697 = vpop.f32.mrb[0].mxu0
      %v5698 = vadd.f32 0.0, %v5697
      %v5699 = vpop.f32.mrb[0].mxu0
      %v5700 = vpop.f32.mrb[0].mxu0
      %v5701 = vadd.f32 0.0, %v5700
      %v5702 = vpop.f32.mrb[0].mxu0
      %5703 = vmatprep.mubr.bf16.mxu0 0
      %5704 = vmatmul.mubr.bf16.gmra.mrb[0].mxu0 %v5650
      %v5705 = vpop.f32.mrb[0].mxu0
      %v5706 = vadd.f32 0.0, %v5705
      %v5707 = vpop.f32.mrb[0].mxu0
      %v5708 = vpop.f32.mrb[0].mxu0
      %v5709 = vpop.f32.mrb[0].mxu0
      %5710 = vdwg.mxu0
      %v5711 = vadd.f32 %v5171, %v5690
      %v5712 = vadd.f32 %v5172, %v5693
      %v5713 = vadd.f32 %v5173, %v5698
      %v5714 = vadd.f32 %v5174, %v5701
      %v5715 = vadd.f32 %v5175, %v5706
      %v5716 = vadd.f32 %v3458, %v5711
      %v5717 = vadd.f32 %v3459, %v5712
      %v5718 = vadd.f32 %v3460, %v5713
      %v5719 = vadd.f32 %v3461, %v5714
      %v5720 = vadd.f32 %v3462, %v5715
      %s5721 = scalar_lea.vmem %s13, 1
      %v5722 = vld [vmem:[%s5721] sm:$0x1]
      %v5724 = vlaneseq
      %v5725 = vshrl.u32 %v5724, 7
      %v5726 = vsub.s32 0, %v5725
      %v5727 = vrot.slane %v5722, %v5726
      %v5729 = vadd.f32 %v5716, %v5727
      %v5730 = vadd.f32 %v5717, %v5727
      %v5731 = vadd.f32 %v5718, %v5727
      %v5732 = vadd.f32 %v5719, %v5727
      %v5733 = vadd.f32 %v5720, %v5727
      %s5734 = scalar_lea.vmem %s14, 1
      %v5735 = vld [vmem:[%s5734] sm:$0x1]
      %s5736 = scalar_lea.vmem %s15, 1
      %v5737 = vld [vmem:[%s5736] sm:$0x1]
      %v5738 = vsel %vm837, %v5729, 0.0
      %5739 = vadd.xlane.f32.xlu0 %v5738
      %v5740 = vpop.xlane.xlu0 %5739
      %v5741 = vsel %vm837, %v5730, 0.0
      %5742 = vadd.xlane.f32.xlu0 %v5741
      %v5743 = vpop.xlane.xlu0 %5742
      %v5744 = vsel %vm837, %v5731, 0.0
      %5745 = vadd.xlane.f32.xlu0 %v5744
      %v5746 = vpop.xlane.xlu0 %5745
      %v5747 = vsel %vm837, %v5732, 0.0
      %5748 = vadd.xlane.f32.xlu0 %v5747
      %v5749 = vpop.xlane.xlu0 %5748
      %v5750 = vsel %vm850, %v5733, 0.0
      %5751 = vadd.xlane.f32.xlu0 %v5750
      %v5752 = vpop.xlane.xlu0 %5751
      %v5753 = vmul.f32 %v5740, %v854
      %v5754 = vmul.f32 %v5743, %v854
      %v5755 = vmul.f32 %v5746, %v854
      %v5756 = vmul.f32 %v5749, %v854
      %v5757 = vmul.f32 %v5752, %v854
      %v5758 = vsub.f32 %v5729, %v5753
      %v5759 = vsub.f32 %v5730, %v5754
      %v5760 = vsub.f32 %v5731, %v5755
      %v5761 = vsub.f32 %v5732, %v5756
      %v5762 = vsub.f32 %v5733, %v5757
      %v5763 = vmul.f32 %v5758, %v5758
      %v5764 = vmul.f32 %v5759, %v5759
      %v5765 = vmul.f32 %v5760, %v5760
      %v5766 = vmul.f32 %v5761, %v5761
      %v5767 = vmul.f32 %v5762, %v5762
      %v5768 = vsel %vm837, %v5763, 0.0
      %5769 = vadd.xlane.f32.xlu0 %v5768
      %v5770 = vpop.xlane.xlu0 %5769
      %v5771 = vsel %vm837, %v5764, 0.0
      %5772 = vadd.xlane.f32.xlu0 %v5771
      %v5773 = vpop.xlane.xlu0 %5772
      %v5774 = vsel %vm837, %v5765, 0.0
      %5775 = vadd.xlane.f32.xlu0 %v5774
      %v5776 = vpop.xlane.xlu0 %5775
      %v5777 = vsel %vm837, %v5766, 0.0
      %5778 = vadd.xlane.f32.xlu0 %v5777
      %v5779 = vpop.xlane.xlu0 %5778
      %v5780 = vsel %vm850, %v5767, 0.0
      %5781 = vadd.xlane.f32.xlu0 %v5780
      %v5782 = vpop.xlane.xlu0 %5781
      %v5783 = vmul.f32 %v5770, %v854
      %v5784 = vmul.f32 %v5773, %v854
      %v5785 = vmul.f32 %v5776, %v854
      %v5786 = vmul.f32 %v5779, %v854
      %v5787 = vmul.f32 %v5782, %v854
      %v5788 = vadd.f32 %v5783, 1e-05
      %v5789 = vadd.f32 %v5784, 1e-05
      %v5790 = vadd.f32 %v5785, 1e-05
      %v5791 = vadd.f32 %v5786, 1e-05
      %v5792 = vadd.f32 %v5787, 1e-05
      %v5793 = vrsqrt.pop %v5788
      %v5794 = vrsqrt.pop %v5789
      %v5795 = vrsqrt.pop %v5790
      %v5796 = vrsqrt.pop %v5791
      %v5797 = vrsqrt.pop %v5792
      %v5798 = vmul.f32 %v5758, %v5793
      %v5799 = vmul.f32 %v5759, %v5794
      %v5800 = vmul.f32 %v5760, %v5795
      %v5801 = vmul.f32 %v5761, %v5796
      %v5802 = vmul.f32 %v5762, %v5797
      %v5804 = vlaneseq
      %v5805 = vshrl.u32 %v5804, 7
      %v5806 = vsub.s32 0, %v5805
      %v5807 = vrot.slane %v5735, %v5806
      %v5809 = vmul.f32 %v5798, %v5807
      %v5810 = vmul.f32 %v5799, %v5807
      %v5811 = vmul.f32 %v5800, %v5807
      %v5812 = vmul.f32 %v5801, %v5807
      %v5813 = vmul.f32 %v5802, %v5807
      %v5815 = vlaneseq
      %v5816 = vshrl.u32 %v5815, 7
      %v5817 = vsub.s32 0, %v5816
      %v5818 = vrot.slane %v5737, %v5817
      %v5820 = vadd.f32 %v5809, %v5818
      %v5821 = vadd.f32 %v5810, %v5818
      %v5822 = vadd.f32 %v5811, %v5818
      %v5823 = vadd.f32 %v5812, %v5818
      %v5824 = vadd.f32 %v5813, %v5818
      %v5825 = vpack.c.bf16 %v5821, %v5820
      %v5826 = vpack.c.bf16 %v5823, %v5822
      %v5827 = vpack.c.bf16 %v5824, %v5824
      %s5828 = scalar_lea.vmem %s16, 16
      %v5829 = vld [vmem:[%s5828] sm:$0xf]
      %v5830 = vld [vmem:[%s5828 + $0x4] sm:$0xf]
      %v5831 = vld [vmem:[%s5828 + $0x8] sm:$0xf]
      %v5832 = vld [vmem:[%s5828 + $0xc] sm:$0xf]
      %s5833 = scalar_lea.vmem %s17, 1
      %v5834 = vld [vmem:[%s5833] sm:$0x1]
      %v5836 = vlaneseq
      %v5837 = vshrl.u32 %v5836, 7
      %v5838 = vsub.s32 0, %v5837
      %v5839 = vrot.slane %v5834, %v5838
      %v5845 = vunpack.c.l.b16 %v5829
      %v5846 = vunpack.c.l.b16 %v5830
      %v5847 = vunpack.c.l.b16 %v5831
      %v5848 = vunpack.c.l.b16 %v5832
      %v5849 = vpack.c.b16 %v5846, %v5845
      %v5850 = vpack.c.b16 %v5848, %v5847
      %v5854 = vsel %vm837, %v5825, 0
      %v5857 = vsel %vm837, %v5826, 0
      %v5860 = vsel %vm837, %v5827, 0
      %5862 = vmatprep.subr.bf16.mxu0 0
      %5863 = vmatpush1.bf16.msra.mxu0 %v5849
      %5864 = vmatprep.subr.bf16.mxu0 0
      %5865 = vmatpush1.bf16.msra.mxu0 %v5850
      %5866 = vmatprep.subr.bf16.mxu0 0
      %5867 = vmatpush1.bf16.msra.mxu0 0
      %5868 = vmatprep.subr.bf16.mxu0 0
      %5869 = vmatpush1.bf16.msra.mxu0 0
      %5870 = vmatprep.subr.bf16.mxu0 0
      %5871 = vmatpush1.bf16.msra.mxu0 0
      %5872 = vmatprep.subr.bf16.mxu0 0
      %5873 = vmatpush1.bf16.msra.mxu0 0
      %5874 = vmatprep.subr.bf16.mxu0 0
      %5875 = vmatpush1.bf16.msra.mxu0 0
      %5876 = vmatprep.subr.bf16.mxu0 0
      %5877 = vmatpush1.bf16.msra.mxu0 0
      %5878 = vmatprep.subr.bf16.mxu0 0
      %5879 = vmatpush1.bf16.msra.mxu0 0
      %5880 = vmatprep.subr.bf16.mxu0 0
      %5881 = vmatpush1.bf16.msra.mxu0 0
      %5882 = vmatprep.subr.bf16.mxu0 0
      %5883 = vmatpush1.bf16.msra.mxu0 0
      %5884 = vmatprep.subr.bf16.mxu0 0
      %5885 = vmatpush1.bf16.msra.mxu0 0
      %5886 = vmatprep.subr.bf16.mxu0 0
      %5887 = vmatpush1.bf16.msra.mxu0 0
      %5888 = vmatprep.subr.bf16.mxu0 0
      %5889 = vmatpush1.bf16.msra.mxu0 0
      %5890 = vmatprep.subr.bf16.mxu0 0
      %5891 = vmatpush1.bf16.msra.mxu0 0
      %5892 = vmatprep.subr.bf16.mxu0 0
      %5893 = vmatpush1.bf16.msra.mxu0 0
      %5894 = vmatprep.mubr.bf16.mxu0 0
      %5895 = vmatmul.mubr.bf16.gmra.mrb[0].mxu0 %v5854
      %v5896 = vpop.f32.mrb[0].mxu0
      %v5897 = vadd.f32 %v5839, %v5896
      %v5898 = vpop.f32.mrb[0].mxu0
      %v5899 = vpop.f32.mrb[0].mxu0
      %v5900 = vadd.f32 %v5839, %v5899
      %v5901 = vpop.f32.mrb[0].mxu0
      %5902 = vmatprep.mubr.bf16.mxu0 0
      %5903 = vmatmul.mubr.bf16.gmra.mrb[0].mxu0 %v5857
      %v5904 = vpop.f32.mrb[0].mxu0
      %v5905 = vadd.f32 %v5839, %v5904
      %v5906 = vpop.f32.mrb[0].mxu0
      %v5907 = vpop.f32.mrb[0].mxu0
      %v5908 = vadd.f32 %v5839, %v5907
      %v5909 = vpop.f32.mrb[0].mxu0
      %5910 = vmatprep.mubr.bf16.mxu0 0
      %5911 = vmatmul.mubr.bf16.gmra.mrb[0].mxu0 %v5860
      %v5912 = vpop.f32.mrb[0].mxu0
      %v5913 = vadd.f32 %v5839, %v5912
      %v5914 = vpop.f32.mrb[0].mxu0
      %v5915 = vpop.f32.mrb[0].mxu0
      %v5916 = vpop.f32.mrb[0].mxu0
      %5917 = vdwg.mxu0
      %v5918 = vmul.f32 %v5897, %v5897
      %v5919 = vmul.f32 %v5900, %v5900
      %v5920 = vmul.f32 %v5905, %v5905
      %v5921 = vmul.f32 %v5908, %v5908
      %v5922 = vmul.f32 %v5913, %v5913
      %v5923 = vmul.f32 %v5897, %v5918
      %v5924 = vmul.f32 %v5900, %v5919
      %v5925 = vmul.f32 %v5905, %v5920
      %v5926 = vmul.f32 %v5908, %v5921
      %v5927 = vmul.f32 %v5913, %v5922
      %v5928 = vmul.f32 %v5923, 0.044715
      %v5929 = vmul.f32 %v5924, 0.044715
      %v5930 = vmul.f32 %v5925, 0.044715
      %v5931 = vmul.f32 %v5926, 0.044715
      %v5932 = vmul.f32 %v5927, 0.044715
      %v5933 = vadd.f32 %v5897, %v5928
      %v5934 = vadd.f32 %v5900, %v5929
      %v5935 = vadd.f32 %v5905, %v5930
      %v5936 = vadd.f32 %v5908, %v5931
      %v5937 = vadd.f32 %v5913, %v5932
      %v5938 = vmul.f32 %v5933, 0.7978846
      %v5939 = vmul.f32 %v5934, 0.7978846
      %v5940 = vmul.f32 %v5935, 0.7978846
      %v5941 = vmul.f32 %v5936, 0.7978846
      %v5942 = vmul.f32 %v5937, 0.7978846
      %v5943 = vtanh.pop %v5938
      %v5944 = vtanh.pop %v5939
      %v5945 = vtanh.pop %v5940
      %v5946 = vtanh.pop %v5941
      %v5947 = vtanh.pop %v5942
      %v5948 = vadd.f32 %v5943, 1.0
      %v5949 = vadd.f32 %v5944, 1.0
      %v5950 = vadd.f32 %v5945, 1.0
      %v5951 = vadd.f32 %v5946, 1.0
      %v5952 = vadd.f32 %v5947, 1.0
      %v5953 = vmul.f32 %v5948, 0.5
      %v5954 = vmul.f32 %v5949, 0.5
      %v5955 = vmul.f32 %v5950, 0.5
      %v5956 = vmul.f32 %v5951, 0.5
      %v5957 = vmul.f32 %v5952, 0.5
      %v5958 = vmul.f32 %v5897, %v5953
      %v5959 = vmul.f32 %v5900, %v5954
      %v5960 = vmul.f32 %v5905, %v5955
      %v5961 = vmul.f32 %v5908, %v5956
      %v5962 = vmul.f32 %v5913, %v5957
      %v5963 = vpack.c.bf16 %v5959, %v5958
      %v5964 = vpack.c.bf16 %v5961, %v5960
      %v5965 = vpack.c.bf16 %v5962, %v5962
      %s5966 = scalar_lea.vmem %s18, 64
      %v5967 = vld [vmem:[%s5966] sm:$0xf]
      %v5968 = vld [vmem:[%s5966 + $0x4] sm:$0xf]
      %v5969 = vld [vmem:[%s5966 + $0x8] sm:$0xf]
      %v5970 = vld [vmem:[%s5966 + $0xc] sm:$0xf]
      %v5971 = vld [vmem:[%s5966 + $0x10] sm:$0xf]
      %v5972 = vld [vmem:[%s5966 + $0x14] sm:$0xf]
      %v5973 = vld [vmem:[%s5966 + $0x18] sm:$0xf]
      %v5974 = vld [vmem:[%s5966 + $0x1c] sm:$0xf]
      %v5975 = vld [vmem:[%s5966 + $0x20] sm:$0xf]
      %v5976 = vld [vmem:[%s5966 + $0x24] sm:$0xf]
      %v5977 = vld [vmem:[%s5966 + $0x28] sm:$0xf]
      %v5978 = vld [vmem:[%s5966 + $0x2c] sm:$0xf]
      %v5979 = vld [vmem:[%s5966 + $0x30] sm:$0xf]
      %v5980 = vld [vmem:[%s5966 + $0x34] sm:$0xf]
      %v5981 = vld [vmem:[%s5966 + $0x38] sm:$0xf]
      %v5982 = vld [vmem:[%s5966 + $0x3c] sm:$0xf]
      %s5983 = scalar_lea.vmem %s19, 1
      %v5984 = vld [vmem:[%s5983] sm:$0x1]
      %v5986 = vlaneseq
      %v5987 = vshrl.u32 %v5986, 7
      %v5988 = vsub.s32 0, %v5987
      %v5989 = vrot.slane %v5984, %v5988
      %v6007 = vunpack.c.l.b16 %v5967
      %v6008 = vunpack.c.l.b16 %v5968
      %v6009 = vunpack.c.l.b16 %v5969
      %v6010 = vunpack.c.l.b16 %v5970
      %v6011 = vunpack.c.l.b16 %v5971
      %v6012 = vunpack.c.l.b16 %v5972
      %v6013 = vunpack.c.l.b16 %v5973
      %v6014 = vunpack.c.l.b16 %v5974
      %v6015 = vunpack.c.l.b16 %v5975
      %v6016 = vunpack.c.l.b16 %v5976
      %v6017 = vunpack.c.l.b16 %v5977
      %v6018 = vunpack.c.l.b16 %v5978
      %v6019 = vunpack.c.l.b16 %v5979
      %v6020 = vunpack.c.l.b16 %v5980
      %v6021 = vunpack.c.l.b16 %v5981
      %v6022 = vunpack.c.l.b16 %v5982
      %v6023 = vpack.c.b16 %v6008, %v6007
      %v6024 = vpack.c.b16 %v6010, %v6009
      %v6025 = vpack.c.b16 %v6012, %v6011
      %v6026 = vpack.c.b16 %v6014, %v6013
      %v6027 = vpack.c.b16 %v6016, %v6015
      %v6028 = vpack.c.b16 %v6018, %v6017
      %v6029 = vpack.c.b16 %v6020, %v6019
      %v6030 = vpack.c.b16 %v6022, %v6021
      %6039 = vmatprep.subr.bf16.mxu0 0
      %6040 = vmatpush1.bf16.msra.mxu0 %v6023
      %6041 = vmatprep.subr.bf16.mxu0 0
      %6042 = vmatpush1.bf16.msra.mxu0 %v6024
      %6043 = vmatprep.subr.bf16.mxu0 0
      %6044 = vmatpush1.bf16.msra.mxu0 %v6025
      %6045 = vmatprep.subr.bf16.mxu0 0
      %6046 = vmatpush1.bf16.msra.mxu0 %v6026
      %6047 = vmatprep.subr.bf16.mxu0 0
      %6048 = vmatpush1.bf16.msra.mxu0 %v6027
      %6049 = vmatprep.subr.bf16.mxu0 0
      %6050 = vmatpush1.bf16.msra.mxu0 %v6028
      %6051 = vmatprep.subr.bf16.mxu0 0
      %6052 = vmatpush1.bf16.msra.mxu0 %v6029
      %6053 = vmatprep.subr.bf16.mxu0 0
      %6054 = vmatpush1.bf16.msra.mxu0 %v6030
      %6055 = vmatprep.subr.bf16.mxu0 0
      %6056 = vmatpush1.bf16.msra.mxu0 0
      %6057 = vmatprep.subr.bf16.mxu0 0
      %6058 = vmatpush1.bf16.msra.mxu0 0
      %6059 = vmatprep.subr.bf16.mxu0 0
      %6060 = vmatpush1.bf16.msra.mxu0 0
      %6061 = vmatprep.subr.bf16.mxu0 0
      %6062 = vmatpush1.bf16.msra.mxu0 0
      %6063 = vmatprep.subr.bf16.mxu0 0
      %6064 = vmatpush1.bf16.msra.mxu0 0
      %6065 = vmatprep.subr.bf16.mxu0 0
      %6066 = vmatpush1.bf16.msra.mxu0 0
      %6067 = vmatprep.subr.bf16.mxu0 0
      %6068 = vmatpush1.bf16.msra.mxu0 0
      %6069 = vmatprep.subr.bf16.mxu0 0
      %6070 = vmatpush1.bf16.msra.mxu0 0
      %6071 = vmatprep.mubr.bf16.mxu0 0
      %6072 = vmatmul.mubr.bf16.gmra.mrb[0].mxu0 %v5963
      %v6073 = vpop.f32.mrb[0].mxu0
      %v6074 = vadd.f32 %v5989, %v6073
      %v6075 = vpop.f32.mrb[0].mxu0
      %v6076 = vpop.f32.mrb[0].mxu0
      %v6077 = vadd.f32 %v5989, %v6076
      %v6078 = vpop.f32.mrb[0].mxu0
      %6079 = vmatprep.mubr.bf16.mxu0 0
      %6080 = vmatmul.mubr.bf16.gmra.mrb[0].mxu0 %v5964
      %v6081 = vpop.f32.mrb[0].mxu0
      %v6082 = vadd.f32 %v5989, %v6081
      %v6083 = vpop.f32.mrb[0].mxu0
      %v6084 = vpop.f32.mrb[0].mxu0
      %v6085 = vadd.f32 %v5989, %v6084
      %v6086 = vpop.f32.mrb[0].mxu0
      %6087 = vmatprep.mubr.bf16.mxu0 0
      %6088 = vmatmul.mubr.bf16.gmra.mrb[0].mxu0 %v5965
      %v6089 = vpop.f32.mrb[0].mxu0
      %v6090 = vadd.f32 %v5989, %v6089
      %v6091 = vpop.f32.mrb[0].mxu0
      %v6092 = vpop.f32.mrb[0].mxu0
      %v6093 = vpop.f32.mrb[0].mxu0
      %6094 = vdwg.mxu0
      %v6095 = vadd.f32 %v5729, %v6074
      %v6096 = vadd.f32 %v5730, %v6077
      %v6097 = vadd.f32 %v5731, %v6082
      %v6098 = vadd.f32 %v5732, %v6085
      %v6099 = vadd.f32 %v5733, %v6090
      %v6100 = vpack.c.bf16 %v6096, %v6095
      %v6101 = vpack.c.bf16 %v6098, %v6097
      %v6102 = vpack.c.bf16 %v6099, %v6099
      %v6103 = vld [vmem:[%s20] sm:$0xf]
      %v6104 = vld [vmem:[%s20 + $0x4] sm:$0xf]
      %v6105 = vld [vmem:[%s20 + $0x8] sm:$0xf]
      %v6106 = vld [vmem:[%s20 + $0xc] sm:$0xf]
      %v6107 = vld [vmem:[%s21] sm:$0x1]
      %v6109 = vlaneseq
      %v6110 = vshrl.u32 %v6109, 7
      %v6111 = vsub.s32 0, %v6110
      %v6112 = vrot.slane %v6107, %v6111
      %v6118 = vunpack.c.l.b16 %v6103
      %v6119 = vunpack.c.l.b16 %v6104
      %v6120 = vunpack.c.l.b16 %v6105
      %v6121 = vunpack.c.l.b16 %v6106
      %v6122 = vpack.c.b16 %v6119, %v6118
      %v6123 = vpack.c.b16 %v6121, %v6120
      %v6127 = vsel %vm837, %v6100, 0
      %v6130 = vsel %vm837, %v6101, 0
      %v6133 = vsel %vm837, %v6102, 0
      %6135 = vmatprep.subr.bf16.mxu0 0
      %6136 = vmatpush1.bf16.msra.mxu0 %v6122
      %6137 = vmatprep.subr.bf16.mxu0 0
      %6138 = vmatpush1.bf16.msra.mxu0 %v6123
      %6139 = vmatprep.subr.bf16.mxu0 0
      %6140 = vmatpush1.bf16.msra.mxu0 0
      %6141 = vmatprep.subr.bf16.mxu0 0
      %6142 = vmatpush1.bf16.msra.mxu0 0
      %6143 = vmatprep.subr.bf16.mxu0 0
      %6144 = vmatpush1.bf16.msra.mxu0 0
      %6145 = vmatprep.subr.bf16.mxu0 0
      %6146 = vmatpush1.bf16.msra.mxu0 0
      %6147 = vmatprep.subr.bf16.mxu0 0
      %6148 = vmatpush1.bf16.msra.mxu0 0
      %6149 = vmatprep.subr.bf16.mxu0 0
      %6150 = vmatpush1.bf16.msra.mxu0 0
      %6151 = vmatprep.subr.bf16.mxu0 0
      %6152 = vmatpush1.bf16.msra.mxu0 0
      %6153 = vmatprep.subr.bf16.mxu0 0
      %6154 = vmatpush1.bf16.msra.mxu0 0
      %6155 = vmatprep.subr.bf16.mxu0 0
      %6156 = vmatpush1.bf16.msra.mxu0 0
      %6157 = vmatprep.subr.bf16.mxu0 0
      %6158 = vmatpush1.bf16.msra.mxu0 0
      %6159 = vmatprep.subr.bf16.mxu0 0
      %6160 = vmatpush1.bf16.msra.mxu0 0
      %6161 = vmatprep.subr.bf16.mxu0 0
      %6162 = vmatpush1.bf16.msra.mxu0 0
      %6163 = vmatprep.subr.bf16.mxu0 0
      %6164 = vmatpush1.bf16.msra.mxu0 0
      %6165 = vmatprep.subr.bf16.mxu0 0
      %6166 = vmatpush1.bf16.msra.mxu0 0
      %6167 = vmatprep.mubr.bf16.mxu0 0
      %6168 = vmatmul.mubr.bf16.gmra.mrb[0].mxu0 %v6127
      %v6169 = vpop.f32.mrb[0].mxu0
      %v6170 = vadd.f32 %v6112, %v6169
      %v6171 = vpop.f32.mrb[0].mxu0
      %v6172 = vpop.f32.mrb[0].mxu0
      %v6173 = vadd.f32 %v6112, %v6172
      %v6174 = vpop.f32.mrb[0].mxu0
      %6175 = vmatprep.mubr.bf16.mxu0 0
      %6176 = vmatmul.mubr.bf16.gmra.mrb[0].mxu0 %v6130
      %v6177 = vpop.f32.mrb[0].mxu0
      %v6178 = vadd.f32 %v6112, %v6177
      %v6179 = vpop.f32.mrb[0].mxu0
      %v6180 = vpop.f32.mrb[0].mxu0
      %v6181 = vadd.f32 %v6112, %v6180
      %v6182 = vpop.f32.mrb[0].mxu0
      %6183 = vmatprep.mubr.bf16.mxu0 0
      %6184 = vmatmul.mubr.bf16.gmra.mrb[0].mxu0 %v6133
      %v6185 = vpop.f32.mrb[0].mxu0
      %v6186 = vadd.f32 %v6112, %v6185
      %v6187 = vpop.f32.mrb[0].mxu0
      %v6188 = vpop.f32.mrb[0].mxu0
      %v6189 = vpop.f32.mrb[0].mxu0
      %6190 = vdwg.mxu0
      %6191 = vst [vmem:[%s705] sm:$0xff] %v6170
      %6192 = vst [vmem:[%s705 + $0x8] sm:$0xff] %v6173
      %6193 = vst [vmem:[%s705 + $0x10] sm:$0x1] %v6178
      %s6194 = scalar_lea.vmem %s705, 24
      %6195 = vst [vmem:[%s6194 - $0x1] sm:$0xfe] %v6178
      %6196 = vst [vmem:[%s6194 + $0x7] sm:$0xff] %v6181
      %6197 = vst [vmem:[%s6194 + $0xf] sm:$0x3] %v6186
      %s6198 = smul.u32 2, %s33
      %p6199 = scmp.lt.s32.totalorder %s6198, 3
      %s6200 = scalar_select %p6199, %s6198, 3
      %s6201 = smul.addr %s6200, 3
      %s6202 = smul.addr %s6201, 8
      %s6203 = scalar_lea.vmem %s22, %s6202
      // Predicated region
      $region109: #{mae_decoder_forward.1} parent=107 // pred_check
        %p6204 = pneg %p523
      $region110: #{mae_decoder_forward.1} parent=107 // pred_check_branch
        %6206 = sbr.rel (%p6204) target = $region112
      $region111: #{mae_decoder_forward.1} parent=107 // pred_region
        %s6207 = smul.u32 2, %s33
      $region112: #{mae_decoder_forward.1} parent=107 // pred_fallthru
        _
    $region108: #{mae_decoder_forward.1} parent=5 // pred_fallthru
      _
    %p6208 = scmp.le.s32.totalorder 2, %s28
    // Predicated region
    $region113: #{mae_decoder_forward.1} parent=5 // pred_check
      %p6209 = pneg %p6208
    $region114: #{mae_decoder_forward.1} parent=5 // pred_check_branch
      %6211 = sbr.rel (%p6209) target = $region116
    $region115: #{mae_decoder_forward.1} parent=5 // pred_region
      %s6212 = ssub.s32 %s28, 2
      // Predicated region
      $region117: #{mae_decoder_forward.1} parent=115 // pred_check
        %p6213 = pneg %p529
      $region118: #{mae_decoder_forward.1} parent=115 // pred_check_branch
        %6215 = sbr.rel (%p6213) target = $region120
      $region119: #{mae_decoder_forward.1} parent=115 // pred_region
        %s6216 = smul.u32 2, %s34
        %p6217 = scmp.lt.s32.totalorder %s6216, 3
        %s6218 = scalar_select %p6217, %s6216, 3
        %s6219 = smul.addr %s6218, 3
        %s6220 = smul.addr %s6219, 8
        %s6221 = scalar_lea.vmem %s22, %s6220
      $region120: #{mae_decoder_forward.1} parent=115 // pred_fallthru
        _
    $region116: #{mae_decoder_forward.1} parent=5 // pred_fallthru
      _
  $region6: #{mae_decoder_forward.1} parent=0 // loop_footer
    %s32 = sadd.s32 1, %s28
  $region7: #{mae_decoder_forward.1} parent=0 // loop_footer_branch
    %27 = sbr.rel target = $region3
  $region8: #{mae_decoder_forward.1} parent=0 // loop_exit
    _

</llo_original>
